<compile_context>
chip_gen: v5e
topology: v5e:2x2
jax: 0.10.0
libtpu: 0.0.40
codegen_flags: <defaults>
</compile_context>

<pallas_src>
import math
from functools import partial

import jax
import jax.numpy as jnp
import numpy as np
from jax.experimental import pallas as pl
from jax.experimental.pallas import tpu as pltpu

# Finite "-inf": keeps exp() underflowing to exactly 0 for masked entries while
# avoiding NaN rows when a query row is fully masked.
_NEG_BIG = -1e30


# ---------------------------------------------------------------------------
# Kernel: one batch element per grid step; heads statically unrolled.
# ---------------------------------------------------------------------------
def _mha_rope_batch_kernel(x_ref, wq_ref, bq_ref, wk_ref, bk_ref, wv_ref, bv_ref,
                           wo_ref, bo_ref, cos_ref, sin_ref, padb_ref,
                           out_ref, *rest, num_heads, head_dim, need_weights):
    if need_weights:
        attn_w_ref, q_sc, k_sc, v_sc, ctx_sc = rest
    else:
        q_sc, k_sc, v_sc, ctx_sc = rest
        attn_w_ref = None

    half = head_dim // 2
    inv_scale = 1.0 / math.sqrt(head_dim)
    cdt = q_sc.dtype                  # MXU operand dtype == input dtype (bf16 in -> bf16 MXU)

    x = x_ref[0]                      # (T, D) in input dtype
    T = x.shape[0]

    # ---- Full-width Q/K/V projections: one MXU-filling (T,D)@(D,D) each ----
    q_sc[...] = (jnp.dot(x, wq_ref[...], preferred_element_type=jnp.float32)
                 + bq_ref[...]).astype(cdt)
    k_sc[...] = (jnp.dot(x, wk_ref[...], preferred_element_type=jnp.float32)
                 + bk_ref[...]).astype(cdt)
    v_sc[...] = (jnp.dot(x, wv_ref[...], preferred_element_type=jnp.float32)
                 + bv_ref[...]).astype(cdt)

    # ---- Shared mask / RoPE tables, hoisted out of the head loop ----
    cos = cos_ref[...]                                          # (T, hd)  = [cos | cos]
    sin = sin_ref[...]                                          # (T, hd)  = [-sin | sin]
    row = jax.lax.broadcasted_iota(jnp.int32, (T, 1), 0)        # small iotas, no (T,T) i32
    col = jax.lax.broadcasted_iota(jnp.int32, (1, T), 1)
    bias = jnp.where(col > row, _NEG_BIG, padb_ref[0])          # (T, T) f32 causal + key-pad

    # ---- Per-head attention (static unroll -> static, lane-aligned slices) ----
    for h in range(num_heads):
        lo, hi = h * head_dim, (h + 1) * head_dim
        q = q_sc[:, lo:hi].astype(jnp.float32)                  # (T, hd) f32 for RoPE
        k = k_sc[:, lo:hi].astype(jnp.float32)

        # RoPE via XLU lane-roll; 1/sqrt(hd) folded into q (T*hd mults, not T*T).
        q = (q * cos + pltpu.roll(q, shift=half, axis=1) * sin) * inv_scale
        k = k * cos + pltpu.roll(k, shift=half, axis=1) * sin

        # QK^T on the MXU in the compute dtype (bf16 if input bf16), f32 accumulation.
        scores = jax.lax.dot_general(
            q.astype(cdt), k.astype(cdt),
            dimension_numbers=(((1,), (1,)), ((), ())),
            preferred_element_type=jnp.float32) + bias          # (T, T) f32

        # Row softmax; reciprocal runs on the (otherwise idle) EUP slot.
        m = jnp.max(scores, axis=-1, keepdims=True)
        e = jnp.exp(scores - m)
        s = jnp.sum(e, axis=-1, keepdims=True)
        w = e * pl.reciprocal(s, approx=True)

        if attn_w_ref is not None:
            attn_w_ref[0, h] = w.astype(attn_w_ref.dtype)

        # PV matmul in compute dtype; write this head's ctx into its lane slot.
        ctx = jnp.dot(w.astype(cdt), v_sc[:, lo:hi],
                      preferred_element_type=jnp.float32)       # (T, hd)
        ctx_sc[:, lo:hi] = ctx.astype(cdt)

    # ---- Single MXU-filling output projection over all heads ----
    out = jnp.dot(ctx_sc[...], wo_ref[...], preferred_element_type=jnp.float32)
    out_ref[0] = (out + bo_ref[...]).astype(out_ref.dtype)


# ---------------------------------------------------------------------------
# Wrapper: RoPE tables, pad bias, resident weight specs, vmem budget, pallas_call.
# ---------------------------------------------------------------------------
def _vmem_limit_bytes(T, D, hd, H, x_bytes, p_bytes, w_bytes, need_weights):
    params = 2 * (4 * D * D + 4 * D) * p_bytes          # resident weights + biases (2 bufs)
    io_blk = 2 * (2 * T * D) * x_bytes                  # x block + out block
    tables = 2 * (2 * T * hd + T) * 4                   # cos, sin, pad bias
    attn = 2 * H * T * T * w_bytes if need_weights else 0
    scratch = 4 * T * D * x_bytes                       # q/k/v/ctx scratch
    interim = 12 * T * T * 4 + 6 * T * D * 4            # scores/softmax/bias + f32 proj temps
    total = params + io_blk + tables + attn + scratch + interim
    # Floor at the default scoped limit; cap at v7x's 64 MiB physical VMEM.
    return int(min(max(total, 32 * 1024 * 1024), 64 * 1024 * 1024))


def mha_with_rope_forward(x, params, input_pad_mask=None, *, num_heads,
                          need_weights=True, attn_weights_dtype=None):
    B, T, D = x.shape
    assert D % num_heads == 0, "d_model must be divisible by num_heads"
    hd = D // num_heads
    assert hd % 2 == 0, "RoPE requires an even head_dim"
    half = hd // 2
    dtype = x.dtype
    attn_dtype = dtype if attn_weights_dtype is None else attn_weights_dtype

    # RoPE tables, full head_dim width, rotation sign folded into sin.
    inv_freq = 1.0 / (10000.0 ** (jnp.arange(0, half, dtype=jnp.float32) / half))
    theta = jnp.arange(T, dtype=jnp.float32)[:, None] * inv_freq[None, :]   # (T, half)
    cos_h = jnp.cos(theta)
    sin_h = jnp.sin(theta)
    cos_full = jnp.concatenate([cos_h, cos_h], axis=-1)                     # (T, hd)
    sin_signed = jnp.concatenate([-sin_h, sin_h], axis=-1)                  # (T, hd)

    # Key-padding additive bias (B, 1, T); causal mask is built inside the kernel.
    if input_pad_mask is None:
        pad_bias = jnp.zeros((B, 1, T), jnp.float32)
    else:
        pad_bias = jnp.where(input_pad_mask[:, None, :], 0.0, _NEG_BIG).astype(jnp.float32)

    wq, wk, wv, wo = params["wq"], params["wk"], params["wv"], params["wo"]
    bq = params["bq"].reshape(1, D)
    bk = params["bk"].reshape(1, D)
    bv = params["bv"].reshape(1, D)
    bo = params["bo"].reshape(1, D)

    kernel = partial(_mha_rope_batch_kernel, num_heads=num_heads, head_dim=hd,
                     need_weights=need_weights)

    # Resident blocks: full array, constant index_map -> DMA'd once for the whole grid.
    res2 = lambda s: pl.BlockSpec(s, lambda b: (0, 0))

    in_specs = [
        pl.BlockSpec((1, T, D), lambda b: (b, 0, 0)),    # x
        res2((D, D)), res2((1, D)),                      # wq, bq
        res2((D, D)), res2((1, D)),                      # wk, bk
        res2((D, D)), res2((1, D)),                      # wv, bv
        res2((D, D)), res2((1, D)),                      # wo, bo
        res2((T, hd)), res2((T, hd)),                    # cos_full, sin_signed
        pl.BlockSpec((1, 1, T), lambda b: (b, 0, 0)),    # pad bias
    ]

    out_shape = [jax.ShapeDtypeStruct((B, T, D), dtype)]
    out_specs = [pl.BlockSpec((1, T, D), lambda b: (b, 0, 0))]
    if need_weights:
        out_shape.append(jax.ShapeDtypeStruct((B, num_heads, T, T), attn_dtype))
        out_specs.append(pl.BlockSpec((1, num_heads, T, T), lambda b: (b, 0, 0, 0)))

    vlim = _vmem_limit_bytes(
        T, D, hd, num_heads,
        jnp.dtype(dtype).itemsize, jnp.dtype(wq.dtype).itemsize,
        jnp.dtype(attn_dtype).itemsize, need_weights)

    results = pl.pallas_call(
        kernel,
        out_shape=tuple(out_shape),
        grid=(B,),
        in_specs=in_specs,
        out_specs=tuple(out_specs),
        scratch_shapes=[pltpu.VMEM((T, D), dtype) for _ in range(4)],  # q/k/v/ctx
        compiler_params=pltpu.CompilerParams(
            dimension_semantics=("parallel",),
            vmem_limit_bytes=vlim),
    )(x, wq, bq, wk, bk, wv, bv, wo, bo, cos_full, sin_signed, pad_bias)

    if need_weights:
        out, attn_w = results
        return out, attn_w
    (out,) = results
    return out


# ---------------------------------------------------------------------------
# Pure-JAX reference (mirrors the PyTorch forward) for correctness check.
# ---------------------------------------------------------------------------
def _ref_forward(x, params, input_pad_mask, *, num_heads):
    B, T, D = x.shape
    hd = D // num_heads
    half = hd // 2

    mask = jnp.zeros((B, num_heads, T, T), x.dtype)
    pad = jnp.logical_not(input_pad_mask)
    mask = jnp.where(pad[:, None, None, :], -jnp.inf, mask)
    causal = jnp.triu(jnp.ones((T, T), dtype=bool), k=1)
    mask = jnp.where(causal[None, None], -jnp.inf, mask)

    q = x @ params["wq"] + params["bq"]
    k = x @ params["wk"] + params["bk"]
    v = x @ params["wv"] + params["bv"]
    q = q.reshape(B, T, num_heads, hd).transpose(0, 2, 1, 3)
    k = k.reshape(B, T, num_heads, hd).transpose(0, 2, 1, 3)
    v = v.reshape(B, T, num_heads, hd).transpose(0, 2, 1, 3)

    inv_freq = 1.0 / (10000.0 ** (jnp.arange(0, half, dtype=jnp.float32) / half))
    theta = jnp.arange(T, dtype=jnp.float32)[:, None] * inv_freq[None, :]
    cos = jnp.cos(theta)[None, None]      # (1,1,T,half)
    sin = jnp.sin(theta)[None, None]

    q1, q2 = q[..., :half], q[..., half:]
    k1, k2 = k[..., :half], k[..., half:]
    q = jnp.concatenate([q1 * cos - q2 * sin, q2 * cos + q1 * sin], axis=-1)
    k = jnp.concatenate([k1 * cos - k2 * sin, k2 * cos + k1 * sin], axis=-1)

    scores = jnp.einsum("bhqd,bhkd->bhqk", q, k) / math.sqrt(hd) + mask
    w = jax.nn.softmax(scores, axis=-1)
    ctx = jnp.einsum("bhqk,bhkd->bhqd", w, v)
    ctx = ctx.transpose(0, 2, 1, 3).reshape(B, T, D)
    out = ctx @ params["wo"] + params["bo"]
    return out, w


if __name__ == "__main__":
    # Lane-dense small test: head_dim = 128, T multiple of 128.
    B, T, d_model, nhead = 2, 128, 512, 4
    key = jax.random.PRNGKey(0)
    ks = jax.random.split(key, 10)

    # Deterministic synthetic parameters (nn.Linear shapes, stored as (in, out)).
    s = 1.0 / math.sqrt(d_model)
    params = {
        "wq": jax.random.uniform(ks[0], (d_model, d_model), jnp.float32, -s, s),
        "bq": jax.random.uniform(ks[1], (d_model,), jnp.float32, -s, s),
        "wk": jax.random.uniform(ks[2], (d_model, d_model), jnp.float32, -s, s),
        "bk": jax.random.uniform(ks[3], (d_model,), jnp.float32, -s, s),
        "wv": jax.random.uniform(ks[4], (d_model, d_model), jnp.float32, -s, s),
        "bv": jax.random.uniform(ks[5], (d_model,), jnp.float32, -s, s),
        "wo": jax.random.uniform(ks[6], (d_model, d_model), jnp.float32, -s, s),
        "bo": jax.random.uniform(ks[7], (d_model,), jnp.float32, -s, s),
    }
    x = jax.random.normal(ks[8], (B, T, d_model), jnp.float32)
    # pad mask: True => real token; mark last 5 tokens of batch 1 as padding.
    input_pad_mask = jnp.ones((B, T), dtype=bool).at[1, -5:].set(False)

    out, attn_w = mha_with_rope_forward(x, params, input_pad_mask, num_heads=nhead)
    out = jax.block_until_ready(out)
    attn_w = jax.block_until_ready(attn_w)

    ref_out, ref_w = _ref_forward(x, params, input_pad_mask, num_heads=nhead)
    # Tolerance accounts for the EUP approximate reciprocal in the softmax epilogue.
    np.testing.assert_allclose(np.asarray(out), np.asarray(ref_out), rtol=2e-3, atol=2e-3)
    np.testing.assert_allclose(np.asarray(attn_w), np.asarray(ref_w), rtol=2e-3, atol=2e-3)

    # need_weights=False path: skips the (B,H,T,T) HBM writeback entirely.
    out_only = mha_with_rope_forward(x, params, input_pad_mask, num_heads=nhead,
                                     need_weights=False)
    out_only = jax.block_until_ready(out_only)
    np.testing.assert_allclose(np.asarray(out_only), np.asarray(ref_out),
                               rtol=2e-3, atol=2e-3)

    print("KERNEL_OK")
</pallas_src>

<mosaic_0001>
module attributes {stable_mosaic.version = 11 : i64} {
  func.func @_mha_rope_batch_kernel(%arg0: i32, %arg1: memref<1x128x512xf32, #tpu.memory_space<vmem>>, %arg2: memref<512x512xf32, #tpu.memory_space<vmem>>, %arg3: memref<1x512xf32, #tpu.memory_space<vmem>>, %arg4: memref<512x512xf32, #tpu.memory_space<vmem>>, %arg5: memref<1x512xf32, #tpu.memory_space<vmem>>, %arg6: memref<512x512xf32, #tpu.memory_space<vmem>>, %arg7: memref<1x512xf32, #tpu.memory_space<vmem>>, %arg8: memref<512x512xf32, #tpu.memory_space<vmem>>, %arg9: memref<1x512xf32, #tpu.memory_space<vmem>>, %arg10: memref<128x128xf32, #tpu.memory_space<vmem>>, %arg11: memref<128x128xf32, #tpu.memory_space<vmem>>, %arg12: memref<1x1x128xf32, #tpu.memory_space<vmem>>, %arg13: memref<1x128x512xf32, #tpu.memory_space<vmem>>, %arg14: memref<1x4x128x128xf32, #tpu.memory_space<vmem>>, %arg15: memref<128x512xf32, #tpu.memory_space<vmem>>, %arg16: memref<128x512xf32, #tpu.memory_space<vmem>>, %arg17: memref<128x512xf32, #tpu.memory_space<vmem>>, %arg18: memref<128x512xf32, #tpu.memory_space<vmem>>) attributes {dimension_semantics = [#tpu.dimension_semantics<parallel>], iteration_bounds = array<i64: 2>, scalar_prefetch = 0 : i64, scratch_operands = 4 : i64, tpu.core_type = #tpu.core_type<tc>, window_params = [{transform_indices = @transform_0, window_bounds = array<i64: 1, 128, 512>}, {pipeline_mode = #tpu.pipeline_mode<synchronous>, transform_indices = @transform_1, window_bounds = array<i64: 512, 512>}, {pipeline_mode = #tpu.pipeline_mode<synchronous>, transform_indices = @transform_2, window_bounds = array<i64: 1, 512>}, {pipeline_mode = #tpu.pipeline_mode<synchronous>, transform_indices = @transform_3, window_bounds = array<i64: 512, 512>}, {pipeline_mode = #tpu.pipeline_mode<synchronous>, transform_indices = @transform_4, window_bounds = array<i64: 1, 512>}, {pipeline_mode = #tpu.pipeline_mode<synchronous>, transform_indices = @transform_5, window_bounds = array<i64: 512, 512>}, {pipeline_mode = #tpu.pipeline_mode<synchronous>, transform_indices = @transform_6, window_bounds = array<i64: 1, 512>}, {pipeline_mode = #tpu.pipeline_mode<synchronous>, transform_indices = @transform_7, window_bounds = array<i64: 512, 512>}, {pipeline_mode = #tpu.pipeline_mode<synchronous>, transform_indices = @transform_8, window_bounds = array<i64: 1, 512>}, {pipeline_mode = #tpu.pipeline_mode<synchronous>, transform_indices = @transform_9, window_bounds = array<i64: 128, 128>}, {pipeline_mode = #tpu.pipeline_mode<synchronous>, transform_indices = @transform_10, window_bounds = array<i64: 128, 128>}, {transform_indices = @transform_11, window_bounds = array<i64: 1, 1, 128>}, {transform_indices = @transform_12, window_bounds = array<i64: 1, 128, 512>}, {transform_indices = @transform_13, window_bounds = array<i64: 1, 4, 128, 128>}]} {
    %c0 = arith.constant 0 : index
    %c0_0 = arith.constant 0 : index
    %c0_1 = arith.constant 0 : index
    %0 = vector.load %arg1[%c0, %c0_0, %c0_1] : memref<1x128x512xf32, #tpu.memory_space<vmem>>, vector<1x128x512xf32>
    %1 = vector.shape_cast %0 : vector<1x128x512xf32> to vector<128x512xf32>
    %c0_2 = arith.constant 0 : index
    %c0_3 = arith.constant 0 : index
    %2 = vector.load %arg2[%c0_2, %c0_3] : memref<512x512xf32, #tpu.memory_space<vmem>>, vector<512x512xf32>
    %cst = arith.constant dense<0.000000e+00> : vector<128x512xf32>
    %3 = tpu.matmul %1, %2, %cst {dimension_numbers = #tpu.dot_dimension_numbers<[1], [0], [0], [1], [0, 0, 1, 1], [], []>} : vector<128x512xf32>, vector<512x512xf32>, vector<128x512xf32> -> vector<128x512xf32>
    %c0_4 = arith.constant 0 : index
    %c0_5 = arith.constant 0 : index
    %4 = vector.load %arg3[%c0_4, %c0_5] : memref<1x512xf32, #tpu.memory_space<vmem>>, vector<1x512xf32>
    %5 = vector.broadcast %4 : vector<1x512xf32> to vector<128x512xf32>
    %6 = arith.addf %3, %5 : vector<128x512xf32>
    %c0_6 = arith.constant 0 : index
    %c0_7 = arith.constant 0 : index
    %7 = vector.load %arg15[%c0_6, %c0_7] : memref<128x512xf32, #tpu.memory_space<vmem>>, vector<128x512xf32>
    tpu.vector_store %arg15[%c0_6, %c0_7], %6 {strides = array<i32>} : memref<128x512xf32, #tpu.memory_space<vmem>>, vector<128x512xf32>,
    %c0_8 = arith.constant 0 : index
    %c0_9 = arith.constant 0 : index
    %8 = vector.load %arg4[%c0_8, %c0_9] : memref<512x512xf32, #tpu.memory_space<vmem>>, vector<512x512xf32>
    %cst_10 = arith.constant dense<0.000000e+00> : vector<128x512xf32>
    %9 = tpu.matmul %1, %8, %cst_10 {dimension_numbers = #tpu.dot_dimension_numbers<[1], [0], [0], [1], [0, 0, 1, 1], [], []>} : vector<128x512xf32>, vector<512x512xf32>, vector<128x512xf32> -> vector<128x512xf32>
    %c0_11 = arith.constant 0 : index
    %c0_12 = arith.constant 0 : index
    %10 = vector.load %arg5[%c0_11, %c0_12] : memref<1x512xf32, #tpu.memory_space<vmem>>, vector<1x512xf32>
    %11 = vector.broadcast %10 : vector<1x512xf32> to vector<128x512xf32>
    %12 = arith.addf %9, %11 : vector<128x512xf32>
    %c0_13 = arith.constant 0 : index
    %c0_14 = arith.constant 0 : index
    %13 = vector.load %arg16[%c0_13, %c0_14] : memref<128x512xf32, #tpu.memory_space<vmem>>, vector<128x512xf32>
    tpu.vector_store %arg16[%c0_13, %c0_14], %12 {strides = array<i32>} : memref<128x512xf32, #tpu.memory_space<vmem>>, vector<128x512xf32>,
    %c0_15 = arith.constant 0 : index
    %c0_16 = arith.constant 0 : index
    %14 = vector.load %arg6[%c0_15, %c0_16] : memref<512x512xf32, #tpu.memory_space<vmem>>, vector<512x512xf32>
    %cst_17 = arith.constant dense<0.000000e+00> : vector<128x512xf32>
    %15 = tpu.matmul %1, %14, %cst_17 {dimension_numbers = #tpu.dot_dimension_numbers<[1], [0], [0], [1], [0, 0, 1, 1], [], []>} : vector<128x512xf32>, vector<512x512xf32>, vector<128x512xf32> -> vector<128x512xf32>
    %c0_18 = arith.constant 0 : index
    %c0_19 = arith.constant 0 : index
    %16 = vector.load %arg7[%c0_18, %c0_19] : memref<1x512xf32, #tpu.memory_space<vmem>>, vector<1x512xf32>
    %17 = vector.broadcast %16 : vector<1x512xf32> to vector<128x512xf32>
    %18 = arith.addf %15, %17 : vector<128x512xf32>
    %c0_20 = arith.constant 0 : index
    %c0_21 = arith.constant 0 : index
    %19 = vector.load %arg17[%c0_20, %c0_21] : memref<128x512xf32, #tpu.memory_space<vmem>>, vector<128x512xf32>
    tpu.vector_store %arg17[%c0_20, %c0_21], %18 {strides = array<i32>} : memref<128x512xf32, #tpu.memory_space<vmem>>, vector<128x512xf32>,
    %c0_22 = arith.constant 0 : index
    %c0_23 = arith.constant 0 : index
    %20 = vector.load %arg10[%c0_22, %c0_23] : memref<128x128xf32, #tpu.memory_space<vmem>>, vector<128x128xf32>
    %c0_24 = arith.constant 0 : index
    %c0_25 = arith.constant 0 : index
    %21 = vector.load %arg11[%c0_24, %c0_25] : memref<128x128xf32, #tpu.memory_space<vmem>>, vector<128x128xf32>
    %22 = tpu.iota {dimensions = array<i32: 0>} : vector<128x1xi32>
    %23 = tpu.iota {dimensions = array<i32: 1>} : vector<1x128xi32>
    %24 = vector.broadcast %23 : vector<1x128xi32> to vector<128x128xi32>
    %25 = vector.broadcast %22 : vector<128x1xi32> to vector<128x128xi32>
    %26 = arith.cmpi sgt, %24, %25 : vector<128x128xi32>
    %c0_26 = arith.constant 0 : index
    %c0_27 = arith.constant 0 : index
    %c0_28 = arith.constant 0 : index
    %27 = vector.load %arg12[%c0_26, %c0_27, %c0_28] : memref<1x1x128xf32, #tpu.memory_space<vmem>>, vector<1x1x128xf32>
    %28 = vector.shape_cast %27 : vector<1x1x128xf32> to vector<1x128xf32>
    %cst_29 = arith.constant -1.000000e+30 : f32
    %29 = vector.broadcast %cst_29 : f32 to vector<128x128xf32>
    %30 = vector.shape_cast %28 : vector<1x128xf32> to vector<1x128xf32>
    %31 = vector.broadcast %30 : vector<1x128xf32> to vector<128x128xf32>
    %32 = arith.select %26, %29, %31 : vector<128x128xi1>, vector<128x128xf32>
    %c0_30 = arith.constant 0 : index
    %c0_31 = arith.constant 0 : index
    %33 = vector.load %arg15[%c0_30, %c0_31] : memref<128x512xf32, #tpu.memory_space<vmem>>, vector<128x128xf32>
    %c0_32 = arith.constant 0 : index
    %c0_33 = arith.constant 0 : index
    %34 = vector.load %arg16[%c0_32, %c0_33] : memref<128x512xf32, #tpu.memory_space<vmem>>, vector<128x128xf32>
    %35 = arith.mulf %33, %20 : vector<128x128xf32>
    %c64_i32 = arith.constant 64 : i32
    %36 = tpu.dynamic_rotate %33 by %c64_i32 dim 1 : vector<128x128xf32>, i32 -> vector<128x128xf32>
    %37 = arith.mulf %36, %21 : vector<128x128xf32>
    %38 = arith.addf %35, %37 : vector<128x128xf32>
    %cst_34 = arith.constant 0.0883883461 : f32
    %39 = vector.broadcast %cst_34 : f32 to vector<128x128xf32>
    %40 = arith.mulf %38, %39 : vector<128x128xf32>
    %41 = arith.mulf %34, %20 : vector<128x128xf32>
    %c64_i32_35 = arith.constant 64 : i32
    %42 = tpu.dynamic_rotate %34 by %c64_i32_35 dim 1 : vector<128x128xf32>, i32 -> vector<128x128xf32>
    %43 = arith.mulf %42, %21 : vector<128x128xf32>
    %44 = arith.addf %41, %43 : vector<128x128xf32>
    %cst_36 = arith.constant dense<0.000000e+00> : vector<128x128xf32>
    %45 = tpu.matmul %40, %44, %cst_36 {dimension_numbers = #tpu.dot_dimension_numbers<[1], [1], [0], [0], [0, 0, 1, 0], [], []>} : vector<128x128xf32>, vector<128x128xf32>, vector<128x128xf32> -> vector<128x128xf32>
    %46 = arith.addf %45, %32 : vector<128x128xf32>
    %cst_37 = arith.constant dense<0xFF800000> : vector<128xf32>
    %47 = vector.multi_reduction <maximumf>, %46, %cst_37 [1] : vector<128x128xf32> to vector<128xf32>
    %48 = vector.shape_cast %47 : vector<128xf32> to vector<128x1xf32>
    %49 = vector.broadcast %48 : vector<128x1xf32> to vector<128x128xf32>
    %50 = arith.subf %46, %49 : vector<128x128xf32>
    %51 = math.exp %50 : vector<128x128xf32>
    %cst_38 = arith.constant dense<0.000000e+00> : vector<128xf32>
    %52 = vector.multi_reduction <add>, %51, %cst_38 [1] : vector<128x128xf32> to vector<128xf32>
    %53 = vector.shape_cast %52 : vector<128xf32> to vector<128x1xf32>
    %54 = tpu.reciprocal %53 {approx = true} : vector<128x1xf32> -> vector<128x1xf32>
    %55 = vector.broadcast %54 : vector<128x1xf32> to vector<128x128xf32>
    %56 = arith.mulf %51, %55 : vector<128x128xf32>
    %c0_39 = arith.constant 0 : index
    %c0_40 = arith.constant 0 : index
    %c0_41 = arith.constant 0 : index
    %c0_42 = arith.constant 0 : index
    %57 = vector.load %arg14[%c0_39, %c0_40, %c0_41, %c0_42] : memref<1x4x128x128xf32, #tpu.memory_space<vmem>>, vector<1x1x128x128xf32>
    %58 = vector.shape_cast %57 : vector<1x1x128x128xf32> to vector<128x128xf32>
    %59 = vector.shape_cast %56 : vector<128x128xf32> to vector<1x1x128x128xf32>
    tpu.vector_store %arg14[%c0_39, %c0_40, %c0_41, %c0_42], %59 {strides = array<i32>} : memref<1x4x128x128xf32, #tpu.memory_space<vmem>>, vector<1x1x128x128xf32>,
    %c0_43 = arith.constant 0 : index
    %c0_44 = arith.constant 0 : index
    %60 = vector.load %arg17[%c0_43, %c0_44] : memref<128x512xf32, #tpu.memory_space<vmem>>, vector<128x128xf32>
    %cst_45 = arith.constant dense<0.000000e+00> : vector<128x128xf32>
    %61 = tpu.matmul %56, %60, %cst_45 {dimension_numbers = #tpu.dot_dimension_numbers<[1], [0], [0], [1], [0, 0, 1, 1], [], []>} : vector<128x128xf32>, vector<128x128xf32>, vector<128x128xf32> -> vector<128x128xf32>
    %c0_46 = arith.constant 0 : index
    %c0_47 = arith.constant 0 : index
    %62 = vector.load %arg18[%c0_46, %c0_47] : memref<128x512xf32, #tpu.memory_space<vmem>>, vector<128x128xf32>
    tpu.vector_store %arg18[%c0_46, %c0_47], %61 {strides = array<i32>} : memref<128x512xf32, #tpu.memory_space<vmem>>, vector<128x128xf32>,
    %c0_48 = arith.constant 0 : index
    %c128 = arith.constant 128 : index
    %63 = vector.load %arg15[%c0_48, %c128] : memref<128x512xf32, #tpu.memory_space<vmem>>, vector<128x128xf32>
    %c0_49 = arith.constant 0 : index
    %c128_50 = arith.constant 128 : index
    %64 = vector.load %arg16[%c0_49, %c128_50] : memref<128x512xf32, #tpu.memory_space<vmem>>, vector<128x128xf32>
    %65 = arith.mulf %63, %20 : vector<128x128xf32>
    %c64_i32_51 = arith.constant 64 : i32
    %66 = tpu.dynamic_rotate %63 by %c64_i32_51 dim 1 : vector<128x128xf32>, i32 -> vector<128x128xf32>
    %67 = arith.mulf %66, %21 : vector<128x128xf32>
    %68 = arith.addf %65, %67 : vector<128x128xf32>
    %cst_52 = arith.constant 0.0883883461 : f32
    %69 = vector.broadcast %cst_52 : f32 to vector<128x128xf32>
    %70 = arith.mulf %68, %69 : vector<128x128xf32>
    %71 = arith.mulf %64, %20 : vector<128x128xf32>
    %c64_i32_53 = arith.constant 64 : i32
    %72 = tpu.dynamic_rotate %64 by %c64_i32_53 dim 1 : vector<128x128xf32>, i32 -> vector<128x128xf32>
    %73 = arith.mulf %72, %21 : vector<128x128xf32>
    %74 = arith.addf %71, %73 : vector<128x128xf32>
    %cst_54 = arith.constant dense<0.000000e+00> : vector<128x128xf32>
    %75 = tpu.matmul %70, %74, %cst_54 {dimension_numbers = #tpu.dot_dimension_numbers<[1], [1], [0], [0], [0, 0, 1, 0], [], []>} : vector<128x128xf32>, vector<128x128xf32>, vector<128x128xf32> -> vector<128x128xf32>
    %76 = arith.addf %75, %32 : vector<128x128xf32>
    %cst_55 = arith.constant dense<0xFF800000> : vector<128xf32>
    %77 = vector.multi_reduction <maximumf>, %76, %cst_55 [1] : vector<128x128xf32> to vector<128xf32>
    %78 = vector.shape_cast %77 : vector<128xf32> to vector<128x1xf32>
    %79 = vector.broadcast %78 : vector<128x1xf32> to vector<128x128xf32>
    %80 = arith.subf %76, %79 : vector<128x128xf32>
    %81 = math.exp %80 : vector<128x128xf32>
    %cst_56 = arith.constant dense<0.000000e+00> : vector<128xf32>
    %82 = vector.multi_reduction <add>, %81, %cst_56 [1] : vector<128x128xf32> to vector<128xf32>
    %83 = vector.shape_cast %82 : vector<128xf32> to vector<128x1xf32>
    %84 = tpu.reciprocal %83 {approx = true} : vector<128x1xf32> -> vector<128x1xf32>
    %85 = vector.broadcast %84 : vector<128x1xf32> to vector<128x128xf32>
    %86 = arith.mulf %81, %85 : vector<128x128xf32>
    %c0_57 = arith.constant 0 : index
    %c1 = arith.constant 1 : index
    %c0_58 = arith.constant 0 : index
    %c0_59 = arith.constant 0 : index
    %87 = vector.load %arg14[%c0_57, %c1, %c0_58, %c0_59] : memref<1x4x128x128xf32, #tpu.memory_space<vmem>>, vector<1x1x128x128xf32>
    %88 = vector.shape_cast %87 : vector<1x1x128x128xf32> to vector<128x128xf32>
    %89 = vector.shape_cast %86 : vector<128x128xf32> to vector<1x1x128x128xf32>
    tpu.vector_store %arg14[%c0_57, %c1, %c0_58, %c0_59], %89 {strides = array<i32>} : memref<1x4x128x128xf32, #tpu.memory_space<vmem>>, vector<1x1x128x128xf32>,
    %c0_60 = arith.constant 0 : index
    %c128_61 = arith.constant 128 : index
    %90 = vector.load %arg17[%c0_60, %c128_61] : memref<128x512xf32, #tpu.memory_space<vmem>>, vector<128x128xf32>
    %cst_62 = arith.constant dense<0.000000e+00> : vector<128x128xf32>
    %91 = tpu.matmul %86, %90, %cst_62 {dimension_numbers = #tpu.dot_dimension_numbers<[1], [0], [0], [1], [0, 0, 1, 1], [], []>} : vector<128x128xf32>, vector<128x128xf32>, vector<128x128xf32> -> vector<128x128xf32>
    %c0_63 = arith.constant 0 : index
    %c128_64 = arith.constant 128 : index
    %92 = vector.load %arg18[%c0_63, %c128_64] : memref<128x512xf32, #tpu.memory_space<vmem>>, vector<128x128xf32>
    tpu.vector_store %arg18[%c0_63, %c128_64], %91 {strides = array<i32>} : memref<128x512xf32, #tpu.memory_space<vmem>>, vector<128x128xf32>,
    %c0_65 = arith.constant 0 : index
    %c256 = arith.constant 256 : index
    %93 = vector.load %arg15[%c0_65, %c256] : memref<128x512xf32, #tpu.memory_space<vmem>>, vector<128x128xf32>
    %c0_66 = arith.constant 0 : index
    %c256_67 = arith.constant 256 : index
    %94 = vector.load %arg16[%c0_66, %c256_67] : memref<128x512xf32, #tpu.memory_space<vmem>>, vector<128x128xf32>
    %95 = arith.mulf %93, %20 : vector<128x128xf32>
    %c64_i32_68 = arith.constant 64 : i32
    %96 = tpu.dynamic_rotate %93 by %c64_i32_68 dim 1 : vector<128x128xf32>, i32 -> vector<128x128xf32>
    %97 = arith.mulf %96, %21 : vector<128x128xf32>
    %98 = arith.addf %95, %97 : vector<128x128xf32>
    %cst_69 = arith.constant 0.0883883461 : f32
    %99 = vector.broadcast %cst_69 : f32 to vector<128x128xf32>
    %100 = arith.mulf %98, %99 : vector<128x128xf32>
    %101 = arith.mulf %94, %20 : vector<128x128xf32>
    %c64_i32_70 = arith.constant 64 : i32
    %102 = tpu.dynamic_rotate %94 by %c64_i32_70 dim 1 : vector<128x128xf32>, i32 -> vector<128x128xf32>
    %103 = arith.mulf %102, %21 : vector<128x128xf32>
    %104 = arith.addf %101, %103 : vector<128x128xf32>
    %cst_71 = arith.constant dense<0.000000e+00> : vector<128x128xf32>
    %105 = tpu.matmul %100, %104, %cst_71 {dimension_numbers = #tpu.dot_dimension_numbers<[1], [1], [0], [0], [0, 0, 1, 0], [], []>} : vector<128x128xf32>, vector<128x128xf32>, vector<128x128xf32> -> vector<128x128xf32>
    %106 = arith.addf %105, %32 : vector<128x128xf32>
    %cst_72 = arith.constant dense<0xFF800000> : vector<128xf32>
    %107 = vector.multi_reduction <maximumf>, %106, %cst_72 [1] : vector<128x128xf32> to vector<128xf32>
    %108 = vector.shape_cast %107 : vector<128xf32> to vector<128x1xf32>
    %109 = vector.broadcast %108 : vector<128x1xf32> to vector<128x128xf32>
    %110 = arith.subf %106, %109 : vector<128x128xf32>
    %111 = math.exp %110 : vector<128x128xf32>
    %cst_73 = arith.constant dense<0.000000e+00> : vector<128xf32>
    %112 = vector.multi_reduction <add>, %111, %cst_73 [1] : vector<128x128xf32> to vector<128xf32>
    %113 = vector.shape_cast %112 : vector<128xf32> to vector<128x1xf32>
    %114 = tpu.reciprocal %113 {approx = true} : vector<128x1xf32> -> vector<128x1xf32>
    %115 = vector.broadcast %114 : vector<128x1xf32> to vector<128x128xf32>
    %116 = arith.mulf %111, %115 : vector<128x128xf32>
    %c0_74 = arith.constant 0 : index
    %c2 = arith.constant 2 : index
    %c0_75 = arith.constant 0 : index
    %c0_76 = arith.constant 0 : index
    %117 = vector.load %arg14[%c0_74, %c2, %c0_75, %c0_76] : memref<1x4x128x128xf32, #tpu.memory_space<vmem>>, vector<1x1x128x128xf32>
    %118 = vector.shape_cast %117 : vector<1x1x128x128xf32> to vector<128x128xf32>
    %119 = vector.shape_cast %116 : vector<128x128xf32> to vector<1x1x128x128xf32>
    tpu.vector_store %arg14[%c0_74, %c2, %c0_75, %c0_76], %119 {strides = array<i32>} : memref<1x4x128x128xf32, #tpu.memory_space<vmem>>, vector<1x1x128x128xf32>,
    %c0_77 = arith.constant 0 : index
    %c256_78 = arith.constant 256 : index
    %120 = vector.load %arg17[%c0_77, %c256_78] : memref<128x512xf32, #tpu.memory_space<vmem>>, vector<128x128xf32>
    %cst_79 = arith.constant dense<0.000000e+00> : vector<128x128xf32>
    %121 = tpu.matmul %116, %120, %cst_79 {dimension_numbers = #tpu.dot_dimension_numbers<[1], [0], [0], [1], [0, 0, 1, 1], [], []>} : vector<128x128xf32>, vector<128x128xf32>, vector<128x128xf32> -> vector<128x128xf32>
    %c0_80 = arith.constant 0 : index
    %c256_81 = arith.constant 256 : index
    %122 = vector.load %arg18[%c0_80, %c256_81] : memref<128x512xf32, #tpu.memory_space<vmem>>, vector<128x128xf32>
    tpu.vector_store %arg18[%c0_80, %c256_81], %121 {strides = array<i32>} : memref<128x512xf32, #tpu.memory_space<vmem>>, vector<128x128xf32>,
    %c0_82 = arith.constant 0 : index
    %c384 = arith.constant 384 : index
    %123 = vector.load %arg15[%c0_82, %c384] : memref<128x512xf32, #tpu.memory_space<vmem>>, vector<128x128xf32>
    %c0_83 = arith.constant 0 : index
    %c384_84 = arith.constant 384 : index
    %124 = vector.load %arg16[%c0_83, %c384_84] : memref<128x512xf32, #tpu.memory_space<vmem>>, vector<128x128xf32>
    %125 = arith.mulf %123, %20 : vector<128x128xf32>
    %c64_i32_85 = arith.constant 64 : i32
    %126 = tpu.dynamic_rotate %123 by %c64_i32_85 dim 1 : vector<128x128xf32>, i32 -> vector<128x128xf32>
    %127 = arith.mulf %126, %21 : vector<128x128xf32>
    %128 = arith.addf %125, %127 : vector<128x128xf32>
    %cst_86 = arith.constant 0.0883883461 : f32
    %129 = vector.broadcast %cst_86 : f32 to vector<128x128xf32>
    %130 = arith.mulf %128, %129 : vector<128x128xf32>
    %131 = arith.mulf %124, %20 : vector<128x128xf32>
    %c64_i32_87 = arith.constant 64 : i32
    %132 = tpu.dynamic_rotate %124 by %c64_i32_87 dim 1 : vector<128x128xf32>, i32 -> vector<128x128xf32>
    %133 = arith.mulf %132, %21 : vector<128x128xf32>
    %134 = arith.addf %131, %133 : vector<128x128xf32>
    %cst_88 = arith.constant dense<0.000000e+00> : vector<128x128xf32>
    %135 = tpu.matmul %130, %134, %cst_88 {dimension_numbers = #tpu.dot_dimension_numbers<[1], [1], [0], [0], [0, 0, 1, 0], [], []>} : vector<128x128xf32>, vector<128x128xf32>, vector<128x128xf32> -> vector<128x128xf32>
    %136 = arith.addf %135, %32 : vector<128x128xf32>
    %cst_89 = arith.constant dense<0xFF800000> : vector<128xf32>
    %137 = vector.multi_reduction <maximumf>, %136, %cst_89 [1] : vector<128x128xf32> to vector<128xf32>
    %138 = vector.shape_cast %137 : vector<128xf32> to vector<128x1xf32>
    %139 = vector.broadcast %138 : vector<128x1xf32> to vector<128x128xf32>
    %140 = arith.subf %136, %139 : vector<128x128xf32>
    %141 = math.exp %140 : vector<128x128xf32>
    %cst_90 = arith.constant dense<0.000000e+00> : vector<128xf32>
    %142 = vector.multi_reduction <add>, %141, %cst_90 [1] : vector<128x128xf32> to vector<128xf32>
    %143 = vector.shape_cast %142 : vector<128xf32> to vector<128x1xf32>
    %144 = tpu.reciprocal %143 {approx = true} : vector<128x1xf32> -> vector<128x1xf32>
    %145 = vector.broadcast %144 : vector<128x1xf32> to vector<128x128xf32>
    %146 = arith.mulf %141, %145 : vector<128x128xf32>
    %c0_91 = arith.constant 0 : index
    %c3 = arith.constant 3 : index
    %c0_92 = arith.constant 0 : index
    %c0_93 = arith.constant 0 : index
    %147 = vector.load %arg14[%c0_91, %c3, %c0_92, %c0_93] : memref<1x4x128x128xf32, #tpu.memory_space<vmem>>, vector<1x1x128x128xf32>
    %148 = vector.shape_cast %147 : vector<1x1x128x128xf32> to vector<128x128xf32>
    %149 = vector.shape_cast %146 : vector<128x128xf32> to vector<1x1x128x128xf32>
    tpu.vector_store %arg14[%c0_91, %c3, %c0_92, %c0_93], %149 {strides = array<i32>} : memref<1x4x128x128xf32, #tpu.memory_space<vmem>>, vector<1x1x128x128xf32>,
    %c0_94 = arith.constant 0 : index
    %c384_95 = arith.constant 384 : index
    %150 = vector.load %arg17[%c0_94, %c384_95] : memref<128x512xf32, #tpu.memory_space<vmem>>, vector<128x128xf32>
    %cst_96 = arith.constant dense<0.000000e+00> : vector<128x128xf32>
    %151 = tpu.matmul %146, %150, %cst_96 {dimension_numbers = #tpu.dot_dimension_numbers<[1], [0], [0], [1], [0, 0, 1, 1], [], []>} : vector<128x128xf32>, vector<128x128xf32>, vector<128x128xf32> -> vector<128x128xf32>
    %c0_97 = arith.constant 0 : index
    %c384_98 = arith.constant 384 : index
    %152 = vector.load %arg18[%c0_97, %c384_98] : memref<128x512xf32, #tpu.memory_space<vmem>>, vector<128x128xf32>
    tpu.vector_store %arg18[%c0_97, %c384_98], %151 {strides = array<i32>} : memref<128x512xf32, #tpu.memory_space<vmem>>, vector<128x128xf32>,
    %c0_99 = arith.constant 0 : index
    %c0_100 = arith.constant 0 : index
    %153 = vector.load %arg18[%c0_99, %c0_100] : memref<128x512xf32, #tpu.memory_space<vmem>>, vector<128x512xf32>
    %c0_101 = arith.constant 0 : index
    %c0_102 = arith.constant 0 : index
    %154 = vector.load %arg8[%c0_101, %c0_102] : memref<512x512xf32, #tpu.memory_space<vmem>>, vector<512x512xf32>
    %cst_103 = arith.constant dense<0.000000e+00> : vector<128x512xf32>
    %155 = tpu.matmul %153, %154, %cst_103 {dimension_numbers = #tpu.dot_dimension_numbers<[1], [0], [0], [1], [0, 0, 1, 1], [], []>} : vector<128x512xf32>, vector<512x512xf32>, vector<128x512xf32> -> vector<128x512xf32>
    %c0_104 = arith.constant 0 : index
    %c0_105 = arith.constant 0 : index
    %156 = vector.load %arg9[%c0_104, %c0_105] : memref<1x512xf32, #tpu.memory_space<vmem>>, vector<1x512xf32>
    %157 = vector.broadcast %156 : vector<1x512xf32> to vector<128x512xf32>
    %158 = arith.addf %155, %157 : vector<128x512xf32>
    %c0_106 = arith.constant 0 : index
    %c0_107 = arith.constant 0 : index
    %c0_108 = arith.constant 0 : index
    %159 = vector.load %arg13[%c0_106, %c0_107, %c0_108] : memref<1x128x512xf32, #tpu.memory_space<vmem>>, vector<1x128x512xf32>
    %160 = vector.shape_cast %159 : vector<1x128x512xf32> to vector<128x512xf32>
    %161 = vector.shape_cast %158 : vector<128x512xf32> to vector<1x128x512xf32>
    tpu.vector_store %arg13[%c0_106, %c0_107, %c0_108], %161 {strides = array<i32>} : memref<1x128x512xf32, #tpu.memory_space<vmem>>, vector<1x128x512xf32>,
    return
  }
  func.func @transform_0(%arg0: i32) -> (i32, i32, i32) {
    %c0_i32 = arith.constant 0 : i32
    %c0_i32_0 = arith.constant 0 : i32
    %c0_i32_1 = arith.constant 0 : i32
    return %arg0, %c0_i32, %c0_i32_0 : i32, i32, i32
  }
  func.func @transform_1(%arg0: i32) -> (i32, i32) {
    %c0_i32 = arith.constant 0 : i32
    %c0_i32_0 = arith.constant 0 : i32
    %c0_i32_1 = arith.constant 0 : i32
    return %c0_i32, %c0_i32_0 : i32, i32
  }
  func.func @transform_2(%arg0: i32) -> (i32, i32) {
    %c0_i32 = arith.constant 0 : i32
    %c0_i32_0 = arith.constant 0 : i32
    %c0_i32_1 = arith.constant 0 : i32
    return %c0_i32, %c0_i32_0 : i32, i32
  }
  func.func @transform_3(%arg0: i32) -> (i32, i32) {
    %c0_i32 = arith.constant 0 : i32
    %c0_i32_0 = arith.constant 0 : i32
    %c0_i32_1 = arith.constant 0 : i32
    return %c0_i32, %c0_i32_0 : i32, i32
  }
  func.func @transform_4(%arg0: i32) -> (i32, i32) {
    %c0_i32 = arith.constant 0 : i32
    %c0_i32_0 = arith.constant 0 : i32
    %c0_i32_1 = arith.constant 0 : i32
    return %c0_i32, %c0_i32_0 : i32, i32
  }
  func.func @transform_5(%arg0: i32) -> (i32, i32) {
    %c0_i32 = arith.constant 0 : i32
    %c0_i32_0 = arith.constant 0 : i32
    %c0_i32_1 = arith.constant 0 : i32
    return %c0_i32, %c0_i32_0 : i32, i32
  }
  func.func @transform_6(%arg0: i32) -> (i32, i32) {
    %c0_i32 = arith.constant 0 : i32
    %c0_i32_0 = arith.constant 0 : i32
    %c0_i32_1 = arith.constant 0 : i32
    return %c0_i32, %c0_i32_0 : i32, i32
  }
  func.func @transform_7(%arg0: i32) -> (i32, i32) {
    %c0_i32 = arith.constant 0 : i32
    %c0_i32_0 = arith.constant 0 : i32
    %c0_i32_1 = arith.constant 0 : i32
    return %c0_i32, %c0_i32_0 : i32, i32
  }
  func.func @transform_8(%arg0: i32) -> (i32, i32) {
    %c0_i32 = arith.constant 0 : i32
    %c0_i32_0 = arith.constant 0 : i32
    %c0_i32_1 = arith.constant 0 : i32
    return %c0_i32, %c0_i32_0 : i32, i32
  }
  func.func @transform_9(%arg0: i32) -> (i32, i32) {
    %c0_i32 = arith.constant 0 : i32
    %c0_i32_0 = arith.constant 0 : i32
    %c0_i32_1 = arith.constant 0 : i32
    return %c0_i32, %c0_i32_0 : i32, i32
  }
  func.func @transform_10(%arg0: i32) -> (i32, i32) {
    %c0_i32 = arith.constant 0 : i32
    %c0_i32_0 = arith.constant 0 : i32
    %c0_i32_1 = arith.constant 0 : i32
    return %c0_i32, %c0_i32_0 : i32, i32
  }
  func.func @transform_11(%arg0: i32) -> (i32, i32, i32) {
    %c0_i32 = arith.constant 0 : i32
    %c0_i32_0 = arith.constant 0 : i32
    %c0_i32_1 = arith.constant 0 : i32
    return %arg0, %c0_i32, %c0_i32_0 : i32, i32, i32
  }
  func.func @transform_12(%arg0: i32) -> (i32, i32, i32) {
    %c0_i32 = arith.constant 0 : i32
    %c0_i32_0 = arith.constant 0 : i32
    %c0_i32_1 = arith.constant 0 : i32
    return %arg0, %c0_i32, %c0_i32_0 : i32, i32, i32
  }
  func.func @transform_13(%arg0: i32) -> (i32, i32, i32, i32) {
    %c0_i32 = arith.constant 0 : i32
    %c0_i32_0 = arith.constant 0 : i32
    %c0_i32_1 = arith.constant 0 : i32
    %c0_i32_2 = arith.constant 0 : i32
    return %arg0, %c0_i32, %c0_i32_0, %c0_i32_1 : i32, i32, i32, i32
  }
}

</mosaic_0001>

<llo_original>
// kernel: tpu_custom_call.1
$region0: #{tpu_custom_call.1}
  #allocation0 [shape = 'u32[]', space=smem, size = 0x4, offset = 0x4, fixed_abs, tag = 'smem constant byte address 0x4 - core index']
  #allocation1 [shape = 'u32[72,128]{1,0:T(1,128)}', space=vmem, size = 0x9000, scoped, tag = 'internal scratch']
  #allocation2 [shape = 'f32[128,512]{1,0:T(8,128)}', space=vmem, size = 0x40000, scoped, tag = 'scratch operand']
  #allocation3 [shape = 'f32[128,512]{1,0:T(8,128)}', space=vmem, size = 0x40000, scoped, tag = 'scratch operand']
  #allocation4 [shape = 'f32[128,512]{1,0:T(8,128)}', space=vmem, size = 0x40000, scoped, tag = 'scratch operand']
  #allocation5 [shape = 'f32[128,512]{1,0:T(8,128)}', space=vmem, size = 0x40000, scoped, tag = 'scratch operand']
  %s0 = inlined_call_operand.hbm [shape: f32[2,128,512], index: 0, kind: input, shape index: {}]
  %s1 = inlined_call_operand.hbm [shape: f32[512,512], index: 1, kind: input, shape index: {}]
  %s2 = inlined_call_operand.hbm [shape: f32[1,512], index: 2, kind: input, shape index: {}]
  %s3 = inlined_call_operand.hbm [shape: f32[512,512], index: 3, kind: input, shape index: {}]
  %s4 = inlined_call_operand.hbm [shape: f32[1,512], index: 4, kind: input, shape index: {}]
  %s5 = inlined_call_operand.hbm [shape: f32[512,512], index: 5, kind: input, shape index: {}]
  %s6 = inlined_call_operand.vmem [shape: f32[1,512], index: 6, kind: input, shape index: {}]
  %s7 = inlined_call_operand.hbm [shape: f32[512,512], index: 7, kind: input, shape index: {}]
  %s8 = inlined_call_operand.hbm [shape: f32[1,512], index: 8, kind: input, shape index: {}]
  %s9 = inlined_call_operand.hbm [shape: f32[128,128], index: 9, kind: input, shape index: {}]
  %s10 = inlined_call_operand.hbm [shape: f32[128,128], index: 10, kind: input, shape index: {}]
  %s11 = inlined_call_operand.vmem [shape: f32[2,1,128], index: 11, kind: input, shape index: {}]
  %s12 = inlined_call_operand.hbm [shape: f32[2,128,512], index: 12, kind: output, shape index: {0}]
  %s13 = inlined_call_operand.hbm [shape: f32[2,4,128,128], index: 13, kind: output, shape index: {1}]
  %14 = xla_tuple %s12, %s13
  %s15 = sld [smem:[#allocation0]]
  $region129: #{tpu_custom_call.1} parent=0
    _
  %s17 = ssub.s32 1, %s15
  %s18 = scalar_select 0, %s17, %s15
  $region1: #{tpu_custom_call.1} parent=0
    #allocation6 [shape = 'u8[524288]{0}', space=vmem, size = 0x80000, scoped, tag = 'input window, operand 0']
    #allocation7 [shape = 's32[2]{0}', space=sflag, size = 0x8, scoped, tag = 'scoped memory for tpu_custom_call.1']
    #allocation8 [shape = 's32[2]{0}', space=sflag, size = 0x8, scoped, tag = 'scoped memory for tpu_custom_call.1']
    #allocation9 [shape = 'u8[1048576]{0}', space=vmem, size = 0x100000, scoped, tag = 'input window, operand 1, single buffered']
    #allocation10 [shape = 's32[1]{0}', space=sflag, size = 0x4, scoped, tag = 'scoped memory for tpu_custom_call.1']
    #allocation11 [shape = 'u8[2048]{0}', space=vmem, size = 0x800, scoped, tag = 'input window, operand 2, single buffered']
    #allocation12 [shape = 'u8[1048576]{0}', space=vmem, size = 0x100000, scoped, tag = 'input window, operand 3, single buffered']
    #allocation13 [shape = 's32[1]{0}', space=sflag, size = 0x4, scoped, tag = 'scoped memory for tpu_custom_call.1']
    #allocation14 [shape = 'u8[2048]{0}', space=vmem, size = 0x800, scoped, tag = 'input window, operand 4, single buffered']
    #allocation15 [shape = 'u8[1048576]{0}', space=vmem, size = 0x100000, scoped, tag = 'input window, operand 5, single buffered']
    #allocation16 [shape = 's32[1]{0}', space=sflag, size = 0x4, scoped, tag = 'scoped memory for tpu_custom_call.1']
    #allocation17 [shape = 'u8[1048576]{0}', space=vmem, size = 0x100000, scoped, tag = 'input window, operand 7, single buffered']
    #allocation18 [shape = 'u8[2048]{0}', space=vmem, size = 0x800, scoped, tag = 'input window, operand 8, single buffered']
    #allocation19 [shape = 's32[1]{0}', space=sflag, size = 0x4, scoped, tag = 'scoped memory for tpu_custom_call.1']
    #allocation20 [shape = 'u8[65536]{0}', space=vmem, size = 0x10000, scoped, tag = 'input window, operand 9, single buffered']
    #allocation21 [shape = 'u8[65536]{0}', space=vmem, size = 0x10000, scoped, tag = 'input window, operand 10, single buffered']
    #allocation22 [shape = 's32[1]{0}', space=sflag, size = 0x4, scoped, tag = 'scoped memory for tpu_custom_call.1']
    #allocation23 [shape = 'u8[524288]{0}', space=vmem, size = 0x80000, scoped, tag = 'output window, operand 0']
    #allocation24 [shape = 'u8[524288]{0}', space=vmem, size = 0x80000, scoped, tag = 'output window, operand 1']
    #allocation25 [shape = 's32[2]{0}', space=sflag, size = 0x8, scoped, tag = 'scoped memory for tpu_custom_call.1']
    %19 = vsyncpa [#allocation7], 0
    %s20 = scalar_lea.sflag [#allocation7], 1
    %21 = vsyncpa %s20, 0
    %22 = vsyncpa [#allocation10], 0
    %23 = vsyncpa [#allocation13], 0
    %24 = vsyncpa [#allocation16], 0
    %25 = vsyncpa [#allocation19], 0
    %26 = vsyncpa [#allocation22], 0
    %27 = vsyncpa [#allocation8], 0
    %s28 = scalar_lea.sflag [#allocation8], 1
    %29 = vsyncpa %s28, 0
    %30 = vsyncpa [#allocation25], 0
    %s31 = scalar_lea.sflag [#allocation25], 1
    %32 = vsyncpa %s31, 0
    loop: start=0, step=1, limit=4
    $region2: #{tpu_custom_call.1} parent=1 // loop_pre_header
      _
    $region3: #{tpu_custom_call.1} parent=1 // loop_header
      %s34 = sphi 0, %s38
      %p35 = scmp.ge.s32.totalorder %s34, 4
      %s44 = sphi 0, %s46
      %s47 = sphi 0, %s44
      %s48 = sphi 0, %s47
      %s64 = sphi 0, %s48
      %s68 = sphi 0, %s68
      %s70 = sphi 0, %s68
      %s71 = sphi 0, %s70
      %s85 = sphi 0, %s71
      %s89 = sphi 0, %s89
      %s91 = sphi 0, %s89
      %s92 = sphi 0, %s91
      %s106 = sphi 0, %s92
      %s110 = sphi 0, %s110
      %s112 = sphi 0, %s110
      %s113 = sphi 0, %s112
      %s127 = sphi 0, %s113
      %s131 = sphi 0, %s131
      %s133 = sphi 0, %s131
      %s134 = sphi 0, %s133
      %s148 = sphi 0, %s134
      %s152 = sphi 0, %s152
      %s154 = sphi 0, %s152
      %s155 = sphi 0, %s154
      %s169 = sphi 0, %s155
      %s173 = sphi 0, %s173
      %s175 = sphi 0, %s173
      %s176 = sphi 0, %s175
      %s190 = sphi 0, %s176
      %s194 = sphi 0, %s194
      %s196 = sphi 0, %s194
      %s197 = sphi 0, %s196
      %s211 = sphi 0, %s197
      %s215 = sphi 0, %s215
      %s217 = sphi 0, %s215
      %s218 = sphi 0, %s217
      %s232 = sphi 0, %s218
      %s236 = sphi 0, %s236
      %s238 = sphi 0, %s236
      %s239 = sphi 0, %s238
      %s253 = sphi 0, %s239
      %s257 = sphi 0, %s257
      %s259 = sphi 0, %s257
      %s260 = sphi 0, %s259
      %s274 = sphi 0, %s260
      %s280 = sphi 0, %s282
      %s283 = sphi 0, %s280
      %s284 = sphi 0, %s283
      %s300 = sphi 0, %s284
      %s306 = sphi 0, %s308
      %s309 = sphi 0, %s306
      %s310 = sphi 0, %s309
      %s326 = sphi 0, %s310
      %s332 = sphi 0, %s334
      %s335 = sphi 0, %s332
      %s336 = sphi 0, %s335
      %s352 = sphi 0, %s336
    $region4: #{tpu_custom_call.1} parent=1 // loop_header_branch
      %37 = sbr.rel (%p35) target = $region8
    $region5: #{tpu_custom_call.1} parent=1 // loop_body
      %s39 = ssub.s32 %s34, 1
      %s40 = ssub.s32 %s34, 2
      %s41 = sadd.s32 %s34, 1
      %s42 = ssub.s32 %s34, %s41
      %p43 = scmp.eq.s32.totalorder %s42, 0
      %s45 = sadd.s32 %s44, 1
      %s46 = scalar_select %p43, %s44, %s45
      %p49 = pneg %p43
      %p50 = scmp.eq.s32.totalorder %s34, 1
      %p51 = por %p49, %p50
      %p52 = scmp.ne.s32.totalorder %s44, %s47
      %p53 = scmp.eq.s32.totalorder %s34, 0
      %p54 = por %p52, %p53
      %p55 = scmp.ne.s32.totalorder %s44, %s47
      %p56 = scmp.eq.s32.totalorder %s39, 1
      %p57 = por %p55, %p56
      %p58 = scmp.ne.s32.totalorder %s47, %s48
      %p59 = scmp.eq.s32.totalorder %s39, 0
      %p60 = por %p58, %p59
      %p61 = scmp.ne.s32.totalorder %s47, %s48
      %p62 = scmp.eq.s32.totalorder %s40, 1
      %p63 = por %p61, %p62
      %p65 = scmp.ne.s32.totalorder %s48, %s64
      %p66 = scmp.eq.s32.totalorder %s40, 0
      %p67 = por %p65, %p66
      %s69 = sadd.s32 %s68, 1
      %p72 = scmp.eq.s32.totalorder %s34, 1
      %p73 = scmp.ne.s32.totalorder %s68, %s70
      %p74 = scmp.eq.s32.totalorder %s34, 0
      %p75 = por %p73, %p74
      %p76 = scmp.ne.s32.totalorder %s68, %s70
      %p77 = scmp.eq.s32.totalorder %s39, 1
      %p78 = por %p76, %p77
      %p79 = scmp.ne.s32.totalorder %s70, %s71
      %p80 = scmp.eq.s32.totalorder %s39, 0
      %p81 = por %p79, %p80
      %p82 = scmp.ne.s32.totalorder %s70, %s71
      %p83 = scmp.eq.s32.totalorder %s40, 1
      %p84 = por %p82, %p83
      %p86 = scmp.ne.s32.totalorder %s71, %s85
      %p87 = scmp.eq.s32.totalorder %s40, 0
      %p88 = por %p86, %p87
      %s90 = sadd.s32 %s89, 1
      %p93 = scmp.eq.s32.totalorder %s34, 1
      %p94 = scmp.ne.s32.totalorder %s89, %s91
      %p95 = scmp.eq.s32.totalorder %s34, 0
      %p96 = por %p94, %p95
      %p97 = scmp.ne.s32.totalorder %s89, %s91
      %p98 = scmp.eq.s32.totalorder %s39, 1
      %p99 = por %p97, %p98
      %p100 = scmp.ne.s32.totalorder %s91, %s92
      %p101 = scmp.eq.s32.totalorder %s39, 0
      %p102 = por %p100, %p101
      %p103 = scmp.ne.s32.totalorder %s91, %s92
      %p104 = scmp.eq.s32.totalorder %s40, 1
      %p105 = por %p103, %p104
      %p107 = scmp.ne.s32.totalorder %s92, %s106
      %p108 = scmp.eq.s32.totalorder %s40, 0
      %p109 = por %p107, %p108
      %s111 = sadd.s32 %s110, 1
      %p114 = scmp.eq.s32.totalorder %s34, 1
      %p115 = scmp.ne.s32.totalorder %s110, %s112
      %p116 = scmp.eq.s32.totalorder %s34, 0
      %p117 = por %p115, %p116
      %p118 = scmp.ne.s32.totalorder %s110, %s112
      %p119 = scmp.eq.s32.totalorder %s39, 1
      %p120 = por %p118, %p119
      %p121 = scmp.ne.s32.totalorder %s112, %s113
      %p122 = scmp.eq.s32.totalorder %s39, 0
      %p123 = por %p121, %p122
      %p124 = scmp.ne.s32.totalorder %s112, %s113
      %p125 = scmp.eq.s32.totalorder %s40, 1
      %p126 = por %p124, %p125
      %p128 = scmp.ne.s32.totalorder %s113, %s127
      %p129 = scmp.eq.s32.totalorder %s40, 0
      %p130 = por %p128, %p129
      %s132 = sadd.s32 %s131, 1
      %p135 = scmp.eq.s32.totalorder %s34, 1
      %p136 = scmp.ne.s32.totalorder %s131, %s133
      %p137 = scmp.eq.s32.totalorder %s34, 0
      %p138 = por %p136, %p137
      %p139 = scmp.ne.s32.totalorder %s131, %s133
      %p140 = scmp.eq.s32.totalorder %s39, 1
      %p141 = por %p139, %p140
      %p142 = scmp.ne.s32.totalorder %s133, %s134
      %p143 = scmp.eq.s32.totalorder %s39, 0
      %p144 = por %p142, %p143
      %p145 = scmp.ne.s32.totalorder %s133, %s134
      %p146 = scmp.eq.s32.totalorder %s40, 1
      %p147 = por %p145, %p146
      %p149 = scmp.ne.s32.totalorder %s134, %s148
      %p150 = scmp.eq.s32.totalorder %s40, 0
      %p151 = por %p149, %p150
      %s153 = sadd.s32 %s152, 1
      %p156 = scmp.eq.s32.totalorder %s34, 1
      %p157 = scmp.ne.s32.totalorder %s152, %s154
      %p158 = scmp.eq.s32.totalorder %s34, 0
      %p159 = por %p157, %p158
      %p160 = scmp.ne.s32.totalorder %s152, %s154
      %p161 = scmp.eq.s32.totalorder %s39, 1
      %p162 = por %p160, %p161
      %p163 = scmp.ne.s32.totalorder %s154, %s155
      %p164 = scmp.eq.s32.totalorder %s39, 0
      %p165 = por %p163, %p164
      %p166 = scmp.ne.s32.totalorder %s154, %s155
      %p167 = scmp.eq.s32.totalorder %s40, 1
      %p168 = por %p166, %p167
      %p170 = scmp.ne.s32.totalorder %s155, %s169
      %p171 = scmp.eq.s32.totalorder %s40, 0
      %p172 = por %p170, %p171
      %s174 = sadd.s32 %s173, 1
      %p177 = scmp.eq.s32.totalorder %s34, 1
      %p178 = scmp.ne.s32.totalorder %s173, %s175
      %p179 = scmp.eq.s32.totalorder %s34, 0
      %p180 = por %p178, %p179
      %p181 = scmp.ne.s32.totalorder %s173, %s175
      %p182 = scmp.eq.s32.totalorder %s39, 1
      %p183 = por %p181, %p182
      %p184 = scmp.ne.s32.totalorder %s175, %s176
      %p185 = scmp.eq.s32.totalorder %s39, 0
      %p186 = por %p184, %p185
      %p187 = scmp.ne.s32.totalorder %s175, %s176
      %p188 = scmp.eq.s32.totalorder %s40, 1
      %p189 = por %p187, %p188
      %p191 = scmp.ne.s32.totalorder %s176, %s190
      %p192 = scmp.eq.s32.totalorder %s40, 0
      %p193 = por %p191, %p192
      %s195 = sadd.s32 %s194, 1
      %p198 = scmp.eq.s32.totalorder %s34, 1
      %p199 = scmp.ne.s32.totalorder %s194, %s196
      %p200 = scmp.eq.s32.totalorder %s34, 0
      %p201 = por %p199, %p200
      %p202 = scmp.ne.s32.totalorder %s194, %s196
      %p203 = scmp.eq.s32.totalorder %s39, 1
      %p204 = por %p202, %p203
      %p205 = scmp.ne.s32.totalorder %s196, %s197
      %p206 = scmp.eq.s32.totalorder %s39, 0
      %p207 = por %p205, %p206
      %p208 = scmp.ne.s32.totalorder %s196, %s197
      %p209 = scmp.eq.s32.totalorder %s40, 1
      %p210 = por %p208, %p209
      %p212 = scmp.ne.s32.totalorder %s197, %s211
      %p213 = scmp.eq.s32.totalorder %s40, 0
      %p214 = por %p212, %p213
      %s216 = sadd.s32 %s215, 1
      %p219 = scmp.eq.s32.totalorder %s34, 1
      %p220 = scmp.ne.s32.totalorder %s215, %s217
      %p221 = scmp.eq.s32.totalorder %s34, 0
      %p222 = por %p220, %p221
      %p223 = scmp.ne.s32.totalorder %s215, %s217
      %p224 = scmp.eq.s32.totalorder %s39, 1
      %p225 = por %p223, %p224
      %p226 = scmp.ne.s32.totalorder %s217, %s218
      %p227 = scmp.eq.s32.totalorder %s39, 0
      %p228 = por %p226, %p227
      %p229 = scmp.ne.s32.totalorder %s217, %s218
      %p230 = scmp.eq.s32.totalorder %s40, 1
      %p231 = por %p229, %p230
      %p233 = scmp.ne.s32.totalorder %s218, %s232
      %p234 = scmp.eq.s32.totalorder %s40, 0
      %p235 = por %p233, %p234
      %s237 = sadd.s32 %s236, 1
      %p240 = scmp.eq.s32.totalorder %s34, 1
      %p241 = scmp.ne.s32.totalorder %s236, %s238
      %p242 = scmp.eq.s32.totalorder %s34, 0
      %p243 = por %p241, %p242
      %p244 = scmp.ne.s32.totalorder %s236, %s238
      %p245 = scmp.eq.s32.totalorder %s39, 1
      %p246 = por %p244, %p245
      %p247 = scmp.ne.s32.totalorder %s238, %s239
      %p248 = scmp.eq.s32.totalorder %s39, 0
      %p249 = por %p247, %p248
      %p250 = scmp.ne.s32.totalorder %s238, %s239
      %p251 = scmp.eq.s32.totalorder %s40, 1
      %p252 = por %p250, %p251
      %p254 = scmp.ne.s32.totalorder %s239, %s253
      %p255 = scmp.eq.s32.totalorder %s40, 0
      %p256 = por %p254, %p255
      %s258 = sadd.s32 %s257, 1
      %p261 = scmp.eq.s32.totalorder %s34, 1
      %p262 = scmp.ne.s32.totalorder %s257, %s259
      %p263 = scmp.eq.s32.totalorder %s34, 0
      %p264 = por %p262, %p263
      %p265 = scmp.ne.s32.totalorder %s257, %s259
      %p266 = scmp.eq.s32.totalorder %s39, 1
      %p267 = por %p265, %p266
      %p268 = scmp.ne.s32.totalorder %s259, %s260
      %p269 = scmp.eq.s32.totalorder %s39, 0
      %p270 = por %p268, %p269
      %p271 = scmp.ne.s32.totalorder %s259, %s260
      %p272 = scmp.eq.s32.totalorder %s40, 1
      %p273 = por %p271, %p272
      %p275 = scmp.ne.s32.totalorder %s260, %s274
      %p276 = scmp.eq.s32.totalorder %s40, 0
      %p277 = por %p275, %p276
      %s278 = ssub.s32 %s34, %s41
      %p279 = scmp.eq.s32.totalorder %s278, 0
      %s281 = sadd.s32 %s280, 1
      %s282 = scalar_select %p279, %s280, %s281
      %p285 = pneg %p279
      %p286 = scmp.eq.s32.totalorder %s34, 1
      %p287 = por %p285, %p286
      %p288 = scmp.ne.s32.totalorder %s280, %s283
      %p289 = scmp.eq.s32.totalorder %s34, 0
      %p290 = por %p288, %p289
      %p291 = scmp.ne.s32.totalorder %s280, %s283
      %p292 = scmp.eq.s32.totalorder %s39, 1
      %p293 = por %p291, %p292
      %p294 = scmp.ne.s32.totalorder %s283, %s284
      %p295 = scmp.eq.s32.totalorder %s39, 0
      %p296 = por %p294, %p295
      %p297 = scmp.ne.s32.totalorder %s283, %s284
      %p298 = scmp.eq.s32.totalorder %s40, 1
      %p299 = por %p297, %p298
      %p301 = scmp.ne.s32.totalorder %s284, %s300
      %p302 = scmp.eq.s32.totalorder %s40, 0
      %p303 = por %p301, %p302
      %s304 = ssub.s32 %s34, %s41
      %p305 = scmp.eq.s32.totalorder %s304, 0
      %s307 = sadd.s32 %s306, 1
      %s308 = scalar_select %p305, %s306, %s307
      %p311 = pneg %p305
      %p312 = scmp.eq.s32.totalorder %s34, 1
      %p313 = por %p311, %p312
      %p314 = scmp.ne.s32.totalorder %s306, %s309
      %p315 = scmp.eq.s32.totalorder %s34, 0
      %p316 = por %p314, %p315
      %p317 = scmp.ne.s32.totalorder %s306, %s309
      %p318 = scmp.eq.s32.totalorder %s39, 1
      %p319 = por %p317, %p318
      %p320 = scmp.ne.s32.totalorder %s309, %s310
      %p321 = scmp.eq.s32.totalorder %s39, 0
      %p322 = por %p320, %p321
      %p323 = scmp.ne.s32.totalorder %s309, %s310
      %p324 = scmp.eq.s32.totalorder %s40, 1
      %p325 = por %p323, %p324
      %p327 = scmp.ne.s32.totalorder %s310, %s326
      %p328 = scmp.eq.s32.totalorder %s40, 0
      %p329 = por %p327, %p328
      %s330 = ssub.s32 %s34, %s41
      %p331 = scmp.eq.s32.totalorder %s330, 0
      %s333 = sadd.s32 %s332, 1
      %s334 = scalar_select %p331, %s332, %s333
      %p337 = pneg %p331
      %p338 = scmp.eq.s32.totalorder %s34, 1
      %p339 = por %p337, %p338
      %p340 = scmp.ne.s32.totalorder %s332, %s335
      %p341 = scmp.eq.s32.totalorder %s34, 0
      %p342 = por %p340, %p341
      %p343 = scmp.ne.s32.totalorder %s332, %s335
      %p344 = scmp.eq.s32.totalorder %s39, 1
      %p345 = por %p343, %p344
      %p346 = scmp.ne.s32.totalorder %s335, %s336
      %p347 = scmp.eq.s32.totalorder %s39, 0
      %p348 = por %p346, %p347
      %p349 = scmp.ne.s32.totalorder %s335, %s336
      %p350 = scmp.eq.s32.totalorder %s40, 1
      %p351 = por %p349, %p350
      %p353 = scmp.ne.s32.totalorder %s336, %s352
      %p354 = scmp.eq.s32.totalorder %s40, 0
      %p355 = por %p353, %p354
      %p356 = scmp.le.s32.totalorder 1, %s34
      %p357 = scmp.lt.s32.totalorder %s34, 3
      %p358 = pnand %p356, %p357
      %p359 = pneg %p358
      // Predicated region
      $region9: #{tpu_custom_call.1} parent=5 // pred_check
        _
      $region10: #{tpu_custom_call.1} parent=5 // pred_check_branch
        %361 = sbr.rel (%p358) target = $region12
      $region11: #{tpu_custom_call.1} parent=5 // pred_region
        %s362 = ssub.s32 %s34, 1
        // Predicated region
        $region13: #{tpu_custom_call.1} parent=11 // pred_check
          %p363 = pneg %p81
        $region14: #{tpu_custom_call.1} parent=11 // pred_check_branch
          %365 = sbr.rel (%p363) target = $region16
        $region15: #{tpu_custom_call.1} parent=11 // pred_region
          %367 = vsyncadd [#allocation10], 0
          %s368 = sshll.u32 %s1, 4
          %s369 = int_to_ptr.hbm [resolvable:$true] %s368
          %s370 = sshll.u32 [#allocation9], 4
          %s371 = int_to_ptr.vmem [resolvable:$true] %s370
          %376 = dma.hbm_to_vmem [thread:$0]  %s369, 32768, %s371, [#allocation10], 512, 512, 32
        $region16: #{tpu_custom_call.1} parent=11 // pred_fallthru
          _
        // Predicated region
        $region17: #{tpu_custom_call.1} parent=11 // pred_check
          %p377 = pneg %p102
        $region18: #{tpu_custom_call.1} parent=11 // pred_check_branch
          %379 = sbr.rel (%p377) target = $region20
        $region19: #{tpu_custom_call.1} parent=11 // pred_region
          %381 = vsyncadd [#allocation10], 0
          %s383 = sshll.u32 %s2, 4
          %s384 = int_to_ptr.hbm [resolvable:$true] %s383
          %s385 = sshll.u32 [#allocation11], 4
          %s386 = int_to_ptr.vmem [resolvable:$true] %s385
          %388 = dma.hbm_to_vmem [thread:$0]  %s384, 64, %s386, [#allocation10]
        $region20: #{tpu_custom_call.1} parent=11 // pred_fallthru
          _
        // Predicated region
        $region21: #{tpu_custom_call.1} parent=11 // pred_check
          %p389 = pneg %p123
        $region22: #{tpu_custom_call.1} parent=11 // pred_check_branch
          %391 = sbr.rel (%p389) target = $region24
        $region23: #{tpu_custom_call.1} parent=11 // pred_region
          %393 = vsyncadd [#allocation13], 0
          %s394 = sshll.u32 %s3, 4
          %s395 = int_to_ptr.hbm [resolvable:$true] %s394
          %s396 = sshll.u32 [#allocation12], 4
          %s397 = int_to_ptr.vmem [resolvable:$true] %s396
          %402 = dma.hbm_to_vmem [thread:$0]  %s395, 32768, %s397, [#allocation13], 512, 512, 32
        $region24: #{tpu_custom_call.1} parent=11 // pred_fallthru
          _
        // Predicated region
        $region25: #{tpu_custom_call.1} parent=11 // pred_check
          %p403 = pneg %p144
        $region26: #{tpu_custom_call.1} parent=11 // pred_check_branch
          %405 = sbr.rel (%p403) target = $region28
        $region27: #{tpu_custom_call.1} parent=11 // pred_region
          %407 = vsyncadd [#allocation13], 0
          %s409 = sshll.u32 %s4, 4
          %s410 = int_to_ptr.hbm [resolvable:$true] %s409
          %s411 = sshll.u32 [#allocation14], 4
          %s412 = int_to_ptr.vmem [resolvable:$true] %s411
          %414 = dma.hbm_to_vmem [thread:$0]  %s410, 64, %s412, [#allocation13]
        $region28: #{tpu_custom_call.1} parent=11 // pred_fallthru
          _
        // Predicated region
        $region29: #{tpu_custom_call.1} parent=11 // pred_check
          %p415 = pneg %p165
        $region30: #{tpu_custom_call.1} parent=11 // pred_check_branch
          %417 = sbr.rel (%p415) target = $region32
        $region31: #{tpu_custom_call.1} parent=11 // pred_region
          %419 = vsyncadd [#allocation16], 0
          %s420 = sshll.u32 %s5, 4
          %s421 = int_to_ptr.hbm [resolvable:$true] %s420
          %s422 = sshll.u32 [#allocation15], 4
          %s423 = int_to_ptr.vmem [resolvable:$true] %s422
          %428 = dma.hbm_to_vmem [thread:$0]  %s421, 32768, %s423, [#allocation16], 512, 512, 32
        $region32: #{tpu_custom_call.1} parent=11 // pred_fallthru
          _
        // Predicated region
        $region33: #{tpu_custom_call.1} parent=11 // pred_check
          %p429 = pneg %p186
        $region34: #{tpu_custom_call.1} parent=11 // pred_check_branch
          %431 = sbr.rel (%p429) target = $region36
        $region35: #{tpu_custom_call.1} parent=11 // pred_region
          _
        $region36: #{tpu_custom_call.1} parent=11 // pred_fallthru
          _
        // Predicated region
        $region37: #{tpu_custom_call.1} parent=11 // pred_check
          %p432 = pneg %p207
        $region38: #{tpu_custom_call.1} parent=11 // pred_check_branch
          %434 = sbr.rel (%p432) target = $region40
        $region39: #{tpu_custom_call.1} parent=11 // pred_region
          %436 = vsyncadd [#allocation16], 0
          %s437 = sshll.u32 %s7, 4
          %s438 = int_to_ptr.hbm [resolvable:$true] %s437
          %s439 = sshll.u32 [#allocation17], 4
          %s440 = int_to_ptr.vmem [resolvable:$true] %s439
          %445 = dma.hbm_to_vmem [thread:$0]  %s438, 32768, %s440, [#allocation16], 512, 512, 32
        $region40: #{tpu_custom_call.1} parent=11 // pred_fallthru
          _
        // Predicated region
        $region41: #{tpu_custom_call.1} parent=11 // pred_check
          %p446 = pneg %p228
        $region42: #{tpu_custom_call.1} parent=11 // pred_check_branch
          %448 = sbr.rel (%p446) target = $region44
        $region43: #{tpu_custom_call.1} parent=11 // pred_region
          %450 = vsyncadd [#allocation19], 0
          %s452 = sshll.u32 %s8, 4
          %s453 = int_to_ptr.hbm [resolvable:$true] %s452
          %s454 = sshll.u32 [#allocation18], 4
          %s455 = int_to_ptr.vmem [resolvable:$true] %s454
          %457 = dma.hbm_to_vmem [thread:$0]  %s453, 64, %s455, [#allocation19]
        $region44: #{tpu_custom_call.1} parent=11 // pred_fallthru
          _
        // Predicated region
        $region45: #{tpu_custom_call.1} parent=11 // pred_check
          %p458 = pneg %p249
        $region46: #{tpu_custom_call.1} parent=11 // pred_check_branch
          %460 = sbr.rel (%p458) target = $region48
        $region47: #{tpu_custom_call.1} parent=11 // pred_region
          %462 = vsyncadd [#allocation19], 0
          %s463 = sshll.u32 %s9, 4
          %s464 = int_to_ptr.hbm [resolvable:$true] %s463
          %s465 = sshll.u32 [#allocation20], 4
          %s466 = int_to_ptr.vmem [resolvable:$true] %s465
          %471 = dma.hbm_to_vmem [thread:$0]  %s464, 2048, %s466, [#allocation19], 128, 128, 8
        $region48: #{tpu_custom_call.1} parent=11 // pred_fallthru
          _
        // Predicated region
        $region49: #{tpu_custom_call.1} parent=11 // pred_check
          %p472 = pneg %p270
        $region50: #{tpu_custom_call.1} parent=11 // pred_check_branch
          %474 = sbr.rel (%p472) target = $region52
        $region51: #{tpu_custom_call.1} parent=11 // pred_region
          %476 = vsyncadd [#allocation22], 0
          %s477 = sshll.u32 %s10, 4
          %s478 = int_to_ptr.hbm [resolvable:$true] %s477
          %s479 = sshll.u32 [#allocation21], 4
          %s480 = int_to_ptr.vmem [resolvable:$true] %s479
          %485 = dma.hbm_to_vmem [thread:$0]  %s478, 2048, %s480, [#allocation22], 128, 128, 8
        $region52: #{tpu_custom_call.1} parent=11 // pred_fallthru
          _
      $region12: #{tpu_custom_call.1} parent=5 // pred_fallthru
        _
      %p486 = scmp.lt.s32.totalorder %s34, 2
      // Predicated region
      $region53: #{tpu_custom_call.1} parent=5 // pred_check
        %p487 = pneg %p486
      $region54: #{tpu_custom_call.1} parent=5 // pred_check_branch
        %489 = sbr.rel (%p487) target = $region56
      $region55: #{tpu_custom_call.1} parent=5 // pred_region
        // Predicated region
        $region57: #{tpu_custom_call.1} parent=55 // pred_check
          %p490 = pneg %p54
        $region58: #{tpu_custom_call.1} parent=55 // pred_check_branch
          %492 = sbr.rel (%p490) target = $region60
        $region59: #{tpu_custom_call.1} parent=55 // pred_region
          %s493 = sand.u32 %s44, 1
          %s494 = scalar_lea.sflag [#allocation7], %s493
          %s495 = sand.u32 %s44, 1
          %s496 = smul.addr %s495, 512
          %s497 = scalar_lea.vmem [#allocation6], %s496
          %499 = vsyncadd %s494, 0
          %s500 = smul.addr %s34, 64
          %s501 = smul.addr %s500, 8
          %s502 = scalar_lea.hbm %s0, %s501
          %s503 = sshll.u32 %s502, 4
          %s504 = int_to_ptr.hbm [resolvable:$true] %s503
          %s505 = sshll.u32 %s497, 4
          %s506 = int_to_ptr.vmem [resolvable:$true] %s505
          %511 = dma.hbm_to_vmem [thread:$0]  %s504, 8192, %s506, %s494, 512, 512, 32
        $region60: #{tpu_custom_call.1} parent=55 // pred_fallthru
          _
        // Predicated region
        $region61: #{tpu_custom_call.1} parent=55 // pred_check
          %p512 = pneg %p290
        $region62: #{tpu_custom_call.1} parent=55 // pred_check_branch
          %514 = sbr.rel (%p512) target = $region64
        $region63: #{tpu_custom_call.1} parent=55 // pred_region
          %p515 = scmp.lt.s32.totalorder %s34, 1
          %s516 = scalar_select %p515, %s34, 1
          %s517 = scalar_lea.vmem %s11, %s516
        $region64: #{tpu_custom_call.1} parent=55 // pred_fallthru
          _
      $region56: #{tpu_custom_call.1} parent=5 // pred_fallthru
        _
      %p518 = scmp.le.s32.totalorder 1, %s34
      %p519 = scmp.lt.s32.totalorder %s34, 3
      %p520 = pnand %p518, %p519
      %p521 = pneg %p520
      // Predicated region
      $region65: #{tpu_custom_call.1} parent=5 // pred_check
        _
      $region66: #{tpu_custom_call.1} parent=5 // pred_check_branch
        %523 = sbr.rel (%p520) target = $region68
      $region67: #{tpu_custom_call.1} parent=5 // pred_region
        %s524 = ssub.s32 %s34, 1
        %s525 = sand.u32 %s47, 1
        %s526 = scalar_lea.sflag [#allocation7], %s525
        %s527 = sand.u32 %s47, 1
        %s528 = smul.addr %s527, 512
        %s529 = scalar_lea.vmem [#allocation6], %s528
        // Predicated region
        $region69: #{tpu_custom_call.1} parent=67 // pred_check
          %p530 = pneg %p60
        $region70: #{tpu_custom_call.1} parent=67 // pred_check_branch
          %532 = sbr.rel (%p530) target = $region72
        $region71: #{tpu_custom_call.1} parent=67 // pred_region
          %534 = dma.done %s526, 8192
        $region72: #{tpu_custom_call.1} parent=67 // pred_fallthru
          _
        // Predicated region
        $region73: #{tpu_custom_call.1} parent=67 // pred_check
          %p535 = pneg %p81
        $region74: #{tpu_custom_call.1} parent=67 // pred_check_branch
          %537 = sbr.rel (%p535) target = $region76
        $region75: #{tpu_custom_call.1} parent=67 // pred_region
          %539 = dma.done [#allocation10], 32768
        $region76: #{tpu_custom_call.1} parent=67 // pred_fallthru
          _
        // Predicated region
        $region77: #{tpu_custom_call.1} parent=67 // pred_check
          %p540 = pneg %p102
        $region78: #{tpu_custom_call.1} parent=67 // pred_check_branch
          %542 = sbr.rel (%p540) target = $region80
        $region79: #{tpu_custom_call.1} parent=67 // pred_region
          %544 = dma.done [#allocation10], 64
        $region80: #{tpu_custom_call.1} parent=67 // pred_fallthru
          _
        // Predicated region
        $region81: #{tpu_custom_call.1} parent=67 // pred_check
          %p545 = pneg %p123
        $region82: #{tpu_custom_call.1} parent=67 // pred_check_branch
          %547 = sbr.rel (%p545) target = $region84
        $region83: #{tpu_custom_call.1} parent=67 // pred_region
          %549 = dma.done [#allocation13], 32768
        $region84: #{tpu_custom_call.1} parent=67 // pred_fallthru
          _
        // Predicated region
        $region85: #{tpu_custom_call.1} parent=67 // pred_check
          %p550 = pneg %p144
        $region86: #{tpu_custom_call.1} parent=67 // pred_check_branch
          %552 = sbr.rel (%p550) target = $region88
        $region87: #{tpu_custom_call.1} parent=67 // pred_region
          %554 = dma.done [#allocation13], 64
        $region88: #{tpu_custom_call.1} parent=67 // pred_fallthru
          _
        // Predicated region
        $region89: #{tpu_custom_call.1} parent=67 // pred_check
          %p555 = pneg %p165
        $region90: #{tpu_custom_call.1} parent=67 // pred_check_branch
          %557 = sbr.rel (%p555) target = $region92
        $region91: #{tpu_custom_call.1} parent=67 // pred_region
          %559 = dma.done [#allocation16], 32768
        $region92: #{tpu_custom_call.1} parent=67 // pred_fallthru
          _
        // Predicated region
        $region93: #{tpu_custom_call.1} parent=67 // pred_check
          %p560 = pneg %p207
        $region94: #{tpu_custom_call.1} parent=67 // pred_check_branch
          %562 = sbr.rel (%p560) target = $region96
        $region95: #{tpu_custom_call.1} parent=67 // pred_region
          %564 = dma.done [#allocation16], 32768
        $region96: #{tpu_custom_call.1} parent=67 // pred_fallthru
          _
        // Predicated region
        $region97: #{tpu_custom_call.1} parent=67 // pred_check
          %p565 = pneg %p228
        $region98: #{tpu_custom_call.1} parent=67 // pred_check_branch
          %567 = sbr.rel (%p565) target = $region100
        $region99: #{tpu_custom_call.1} parent=67 // pred_region
          %569 = dma.done [#allocation19], 64
        $region100: #{tpu_custom_call.1} parent=67 // pred_fallthru
          _
        // Predicated region
        $region101: #{tpu_custom_call.1} parent=67 // pred_check
          %p570 = pneg %p249
        $region102: #{tpu_custom_call.1} parent=67 // pred_check_branch
          %572 = sbr.rel (%p570) target = $region104
        $region103: #{tpu_custom_call.1} parent=67 // pred_region
          %574 = dma.done [#allocation19], 2048
        $region104: #{tpu_custom_call.1} parent=67 // pred_fallthru
          _
        // Predicated region
        $region105: #{tpu_custom_call.1} parent=67 // pred_check
          %p575 = pneg %p270
        $region106: #{tpu_custom_call.1} parent=67 // pred_check_branch
          %577 = sbr.rel (%p575) target = $region108
        $region107: #{tpu_custom_call.1} parent=67 // pred_region
          %579 = dma.done [#allocation22], 2048
        $region108: #{tpu_custom_call.1} parent=67 // pred_fallthru
          _
        %s580 = sand.u32 %s47, 1
        %s581 = scalar_lea.sflag [#allocation7], %s580
        %s582 = sand.u32 %s47, 1
        %s583 = smul.addr %s582, 512
        %s584 = scalar_lea.vmem [#allocation6], %s583
        %p585 = pneg %p60
        %p586 = pneg %p57
        %p587 = pneg %p81
        %p588 = pneg %p78
        %p589 = pneg %p102
        %p590 = pneg %p99
        %p591 = pneg %p123
        %p592 = pneg %p120
        %p593 = pneg %p144
        %p594 = pneg %p141
        %p595 = pneg %p165
        %p596 = pneg %p162
        %p597 = pneg %p186
        %p598 = pneg %p183
        %p599 = pneg %p207
        %p600 = pneg %p204
        %p601 = pneg %p228
        %p602 = pneg %p225
        %p603 = pneg %p249
        %p604 = pneg %p246
        %p605 = pneg %p270
        %p606 = pneg %p267
        %p607 = scmp.lt.s32.totalorder %s39, 1
        %s608 = scalar_select %p607, %s39, 1
        %s609 = scalar_lea.vmem %s11, %s608
        %p610 = pneg %p296
        %p611 = pneg %p293
        %p612 = pneg %p322
        %p613 = pneg %p319
        %s614 = sand.u32 %s309, 1
        %s615 = scalar_lea.sflag [#allocation8], %s614
        %s616 = sand.u32 %s309, 1
        %s617 = smul.addr %s616, 512
        %s618 = scalar_lea.vmem [#allocation23], %s617
        %p619 = pneg %p348
        %p620 = pneg %p345
        %s621 = sand.u32 %s335, 1
        %s622 = scalar_lea.sflag [#allocation25], %s621
        %s623 = sand.u32 %s335, 1
        %s624 = smul.addr %s623, 512
        %s625 = scalar_lea.vmem [#allocation24], %s624
        %p626 = scmp.lt.s32.totalorder %s39, 1
        %s627 = scalar_select %p626, %s39, 1
        %s628 = scalar_lea.vmem %s11, %s627
        %v629 = vld [vmem:[%s529] sm:$0xff]
        %v630 = vld [vmem:[%s529 + $0x8] sm:$0xff]
        %v631 = vld [vmem:[%s529 + $0x10] sm:$0xff]
        %v632 = vld [vmem:[%s529 + $0x18] sm:$0xff]
        %v633 = vld [vmem:[%s529 + $0x20] sm:$0xff]
        %v634 = vld [vmem:[%s529 + $0x28] sm:$0xff]
        %v635 = vld [vmem:[%s529 + $0x30] sm:$0xff]
        %v636 = vld [vmem:[%s529 + $0x38] sm:$0xff]
        %v637 = vld [vmem:[%s529 + $0x40] sm:$0xff]
        %v638 = vld [vmem:[%s529 + $0x48] sm:$0xff]
        %v639 = vld [vmem:[%s529 + $0x50] sm:$0xff]
        %v640 = vld [vmem:[%s529 + $0x58] sm:$0xff]
        %v641 = vld [vmem:[%s529 + $0x60] sm:$0xff]
        %v642 = vld [vmem:[%s529 + $0x68] sm:$0xff]
        %v643 = vld [vmem:[%s529 + $0x70] sm:$0xff]
        %v644 = vld [vmem:[%s529 + $0x78] sm:$0xff]
        %v645 = vld [vmem:[%s529 + $0x80] sm:$0xff]
        %v646 = vld [vmem:[%s529 + $0x88] sm:$0xff]
        %v647 = vld [vmem:[%s529 + $0x90] sm:$0xff]
        %v648 = vld [vmem:[%s529 + $0x98] sm:$0xff]
        %v649 = vld [vmem:[%s529 + $0xa0] sm:$0xff]
        %v650 = vld [vmem:[%s529 + $0xa8] sm:$0xff]
        %v651 = vld [vmem:[%s529 + $0xb0] sm:$0xff]
        %v652 = vld [vmem:[%s529 + $0xb8] sm:$0xff]
        %v653 = vld [vmem:[%s529 + $0xc0] sm:$0xff]
        %v654 = vld [vmem:[%s529 + $0xc8] sm:$0xff]
        %v655 = vld [vmem:[%s529 + $0xd0] sm:$0xff]
        %v656 = vld [vmem:[%s529 + $0xd8] sm:$0xff]
        %v657 = vld [vmem:[%s529 + $0xe0] sm:$0xff]
        %v658 = vld [vmem:[%s529 + $0xe8] sm:$0xff]
        %v659 = vld [vmem:[%s529 + $0xf0] sm:$0xff]
        %v660 = vld [vmem:[%s529 + $0xf8] sm:$0xff]
        %v661 = vld [vmem:[%s529 + $0x100] sm:$0xff]
        %v662 = vld [vmem:[%s529 + $0x108] sm:$0xff]
        %v663 = vld [vmem:[%s529 + $0x110] sm:$0xff]
        %v664 = vld [vmem:[%s529 + $0x118] sm:$0xff]
        %v665 = vld [vmem:[%s529 + $0x120] sm:$0xff]
        %v666 = vld [vmem:[%s529 + $0x128] sm:$0xff]
        %v667 = vld [vmem:[%s529 + $0x130] sm:$0xff]
        %v668 = vld [vmem:[%s529 + $0x138] sm:$0xff]
        %v669 = vld [vmem:[%s529 + $0x140] sm:$0xff]
        %v670 = vld [vmem:[%s529 + $0x148] sm:$0xff]
        %v671 = vld [vmem:[%s529 + $0x150] sm:$0xff]
        %v672 = vld [vmem:[%s529 + $0x158] sm:$0xff]
        %v673 = vld [vmem:[%s529 + $0x160] sm:$0xff]
        %v674 = vld [vmem:[%s529 + $0x168] sm:$0xff]
        %v675 = vld [vmem:[%s529 + $0x170] sm:$0xff]
        %v676 = vld [vmem:[%s529 + $0x178] sm:$0xff]
        %v677 = vld [vmem:[%s529 + $0x180] sm:$0xff]
        %v678 = vld [vmem:[%s529 + $0x188] sm:$0xff]
        %v679 = vld [vmem:[%s529 + $0x190] sm:$0xff]
        %v680 = vld [vmem:[%s529 + $0x198] sm:$0xff]
        %v681 = vld [vmem:[%s529 + $0x1a0] sm:$0xff]
        %v682 = vld [vmem:[%s529 + $0x1a8] sm:$0xff]
        %v683 = vld [vmem:[%s529 + $0x1b0] sm:$0xff]
        %v684 = vld [vmem:[%s529 + $0x1b8] sm:$0xff]
        %v685 = vld [vmem:[%s529 + $0x1c0] sm:$0xff]
        %v686 = vld [vmem:[%s529 + $0x1c8] sm:$0xff]
        %v687 = vld [vmem:[%s529 + $0x1d0] sm:$0xff]
        %v688 = vld [vmem:[%s529 + $0x1d8] sm:$0xff]
        %v689 = vld [vmem:[%s529 + $0x1e0] sm:$0xff]
        %v690 = vld [vmem:[%s529 + $0x1e8] sm:$0xff]
        %v691 = vld [vmem:[%s529 + $0x1f0] sm:$0xff]
        %v692 = vld [vmem:[%s529 + $0x1f8] sm:$0xff]
        %v693 = vld [vmem:[#allocation9] sm:$0xff]
        %v694 = vld [vmem:[#allocation9 + $0x8] sm:$0xff]
        %v695 = vld [vmem:[#allocation9 + $0x10] sm:$0xff]
        %v696 = vld [vmem:[#allocation9 + $0x18] sm:$0xff]
        %v697 = vld [vmem:[#allocation9 + $0x20] sm:$0xff]
        %v698 = vld [vmem:[#allocation9 + $0x28] sm:$0xff]
        %v699 = vld [vmem:[#allocation9 + $0x30] sm:$0xff]
        %v700 = vld [vmem:[#allocation9 + $0x38] sm:$0xff]
        %v701 = vld [vmem:[#allocation9 + $0x40] sm:$0xff]
        %v702 = vld [vmem:[#allocation9 + $0x48] sm:$0xff]
        %v703 = vld [vmem:[#allocation9 + $0x50] sm:$0xff]
        %v704 = vld [vmem:[#allocation9 + $0x58] sm:$0xff]
        %v705 = vld [vmem:[#allocation9 + $0x60] sm:$0xff]
        %v706 = vld [vmem:[#allocation9 + $0x68] sm:$0xff]
        %v707 = vld [vmem:[#allocation9 + $0x70] sm:$0xff]
        %v708 = vld [vmem:[#allocation9 + $0x78] sm:$0xff]
        %v709 = vld [vmem:[#allocation9 + $0x80] sm:$0xff]
        %v710 = vld [vmem:[#allocation9 + $0x88] sm:$0xff]
        %v711 = vld [vmem:[#allocation9 + $0x90] sm:$0xff]
        %v712 = vld [vmem:[#allocation9 + $0x98] sm:$0xff]
        %v713 = vld [vmem:[#allocation9 + $0xa0] sm:$0xff]
        %v714 = vld [vmem:[#allocation9 + $0xa8] sm:$0xff]
        %v715 = vld [vmem:[#allocation9 + $0xb0] sm:$0xff]
        %v716 = vld [vmem:[#allocation9 + $0xb8] sm:$0xff]
        %v717 = vld [vmem:[#allocation9 + $0xc0] sm:$0xff]
        %v718 = vld [vmem:[#allocation9 + $0xc8] sm:$0xff]
        %v719 = vld [vmem:[#allocation9 + $0xd0] sm:$0xff]
        %v720 = vld [vmem:[#allocation9 + $0xd8] sm:$0xff]
        %v721 = vld [vmem:[#allocation9 + $0xe0] sm:$0xff]
        %v722 = vld [vmem:[#allocation9 + $0xe8] sm:$0xff]
        %v723 = vld [vmem:[#allocation9 + $0xf0] sm:$0xff]
        %v724 = vld [vmem:[#allocation9 + $0xf8] sm:$0xff]
        %v725 = vld [vmem:[#allocation9 + $0x100] sm:$0xff]
        %v726 = vld [vmem:[#allocation9 + $0x108] sm:$0xff]
        %v727 = vld [vmem:[#allocation9 + $0x110] sm:$0xff]
        %v728 = vld [vmem:[#allocation9 + $0x118] sm:$0xff]
        %v729 = vld [vmem:[#allocation9 + $0x120] sm:$0xff]
        %v730 = vld [vmem:[#allocation9 + $0x128] sm:$0xff]
        %v731 = vld [vmem:[#allocation9 + $0x130] sm:$0xff]
        %v732 = vld [vmem:[#allocation9 + $0x138] sm:$0xff]
        %v733 = vld [vmem:[#allocation9 + $0x140] sm:$0xff]
        %v734 = vld [vmem:[#allocation9 + $0x148] sm:$0xff]
        %v735 = vld [vmem:[#allocation9 + $0x150] sm:$0xff]
        %v736 = vld [vmem:[#allocation9 + $0x158] sm:$0xff]
        %v737 = vld [vmem:[#allocation9 + $0x160] sm:$0xff]
        %v738 = vld [vmem:[#allocation9 + $0x168] sm:$0xff]
        %v739 = vld [vmem:[#allocation9 + $0x170] sm:$0xff]
        %v740 = vld [vmem:[#allocation9 + $0x178] sm:$0xff]
        %v741 = vld [vmem:[#allocation9 + $0x180] sm:$0xff]
        %v742 = vld [vmem:[#allocation9 + $0x188] sm:$0xff]
        %v743 = vld [vmem:[#allocation9 + $0x190] sm:$0xff]
        %v744 = vld [vmem:[#allocation9 + $0x198] sm:$0xff]
        %v745 = vld [vmem:[#allocation9 + $0x1a0] sm:$0xff]
        %v746 = vld [vmem:[#allocation9 + $0x1a8] sm:$0xff]
        %v747 = vld [vmem:[#allocation9 + $0x1b0] sm:$0xff]
        %v748 = vld [vmem:[#allocation9 + $0x1b8] sm:$0xff]
        %v749 = vld [vmem:[#allocation9 + $0x1c0] sm:$0xff]
        %v750 = vld [vmem:[#allocation9 + $0x1c8] sm:$0xff]
        %v751 = vld [vmem:[#allocation9 + $0x1d0] sm:$0xff]
        %v752 = vld [vmem:[#allocation9 + $0x1d8] sm:$0xff]
        %v753 = vld [vmem:[#allocation9 + $0x1e0] sm:$0xff]
        %v754 = vld [vmem:[#allocation9 + $0x1e8] sm:$0xff]
        %v755 = vld [vmem:[#allocation9 + $0x1f0] sm:$0xff]
        %v756 = vld [vmem:[#allocation9 + $0x1f8] sm:$0xff]
        %v757 = vld [vmem:[#allocation9 + $0x200] sm:$0xff]
        %v758 = vld [vmem:[#allocation9 + $0x208] sm:$0xff]
        %v759 = vld [vmem:[#allocation9 + $0x210] sm:$0xff]
        %v760 = vld [vmem:[#allocation9 + $0x218] sm:$0xff]
        %v761 = vld [vmem:[#allocation9 + $0x220] sm:$0xff]
        %v762 = vld [vmem:[#allocation9 + $0x228] sm:$0xff]
        %v763 = vld [vmem:[#allocation9 + $0x230] sm:$0xff]
        %v764 = vld [vmem:[#allocation9 + $0x238] sm:$0xff]
        %v765 = vld [vmem:[#allocation9 + $0x240] sm:$0xff]
        %v766 = vld [vmem:[#allocation9 + $0x248] sm:$0xff]
        %v767 = vld [vmem:[#allocation9 + $0x250] sm:$0xff]
        %v768 = vld [vmem:[#allocation9 + $0x258] sm:$0xff]
        %v769 = vld [vmem:[#allocation9 + $0x260] sm:$0xff]
        %v770 = vld [vmem:[#allocation9 + $0x268] sm:$0xff]
        %v771 = vld [vmem:[#allocation9 + $0x270] sm:$0xff]
        %v772 = vld [vmem:[#allocation9 + $0x278] sm:$0xff]
        %v773 = vld [vmem:[#allocation9 + $0x280] sm:$0xff]
        %v774 = vld [vmem:[#allocation9 + $0x288] sm:$0xff]
        %v775 = vld [vmem:[#allocation9 + $0x290] sm:$0xff]
        %v776 = vld [vmem:[#allocation9 + $0x298] sm:$0xff]
        %v777 = vld [vmem:[#allocation9 + $0x2a0] sm:$0xff]
        %v778 = vld [vmem:[#allocation9 + $0x2a8] sm:$0xff]
        %v779 = vld [vmem:[#allocation9 + $0x2b0] sm:$0xff]
        %v780 = vld [vmem:[#allocation9 + $0x2b8] sm:$0xff]
        %v781 = vld [vmem:[#allocation9 + $0x2c0] sm:$0xff]
        %v782 = vld [vmem:[#allocation9 + $0x2c8] sm:$0xff]
        %v783 = vld [vmem:[#allocation9 + $0x2d0] sm:$0xff]
        %v784 = vld [vmem:[#allocation9 + $0x2d8] sm:$0xff]
        %v785 = vld [vmem:[#allocation9 + $0x2e0] sm:$0xff]
        %v786 = vld [vmem:[#allocation9 + $0x2e8] sm:$0xff]
        %v787 = vld [vmem:[#allocation9 + $0x2f0] sm:$0xff]
        %v788 = vld [vmem:[#allocation9 + $0x2f8] sm:$0xff]
        %v789 = vld [vmem:[#allocation9 + $0x300] sm:$0xff]
        %v790 = vld [vmem:[#allocation9 + $0x308] sm:$0xff]
        %v791 = vld [vmem:[#allocation9 + $0x310] sm:$0xff]
        %v792 = vld [vmem:[#allocation9 + $0x318] sm:$0xff]
        %v793 = vld [vmem:[#allocation9 + $0x320] sm:$0xff]
        %v794 = vld [vmem:[#allocation9 + $0x328] sm:$0xff]
        %v795 = vld [vmem:[#allocation9 + $0x330] sm:$0xff]
        %v796 = vld [vmem:[#allocation9 + $0x338] sm:$0xff]
        %v797 = vld [vmem:[#allocation9 + $0x340] sm:$0xff]
        %v798 = vld [vmem:[#allocation9 + $0x348] sm:$0xff]
        %v799 = vld [vmem:[#allocation9 + $0x350] sm:$0xff]
        %v800 = vld [vmem:[#allocation9 + $0x358] sm:$0xff]
        %v801 = vld [vmem:[#allocation9 + $0x360] sm:$0xff]
        %v802 = vld [vmem:[#allocation9 + $0x368] sm:$0xff]
        %v803 = vld [vmem:[#allocation9 + $0x370] sm:$0xff]
        %v804 = vld [vmem:[#allocation9 + $0x378] sm:$0xff]
        %v805 = vld [vmem:[#allocation9 + $0x380] sm:$0xff]
        %v806 = vld [vmem:[#allocation9 + $0x388] sm:$0xff]
        %v807 = vld [vmem:[#allocation9 + $0x390] sm:$0xff]
        %v808 = vld [vmem:[#allocation9 + $0x398] sm:$0xff]
        %v809 = vld [vmem:[#allocation9 + $0x3a0] sm:$0xff]
        %v810 = vld [vmem:[#allocation9 + $0x3a8] sm:$0xff]
        %v811 = vld [vmem:[#allocation9 + $0x3b0] sm:$0xff]
        %v812 = vld [vmem:[#allocation9 + $0x3b8] sm:$0xff]
        %v813 = vld [vmem:[#allocation9 + $0x3c0] sm:$0xff]
        %v814 = vld [vmem:[#allocation9 + $0x3c8] sm:$0xff]
        %v815 = vld [vmem:[#allocation9 + $0x3d0] sm:$0xff]
        %v816 = vld [vmem:[#allocation9 + $0x3d8] sm:$0xff]
        %v817 = vld [vmem:[#allocation9 + $0x3e0] sm:$0xff]
        %v818 = vld [vmem:[#allocation9 + $0x3e8] sm:$0xff]
        %v819 = vld [vmem:[#allocation9 + $0x3f0] sm:$0xff]
        %v820 = vld [vmem:[#allocation9 + $0x3f8] sm:$0xff]
        %v821 = vld [vmem:[#allocation9 + $0x400] sm:$0xff]
        %v822 = vld [vmem:[#allocation9 + $0x408] sm:$0xff]
        %v823 = vld [vmem:[#allocation9 + $0x410] sm:$0xff]
        %v824 = vld [vmem:[#allocation9 + $0x418] sm:$0xff]
        %v825 = vld [vmem:[#allocation9 + $0x420] sm:$0xff]
        %v826 = vld [vmem:[#allocation9 + $0x428] sm:$0xff]
        %v827 = vld [vmem:[#allocation9 + $0x430] sm:$0xff]
        %v828 = vld [vmem:[#allocation9 + $0x438] sm:$0xff]
        %v829 = vld [vmem:[#allocation9 + $0x440] sm:$0xff]
        %v830 = vld [vmem:[#allocation9 + $0x448] sm:$0xff]
        %v831 = vld [vmem:[#allocation9 + $0x450] sm:$0xff]
        %v832 = vld [vmem:[#allocation9 + $0x458] sm:$0xff]
        %v833 = vld [vmem:[#allocation9 + $0x460] sm:$0xff]
        %v834 = vld [vmem:[#allocation9 + $0x468] sm:$0xff]
        %v835 = vld [vmem:[#allocation9 + $0x470] sm:$0xff]
        %v836 = vld [vmem:[#allocation9 + $0x478] sm:$0xff]
        %v837 = vld [vmem:[#allocation9 + $0x480] sm:$0xff]
        %v838 = vld [vmem:[#allocation9 + $0x488] sm:$0xff]
        %v839 = vld [vmem:[#allocation9 + $0x490] sm:$0xff]
        %v840 = vld [vmem:[#allocation9 + $0x498] sm:$0xff]
        %v841 = vld [vmem:[#allocation9 + $0x4a0] sm:$0xff]
        %v842 = vld [vmem:[#allocation9 + $0x4a8] sm:$0xff]
        %v843 = vld [vmem:[#allocation9 + $0x4b0] sm:$0xff]
        %v844 = vld [vmem:[#allocation9 + $0x4b8] sm:$0xff]
        %v845 = vld [vmem:[#allocation9 + $0x4c0] sm:$0xff]
        %v846 = vld [vmem:[#allocation9 + $0x4c8] sm:$0xff]
        %v847 = vld [vmem:[#allocation9 + $0x4d0] sm:$0xff]
        %v848 = vld [vmem:[#allocation9 + $0x4d8] sm:$0xff]
        %v849 = vld [vmem:[#allocation9 + $0x4e0] sm:$0xff]
        %v850 = vld [vmem:[#allocation9 + $0x4e8] sm:$0xff]
        %v851 = vld [vmem:[#allocation9 + $0x4f0] sm:$0xff]
        %v852 = vld [vmem:[#allocation9 + $0x4f8] sm:$0xff]
        %v853 = vld [vmem:[#allocation9 + $0x500] sm:$0xff]
        %v854 = vld [vmem:[#allocation9 + $0x508] sm:$0xff]
        %v855 = vld [vmem:[#allocation9 + $0x510] sm:$0xff]
        %v856 = vld [vmem:[#allocation9 + $0x518] sm:$0xff]
        %v857 = vld [vmem:[#allocation9 + $0x520] sm:$0xff]
        %v858 = vld [vmem:[#allocation9 + $0x528] sm:$0xff]
        %v859 = vld [vmem:[#allocation9 + $0x530] sm:$0xff]
        %v860 = vld [vmem:[#allocation9 + $0x538] sm:$0xff]
        %v861 = vld [vmem:[#allocation9 + $0x540] sm:$0xff]
        %v862 = vld [vmem:[#allocation9 + $0x548] sm:$0xff]
        %v863 = vld [vmem:[#allocation9 + $0x550] sm:$0xff]
        %v864 = vld [vmem:[#allocation9 + $0x558] sm:$0xff]
        %v865 = vld [vmem:[#allocation9 + $0x560] sm:$0xff]
        %v866 = vld [vmem:[#allocation9 + $0x568] sm:$0xff]
        %v867 = vld [vmem:[#allocation9 + $0x570] sm:$0xff]
        %v868 = vld [vmem:[#allocation9 + $0x578] sm:$0xff]
        %v869 = vld [vmem:[#allocation9 + $0x580] sm:$0xff]
        %v870 = vld [vmem:[#allocation9 + $0x588] sm:$0xff]
        %v871 = vld [vmem:[#allocation9 + $0x590] sm:$0xff]
        %v872 = vld [vmem:[#allocation9 + $0x598] sm:$0xff]
        %v873 = vld [vmem:[#allocation9 + $0x5a0] sm:$0xff]
        %v874 = vld [vmem:[#allocation9 + $0x5a8] sm:$0xff]
        %v875 = vld [vmem:[#allocation9 + $0x5b0] sm:$0xff]
        %v876 = vld [vmem:[#allocation9 + $0x5b8] sm:$0xff]
        %v877 = vld [vmem:[#allocation9 + $0x5c0] sm:$0xff]
        %v878 = vld [vmem:[#allocation9 + $0x5c8] sm:$0xff]
        %v879 = vld [vmem:[#allocation9 + $0x5d0] sm:$0xff]
        %v880 = vld [vmem:[#allocation9 + $0x5d8] sm:$0xff]
        %v881 = vld [vmem:[#allocation9 + $0x5e0] sm:$0xff]
        %v882 = vld [vmem:[#allocation9 + $0x5e8] sm:$0xff]
        %v883 = vld [vmem:[#allocation9 + $0x5f0] sm:$0xff]
        %v884 = vld [vmem:[#allocation9 + $0x5f8] sm:$0xff]
        %v885 = vld [vmem:[#allocation9 + $0x600] sm:$0xff]
        %v886 = vld [vmem:[#allocation9 + $0x608] sm:$0xff]
        %v887 = vld [vmem:[#allocation9 + $0x610] sm:$0xff]
        %v888 = vld [vmem:[#allocation9 + $0x618] sm:$0xff]
        %v889 = vld [vmem:[#allocation9 + $0x620] sm:$0xff]
        %v890 = vld [vmem:[#allocation9 + $0x628] sm:$0xff]
        %v891 = vld [vmem:[#allocation9 + $0x630] sm:$0xff]
        %v892 = vld [vmem:[#allocation9 + $0x638] sm:$0xff]
        %v893 = vld [vmem:[#allocation9 + $0x640] sm:$0xff]
        %v894 = vld [vmem:[#allocation9 + $0x648] sm:$0xff]
        %v895 = vld [vmem:[#allocation9 + $0x650] sm:$0xff]
        %v896 = vld [vmem:[#allocation9 + $0x658] sm:$0xff]
        %v897 = vld [vmem:[#allocation9 + $0x660] sm:$0xff]
        %v898 = vld [vmem:[#allocation9 + $0x668] sm:$0xff]
        %v899 = vld [vmem:[#allocation9 + $0x670] sm:$0xff]
        %v900 = vld [vmem:[#allocation9 + $0x678] sm:$0xff]
        %v901 = vld [vmem:[#allocation9 + $0x680] sm:$0xff]
        %v902 = vld [vmem:[#allocation9 + $0x688] sm:$0xff]
        %v903 = vld [vmem:[#allocation9 + $0x690] sm:$0xff]
        %v904 = vld [vmem:[#allocation9 + $0x698] sm:$0xff]
        %v905 = vld [vmem:[#allocation9 + $0x6a0] sm:$0xff]
        %v906 = vld [vmem:[#allocation9 + $0x6a8] sm:$0xff]
        %v907 = vld [vmem:[#allocation9 + $0x6b0] sm:$0xff]
        %v908 = vld [vmem:[#allocation9 + $0x6b8] sm:$0xff]
        %v909 = vld [vmem:[#allocation9 + $0x6c0] sm:$0xff]
        %v910 = vld [vmem:[#allocation9 + $0x6c8] sm:$0xff]
        %v911 = vld [vmem:[#allocation9 + $0x6d0] sm:$0xff]
        %v912 = vld [vmem:[#allocation9 + $0x6d8] sm:$0xff]
        %v913 = vld [vmem:[#allocation9 + $0x6e0] sm:$0xff]
        %v914 = vld [vmem:[#allocation9 + $0x6e8] sm:$0xff]
        %v915 = vld [vmem:[#allocation9 + $0x6f0] sm:$0xff]
        %v916 = vld [vmem:[#allocation9 + $0x6f8] sm:$0xff]
        %v917 = vld [vmem:[#allocation9 + $0x700] sm:$0xff]
        %v918 = vld [vmem:[#allocation9 + $0x708] sm:$0xff]
        %v919 = vld [vmem:[#allocation9 + $0x710] sm:$0xff]
        %v920 = vld [vmem:[#allocation9 + $0x718] sm:$0xff]
        %v921 = vld [vmem:[#allocation9 + $0x720] sm:$0xff]
        %v922 = vld [vmem:[#allocation9 + $0x728] sm:$0xff]
        %v923 = vld [vmem:[#allocation9 + $0x730] sm:$0xff]
        %v924 = vld [vmem:[#allocation9 + $0x738] sm:$0xff]
        %v925 = vld [vmem:[#allocation9 + $0x740] sm:$0xff]
        %v926 = vld [vmem:[#allocation9 + $0x748] sm:$0xff]
        %v927 = vld [vmem:[#allocation9 + $0x750] sm:$0xff]
        %v928 = vld [vmem:[#allocation9 + $0x758] sm:$0xff]
        %v929 = vld [vmem:[#allocation9 + $0x760] sm:$0xff]
        %v930 = vld [vmem:[#allocation9 + $0x768] sm:$0xff]
        %v931 = vld [vmem:[#allocation9 + $0x770] sm:$0xff]
        %v932 = vld [vmem:[#allocation9 + $0x778] sm:$0xff]
        %v933 = vld [vmem:[#allocation9 + $0x780] sm:$0xff]
        %v934 = vld [vmem:[#allocation9 + $0x788] sm:$0xff]
        %v935 = vld [vmem:[#allocation9 + $0x790] sm:$0xff]
        %v936 = vld [vmem:[#allocation9 + $0x798] sm:$0xff]
        %v937 = vld [vmem:[#allocation9 + $0x7a0] sm:$0xff]
        %v938 = vld [vmem:[#allocation9 + $0x7a8] sm:$0xff]
        %v939 = vld [vmem:[#allocation9 + $0x7b0] sm:$0xff]
        %v940 = vld [vmem:[#allocation9 + $0x7b8] sm:$0xff]
        %v941 = vld [vmem:[#allocation9 + $0x7c0] sm:$0xff]
        %v942 = vld [vmem:[#allocation9 + $0x7c8] sm:$0xff]
        %v943 = vld [vmem:[#allocation9 + $0x7d0] sm:$0xff]
        %v944 = vld [vmem:[#allocation9 + $0x7d8] sm:$0xff]
        %v945 = vld [vmem:[#allocation9 + $0x7e0] sm:$0xff]
        %v946 = vld [vmem:[#allocation9 + $0x7e8] sm:$0xff]
        %v947 = vld [vmem:[#allocation9 + $0x7f0] sm:$0xff]
        %v948 = vld [vmem:[#allocation9 + $0x7f8] sm:$0xff]
        %v949 = vld [vmem:[#allocation11] sm:$0xf]
        %v951 = vperm.slane %v949, 0
        %v952 = vperm.slane %v949, 1
        %v953 = vperm.slane %v949, 2
        %v954 = vperm.slane %v949, 3
        %959 = vmatpush.msra.mxu0 %v753
        %960 = vmatpush.msra.mxu0 %v749
        %961 = vmatpush.msra.mxu0 %v745
        %962 = vmatpush.msra.mxu0 %v741
        %963 = vmatpush.msra.mxu0 %v737
        %964 = vmatpush.msra.mxu0 %v733
        %965 = vmatpush.msra.mxu0 %v729
        %966 = vmatpush.msra.mxu0 %v725
        %967 = vmatpush.msra.mxu0 %v721
        %968 = vmatpush.msra.mxu0 %v717
        %969 = vmatpush.msra.mxu0 %v713
        %970 = vmatpush.msra.mxu0 %v709
        %971 = vmatpush.msra.mxu0 %v705
        %972 = vmatpush.msra.mxu0 %v701
        %973 = vmatpush.msra.mxu0 %v697
        %974 = vmatpush.msra.mxu0 %v693
        %975 = vmatmul.f32.gmra.mxu0 %v629
        %v976 = vpop.f32.mrf.mxu0
        %v977 = vadd.f32 %v951, %v976
        %978 = vmatmul.f32.gmra.mxu0 %v633
        %v979 = vpop.f32.mrf.mxu0
        %v980 = vadd.f32 %v951, %v979
        %981 = vmatmul.f32.gmra.mxu0 %v637
        %v982 = vpop.f32.mrf.mxu0
        %v983 = vadd.f32 %v951, %v982
        %984 = vmatmul.f32.gmra.mxu0 %v641
        %v985 = vpop.f32.mrf.mxu0
        %v986 = vadd.f32 %v951, %v985
        %987 = vmatmul.f32.gmra.mxu0 %v645
        %v988 = vpop.f32.mrf.mxu0
        %v989 = vadd.f32 %v951, %v988
        %990 = vmatmul.f32.gmra.mxu0 %v649
        %v991 = vpop.f32.mrf.mxu0
        %v992 = vadd.f32 %v951, %v991
        %993 = vmatmul.f32.gmra.mxu0 %v653
        %v994 = vpop.f32.mrf.mxu0
        %v995 = vadd.f32 %v951, %v994
        %996 = vmatmul.f32.gmra.mxu0 %v657
        %v997 = vpop.f32.mrf.mxu0
        %v998 = vadd.f32 %v951, %v997
        %999 = vmatmul.f32.gmra.mxu0 %v661
        %v1000 = vpop.f32.mrf.mxu0
        %v1001 = vadd.f32 %v951, %v1000
        %1002 = vmatmul.f32.gmra.mxu0 %v665
        %v1003 = vpop.f32.mrf.mxu0
        %v1004 = vadd.f32 %v951, %v1003
        %1005 = vmatmul.f32.gmra.mxu0 %v669
        %v1006 = vpop.f32.mrf.mxu0
        %v1007 = vadd.f32 %v951, %v1006
        %1008 = vmatmul.f32.gmra.mxu0 %v673
        %v1009 = vpop.f32.mrf.mxu0
        %v1010 = vadd.f32 %v951, %v1009
        %1011 = vmatmul.f32.gmra.mxu0 %v677
        %v1012 = vpop.f32.mrf.mxu0
        %v1013 = vadd.f32 %v951, %v1012
        %1014 = vmatmul.f32.gmra.mxu0 %v681
        %v1015 = vpop.f32.mrf.mxu0
        %v1016 = vadd.f32 %v951, %v1015
        %1017 = vmatmul.f32.gmra.mxu0 %v685
        %v1018 = vpop.f32.mrf.mxu0
        %v1019 = vadd.f32 %v951, %v1018
        %1020 = vmatmul.f32.gmra.mxu0 %v689
        %v1021 = vpop.f32.mrf.mxu0
        %v1022 = vadd.f32 %v951, %v1021
        %1023 = vdwg.mxu0
        %1024 = vmatpush.msra.mxu0 %v817
        %1025 = vmatpush.msra.mxu0 %v813
        %1026 = vmatpush.msra.mxu0 %v809
        %1027 = vmatpush.msra.mxu0 %v805
        %1028 = vmatpush.msra.mxu0 %v801
        %1029 = vmatpush.msra.mxu0 %v797
        %1030 = vmatpush.msra.mxu0 %v793
        %1031 = vmatpush.msra.mxu0 %v789
        %1032 = vmatpush.msra.mxu0 %v785
        %1033 = vmatpush.msra.mxu0 %v781
        %1034 = vmatpush.msra.mxu0 %v777
        %1035 = vmatpush.msra.mxu0 %v773
        %1036 = vmatpush.msra.mxu0 %v769
        %1037 = vmatpush.msra.mxu0 %v765
        %1038 = vmatpush.msra.mxu0 %v761
        %1039 = vmatpush.msra.mxu0 %v757
        %1040 = vmatmul.f32.gmra.mxu0 %v630
        %v1041 = vpop.f32.mrf.mxu0
        %v1042 = vadd.f32 %v977, %v1041
        %1043 = vmatmul.f32.gmra.mxu0 %v634
        %v1044 = vpop.f32.mrf.mxu0
        %v1045 = vadd.f32 %v980, %v1044
        %1046 = vmatmul.f32.gmra.mxu0 %v638
        %v1047 = vpop.f32.mrf.mxu0
        %v1048 = vadd.f32 %v983, %v1047
        %1049 = vmatmul.f32.gmra.mxu0 %v642
        %v1050 = vpop.f32.mrf.mxu0
        %v1051 = vadd.f32 %v986, %v1050
        %1052 = vmatmul.f32.gmra.mxu0 %v646
        %v1053 = vpop.f32.mrf.mxu0
        %v1054 = vadd.f32 %v989, %v1053
        %1055 = vmatmul.f32.gmra.mxu0 %v650
        %v1056 = vpop.f32.mrf.mxu0
        %v1057 = vadd.f32 %v992, %v1056
        %1058 = vmatmul.f32.gmra.mxu0 %v654
        %v1059 = vpop.f32.mrf.mxu0
        %v1060 = vadd.f32 %v995, %v1059
        %1061 = vmatmul.f32.gmra.mxu0 %v658
        %v1062 = vpop.f32.mrf.mxu0
        %v1063 = vadd.f32 %v998, %v1062
        %1064 = vmatmul.f32.gmra.mxu0 %v662
        %v1065 = vpop.f32.mrf.mxu0
        %v1066 = vadd.f32 %v1001, %v1065
        %1067 = vmatmul.f32.gmra.mxu0 %v666
        %v1068 = vpop.f32.mrf.mxu0
        %v1069 = vadd.f32 %v1004, %v1068
        %1070 = vmatmul.f32.gmra.mxu0 %v670
        %v1071 = vpop.f32.mrf.mxu0
        %v1072 = vadd.f32 %v1007, %v1071
        %1073 = vmatmul.f32.gmra.mxu0 %v674
        %v1074 = vpop.f32.mrf.mxu0
        %v1075 = vadd.f32 %v1010, %v1074
        %1076 = vmatmul.f32.gmra.mxu0 %v678
        %v1077 = vpop.f32.mrf.mxu0
        %v1078 = vadd.f32 %v1013, %v1077
        %1079 = vmatmul.f32.gmra.mxu0 %v682
        %v1080 = vpop.f32.mrf.mxu0
        %v1081 = vadd.f32 %v1016, %v1080
        %1082 = vmatmul.f32.gmra.mxu0 %v686
        %v1083 = vpop.f32.mrf.mxu0
        %v1084 = vadd.f32 %v1019, %v1083
        %1085 = vmatmul.f32.gmra.mxu0 %v690
        %v1086 = vpop.f32.mrf.mxu0
        %v1087 = vadd.f32 %v1022, %v1086
        %1088 = vdwg.mxu0
        %1089 = vmatpush.msra.mxu0 %v881
        %1090 = vmatpush.msra.mxu0 %v877
        %1091 = vmatpush.msra.mxu0 %v873
        %1092 = vmatpush.msra.mxu0 %v869
        %1093 = vmatpush.msra.mxu0 %v865
        %1094 = vmatpush.msra.mxu0 %v861
        %1095 = vmatpush.msra.mxu0 %v857
        %1096 = vmatpush.msra.mxu0 %v853
        %1097 = vmatpush.msra.mxu0 %v849
        %1098 = vmatpush.msra.mxu0 %v845
        %1099 = vmatpush.msra.mxu0 %v841
        %1100 = vmatpush.msra.mxu0 %v837
        %1101 = vmatpush.msra.mxu0 %v833
        %1102 = vmatpush.msra.mxu0 %v829
        %1103 = vmatpush.msra.mxu0 %v825
        %1104 = vmatpush.msra.mxu0 %v821
        %1105 = vmatmul.f32.gmra.mxu0 %v631
        %v1106 = vpop.f32.mrf.mxu0
        %v1107 = vadd.f32 %v1042, %v1106
        %1108 = vmatmul.f32.gmra.mxu0 %v635
        %v1109 = vpop.f32.mrf.mxu0
        %v1110 = vadd.f32 %v1045, %v1109
        %1111 = vmatmul.f32.gmra.mxu0 %v639
        %v1112 = vpop.f32.mrf.mxu0
        %v1113 = vadd.f32 %v1048, %v1112
        %1114 = vmatmul.f32.gmra.mxu0 %v643
        %v1115 = vpop.f32.mrf.mxu0
        %v1116 = vadd.f32 %v1051, %v1115
        %1117 = vmatmul.f32.gmra.mxu0 %v647
        %v1118 = vpop.f32.mrf.mxu0
        %v1119 = vadd.f32 %v1054, %v1118
        %1120 = vmatmul.f32.gmra.mxu0 %v651
        %v1121 = vpop.f32.mrf.mxu0
        %v1122 = vadd.f32 %v1057, %v1121
        %1123 = vmatmul.f32.gmra.mxu0 %v655
        %v1124 = vpop.f32.mrf.mxu0
        %v1125 = vadd.f32 %v1060, %v1124
        %1126 = vmatmul.f32.gmra.mxu0 %v659
        %v1127 = vpop.f32.mrf.mxu0
        %v1128 = vadd.f32 %v1063, %v1127
        %1129 = vmatmul.f32.gmra.mxu0 %v663
        %v1130 = vpop.f32.mrf.mxu0
        %v1131 = vadd.f32 %v1066, %v1130
        %1132 = vmatmul.f32.gmra.mxu0 %v667
        %v1133 = vpop.f32.mrf.mxu0
        %v1134 = vadd.f32 %v1069, %v1133
        %1135 = vmatmul.f32.gmra.mxu0 %v671
        %v1136 = vpop.f32.mrf.mxu0
        %v1137 = vadd.f32 %v1072, %v1136
        %1138 = vmatmul.f32.gmra.mxu0 %v675
        %v1139 = vpop.f32.mrf.mxu0
        %v1140 = vadd.f32 %v1075, %v1139
        %1141 = vmatmul.f32.gmra.mxu0 %v679
        %v1142 = vpop.f32.mrf.mxu0
        %v1143 = vadd.f32 %v1078, %v1142
        %1144 = vmatmul.f32.gmra.mxu0 %v683
        %v1145 = vpop.f32.mrf.mxu0
        %v1146 = vadd.f32 %v1081, %v1145
        %1147 = vmatmul.f32.gmra.mxu0 %v687
        %v1148 = vpop.f32.mrf.mxu0
        %v1149 = vadd.f32 %v1084, %v1148
        %1150 = vmatmul.f32.gmra.mxu0 %v691
        %v1151 = vpop.f32.mrf.mxu0
        %v1152 = vadd.f32 %v1087, %v1151
        %1153 = vdwg.mxu0
        %1154 = vmatpush.msra.mxu0 %v945
        %1155 = vmatpush.msra.mxu0 %v941
        %1156 = vmatpush.msra.mxu0 %v937
        %1157 = vmatpush.msra.mxu0 %v933
        %1158 = vmatpush.msra.mxu0 %v929
        %1159 = vmatpush.msra.mxu0 %v925
        %1160 = vmatpush.msra.mxu0 %v921
        %1161 = vmatpush.msra.mxu0 %v917
        %1162 = vmatpush.msra.mxu0 %v913
        %1163 = vmatpush.msra.mxu0 %v909
        %1164 = vmatpush.msra.mxu0 %v905
        %1165 = vmatpush.msra.mxu0 %v901
        %1166 = vmatpush.msra.mxu0 %v897
        %1167 = vmatpush.msra.mxu0 %v893
        %1168 = vmatpush.msra.mxu0 %v889
        %1169 = vmatpush.msra.mxu0 %v885
        %1170 = vmatmul.f32.gmra.mxu0 %v632
        %v1171 = vpop.f32.mrf.mxu0
        %v1172 = vadd.f32 %v1107, %v1171
        %1173 = vmatmul.f32.gmra.mxu0 %v636
        %v1174 = vpop.f32.mrf.mxu0
        %v1175 = vadd.f32 %v1110, %v1174
        %1176 = vmatmul.f32.gmra.mxu0 %v640
        %v1177 = vpop.f32.mrf.mxu0
        %v1178 = vadd.f32 %v1113, %v1177
        %1179 = vmatmul.f32.gmra.mxu0 %v644
        %v1180 = vpop.f32.mrf.mxu0
        %v1181 = vadd.f32 %v1116, %v1180
        %1182 = vmatmul.f32.gmra.mxu0 %v648
        %v1183 = vpop.f32.mrf.mxu0
        %v1184 = vadd.f32 %v1119, %v1183
        %1185 = vmatmul.f32.gmra.mxu0 %v652
        %v1186 = vpop.f32.mrf.mxu0
        %v1187 = vadd.f32 %v1122, %v1186
        %1188 = vmatmul.f32.gmra.mxu0 %v656
        %v1189 = vpop.f32.mrf.mxu0
        %v1190 = vadd.f32 %v1125, %v1189
        %1191 = vmatmul.f32.gmra.mxu0 %v660
        %v1192 = vpop.f32.mrf.mxu0
        %v1193 = vadd.f32 %v1128, %v1192
        %1194 = vmatmul.f32.gmra.mxu0 %v664
        %v1195 = vpop.f32.mrf.mxu0
        %v1196 = vadd.f32 %v1131, %v1195
        %1197 = vmatmul.f32.gmra.mxu0 %v668
        %v1198 = vpop.f32.mrf.mxu0
        %v1199 = vadd.f32 %v1134, %v1198
        %1200 = vmatmul.f32.gmra.mxu0 %v672
        %v1201 = vpop.f32.mrf.mxu0
        %v1202 = vadd.f32 %v1137, %v1201
        %1203 = vmatmul.f32.gmra.mxu0 %v676
        %v1204 = vpop.f32.mrf.mxu0
        %v1205 = vadd.f32 %v1140, %v1204
        %1206 = vmatmul.f32.gmra.mxu0 %v680
        %v1207 = vpop.f32.mrf.mxu0
        %v1208 = vadd.f32 %v1143, %v1207
        %1209 = vmatmul.f32.gmra.mxu0 %v684
        %v1210 = vpop.f32.mrf.mxu0
        %v1211 = vadd.f32 %v1146, %v1210
        %1212 = vmatmul.f32.gmra.mxu0 %v688
        %v1213 = vpop.f32.mrf.mxu0
        %v1214 = vadd.f32 %v1149, %v1213
        %1215 = vmatmul.f32.gmra.mxu0 %v692
        %v1216 = vpop.f32.mrf.mxu0
        %v1217 = vadd.f32 %v1152, %v1216
        %1218 = vdwg.mxu0
        %1219 = vmatpush.msra.mxu0 %v754
        %1220 = vmatpush.msra.mxu0 %v750
        %1221 = vmatpush.msra.mxu0 %v746
        %1222 = vmatpush.msra.mxu0 %v742
        %1223 = vmatpush.msra.mxu0 %v738
        %1224 = vmatpush.msra.mxu0 %v734
        %1225 = vmatpush.msra.mxu0 %v730
        %1226 = vmatpush.msra.mxu0 %v726
        %1227 = vmatpush.msra.mxu0 %v722
        %1228 = vmatpush.msra.mxu0 %v718
        %1229 = vmatpush.msra.mxu0 %v714
        %1230 = vmatpush.msra.mxu0 %v710
        %1231 = vmatpush.msra.mxu0 %v706
        %1232 = vmatpush.msra.mxu0 %v702
        %1233 = vmatpush.msra.mxu0 %v698
        %1234 = vmatpush.msra.mxu0 %v694
        %1235 = vmatmul.f32.gmra.mxu0 %v629
        %v1236 = vpop.f32.mrf.mxu0
        %v1237 = vadd.f32 %v952, %v1236
        %1238 = vmatmul.f32.gmra.mxu0 %v633
        %v1239 = vpop.f32.mrf.mxu0
        %v1240 = vadd.f32 %v952, %v1239
        %1241 = vmatmul.f32.gmra.mxu0 %v637
        %v1242 = vpop.f32.mrf.mxu0
        %v1243 = vadd.f32 %v952, %v1242
        %1244 = vmatmul.f32.gmra.mxu0 %v641
        %v1245 = vpop.f32.mrf.mxu0
        %v1246 = vadd.f32 %v952, %v1245
        %1247 = vmatmul.f32.gmra.mxu0 %v645
        %v1248 = vpop.f32.mrf.mxu0
        %v1249 = vadd.f32 %v952, %v1248
        %1250 = vmatmul.f32.gmra.mxu0 %v649
        %v1251 = vpop.f32.mrf.mxu0
        %v1252 = vadd.f32 %v952, %v1251
        %1253 = vmatmul.f32.gmra.mxu0 %v653
        %v1254 = vpop.f32.mrf.mxu0
        %v1255 = vadd.f32 %v952, %v1254
        %1256 = vmatmul.f32.gmra.mxu0 %v657
        %v1257 = vpop.f32.mrf.mxu0
        %v1258 = vadd.f32 %v952, %v1257
        %1259 = vmatmul.f32.gmra.mxu0 %v661
        %v1260 = vpop.f32.mrf.mxu0
        %v1261 = vadd.f32 %v952, %v1260
        %1262 = vmatmul.f32.gmra.mxu0 %v665
        %v1263 = vpop.f32.mrf.mxu0
        %v1264 = vadd.f32 %v952, %v1263
        %1265 = vmatmul.f32.gmra.mxu0 %v669
        %v1266 = vpop.f32.mrf.mxu0
        %v1267 = vadd.f32 %v952, %v1266
        %1268 = vmatmul.f32.gmra.mxu0 %v673
        %v1269 = vpop.f32.mrf.mxu0
        %v1270 = vadd.f32 %v952, %v1269
        %1271 = vmatmul.f32.gmra.mxu0 %v677
        %v1272 = vpop.f32.mrf.mxu0
        %v1273 = vadd.f32 %v952, %v1272
        %1274 = vmatmul.f32.gmra.mxu0 %v681
        %v1275 = vpop.f32.mrf.mxu0
        %v1276 = vadd.f32 %v952, %v1275
        %1277 = vmatmul.f32.gmra.mxu0 %v685
        %v1278 = vpop.f32.mrf.mxu0
        %v1279 = vadd.f32 %v952, %v1278
        %1280 = vmatmul.f32.gmra.mxu0 %v689
        %v1281 = vpop.f32.mrf.mxu0
        %v1282 = vadd.f32 %v952, %v1281
        %1283 = vdwg.mxu0
        %1284 = vmatpush.msra.mxu0 %v818
        %1285 = vmatpush.msra.mxu0 %v814
        %1286 = vmatpush.msra.mxu0 %v810
        %1287 = vmatpush.msra.mxu0 %v806
        %1288 = vmatpush.msra.mxu0 %v802
        %1289 = vmatpush.msra.mxu0 %v798
        %1290 = vmatpush.msra.mxu0 %v794
        %1291 = vmatpush.msra.mxu0 %v790
        %1292 = vmatpush.msra.mxu0 %v786
        %1293 = vmatpush.msra.mxu0 %v782
        %1294 = vmatpush.msra.mxu0 %v778
        %1295 = vmatpush.msra.mxu0 %v774
        %1296 = vmatpush.msra.mxu0 %v770
        %1297 = vmatpush.msra.mxu0 %v766
        %1298 = vmatpush.msra.mxu0 %v762
        %1299 = vmatpush.msra.mxu0 %v758
        %1300 = vmatmul.f32.gmra.mxu0 %v630
        %v1301 = vpop.f32.mrf.mxu0
        %v1302 = vadd.f32 %v1237, %v1301
        %1303 = vmatmul.f32.gmra.mxu0 %v634
        %v1304 = vpop.f32.mrf.mxu0
        %v1305 = vadd.f32 %v1240, %v1304
        %1306 = vmatmul.f32.gmra.mxu0 %v638
        %v1307 = vpop.f32.mrf.mxu0
        %v1308 = vadd.f32 %v1243, %v1307
        %1309 = vmatmul.f32.gmra.mxu0 %v642
        %v1310 = vpop.f32.mrf.mxu0
        %v1311 = vadd.f32 %v1246, %v1310
        %1312 = vmatmul.f32.gmra.mxu0 %v646
        %v1313 = vpop.f32.mrf.mxu0
        %v1314 = vadd.f32 %v1249, %v1313
        %1315 = vmatmul.f32.gmra.mxu0 %v650
        %v1316 = vpop.f32.mrf.mxu0
        %v1317 = vadd.f32 %v1252, %v1316
        %1318 = vmatmul.f32.gmra.mxu0 %v654
        %v1319 = vpop.f32.mrf.mxu0
        %v1320 = vadd.f32 %v1255, %v1319
        %1321 = vmatmul.f32.gmra.mxu0 %v658
        %v1322 = vpop.f32.mrf.mxu0
        %v1323 = vadd.f32 %v1258, %v1322
        %1324 = vmatmul.f32.gmra.mxu0 %v662
        %v1325 = vpop.f32.mrf.mxu0
        %v1326 = vadd.f32 %v1261, %v1325
        %1327 = vmatmul.f32.gmra.mxu0 %v666
        %v1328 = vpop.f32.mrf.mxu0
        %v1329 = vadd.f32 %v1264, %v1328
        %1330 = vmatmul.f32.gmra.mxu0 %v670
        %v1331 = vpop.f32.mrf.mxu0
        %v1332 = vadd.f32 %v1267, %v1331
        %1333 = vmatmul.f32.gmra.mxu0 %v674
        %v1334 = vpop.f32.mrf.mxu0
        %v1335 = vadd.f32 %v1270, %v1334
        %1336 = vmatmul.f32.gmra.mxu0 %v678
        %v1337 = vpop.f32.mrf.mxu0
        %v1338 = vadd.f32 %v1273, %v1337
        %1339 = vmatmul.f32.gmra.mxu0 %v682
        %v1340 = vpop.f32.mrf.mxu0
        %v1341 = vadd.f32 %v1276, %v1340
        %1342 = vmatmul.f32.gmra.mxu0 %v686
        %v1343 = vpop.f32.mrf.mxu0
        %v1344 = vadd.f32 %v1279, %v1343
        %1345 = vmatmul.f32.gmra.mxu0 %v690
        %v1346 = vpop.f32.mrf.mxu0
        %v1347 = vadd.f32 %v1282, %v1346
        %1348 = vdwg.mxu0
        %1349 = vmatpush.msra.mxu0 %v882
        %1350 = vmatpush.msra.mxu0 %v878
        %1351 = vmatpush.msra.mxu0 %v874
        %1352 = vmatpush.msra.mxu0 %v870
        %1353 = vmatpush.msra.mxu0 %v866
        %1354 = vmatpush.msra.mxu0 %v862
        %1355 = vmatpush.msra.mxu0 %v858
        %1356 = vmatpush.msra.mxu0 %v854
        %1357 = vmatpush.msra.mxu0 %v850
        %1358 = vmatpush.msra.mxu0 %v846
        %1359 = vmatpush.msra.mxu0 %v842
        %1360 = vmatpush.msra.mxu0 %v838
        %1361 = vmatpush.msra.mxu0 %v834
        %1362 = vmatpush.msra.mxu0 %v830
        %1363 = vmatpush.msra.mxu0 %v826
        %1364 = vmatpush.msra.mxu0 %v822
        %1365 = vmatmul.f32.gmra.mxu0 %v631
        %v1366 = vpop.f32.mrf.mxu0
        %v1367 = vadd.f32 %v1302, %v1366
        %1368 = vmatmul.f32.gmra.mxu0 %v635
        %v1369 = vpop.f32.mrf.mxu0
        %v1370 = vadd.f32 %v1305, %v1369
        %1371 = vmatmul.f32.gmra.mxu0 %v639
        %v1372 = vpop.f32.mrf.mxu0
        %v1373 = vadd.f32 %v1308, %v1372
        %1374 = vmatmul.f32.gmra.mxu0 %v643
        %v1375 = vpop.f32.mrf.mxu0
        %v1376 = vadd.f32 %v1311, %v1375
        %1377 = vmatmul.f32.gmra.mxu0 %v647
        %v1378 = vpop.f32.mrf.mxu0
        %v1379 = vadd.f32 %v1314, %v1378
        %1380 = vmatmul.f32.gmra.mxu0 %v651
        %v1381 = vpop.f32.mrf.mxu0
        %v1382 = vadd.f32 %v1317, %v1381
        %1383 = vmatmul.f32.gmra.mxu0 %v655
        %v1384 = vpop.f32.mrf.mxu0
        %v1385 = vadd.f32 %v1320, %v1384
        %1386 = vmatmul.f32.gmra.mxu0 %v659
        %v1387 = vpop.f32.mrf.mxu0
        %v1388 = vadd.f32 %v1323, %v1387
        %1389 = vmatmul.f32.gmra.mxu0 %v663
        %v1390 = vpop.f32.mrf.mxu0
        %v1391 = vadd.f32 %v1326, %v1390
        %1392 = vmatmul.f32.gmra.mxu0 %v667
        %v1393 = vpop.f32.mrf.mxu0
        %v1394 = vadd.f32 %v1329, %v1393
        %1395 = vmatmul.f32.gmra.mxu0 %v671
        %v1396 = vpop.f32.mrf.mxu0
        %v1397 = vadd.f32 %v1332, %v1396
        %1398 = vmatmul.f32.gmra.mxu0 %v675
        %v1399 = vpop.f32.mrf.mxu0
        %v1400 = vadd.f32 %v1335, %v1399
        %1401 = vmatmul.f32.gmra.mxu0 %v679
        %v1402 = vpop.f32.mrf.mxu0
        %v1403 = vadd.f32 %v1338, %v1402
        %1404 = vmatmul.f32.gmra.mxu0 %v683
        %v1405 = vpop.f32.mrf.mxu0
        %v1406 = vadd.f32 %v1341, %v1405
        %1407 = vmatmul.f32.gmra.mxu0 %v687
        %v1408 = vpop.f32.mrf.mxu0
        %v1409 = vadd.f32 %v1344, %v1408
        %1410 = vmatmul.f32.gmra.mxu0 %v691
        %v1411 = vpop.f32.mrf.mxu0
        %v1412 = vadd.f32 %v1347, %v1411
        %1413 = vdwg.mxu0
        %1414 = vmatpush.msra.mxu0 %v946
        %1415 = vmatpush.msra.mxu0 %v942
        %1416 = vmatpush.msra.mxu0 %v938
        %1417 = vmatpush.msra.mxu0 %v934
        %1418 = vmatpush.msra.mxu0 %v930
        %1419 = vmatpush.msra.mxu0 %v926
        %1420 = vmatpush.msra.mxu0 %v922
        %1421 = vmatpush.msra.mxu0 %v918
        %1422 = vmatpush.msra.mxu0 %v914
        %1423 = vmatpush.msra.mxu0 %v910
        %1424 = vmatpush.msra.mxu0 %v906
        %1425 = vmatpush.msra.mxu0 %v902
        %1426 = vmatpush.msra.mxu0 %v898
        %1427 = vmatpush.msra.mxu0 %v894
        %1428 = vmatpush.msra.mxu0 %v890
        %1429 = vmatpush.msra.mxu0 %v886
        %1430 = vmatmul.f32.gmra.mxu0 %v632
        %v1431 = vpop.f32.mrf.mxu0
        %v1432 = vadd.f32 %v1367, %v1431
        %1433 = vmatmul.f32.gmra.mxu0 %v636
        %v1434 = vpop.f32.mrf.mxu0
        %v1435 = vadd.f32 %v1370, %v1434
        %1436 = vmatmul.f32.gmra.mxu0 %v640
        %v1437 = vpop.f32.mrf.mxu0
        %v1438 = vadd.f32 %v1373, %v1437
        %1439 = vmatmul.f32.gmra.mxu0 %v644
        %v1440 = vpop.f32.mrf.mxu0
        %v1441 = vadd.f32 %v1376, %v1440
        %1442 = vmatmul.f32.gmra.mxu0 %v648
        %v1443 = vpop.f32.mrf.mxu0
        %v1444 = vadd.f32 %v1379, %v1443
        %1445 = vmatmul.f32.gmra.mxu0 %v652
        %v1446 = vpop.f32.mrf.mxu0
        %v1447 = vadd.f32 %v1382, %v1446
        %1448 = vmatmul.f32.gmra.mxu0 %v656
        %v1449 = vpop.f32.mrf.mxu0
        %v1450 = vadd.f32 %v1385, %v1449
        %1451 = vmatmul.f32.gmra.mxu0 %v660
        %v1452 = vpop.f32.mrf.mxu0
        %v1453 = vadd.f32 %v1388, %v1452
        %1454 = vmatmul.f32.gmra.mxu0 %v664
        %v1455 = vpop.f32.mrf.mxu0
        %v1456 = vadd.f32 %v1391, %v1455
        %1457 = vmatmul.f32.gmra.mxu0 %v668
        %v1458 = vpop.f32.mrf.mxu0
        %v1459 = vadd.f32 %v1394, %v1458
        %1460 = vmatmul.f32.gmra.mxu0 %v672
        %v1461 = vpop.f32.mrf.mxu0
        %v1462 = vadd.f32 %v1397, %v1461
        %1463 = vmatmul.f32.gmra.mxu0 %v676
        %v1464 = vpop.f32.mrf.mxu0
        %v1465 = vadd.f32 %v1400, %v1464
        %1466 = vmatmul.f32.gmra.mxu0 %v680
        %v1467 = vpop.f32.mrf.mxu0
        %v1468 = vadd.f32 %v1403, %v1467
        %1469 = vmatmul.f32.gmra.mxu0 %v684
        %v1470 = vpop.f32.mrf.mxu0
        %v1471 = vadd.f32 %v1406, %v1470
        %1472 = vmatmul.f32.gmra.mxu0 %v688
        %v1473 = vpop.f32.mrf.mxu0
        %v1474 = vadd.f32 %v1409, %v1473
        %1475 = vmatmul.f32.gmra.mxu0 %v692
        %v1476 = vpop.f32.mrf.mxu0
        %v1477 = vadd.f32 %v1412, %v1476
        %1478 = vdwg.mxu0
        %1479 = vmatpush.msra.mxu0 %v755
        %1480 = vmatpush.msra.mxu0 %v751
        %1481 = vmatpush.msra.mxu0 %v747
        %1482 = vmatpush.msra.mxu0 %v743
        %1483 = vmatpush.msra.mxu0 %v739
        %1484 = vmatpush.msra.mxu0 %v735
        %1485 = vmatpush.msra.mxu0 %v731
        %1486 = vmatpush.msra.mxu0 %v727
        %1487 = vmatpush.msra.mxu0 %v723
        %1488 = vmatpush.msra.mxu0 %v719
        %1489 = vmatpush.msra.mxu0 %v715
        %1490 = vmatpush.msra.mxu0 %v711
        %1491 = vmatpush.msra.mxu0 %v707
        %1492 = vmatpush.msra.mxu0 %v703
        %1493 = vmatpush.msra.mxu0 %v699
        %1494 = vmatpush.msra.mxu0 %v695
        %1495 = vmatmul.f32.gmra.mxu0 %v629
        %v1496 = vpop.f32.mrf.mxu0
        %v1497 = vadd.f32 %v953, %v1496
        %1498 = vmatmul.f32.gmra.mxu0 %v633
        %v1499 = vpop.f32.mrf.mxu0
        %v1500 = vadd.f32 %v953, %v1499
        %1501 = vmatmul.f32.gmra.mxu0 %v637
        %v1502 = vpop.f32.mrf.mxu0
        %v1503 = vadd.f32 %v953, %v1502
        %1504 = vmatmul.f32.gmra.mxu0 %v641
        %v1505 = vpop.f32.mrf.mxu0
        %v1506 = vadd.f32 %v953, %v1505
        %1507 = vmatmul.f32.gmra.mxu0 %v645
        %v1508 = vpop.f32.mrf.mxu0
        %v1509 = vadd.f32 %v953, %v1508
        %1510 = vmatmul.f32.gmra.mxu0 %v649
        %v1511 = vpop.f32.mrf.mxu0
        %v1512 = vadd.f32 %v953, %v1511
        %1513 = vmatmul.f32.gmra.mxu0 %v653
        %v1514 = vpop.f32.mrf.mxu0
        %v1515 = vadd.f32 %v953, %v1514
        %1516 = vmatmul.f32.gmra.mxu0 %v657
        %v1517 = vpop.f32.mrf.mxu0
        %v1518 = vadd.f32 %v953, %v1517
        %1519 = vmatmul.f32.gmra.mxu0 %v661
        %v1520 = vpop.f32.mrf.mxu0
        %v1521 = vadd.f32 %v953, %v1520
        %1522 = vmatmul.f32.gmra.mxu0 %v665
        %v1523 = vpop.f32.mrf.mxu0
        %v1524 = vadd.f32 %v953, %v1523
        %1525 = vmatmul.f32.gmra.mxu0 %v669
        %v1526 = vpop.f32.mrf.mxu0
        %v1527 = vadd.f32 %v953, %v1526
        %1528 = vmatmul.f32.gmra.mxu0 %v673
        %v1529 = vpop.f32.mrf.mxu0
        %v1530 = vadd.f32 %v953, %v1529
        %1531 = vmatmul.f32.gmra.mxu0 %v677
        %v1532 = vpop.f32.mrf.mxu0
        %v1533 = vadd.f32 %v953, %v1532
        %1534 = vmatmul.f32.gmra.mxu0 %v681
        %v1535 = vpop.f32.mrf.mxu0
        %v1536 = vadd.f32 %v953, %v1535
        %1537 = vmatmul.f32.gmra.mxu0 %v685
        %v1538 = vpop.f32.mrf.mxu0
        %v1539 = vadd.f32 %v953, %v1538
        %1540 = vmatmul.f32.gmra.mxu0 %v689
        %v1541 = vpop.f32.mrf.mxu0
        %v1542 = vadd.f32 %v953, %v1541
        %1543 = vdwg.mxu0
        %1544 = vmatpush.msra.mxu0 %v819
        %1545 = vmatpush.msra.mxu0 %v815
        %1546 = vmatpush.msra.mxu0 %v811
        %1547 = vmatpush.msra.mxu0 %v807
        %1548 = vmatpush.msra.mxu0 %v803
        %1549 = vmatpush.msra.mxu0 %v799
        %1550 = vmatpush.msra.mxu0 %v795
        %1551 = vmatpush.msra.mxu0 %v791
        %1552 = vmatpush.msra.mxu0 %v787
        %1553 = vmatpush.msra.mxu0 %v783
        %1554 = vmatpush.msra.mxu0 %v779
        %1555 = vmatpush.msra.mxu0 %v775
        %1556 = vmatpush.msra.mxu0 %v771
        %1557 = vmatpush.msra.mxu0 %v767
        %1558 = vmatpush.msra.mxu0 %v763
        %1559 = vmatpush.msra.mxu0 %v759
        %1560 = vmatmul.f32.gmra.mxu0 %v630
        %v1561 = vpop.f32.mrf.mxu0
        %v1562 = vadd.f32 %v1497, %v1561
        %1563 = vmatmul.f32.gmra.mxu0 %v634
        %v1564 = vpop.f32.mrf.mxu0
        %v1565 = vadd.f32 %v1500, %v1564
        %1566 = vmatmul.f32.gmra.mxu0 %v638
        %v1567 = vpop.f32.mrf.mxu0
        %v1568 = vadd.f32 %v1503, %v1567
        %1569 = vmatmul.f32.gmra.mxu0 %v642
        %v1570 = vpop.f32.mrf.mxu0
        %v1571 = vadd.f32 %v1506, %v1570
        %1572 = vmatmul.f32.gmra.mxu0 %v646
        %v1573 = vpop.f32.mrf.mxu0
        %v1574 = vadd.f32 %v1509, %v1573
        %1575 = vmatmul.f32.gmra.mxu0 %v650
        %v1576 = vpop.f32.mrf.mxu0
        %v1577 = vadd.f32 %v1512, %v1576
        %1578 = vmatmul.f32.gmra.mxu0 %v654
        %v1579 = vpop.f32.mrf.mxu0
        %v1580 = vadd.f32 %v1515, %v1579
        %1581 = vmatmul.f32.gmra.mxu0 %v658
        %v1582 = vpop.f32.mrf.mxu0
        %v1583 = vadd.f32 %v1518, %v1582
        %1584 = vmatmul.f32.gmra.mxu0 %v662
        %v1585 = vpop.f32.mrf.mxu0
        %v1586 = vadd.f32 %v1521, %v1585
        %1587 = vmatmul.f32.gmra.mxu0 %v666
        %v1588 = vpop.f32.mrf.mxu0
        %v1589 = vadd.f32 %v1524, %v1588
        %1590 = vmatmul.f32.gmra.mxu0 %v670
        %v1591 = vpop.f32.mrf.mxu0
        %v1592 = vadd.f32 %v1527, %v1591
        %1593 = vmatmul.f32.gmra.mxu0 %v674
        %v1594 = vpop.f32.mrf.mxu0
        %v1595 = vadd.f32 %v1530, %v1594
        %1596 = vmatmul.f32.gmra.mxu0 %v678
        %v1597 = vpop.f32.mrf.mxu0
        %v1598 = vadd.f32 %v1533, %v1597
        %1599 = vmatmul.f32.gmra.mxu0 %v682
        %v1600 = vpop.f32.mrf.mxu0
        %v1601 = vadd.f32 %v1536, %v1600
        %1602 = vmatmul.f32.gmra.mxu0 %v686
        %v1603 = vpop.f32.mrf.mxu0
        %v1604 = vadd.f32 %v1539, %v1603
        %1605 = vmatmul.f32.gmra.mxu0 %v690
        %v1606 = vpop.f32.mrf.mxu0
        %v1607 = vadd.f32 %v1542, %v1606
        %1608 = vdwg.mxu0
        %1609 = vmatpush.msra.mxu0 %v883
        %1610 = vmatpush.msra.mxu0 %v879
        %1611 = vmatpush.msra.mxu0 %v875
        %1612 = vmatpush.msra.mxu0 %v871
        %1613 = vmatpush.msra.mxu0 %v867
        %1614 = vmatpush.msra.mxu0 %v863
        %1615 = vmatpush.msra.mxu0 %v859
        %1616 = vmatpush.msra.mxu0 %v855
        %1617 = vmatpush.msra.mxu0 %v851
        %1618 = vmatpush.msra.mxu0 %v847
        %1619 = vmatpush.msra.mxu0 %v843
        %1620 = vmatpush.msra.mxu0 %v839
        %1621 = vmatpush.msra.mxu0 %v835
        %1622 = vmatpush.msra.mxu0 %v831
        %1623 = vmatpush.msra.mxu0 %v827
        %1624 = vmatpush.msra.mxu0 %v823
        %1625 = vmatmul.f32.gmra.mxu0 %v631
        %v1626 = vpop.f32.mrf.mxu0
        %v1627 = vadd.f32 %v1562, %v1626
        %1628 = vmatmul.f32.gmra.mxu0 %v635
        %v1629 = vpop.f32.mrf.mxu0
        %v1630 = vadd.f32 %v1565, %v1629
        %1631 = vmatmul.f32.gmra.mxu0 %v639
        %v1632 = vpop.f32.mrf.mxu0
        %v1633 = vadd.f32 %v1568, %v1632
        %1634 = vmatmul.f32.gmra.mxu0 %v643
        %v1635 = vpop.f32.mrf.mxu0
        %v1636 = vadd.f32 %v1571, %v1635
        %1637 = vmatmul.f32.gmra.mxu0 %v647
        %v1638 = vpop.f32.mrf.mxu0
        %v1639 = vadd.f32 %v1574, %v1638
        %1640 = vmatmul.f32.gmra.mxu0 %v651
        %v1641 = vpop.f32.mrf.mxu0
        %v1642 = vadd.f32 %v1577, %v1641
        %1643 = vmatmul.f32.gmra.mxu0 %v655
        %v1644 = vpop.f32.mrf.mxu0
        %v1645 = vadd.f32 %v1580, %v1644
        %1646 = vmatmul.f32.gmra.mxu0 %v659
        %v1647 = vpop.f32.mrf.mxu0
        %v1648 = vadd.f32 %v1583, %v1647
        %1649 = vmatmul.f32.gmra.mxu0 %v663
        %v1650 = vpop.f32.mrf.mxu0
        %v1651 = vadd.f32 %v1586, %v1650
        %1652 = vmatmul.f32.gmra.mxu0 %v667
        %v1653 = vpop.f32.mrf.mxu0
        %v1654 = vadd.f32 %v1589, %v1653
        %1655 = vmatmul.f32.gmra.mxu0 %v671
        %v1656 = vpop.f32.mrf.mxu0
        %v1657 = vadd.f32 %v1592, %v1656
        %1658 = vmatmul.f32.gmra.mxu0 %v675
        %v1659 = vpop.f32.mrf.mxu0
        %v1660 = vadd.f32 %v1595, %v1659
        %1661 = vmatmul.f32.gmra.mxu0 %v679
        %v1662 = vpop.f32.mrf.mxu0
        %v1663 = vadd.f32 %v1598, %v1662
        %1664 = vmatmul.f32.gmra.mxu0 %v683
        %v1665 = vpop.f32.mrf.mxu0
        %v1666 = vadd.f32 %v1601, %v1665
        %1667 = vmatmul.f32.gmra.mxu0 %v687
        %v1668 = vpop.f32.mrf.mxu0
        %v1669 = vadd.f32 %v1604, %v1668
        %1670 = vmatmul.f32.gmra.mxu0 %v691
        %v1671 = vpop.f32.mrf.mxu0
        %v1672 = vadd.f32 %v1607, %v1671
        %1673 = vdwg.mxu0
        %1674 = vmatpush.msra.mxu0 %v947
        %1675 = vmatpush.msra.mxu0 %v943
        %1676 = vmatpush.msra.mxu0 %v939
        %1677 = vmatpush.msra.mxu0 %v935
        %1678 = vmatpush.msra.mxu0 %v931
        %1679 = vmatpush.msra.mxu0 %v927
        %1680 = vmatpush.msra.mxu0 %v923
        %1681 = vmatpush.msra.mxu0 %v919
        %1682 = vmatpush.msra.mxu0 %v915
        %1683 = vmatpush.msra.mxu0 %v911
        %1684 = vmatpush.msra.mxu0 %v907
        %1685 = vmatpush.msra.mxu0 %v903
        %1686 = vmatpush.msra.mxu0 %v899
        %1687 = vmatpush.msra.mxu0 %v895
        %1688 = vmatpush.msra.mxu0 %v891
        %1689 = vmatpush.msra.mxu0 %v887
        %1690 = vmatmul.f32.gmra.mxu0 %v632
        %v1691 = vpop.f32.mrf.mxu0
        %v1692 = vadd.f32 %v1627, %v1691
        %1693 = vmatmul.f32.gmra.mxu0 %v636
        %v1694 = vpop.f32.mrf.mxu0
        %v1695 = vadd.f32 %v1630, %v1694
        %1696 = vmatmul.f32.gmra.mxu0 %v640
        %v1697 = vpop.f32.mrf.mxu0
        %v1698 = vadd.f32 %v1633, %v1697
        %1699 = vmatmul.f32.gmra.mxu0 %v644
        %v1700 = vpop.f32.mrf.mxu0
        %v1701 = vadd.f32 %v1636, %v1700
        %1702 = vmatmul.f32.gmra.mxu0 %v648
        %v1703 = vpop.f32.mrf.mxu0
        %v1704 = vadd.f32 %v1639, %v1703
        %1705 = vmatmul.f32.gmra.mxu0 %v652
        %v1706 = vpop.f32.mrf.mxu0
        %v1707 = vadd.f32 %v1642, %v1706
        %1708 = vmatmul.f32.gmra.mxu0 %v656
        %v1709 = vpop.f32.mrf.mxu0
        %v1710 = vadd.f32 %v1645, %v1709
        %1711 = vmatmul.f32.gmra.mxu0 %v660
        %v1712 = vpop.f32.mrf.mxu0
        %v1713 = vadd.f32 %v1648, %v1712
        %1714 = vmatmul.f32.gmra.mxu0 %v664
        %v1715 = vpop.f32.mrf.mxu0
        %v1716 = vadd.f32 %v1651, %v1715
        %1717 = vmatmul.f32.gmra.mxu0 %v668
        %v1718 = vpop.f32.mrf.mxu0
        %v1719 = vadd.f32 %v1654, %v1718
        %1720 = vmatmul.f32.gmra.mxu0 %v672
        %v1721 = vpop.f32.mrf.mxu0
        %v1722 = vadd.f32 %v1657, %v1721
        %1723 = vmatmul.f32.gmra.mxu0 %v676
        %v1724 = vpop.f32.mrf.mxu0
        %v1725 = vadd.f32 %v1660, %v1724
        %1726 = vmatmul.f32.gmra.mxu0 %v680
        %v1727 = vpop.f32.mrf.mxu0
        %v1728 = vadd.f32 %v1663, %v1727
        %1729 = vmatmul.f32.gmra.mxu0 %v684
        %v1730 = vpop.f32.mrf.mxu0
        %v1731 = vadd.f32 %v1666, %v1730
        %1732 = vmatmul.f32.gmra.mxu0 %v688
        %v1733 = vpop.f32.mrf.mxu0
        %v1734 = vadd.f32 %v1669, %v1733
        %1735 = vmatmul.f32.gmra.mxu0 %v692
        %v1736 = vpop.f32.mrf.mxu0
        %v1737 = vadd.f32 %v1672, %v1736
        %1738 = vdwg.mxu0
        %1739 = vmatpush.msra.mxu0 %v756
        %1740 = vmatpush.msra.mxu0 %v752
        %1741 = vmatpush.msra.mxu0 %v748
        %1742 = vmatpush.msra.mxu0 %v744
        %1743 = vmatpush.msra.mxu0 %v740
        %1744 = vmatpush.msra.mxu0 %v736
        %1745 = vmatpush.msra.mxu0 %v732
        %1746 = vmatpush.msra.mxu0 %v728
        %1747 = vmatpush.msra.mxu0 %v724
        %1748 = vmatpush.msra.mxu0 %v720
        %1749 = vmatpush.msra.mxu0 %v716
        %1750 = vmatpush.msra.mxu0 %v712
        %1751 = vmatpush.msra.mxu0 %v708
        %1752 = vmatpush.msra.mxu0 %v704
        %1753 = vmatpush.msra.mxu0 %v700
        %1754 = vmatpush.msra.mxu0 %v696
        %1755 = vmatmul.f32.gmra.mxu0 %v629
        %v1756 = vpop.f32.mrf.mxu0
        %v1757 = vadd.f32 %v954, %v1756
        %1758 = vmatmul.f32.gmra.mxu0 %v633
        %v1759 = vpop.f32.mrf.mxu0
        %v1760 = vadd.f32 %v954, %v1759
        %1761 = vmatmul.f32.gmra.mxu0 %v637
        %v1762 = vpop.f32.mrf.mxu0
        %v1763 = vadd.f32 %v954, %v1762
        %1764 = vmatmul.f32.gmra.mxu0 %v641
        %v1765 = vpop.f32.mrf.mxu0
        %v1766 = vadd.f32 %v954, %v1765
        %1767 = vmatmul.f32.gmra.mxu0 %v645
        %v1768 = vpop.f32.mrf.mxu0
        %v1769 = vadd.f32 %v954, %v1768
        %1770 = vmatmul.f32.gmra.mxu0 %v649
        %v1771 = vpop.f32.mrf.mxu0
        %v1772 = vadd.f32 %v954, %v1771
        %1773 = vmatmul.f32.gmra.mxu0 %v653
        %v1774 = vpop.f32.mrf.mxu0
        %v1775 = vadd.f32 %v954, %v1774
        %1776 = vmatmul.f32.gmra.mxu0 %v657
        %v1777 = vpop.f32.mrf.mxu0
        %v1778 = vadd.f32 %v954, %v1777
        %1779 = vmatmul.f32.gmra.mxu0 %v661
        %v1780 = vpop.f32.mrf.mxu0
        %v1781 = vadd.f32 %v954, %v1780
        %1782 = vmatmul.f32.gmra.mxu0 %v665
        %v1783 = vpop.f32.mrf.mxu0
        %v1784 = vadd.f32 %v954, %v1783
        %1785 = vmatmul.f32.gmra.mxu0 %v669
        %v1786 = vpop.f32.mrf.mxu0
        %v1787 = vadd.f32 %v954, %v1786
        %1788 = vmatmul.f32.gmra.mxu0 %v673
        %v1789 = vpop.f32.mrf.mxu0
        %v1790 = vadd.f32 %v954, %v1789
        %1791 = vmatmul.f32.gmra.mxu0 %v677
        %v1792 = vpop.f32.mrf.mxu0
        %v1793 = vadd.f32 %v954, %v1792
        %1794 = vmatmul.f32.gmra.mxu0 %v681
        %v1795 = vpop.f32.mrf.mxu0
        %v1796 = vadd.f32 %v954, %v1795
        %1797 = vmatmul.f32.gmra.mxu0 %v685
        %v1798 = vpop.f32.mrf.mxu0
        %v1799 = vadd.f32 %v954, %v1798
        %1800 = vmatmul.f32.gmra.mxu0 %v689
        %v1801 = vpop.f32.mrf.mxu0
        %v1802 = vadd.f32 %v954, %v1801
        %1803 = vdwg.mxu0
        %1804 = vmatpush.msra.mxu0 %v820
        %1805 = vmatpush.msra.mxu0 %v816
        %1806 = vmatpush.msra.mxu0 %v812
        %1807 = vmatpush.msra.mxu0 %v808
        %1808 = vmatpush.msra.mxu0 %v804
        %1809 = vmatpush.msra.mxu0 %v800
        %1810 = vmatpush.msra.mxu0 %v796
        %1811 = vmatpush.msra.mxu0 %v792
        %1812 = vmatpush.msra.mxu0 %v788
        %1813 = vmatpush.msra.mxu0 %v784
        %1814 = vmatpush.msra.mxu0 %v780
        %1815 = vmatpush.msra.mxu0 %v776
        %1816 = vmatpush.msra.mxu0 %v772
        %1817 = vmatpush.msra.mxu0 %v768
        %1818 = vmatpush.msra.mxu0 %v764
        %1819 = vmatpush.msra.mxu0 %v760
        %1820 = vmatmul.f32.gmra.mxu0 %v630
        %v1821 = vpop.f32.mrf.mxu0
        %v1822 = vadd.f32 %v1757, %v1821
        %1823 = vmatmul.f32.gmra.mxu0 %v634
        %v1824 = vpop.f32.mrf.mxu0
        %v1825 = vadd.f32 %v1760, %v1824
        %1826 = vmatmul.f32.gmra.mxu0 %v638
        %v1827 = vpop.f32.mrf.mxu0
        %v1828 = vadd.f32 %v1763, %v1827
        %1829 = vmatmul.f32.gmra.mxu0 %v642
        %v1830 = vpop.f32.mrf.mxu0
        %v1831 = vadd.f32 %v1766, %v1830
        %1832 = vmatmul.f32.gmra.mxu0 %v646
        %v1833 = vpop.f32.mrf.mxu0
        %v1834 = vadd.f32 %v1769, %v1833
        %1835 = vmatmul.f32.gmra.mxu0 %v650
        %v1836 = vpop.f32.mrf.mxu0
        %v1837 = vadd.f32 %v1772, %v1836
        %1838 = vmatmul.f32.gmra.mxu0 %v654
        %v1839 = vpop.f32.mrf.mxu0
        %v1840 = vadd.f32 %v1775, %v1839
        %1841 = vmatmul.f32.gmra.mxu0 %v658
        %v1842 = vpop.f32.mrf.mxu0
        %v1843 = vadd.f32 %v1778, %v1842
        %1844 = vmatmul.f32.gmra.mxu0 %v662
        %v1845 = vpop.f32.mrf.mxu0
        %v1846 = vadd.f32 %v1781, %v1845
        %1847 = vmatmul.f32.gmra.mxu0 %v666
        %v1848 = vpop.f32.mrf.mxu0
        %v1849 = vadd.f32 %v1784, %v1848
        %1850 = vmatmul.f32.gmra.mxu0 %v670
        %v1851 = vpop.f32.mrf.mxu0
        %v1852 = vadd.f32 %v1787, %v1851
        %1853 = vmatmul.f32.gmra.mxu0 %v674
        %v1854 = vpop.f32.mrf.mxu0
        %v1855 = vadd.f32 %v1790, %v1854
        %1856 = vmatmul.f32.gmra.mxu0 %v678
        %v1857 = vpop.f32.mrf.mxu0
        %v1858 = vadd.f32 %v1793, %v1857
        %1859 = vmatmul.f32.gmra.mxu0 %v682
        %v1860 = vpop.f32.mrf.mxu0
        %v1861 = vadd.f32 %v1796, %v1860
        %1862 = vmatmul.f32.gmra.mxu0 %v686
        %v1863 = vpop.f32.mrf.mxu0
        %v1864 = vadd.f32 %v1799, %v1863
        %1865 = vmatmul.f32.gmra.mxu0 %v690
        %v1866 = vpop.f32.mrf.mxu0
        %v1867 = vadd.f32 %v1802, %v1866
        %1868 = vdwg.mxu0
        %1869 = vmatpush.msra.mxu0 %v884
        %1870 = vmatpush.msra.mxu0 %v880
        %1871 = vmatpush.msra.mxu0 %v876
        %1872 = vmatpush.msra.mxu0 %v872
        %1873 = vmatpush.msra.mxu0 %v868
        %1874 = vmatpush.msra.mxu0 %v864
        %1875 = vmatpush.msra.mxu0 %v860
        %1876 = vmatpush.msra.mxu0 %v856
        %1877 = vmatpush.msra.mxu0 %v852
        %1878 = vmatpush.msra.mxu0 %v848
        %1879 = vmatpush.msra.mxu0 %v844
        %1880 = vmatpush.msra.mxu0 %v840
        %1881 = vmatpush.msra.mxu0 %v836
        %1882 = vmatpush.msra.mxu0 %v832
        %1883 = vmatpush.msra.mxu0 %v828
        %1884 = vmatpush.msra.mxu0 %v824
        %1885 = vmatmul.f32.gmra.mxu0 %v631
        %v1886 = vpop.f32.mrf.mxu0
        %v1887 = vadd.f32 %v1822, %v1886
        %1888 = vmatmul.f32.gmra.mxu0 %v635
        %v1889 = vpop.f32.mrf.mxu0
        %v1890 = vadd.f32 %v1825, %v1889
        %1891 = vmatmul.f32.gmra.mxu0 %v639
        %v1892 = vpop.f32.mrf.mxu0
        %v1893 = vadd.f32 %v1828, %v1892
        %1894 = vmatmul.f32.gmra.mxu0 %v643
        %v1895 = vpop.f32.mrf.mxu0
        %v1896 = vadd.f32 %v1831, %v1895
        %1897 = vmatmul.f32.gmra.mxu0 %v647
        %v1898 = vpop.f32.mrf.mxu0
        %v1899 = vadd.f32 %v1834, %v1898
        %1900 = vmatmul.f32.gmra.mxu0 %v651
        %v1901 = vpop.f32.mrf.mxu0
        %v1902 = vadd.f32 %v1837, %v1901
        %1903 = vmatmul.f32.gmra.mxu0 %v655
        %v1904 = vpop.f32.mrf.mxu0
        %v1905 = vadd.f32 %v1840, %v1904
        %1906 = vmatmul.f32.gmra.mxu0 %v659
        %v1907 = vpop.f32.mrf.mxu0
        %v1908 = vadd.f32 %v1843, %v1907
        %1909 = vmatmul.f32.gmra.mxu0 %v663
        %v1910 = vpop.f32.mrf.mxu0
        %v1911 = vadd.f32 %v1846, %v1910
        %1912 = vmatmul.f32.gmra.mxu0 %v667
        %v1913 = vpop.f32.mrf.mxu0
        %v1914 = vadd.f32 %v1849, %v1913
        %1915 = vmatmul.f32.gmra.mxu0 %v671
        %v1916 = vpop.f32.mrf.mxu0
        %v1917 = vadd.f32 %v1852, %v1916
        %1918 = vmatmul.f32.gmra.mxu0 %v675
        %v1919 = vpop.f32.mrf.mxu0
        %v1920 = vadd.f32 %v1855, %v1919
        %1921 = vmatmul.f32.gmra.mxu0 %v679
        %v1922 = vpop.f32.mrf.mxu0
        %v1923 = vadd.f32 %v1858, %v1922
        %1924 = vmatmul.f32.gmra.mxu0 %v683
        %v1925 = vpop.f32.mrf.mxu0
        %v1926 = vadd.f32 %v1861, %v1925
        %1927 = vmatmul.f32.gmra.mxu0 %v687
        %v1928 = vpop.f32.mrf.mxu0
        %v1929 = vadd.f32 %v1864, %v1928
        %1930 = vmatmul.f32.gmra.mxu0 %v691
        %v1931 = vpop.f32.mrf.mxu0
        %v1932 = vadd.f32 %v1867, %v1931
        %1933 = vdwg.mxu0
        %1934 = vmatpush.msra.mxu0 %v948
        %1935 = vmatpush.msra.mxu0 %v944
        %1936 = vmatpush.msra.mxu0 %v940
        %1937 = vmatpush.msra.mxu0 %v936
        %1938 = vmatpush.msra.mxu0 %v932
        %1939 = vmatpush.msra.mxu0 %v928
        %1940 = vmatpush.msra.mxu0 %v924
        %1941 = vmatpush.msra.mxu0 %v920
        %1942 = vmatpush.msra.mxu0 %v916
        %1943 = vmatpush.msra.mxu0 %v912
        %1944 = vmatpush.msra.mxu0 %v908
        %1945 = vmatpush.msra.mxu0 %v904
        %1946 = vmatpush.msra.mxu0 %v900
        %1947 = vmatpush.msra.mxu0 %v896
        %1948 = vmatpush.msra.mxu0 %v892
        %1949 = vmatpush.msra.mxu0 %v888
        %1950 = vmatmul.f32.gmra.mxu0 %v632
        %v1951 = vpop.f32.mrf.mxu0
        %v1952 = vadd.f32 %v1887, %v1951
        %1953 = vmatmul.f32.gmra.mxu0 %v636
        %v1954 = vpop.f32.mrf.mxu0
        %v1955 = vadd.f32 %v1890, %v1954
        %1956 = vmatmul.f32.gmra.mxu0 %v640
        %v1957 = vpop.f32.mrf.mxu0
        %v1958 = vadd.f32 %v1893, %v1957
        %1959 = vmatmul.f32.gmra.mxu0 %v644
        %v1960 = vpop.f32.mrf.mxu0
        %v1961 = vadd.f32 %v1896, %v1960
        %1962 = vmatmul.f32.gmra.mxu0 %v648
        %v1963 = vpop.f32.mrf.mxu0
        %v1964 = vadd.f32 %v1899, %v1963
        %1965 = vmatmul.f32.gmra.mxu0 %v652
        %v1966 = vpop.f32.mrf.mxu0
        %v1967 = vadd.f32 %v1902, %v1966
        %1968 = vmatmul.f32.gmra.mxu0 %v656
        %v1969 = vpop.f32.mrf.mxu0
        %v1970 = vadd.f32 %v1905, %v1969
        %1971 = vmatmul.f32.gmra.mxu0 %v660
        %v1972 = vpop.f32.mrf.mxu0
        %v1973 = vadd.f32 %v1908, %v1972
        %1974 = vmatmul.f32.gmra.mxu0 %v664
        %v1975 = vpop.f32.mrf.mxu0
        %v1976 = vadd.f32 %v1911, %v1975
        %1977 = vmatmul.f32.gmra.mxu0 %v668
        %v1978 = vpop.f32.mrf.mxu0
        %v1979 = vadd.f32 %v1914, %v1978
        %1980 = vmatmul.f32.gmra.mxu0 %v672
        %v1981 = vpop.f32.mrf.mxu0
        %v1982 = vadd.f32 %v1917, %v1981
        %1983 = vmatmul.f32.gmra.mxu0 %v676
        %v1984 = vpop.f32.mrf.mxu0
        %v1985 = vadd.f32 %v1920, %v1984
        %1986 = vmatmul.f32.gmra.mxu0 %v680
        %v1987 = vpop.f32.mrf.mxu0
        %v1988 = vadd.f32 %v1923, %v1987
        %1989 = vmatmul.f32.gmra.mxu0 %v684
        %v1990 = vpop.f32.mrf.mxu0
        %v1991 = vadd.f32 %v1926, %v1990
        %1992 = vmatmul.f32.gmra.mxu0 %v688
        %v1993 = vpop.f32.mrf.mxu0
        %v1994 = vadd.f32 %v1929, %v1993
        %1995 = vmatmul.f32.gmra.mxu0 %v692
        %v1996 = vpop.f32.mrf.mxu0
        %v1997 = vadd.f32 %v1932, %v1996
        %1998 = vdwg.mxu0
        %1999 = vst [vmem:[#allocation2] sm:$0xff] %v1172
        %2000 = vst [vmem:[#allocation2 + $0x8] sm:$0xff] %v1432
        %2001 = vst [vmem:[#allocation2 + $0x10] sm:$0xff] %v1692
        %2002 = vst [vmem:[#allocation2 + $0x18] sm:$0xff] %v1952
        %2003 = vst [vmem:[#allocation2 + $0x20] sm:$0xff] %v1175
        %2004 = vst [vmem:[#allocation2 + $0x28] sm:$0xff] %v1435
        %2005 = vst [vmem:[#allocation2 + $0x30] sm:$0xff] %v1695
        %2006 = vst [vmem:[#allocation2 + $0x38] sm:$0xff] %v1955
        %2007 = vst [vmem:[#allocation2 + $0x40] sm:$0xff] %v1178
        %2008 = vst [vmem:[#allocation2 + $0x48] sm:$0xff] %v1438
        %2009 = vst [vmem:[#allocation2 + $0x50] sm:$0xff] %v1698
        %2010 = vst [vmem:[#allocation2 + $0x58] sm:$0xff] %v1958
        %2011 = vst [vmem:[#allocation2 + $0x60] sm:$0xff] %v1181
        %2012 = vst [vmem:[#allocation2 + $0x68] sm:$0xff] %v1441
        %2013 = vst [vmem:[#allocation2 + $0x70] sm:$0xff] %v1701
        %2014 = vst [vmem:[#allocation2 + $0x78] sm:$0xff] %v1961
        %2015 = vst [vmem:[#allocation2 + $0x80] sm:$0xff] %v1184
        %2016 = vst [vmem:[#allocation2 + $0x88] sm:$0xff] %v1444
        %2017 = vst [vmem:[#allocation2 + $0x90] sm:$0xff] %v1704
        %2018 = vst [vmem:[#allocation2 + $0x98] sm:$0xff] %v1964
        %2019 = vst [vmem:[#allocation2 + $0xa0] sm:$0xff] %v1187
        %2020 = vst [vmem:[#allocation2 + $0xa8] sm:$0xff] %v1447
        %2021 = vst [vmem:[#allocation2 + $0xb0] sm:$0xff] %v1707
        %2022 = vst [vmem:[#allocation2 + $0xb8] sm:$0xff] %v1967
        %2023 = vst [vmem:[#allocation2 + $0xc0] sm:$0xff] %v1190
        %2024 = vst [vmem:[#allocation2 + $0xc8] sm:$0xff] %v1450
        %2025 = vst [vmem:[#allocation2 + $0xd0] sm:$0xff] %v1710
        %2026 = vst [vmem:[#allocation2 + $0xd8] sm:$0xff] %v1970
        %2027 = vst [vmem:[#allocation2 + $0xe0] sm:$0xff] %v1193
        %2028 = vst [vmem:[#allocation2 + $0xe8] sm:$0xff] %v1453
        %2029 = vst [vmem:[#allocation2 + $0xf0] sm:$0xff] %v1713
        %2030 = vst [vmem:[#allocation2 + $0xf8] sm:$0xff] %v1973
        %2031 = vst [vmem:[#allocation2 + $0x100] sm:$0xff] %v1196
        %2032 = vst [vmem:[#allocation2 + $0x108] sm:$0xff] %v1456
        %2033 = vst [vmem:[#allocation2 + $0x110] sm:$0xff] %v1716
        %2034 = vst [vmem:[#allocation2 + $0x118] sm:$0xff] %v1976
        %2035 = vst [vmem:[#allocation2 + $0x120] sm:$0xff] %v1199
        %2036 = vst [vmem:[#allocation2 + $0x128] sm:$0xff] %v1459
        %2037 = vst [vmem:[#allocation2 + $0x130] sm:$0xff] %v1719
        %2038 = vst [vmem:[#allocation2 + $0x138] sm:$0xff] %v1979
        %2039 = vst [vmem:[#allocation2 + $0x140] sm:$0xff] %v1202
        %2040 = vst [vmem:[#allocation2 + $0x148] sm:$0xff] %v1462
        %2041 = vst [vmem:[#allocation2 + $0x150] sm:$0xff] %v1722
        %2042 = vst [vmem:[#allocation2 + $0x158] sm:$0xff] %v1982
        %2043 = vst [vmem:[#allocation2 + $0x160] sm:$0xff] %v1205
        %2044 = vst [vmem:[#allocation2 + $0x168] sm:$0xff] %v1465
        %2045 = vst [vmem:[#allocation2 + $0x170] sm:$0xff] %v1725
        %2046 = vst [vmem:[#allocation2 + $0x178] sm:$0xff] %v1985
        %2047 = vst [vmem:[#allocation2 + $0x180] sm:$0xff] %v1208
        %2048 = vst [vmem:[#allocation2 + $0x188] sm:$0xff] %v1468
        %2049 = vst [vmem:[#allocation2 + $0x190] sm:$0xff] %v1728
        %2050 = vst [vmem:[#allocation2 + $0x198] sm:$0xff] %v1988
        %2051 = vst [vmem:[#allocation2 + $0x1a0] sm:$0xff] %v1211
        %2052 = vst [vmem:[#allocation2 + $0x1a8] sm:$0xff] %v1471
        %2053 = vst [vmem:[#allocation2 + $0x1b0] sm:$0xff] %v1731
        %2054 = vst [vmem:[#allocation2 + $0x1b8] sm:$0xff] %v1991
        %2055 = vst [vmem:[#allocation2 + $0x1c0] sm:$0xff] %v1214
        %2056 = vst [vmem:[#allocation2 + $0x1c8] sm:$0xff] %v1474
        %2057 = vst [vmem:[#allocation2 + $0x1d0] sm:$0xff] %v1734
        %2058 = vst [vmem:[#allocation2 + $0x1d8] sm:$0xff] %v1994
        %2059 = vst [vmem:[#allocation2 + $0x1e0] sm:$0xff] %v1217
        %2060 = vst [vmem:[#allocation2 + $0x1e8] sm:$0xff] %v1477
        %2061 = vst [vmem:[#allocation2 + $0x1f0] sm:$0xff] %v1737
        %2062 = vst [vmem:[#allocation2 + $0x1f8] sm:$0xff] %v1997
        %v2063 = vld [vmem:[#allocation12] sm:$0xff]
        %v2064 = vld [vmem:[#allocation12 + $0x8] sm:$0xff]
        %v2065 = vld [vmem:[#allocation12 + $0x10] sm:$0xff]
        %v2066 = vld [vmem:[#allocation12 + $0x18] sm:$0xff]
        %v2067 = vld [vmem:[#allocation12 + $0x20] sm:$0xff]
        %v2068 = vld [vmem:[#allocation12 + $0x28] sm:$0xff]
        %v2069 = vld [vmem:[#allocation12 + $0x30] sm:$0xff]
        %v2070 = vld [vmem:[#allocation12 + $0x38] sm:$0xff]
        %v2071 = vld [vmem:[#allocation12 + $0x40] sm:$0xff]
        %v2072 = vld [vmem:[#allocation12 + $0x48] sm:$0xff]
        %v2073 = vld [vmem:[#allocation12 + $0x50] sm:$0xff]
        %v2074 = vld [vmem:[#allocation12 + $0x58] sm:$0xff]
        %v2075 = vld [vmem:[#allocation12 + $0x60] sm:$0xff]
        %v2076 = vld [vmem:[#allocation12 + $0x68] sm:$0xff]
        %v2077 = vld [vmem:[#allocation12 + $0x70] sm:$0xff]
        %v2078 = vld [vmem:[#allocation12 + $0x78] sm:$0xff]
        %v2079 = vld [vmem:[#allocation12 + $0x80] sm:$0xff]
        %v2080 = vld [vmem:[#allocation12 + $0x88] sm:$0xff]
        %v2081 = vld [vmem:[#allocation12 + $0x90] sm:$0xff]
        %v2082 = vld [vmem:[#allocation12 + $0x98] sm:$0xff]
        %v2083 = vld [vmem:[#allocation12 + $0xa0] sm:$0xff]
        %v2084 = vld [vmem:[#allocation12 + $0xa8] sm:$0xff]
        %v2085 = vld [vmem:[#allocation12 + $0xb0] sm:$0xff]
        %v2086 = vld [vmem:[#allocation12 + $0xb8] sm:$0xff]
        %v2087 = vld [vmem:[#allocation12 + $0xc0] sm:$0xff]
        %v2088 = vld [vmem:[#allocation12 + $0xc8] sm:$0xff]
        %v2089 = vld [vmem:[#allocation12 + $0xd0] sm:$0xff]
        %v2090 = vld [vmem:[#allocation12 + $0xd8] sm:$0xff]
        %v2091 = vld [vmem:[#allocation12 + $0xe0] sm:$0xff]
        %v2092 = vld [vmem:[#allocation12 + $0xe8] sm:$0xff]
        %v2093 = vld [vmem:[#allocation12 + $0xf0] sm:$0xff]
        %v2094 = vld [vmem:[#allocation12 + $0xf8] sm:$0xff]
        %v2095 = vld [vmem:[#allocation12 + $0x100] sm:$0xff]
        %v2096 = vld [vmem:[#allocation12 + $0x108] sm:$0xff]
        %v2097 = vld [vmem:[#allocation12 + $0x110] sm:$0xff]
        %v2098 = vld [vmem:[#allocation12 + $0x118] sm:$0xff]
        %v2099 = vld [vmem:[#allocation12 + $0x120] sm:$0xff]
        %v2100 = vld [vmem:[#allocation12 + $0x128] sm:$0xff]
        %v2101 = vld [vmem:[#allocation12 + $0x130] sm:$0xff]
        %v2102 = vld [vmem:[#allocation12 + $0x138] sm:$0xff]
        %v2103 = vld [vmem:[#allocation12 + $0x140] sm:$0xff]
        %v2104 = vld [vmem:[#allocation12 + $0x148] sm:$0xff]
        %v2105 = vld [vmem:[#allocation12 + $0x150] sm:$0xff]
        %v2106 = vld [vmem:[#allocation12 + $0x158] sm:$0xff]
        %v2107 = vld [vmem:[#allocation12 + $0x160] sm:$0xff]
        %v2108 = vld [vmem:[#allocation12 + $0x168] sm:$0xff]
        %v2109 = vld [vmem:[#allocation12 + $0x170] sm:$0xff]
        %v2110 = vld [vmem:[#allocation12 + $0x178] sm:$0xff]
        %v2111 = vld [vmem:[#allocation12 + $0x180] sm:$0xff]
        %v2112 = vld [vmem:[#allocation12 + $0x188] sm:$0xff]
        %v2113 = vld [vmem:[#allocation12 + $0x190] sm:$0xff]
        %v2114 = vld [vmem:[#allocation12 + $0x198] sm:$0xff]
        %v2115 = vld [vmem:[#allocation12 + $0x1a0] sm:$0xff]
        %v2116 = vld [vmem:[#allocation12 + $0x1a8] sm:$0xff]
        %v2117 = vld [vmem:[#allocation12 + $0x1b0] sm:$0xff]
        %v2118 = vld [vmem:[#allocation12 + $0x1b8] sm:$0xff]
        %v2119 = vld [vmem:[#allocation12 + $0x1c0] sm:$0xff]
        %v2120 = vld [vmem:[#allocation12 + $0x1c8] sm:$0xff]
        %v2121 = vld [vmem:[#allocation12 + $0x1d0] sm:$0xff]
        %v2122 = vld [vmem:[#allocation12 + $0x1d8] sm:$0xff]
        %v2123 = vld [vmem:[#allocation12 + $0x1e0] sm:$0xff]
        %v2124 = vld [vmem:[#allocation12 + $0x1e8] sm:$0xff]
        %v2125 = vld [vmem:[#allocation12 + $0x1f0] sm:$0xff]
        %v2126 = vld [vmem:[#allocation12 + $0x1f8] sm:$0xff]
        %v2127 = vld [vmem:[#allocation12 + $0x200] sm:$0xff]
        %v2128 = vld [vmem:[#allocation12 + $0x208] sm:$0xff]
        %v2129 = vld [vmem:[#allocation12 + $0x210] sm:$0xff]
        %v2130 = vld [vmem:[#allocation12 + $0x218] sm:$0xff]
        %v2131 = vld [vmem:[#allocation12 + $0x220] sm:$0xff]
        %v2132 = vld [vmem:[#allocation12 + $0x228] sm:$0xff]
        %v2133 = vld [vmem:[#allocation12 + $0x230] sm:$0xff]
        %v2134 = vld [vmem:[#allocation12 + $0x238] sm:$0xff]
        %v2135 = vld [vmem:[#allocation12 + $0x240] sm:$0xff]
        %v2136 = vld [vmem:[#allocation12 + $0x248] sm:$0xff]
        %v2137 = vld [vmem:[#allocation12 + $0x250] sm:$0xff]
        %v2138 = vld [vmem:[#allocation12 + $0x258] sm:$0xff]
        %v2139 = vld [vmem:[#allocation12 + $0x260] sm:$0xff]
        %v2140 = vld [vmem:[#allocation12 + $0x268] sm:$0xff]
        %v2141 = vld [vmem:[#allocation12 + $0x270] sm:$0xff]
        %v2142 = vld [vmem:[#allocation12 + $0x278] sm:$0xff]
        %v2143 = vld [vmem:[#allocation12 + $0x280] sm:$0xff]
        %v2144 = vld [vmem:[#allocation12 + $0x288] sm:$0xff]
        %v2145 = vld [vmem:[#allocation12 + $0x290] sm:$0xff]
        %v2146 = vld [vmem:[#allocation12 + $0x298] sm:$0xff]
        %v2147 = vld [vmem:[#allocation12 + $0x2a0] sm:$0xff]
        %v2148 = vld [vmem:[#allocation12 + $0x2a8] sm:$0xff]
        %v2149 = vld [vmem:[#allocation12 + $0x2b0] sm:$0xff]
        %v2150 = vld [vmem:[#allocation12 + $0x2b8] sm:$0xff]
        %v2151 = vld [vmem:[#allocation12 + $0x2c0] sm:$0xff]
        %v2152 = vld [vmem:[#allocation12 + $0x2c8] sm:$0xff]
        %v2153 = vld [vmem:[#allocation12 + $0x2d0] sm:$0xff]
        %v2154 = vld [vmem:[#allocation12 + $0x2d8] sm:$0xff]
        %v2155 = vld [vmem:[#allocation12 + $0x2e0] sm:$0xff]
        %v2156 = vld [vmem:[#allocation12 + $0x2e8] sm:$0xff]
        %v2157 = vld [vmem:[#allocation12 + $0x2f0] sm:$0xff]
        %v2158 = vld [vmem:[#allocation12 + $0x2f8] sm:$0xff]
        %v2159 = vld [vmem:[#allocation12 + $0x300] sm:$0xff]
        %v2160 = vld [vmem:[#allocation12 + $0x308] sm:$0xff]
        %v2161 = vld [vmem:[#allocation12 + $0x310] sm:$0xff]
        %v2162 = vld [vmem:[#allocation12 + $0x318] sm:$0xff]
        %v2163 = vld [vmem:[#allocation12 + $0x320] sm:$0xff]
        %v2164 = vld [vmem:[#allocation12 + $0x328] sm:$0xff]
        %v2165 = vld [vmem:[#allocation12 + $0x330] sm:$0xff]
        %v2166 = vld [vmem:[#allocation12 + $0x338] sm:$0xff]
        %v2167 = vld [vmem:[#allocation12 + $0x340] sm:$0xff]
        %v2168 = vld [vmem:[#allocation12 + $0x348] sm:$0xff]
        %v2169 = vld [vmem:[#allocation12 + $0x350] sm:$0xff]
        %v2170 = vld [vmem:[#allocation12 + $0x358] sm:$0xff]
        %v2171 = vld [vmem:[#allocation12 + $0x360] sm:$0xff]
        %v2172 = vld [vmem:[#allocation12 + $0x368] sm:$0xff]
        %v2173 = vld [vmem:[#allocation12 + $0x370] sm:$0xff]
        %v2174 = vld [vmem:[#allocation12 + $0x378] sm:$0xff]
        %v2175 = vld [vmem:[#allocation12 + $0x380] sm:$0xff]
        %v2176 = vld [vmem:[#allocation12 + $0x388] sm:$0xff]
        %v2177 = vld [vmem:[#allocation12 + $0x390] sm:$0xff]
        %v2178 = vld [vmem:[#allocation12 + $0x398] sm:$0xff]
        %v2179 = vld [vmem:[#allocation12 + $0x3a0] sm:$0xff]
        %v2180 = vld [vmem:[#allocation12 + $0x3a8] sm:$0xff]
        %v2181 = vld [vmem:[#allocation12 + $0x3b0] sm:$0xff]
        %v2182 = vld [vmem:[#allocation12 + $0x3b8] sm:$0xff]
        %v2183 = vld [vmem:[#allocation12 + $0x3c0] sm:$0xff]
        %v2184 = vld [vmem:[#allocation12 + $0x3c8] sm:$0xff]
        %v2185 = vld [vmem:[#allocation12 + $0x3d0] sm:$0xff]
        %v2186 = vld [vmem:[#allocation12 + $0x3d8] sm:$0xff]
        %v2187 = vld [vmem:[#allocation12 + $0x3e0] sm:$0xff]
        %v2188 = vld [vmem:[#allocation12 + $0x3e8] sm:$0xff]
        %v2189 = vld [vmem:[#allocation12 + $0x3f0] sm:$0xff]
        %v2190 = vld [vmem:[#allocation12 + $0x3f8] sm:$0xff]
        %v2191 = vld [vmem:[#allocation12 + $0x400] sm:$0xff]
        %v2192 = vld [vmem:[#allocation12 + $0x408] sm:$0xff]
        %v2193 = vld [vmem:[#allocation12 + $0x410] sm:$0xff]
        %v2194 = vld [vmem:[#allocation12 + $0x418] sm:$0xff]
        %v2195 = vld [vmem:[#allocation12 + $0x420] sm:$0xff]
        %v2196 = vld [vmem:[#allocation12 + $0x428] sm:$0xff]
        %v2197 = vld [vmem:[#allocation12 + $0x430] sm:$0xff]
        %v2198 = vld [vmem:[#allocation12 + $0x438] sm:$0xff]
        %v2199 = vld [vmem:[#allocation12 + $0x440] sm:$0xff]
        %v2200 = vld [vmem:[#allocation12 + $0x448] sm:$0xff]
        %v2201 = vld [vmem:[#allocation12 + $0x450] sm:$0xff]
        %v2202 = vld [vmem:[#allocation12 + $0x458] sm:$0xff]
        %v2203 = vld [vmem:[#allocation12 + $0x460] sm:$0xff]
        %v2204 = vld [vmem:[#allocation12 + $0x468] sm:$0xff]
        %v2205 = vld [vmem:[#allocation12 + $0x470] sm:$0xff]
        %v2206 = vld [vmem:[#allocation12 + $0x478] sm:$0xff]
        %v2207 = vld [vmem:[#allocation12 + $0x480] sm:$0xff]
        %v2208 = vld [vmem:[#allocation12 + $0x488] sm:$0xff]
        %v2209 = vld [vmem:[#allocation12 + $0x490] sm:$0xff]
        %v2210 = vld [vmem:[#allocation12 + $0x498] sm:$0xff]
        %v2211 = vld [vmem:[#allocation12 + $0x4a0] sm:$0xff]
        %v2212 = vld [vmem:[#allocation12 + $0x4a8] sm:$0xff]
        %v2213 = vld [vmem:[#allocation12 + $0x4b0] sm:$0xff]
        %v2214 = vld [vmem:[#allocation12 + $0x4b8] sm:$0xff]
        %v2215 = vld [vmem:[#allocation12 + $0x4c0] sm:$0xff]
        %v2216 = vld [vmem:[#allocation12 + $0x4c8] sm:$0xff]
        %v2217 = vld [vmem:[#allocation12 + $0x4d0] sm:$0xff]
        %v2218 = vld [vmem:[#allocation12 + $0x4d8] sm:$0xff]
        %v2219 = vld [vmem:[#allocation12 + $0x4e0] sm:$0xff]
        %v2220 = vld [vmem:[#allocation12 + $0x4e8] sm:$0xff]
        %v2221 = vld [vmem:[#allocation12 + $0x4f0] sm:$0xff]
        %v2222 = vld [vmem:[#allocation12 + $0x4f8] sm:$0xff]
        %v2223 = vld [vmem:[#allocation12 + $0x500] sm:$0xff]
        %v2224 = vld [vmem:[#allocation12 + $0x508] sm:$0xff]
        %v2225 = vld [vmem:[#allocation12 + $0x510] sm:$0xff]
        %v2226 = vld [vmem:[#allocation12 + $0x518] sm:$0xff]
        %v2227 = vld [vmem:[#allocation12 + $0x520] sm:$0xff]
        %v2228 = vld [vmem:[#allocation12 + $0x528] sm:$0xff]
        %v2229 = vld [vmem:[#allocation12 + $0x530] sm:$0xff]
        %v2230 = vld [vmem:[#allocation12 + $0x538] sm:$0xff]
        %v2231 = vld [vmem:[#allocation12 + $0x540] sm:$0xff]
        %v2232 = vld [vmem:[#allocation12 + $0x548] sm:$0xff]
        %v2233 = vld [vmem:[#allocation12 + $0x550] sm:$0xff]
        %v2234 = vld [vmem:[#allocation12 + $0x558] sm:$0xff]
        %v2235 = vld [vmem:[#allocation12 + $0x560] sm:$0xff]
        %v2236 = vld [vmem:[#allocation12 + $0x568] sm:$0xff]
        %v2237 = vld [vmem:[#allocation12 + $0x570] sm:$0xff]
        %v2238 = vld [vmem:[#allocation12 + $0x578] sm:$0xff]
        %v2239 = vld [vmem:[#allocation12 + $0x580] sm:$0xff]
        %v2240 = vld [vmem:[#allocation12 + $0x588] sm:$0xff]
        %v2241 = vld [vmem:[#allocation12 + $0x590] sm:$0xff]
        %v2242 = vld [vmem:[#allocation12 + $0x598] sm:$0xff]
        %v2243 = vld [vmem:[#allocation12 + $0x5a0] sm:$0xff]
        %v2244 = vld [vmem:[#allocation12 + $0x5a8] sm:$0xff]
        %v2245 = vld [vmem:[#allocation12 + $0x5b0] sm:$0xff]
        %v2246 = vld [vmem:[#allocation12 + $0x5b8] sm:$0xff]
        %v2247 = vld [vmem:[#allocation12 + $0x5c0] sm:$0xff]
        %v2248 = vld [vmem:[#allocation12 + $0x5c8] sm:$0xff]
        %v2249 = vld [vmem:[#allocation12 + $0x5d0] sm:$0xff]
        %v2250 = vld [vmem:[#allocation12 + $0x5d8] sm:$0xff]
        %v2251 = vld [vmem:[#allocation12 + $0x5e0] sm:$0xff]
        %v2252 = vld [vmem:[#allocation12 + $0x5e8] sm:$0xff]
        %v2253 = vld [vmem:[#allocation12 + $0x5f0] sm:$0xff]
        %v2254 = vld [vmem:[#allocation12 + $0x5f8] sm:$0xff]
        %v2255 = vld [vmem:[#allocation12 + $0x600] sm:$0xff]
        %v2256 = vld [vmem:[#allocation12 + $0x608] sm:$0xff]
        %v2257 = vld [vmem:[#allocation12 + $0x610] sm:$0xff]
        %v2258 = vld [vmem:[#allocation12 + $0x618] sm:$0xff]
        %v2259 = vld [vmem:[#allocation12 + $0x620] sm:$0xff]
        %v2260 = vld [vmem:[#allocation12 + $0x628] sm:$0xff]
        %v2261 = vld [vmem:[#allocation12 + $0x630] sm:$0xff]
        %v2262 = vld [vmem:[#allocation12 + $0x638] sm:$0xff]
        %v2263 = vld [vmem:[#allocation12 + $0x640] sm:$0xff]
        %v2264 = vld [vmem:[#allocation12 + $0x648] sm:$0xff]
        %v2265 = vld [vmem:[#allocation12 + $0x650] sm:$0xff]
        %v2266 = vld [vmem:[#allocation12 + $0x658] sm:$0xff]
        %v2267 = vld [vmem:[#allocation12 + $0x660] sm:$0xff]
        %v2268 = vld [vmem:[#allocation12 + $0x668] sm:$0xff]
        %v2269 = vld [vmem:[#allocation12 + $0x670] sm:$0xff]
        %v2270 = vld [vmem:[#allocation12 + $0x678] sm:$0xff]
        %v2271 = vld [vmem:[#allocation12 + $0x680] sm:$0xff]
        %v2272 = vld [vmem:[#allocation12 + $0x688] sm:$0xff]
        %v2273 = vld [vmem:[#allocation12 + $0x690] sm:$0xff]
        %v2274 = vld [vmem:[#allocation12 + $0x698] sm:$0xff]
        %v2275 = vld [vmem:[#allocation12 + $0x6a0] sm:$0xff]
        %v2276 = vld [vmem:[#allocation12 + $0x6a8] sm:$0xff]
        %v2277 = vld [vmem:[#allocation12 + $0x6b0] sm:$0xff]
        %v2278 = vld [vmem:[#allocation12 + $0x6b8] sm:$0xff]
        %v2279 = vld [vmem:[#allocation12 + $0x6c0] sm:$0xff]
        %v2280 = vld [vmem:[#allocation12 + $0x6c8] sm:$0xff]
        %v2281 = vld [vmem:[#allocation12 + $0x6d0] sm:$0xff]
        %v2282 = vld [vmem:[#allocation12 + $0x6d8] sm:$0xff]
        %v2283 = vld [vmem:[#allocation12 + $0x6e0] sm:$0xff]
        %v2284 = vld [vmem:[#allocation12 + $0x6e8] sm:$0xff]
        %v2285 = vld [vmem:[#allocation12 + $0x6f0] sm:$0xff]
        %v2286 = vld [vmem:[#allocation12 + $0x6f8] sm:$0xff]
        %v2287 = vld [vmem:[#allocation12 + $0x700] sm:$0xff]
        %v2288 = vld [vmem:[#allocation12 + $0x708] sm:$0xff]
        %v2289 = vld [vmem:[#allocation12 + $0x710] sm:$0xff]
        %v2290 = vld [vmem:[#allocation12 + $0x718] sm:$0xff]
        %v2291 = vld [vmem:[#allocation12 + $0x720] sm:$0xff]
        %v2292 = vld [vmem:[#allocation12 + $0x728] sm:$0xff]
        %v2293 = vld [vmem:[#allocation12 + $0x730] sm:$0xff]
        %v2294 = vld [vmem:[#allocation12 + $0x738] sm:$0xff]
        %v2295 = vld [vmem:[#allocation12 + $0x740] sm:$0xff]
        %v2296 = vld [vmem:[#allocation12 + $0x748] sm:$0xff]
        %v2297 = vld [vmem:[#allocation12 + $0x750] sm:$0xff]
        %v2298 = vld [vmem:[#allocation12 + $0x758] sm:$0xff]
        %v2299 = vld [vmem:[#allocation12 + $0x760] sm:$0xff]
        %v2300 = vld [vmem:[#allocation12 + $0x768] sm:$0xff]
        %v2301 = vld [vmem:[#allocation12 + $0x770] sm:$0xff]
        %v2302 = vld [vmem:[#allocation12 + $0x778] sm:$0xff]
        %v2303 = vld [vmem:[#allocation12 + $0x780] sm:$0xff]
        %v2304 = vld [vmem:[#allocation12 + $0x788] sm:$0xff]
        %v2305 = vld [vmem:[#allocation12 + $0x790] sm:$0xff]
        %v2306 = vld [vmem:[#allocation12 + $0x798] sm:$0xff]
        %v2307 = vld [vmem:[#allocation12 + $0x7a0] sm:$0xff]
        %v2308 = vld [vmem:[#allocation12 + $0x7a8] sm:$0xff]
        %v2309 = vld [vmem:[#allocation12 + $0x7b0] sm:$0xff]
        %v2310 = vld [vmem:[#allocation12 + $0x7b8] sm:$0xff]
        %v2311 = vld [vmem:[#allocation12 + $0x7c0] sm:$0xff]
        %v2312 = vld [vmem:[#allocation12 + $0x7c8] sm:$0xff]
        %v2313 = vld [vmem:[#allocation12 + $0x7d0] sm:$0xff]
        %v2314 = vld [vmem:[#allocation12 + $0x7d8] sm:$0xff]
        %v2315 = vld [vmem:[#allocation12 + $0x7e0] sm:$0xff]
        %v2316 = vld [vmem:[#allocation12 + $0x7e8] sm:$0xff]
        %v2317 = vld [vmem:[#allocation12 + $0x7f0] sm:$0xff]
        %v2318 = vld [vmem:[#allocation12 + $0x7f8] sm:$0xff]
        %v2319 = vld [vmem:[#allocation14] sm:$0xf]
        %v2321 = vperm.slane %v2319, 0
        %v2322 = vperm.slane %v2319, 1
        %v2323 = vperm.slane %v2319, 2
        %v2324 = vperm.slane %v2319, 3
        %2329 = vmatpush.msra.mxu0 %v2123
        %2330 = vmatpush.msra.mxu0 %v2119
        %2331 = vmatpush.msra.mxu0 %v2115
        %2332 = vmatpush.msra.mxu0 %v2111
        %2333 = vmatpush.msra.mxu0 %v2107
        %2334 = vmatpush.msra.mxu0 %v2103
        %2335 = vmatpush.msra.mxu0 %v2099
        %2336 = vmatpush.msra.mxu0 %v2095
        %2337 = vmatpush.msra.mxu0 %v2091
        %2338 = vmatpush.msra.mxu0 %v2087
        %2339 = vmatpush.msra.mxu0 %v2083
        %2340 = vmatpush.msra.mxu0 %v2079
        %2341 = vmatpush.msra.mxu0 %v2075
        %2342 = vmatpush.msra.mxu0 %v2071
        %2343 = vmatpush.msra.mxu0 %v2067
        %2344 = vmatpush.msra.mxu0 %v2063
        %2345 = vmatmul.f32.gmra.mxu0 %v629
        %v2346 = vpop.f32.mrf.mxu0
        %v2347 = vadd.f32 %v2321, %v2346
        %2348 = vmatmul.f32.gmra.mxu0 %v633
        %v2349 = vpop.f32.mrf.mxu0
        %v2350 = vadd.f32 %v2321, %v2349
        %2351 = vmatmul.f32.gmra.mxu0 %v637
        %v2352 = vpop.f32.mrf.mxu0
        %v2353 = vadd.f32 %v2321, %v2352
        %2354 = vmatmul.f32.gmra.mxu0 %v641
        %v2355 = vpop.f32.mrf.mxu0
        %v2356 = vadd.f32 %v2321, %v2355
        %2357 = vmatmul.f32.gmra.mxu0 %v645
        %v2358 = vpop.f32.mrf.mxu0
        %v2359 = vadd.f32 %v2321, %v2358
        %2360 = vmatmul.f32.gmra.mxu0 %v649
        %v2361 = vpop.f32.mrf.mxu0
        %v2362 = vadd.f32 %v2321, %v2361
        %2363 = vmatmul.f32.gmra.mxu0 %v653
        %v2364 = vpop.f32.mrf.mxu0
        %v2365 = vadd.f32 %v2321, %v2364
        %2366 = vmatmul.f32.gmra.mxu0 %v657
        %v2367 = vpop.f32.mrf.mxu0
        %v2368 = vadd.f32 %v2321, %v2367
        %2369 = vmatmul.f32.gmra.mxu0 %v661
        %v2370 = vpop.f32.mrf.mxu0
        %v2371 = vadd.f32 %v2321, %v2370
        %2372 = vmatmul.f32.gmra.mxu0 %v665
        %v2373 = vpop.f32.mrf.mxu0
        %v2374 = vadd.f32 %v2321, %v2373
        %2375 = vmatmul.f32.gmra.mxu0 %v669
        %v2376 = vpop.f32.mrf.mxu0
        %v2377 = vadd.f32 %v2321, %v2376
        %2378 = vmatmul.f32.gmra.mxu0 %v673
        %v2379 = vpop.f32.mrf.mxu0
        %v2380 = vadd.f32 %v2321, %v2379
        %2381 = vmatmul.f32.gmra.mxu0 %v677
        %v2382 = vpop.f32.mrf.mxu0
        %v2383 = vadd.f32 %v2321, %v2382
        %2384 = vmatmul.f32.gmra.mxu0 %v681
        %v2385 = vpop.f32.mrf.mxu0
        %v2386 = vadd.f32 %v2321, %v2385
        %2387 = vmatmul.f32.gmra.mxu0 %v685
        %v2388 = vpop.f32.mrf.mxu0
        %v2389 = vadd.f32 %v2321, %v2388
        %2390 = vmatmul.f32.gmra.mxu0 %v689
        %v2391 = vpop.f32.mrf.mxu0
        %v2392 = vadd.f32 %v2321, %v2391
        %2393 = vdwg.mxu0
        %2394 = vmatpush.msra.mxu0 %v2187
        %2395 = vmatpush.msra.mxu0 %v2183
        %2396 = vmatpush.msra.mxu0 %v2179
        %2397 = vmatpush.msra.mxu0 %v2175
        %2398 = vmatpush.msra.mxu0 %v2171
        %2399 = vmatpush.msra.mxu0 %v2167
        %2400 = vmatpush.msra.mxu0 %v2163
        %2401 = vmatpush.msra.mxu0 %v2159
        %2402 = vmatpush.msra.mxu0 %v2155
        %2403 = vmatpush.msra.mxu0 %v2151
        %2404 = vmatpush.msra.mxu0 %v2147
        %2405 = vmatpush.msra.mxu0 %v2143
        %2406 = vmatpush.msra.mxu0 %v2139
        %2407 = vmatpush.msra.mxu0 %v2135
        %2408 = vmatpush.msra.mxu0 %v2131
        %2409 = vmatpush.msra.mxu0 %v2127
        %2410 = vmatmul.f32.gmra.mxu0 %v630
        %v2411 = vpop.f32.mrf.mxu0
        %v2412 = vadd.f32 %v2347, %v2411
        %2413 = vmatmul.f32.gmra.mxu0 %v634
        %v2414 = vpop.f32.mrf.mxu0
        %v2415 = vadd.f32 %v2350, %v2414
        %2416 = vmatmul.f32.gmra.mxu0 %v638
        %v2417 = vpop.f32.mrf.mxu0
        %v2418 = vadd.f32 %v2353, %v2417
        %2419 = vmatmul.f32.gmra.mxu0 %v642
        %v2420 = vpop.f32.mrf.mxu0
        %v2421 = vadd.f32 %v2356, %v2420
        %2422 = vmatmul.f32.gmra.mxu0 %v646
        %v2423 = vpop.f32.mrf.mxu0
        %v2424 = vadd.f32 %v2359, %v2423
        %2425 = vmatmul.f32.gmra.mxu0 %v650
        %v2426 = vpop.f32.mrf.mxu0
        %v2427 = vadd.f32 %v2362, %v2426
        %2428 = vmatmul.f32.gmra.mxu0 %v654
        %v2429 = vpop.f32.mrf.mxu0
        %v2430 = vadd.f32 %v2365, %v2429
        %2431 = vmatmul.f32.gmra.mxu0 %v658
        %v2432 = vpop.f32.mrf.mxu0
        %v2433 = vadd.f32 %v2368, %v2432
        %2434 = vmatmul.f32.gmra.mxu0 %v662
        %v2435 = vpop.f32.mrf.mxu0
        %v2436 = vadd.f32 %v2371, %v2435
        %2437 = vmatmul.f32.gmra.mxu0 %v666
        %v2438 = vpop.f32.mrf.mxu0
        %v2439 = vadd.f32 %v2374, %v2438
        %2440 = vmatmul.f32.gmra.mxu0 %v670
        %v2441 = vpop.f32.mrf.mxu0
        %v2442 = vadd.f32 %v2377, %v2441
        %2443 = vmatmul.f32.gmra.mxu0 %v674
        %v2444 = vpop.f32.mrf.mxu0
        %v2445 = vadd.f32 %v2380, %v2444
        %2446 = vmatmul.f32.gmra.mxu0 %v678
        %v2447 = vpop.f32.mrf.mxu0
        %v2448 = vadd.f32 %v2383, %v2447
        %2449 = vmatmul.f32.gmra.mxu0 %v682
        %v2450 = vpop.f32.mrf.mxu0
        %v2451 = vadd.f32 %v2386, %v2450
        %2452 = vmatmul.f32.gmra.mxu0 %v686
        %v2453 = vpop.f32.mrf.mxu0
        %v2454 = vadd.f32 %v2389, %v2453
        %2455 = vmatmul.f32.gmra.mxu0 %v690
        %v2456 = vpop.f32.mrf.mxu0
        %v2457 = vadd.f32 %v2392, %v2456
        %2458 = vdwg.mxu0
        %2459 = vmatpush.msra.mxu0 %v2251
        %2460 = vmatpush.msra.mxu0 %v2247
        %2461 = vmatpush.msra.mxu0 %v2243
        %2462 = vmatpush.msra.mxu0 %v2239
        %2463 = vmatpush.msra.mxu0 %v2235
        %2464 = vmatpush.msra.mxu0 %v2231
        %2465 = vmatpush.msra.mxu0 %v2227
        %2466 = vmatpush.msra.mxu0 %v2223
        %2467 = vmatpush.msra.mxu0 %v2219
        %2468 = vmatpush.msra.mxu0 %v2215
        %2469 = vmatpush.msra.mxu0 %v2211
        %2470 = vmatpush.msra.mxu0 %v2207
        %2471 = vmatpush.msra.mxu0 %v2203
        %2472 = vmatpush.msra.mxu0 %v2199
        %2473 = vmatpush.msra.mxu0 %v2195
        %2474 = vmatpush.msra.mxu0 %v2191
        %2475 = vmatmul.f32.gmra.mxu0 %v631
        %v2476 = vpop.f32.mrf.mxu0
        %v2477 = vadd.f32 %v2412, %v2476
        %2478 = vmatmul.f32.gmra.mxu0 %v635
        %v2479 = vpop.f32.mrf.mxu0
        %v2480 = vadd.f32 %v2415, %v2479
        %2481 = vmatmul.f32.gmra.mxu0 %v639
        %v2482 = vpop.f32.mrf.mxu0
        %v2483 = vadd.f32 %v2418, %v2482
        %2484 = vmatmul.f32.gmra.mxu0 %v643
        %v2485 = vpop.f32.mrf.mxu0
        %v2486 = vadd.f32 %v2421, %v2485
        %2487 = vmatmul.f32.gmra.mxu0 %v647
        %v2488 = vpop.f32.mrf.mxu0
        %v2489 = vadd.f32 %v2424, %v2488
        %2490 = vmatmul.f32.gmra.mxu0 %v651
        %v2491 = vpop.f32.mrf.mxu0
        %v2492 = vadd.f32 %v2427, %v2491
        %2493 = vmatmul.f32.gmra.mxu0 %v655
        %v2494 = vpop.f32.mrf.mxu0
        %v2495 = vadd.f32 %v2430, %v2494
        %2496 = vmatmul.f32.gmra.mxu0 %v659
        %v2497 = vpop.f32.mrf.mxu0
        %v2498 = vadd.f32 %v2433, %v2497
        %2499 = vmatmul.f32.gmra.mxu0 %v663
        %v2500 = vpop.f32.mrf.mxu0
        %v2501 = vadd.f32 %v2436, %v2500
        %2502 = vmatmul.f32.gmra.mxu0 %v667
        %v2503 = vpop.f32.mrf.mxu0
        %v2504 = vadd.f32 %v2439, %v2503
        %2505 = vmatmul.f32.gmra.mxu0 %v671
        %v2506 = vpop.f32.mrf.mxu0
        %v2507 = vadd.f32 %v2442, %v2506
        %2508 = vmatmul.f32.gmra.mxu0 %v675
        %v2509 = vpop.f32.mrf.mxu0
        %v2510 = vadd.f32 %v2445, %v2509
        %2511 = vmatmul.f32.gmra.mxu0 %v679
        %v2512 = vpop.f32.mrf.mxu0
        %v2513 = vadd.f32 %v2448, %v2512
        %2514 = vmatmul.f32.gmra.mxu0 %v683
        %v2515 = vpop.f32.mrf.mxu0
        %v2516 = vadd.f32 %v2451, %v2515
        %2517 = vmatmul.f32.gmra.mxu0 %v687
        %v2518 = vpop.f32.mrf.mxu0
        %v2519 = vadd.f32 %v2454, %v2518
        %2520 = vmatmul.f32.gmra.mxu0 %v691
        %v2521 = vpop.f32.mrf.mxu0
        %v2522 = vadd.f32 %v2457, %v2521
        %2523 = vdwg.mxu0
        %2524 = vmatpush.msra.mxu0 %v2315
        %2525 = vmatpush.msra.mxu0 %v2311
        %2526 = vmatpush.msra.mxu0 %v2307
        %2527 = vmatpush.msra.mxu0 %v2303
        %2528 = vmatpush.msra.mxu0 %v2299
        %2529 = vmatpush.msra.mxu0 %v2295
        %2530 = vmatpush.msra.mxu0 %v2291
        %2531 = vmatpush.msra.mxu0 %v2287
        %2532 = vmatpush.msra.mxu0 %v2283
        %2533 = vmatpush.msra.mxu0 %v2279
        %2534 = vmatpush.msra.mxu0 %v2275
        %2535 = vmatpush.msra.mxu0 %v2271
        %2536 = vmatpush.msra.mxu0 %v2267
        %2537 = vmatpush.msra.mxu0 %v2263
        %2538 = vmatpush.msra.mxu0 %v2259
        %2539 = vmatpush.msra.mxu0 %v2255
        %2540 = vmatmul.f32.gmra.mxu0 %v632
        %v2541 = vpop.f32.mrf.mxu0
        %v2542 = vadd.f32 %v2477, %v2541
        %2543 = vmatmul.f32.gmra.mxu0 %v636
        %v2544 = vpop.f32.mrf.mxu0
        %v2545 = vadd.f32 %v2480, %v2544
        %2546 = vmatmul.f32.gmra.mxu0 %v640
        %v2547 = vpop.f32.mrf.mxu0
        %v2548 = vadd.f32 %v2483, %v2547
        %2549 = vmatmul.f32.gmra.mxu0 %v644
        %v2550 = vpop.f32.mrf.mxu0
        %v2551 = vadd.f32 %v2486, %v2550
        %2552 = vmatmul.f32.gmra.mxu0 %v648
        %v2553 = vpop.f32.mrf.mxu0
        %v2554 = vadd.f32 %v2489, %v2553
        %2555 = vmatmul.f32.gmra.mxu0 %v652
        %v2556 = vpop.f32.mrf.mxu0
        %v2557 = vadd.f32 %v2492, %v2556
        %2558 = vmatmul.f32.gmra.mxu0 %v656
        %v2559 = vpop.f32.mrf.mxu0
        %v2560 = vadd.f32 %v2495, %v2559
        %2561 = vmatmul.f32.gmra.mxu0 %v660
        %v2562 = vpop.f32.mrf.mxu0
        %v2563 = vadd.f32 %v2498, %v2562
        %2564 = vmatmul.f32.gmra.mxu0 %v664
        %v2565 = vpop.f32.mrf.mxu0
        %v2566 = vadd.f32 %v2501, %v2565
        %2567 = vmatmul.f32.gmra.mxu0 %v668
        %v2568 = vpop.f32.mrf.mxu0
        %v2569 = vadd.f32 %v2504, %v2568
        %2570 = vmatmul.f32.gmra.mxu0 %v672
        %v2571 = vpop.f32.mrf.mxu0
        %v2572 = vadd.f32 %v2507, %v2571
        %2573 = vmatmul.f32.gmra.mxu0 %v676
        %v2574 = vpop.f32.mrf.mxu0
        %v2575 = vadd.f32 %v2510, %v2574
        %2576 = vmatmul.f32.gmra.mxu0 %v680
        %v2577 = vpop.f32.mrf.mxu0
        %v2578 = vadd.f32 %v2513, %v2577
        %2579 = vmatmul.f32.gmra.mxu0 %v684
        %v2580 = vpop.f32.mrf.mxu0
        %v2581 = vadd.f32 %v2516, %v2580
        %2582 = vmatmul.f32.gmra.mxu0 %v688
        %v2583 = vpop.f32.mrf.mxu0
        %v2584 = vadd.f32 %v2519, %v2583
        %2585 = vmatmul.f32.gmra.mxu0 %v692
        %v2586 = vpop.f32.mrf.mxu0
        %v2587 = vadd.f32 %v2522, %v2586
        %2588 = vdwg.mxu0
        %2589 = vmatpush.msra.mxu0 %v2124
        %2590 = vmatpush.msra.mxu0 %v2120
        %2591 = vmatpush.msra.mxu0 %v2116
        %2592 = vmatpush.msra.mxu0 %v2112
        %2593 = vmatpush.msra.mxu0 %v2108
        %2594 = vmatpush.msra.mxu0 %v2104
        %2595 = vmatpush.msra.mxu0 %v2100
        %2596 = vmatpush.msra.mxu0 %v2096
        %2597 = vmatpush.msra.mxu0 %v2092
        %2598 = vmatpush.msra.mxu0 %v2088
        %2599 = vmatpush.msra.mxu0 %v2084
        %2600 = vmatpush.msra.mxu0 %v2080
        %2601 = vmatpush.msra.mxu0 %v2076
        %2602 = vmatpush.msra.mxu0 %v2072
        %2603 = vmatpush.msra.mxu0 %v2068
        %2604 = vmatpush.msra.mxu0 %v2064
        %2605 = vmatmul.f32.gmra.mxu0 %v629
        %v2606 = vpop.f32.mrf.mxu0
        %v2607 = vadd.f32 %v2322, %v2606
        %2608 = vmatmul.f32.gmra.mxu0 %v633
        %v2609 = vpop.f32.mrf.mxu0
        %v2610 = vadd.f32 %v2322, %v2609
        %2611 = vmatmul.f32.gmra.mxu0 %v637
        %v2612 = vpop.f32.mrf.mxu0
        %v2613 = vadd.f32 %v2322, %v2612
        %2614 = vmatmul.f32.gmra.mxu0 %v641
        %v2615 = vpop.f32.mrf.mxu0
        %v2616 = vadd.f32 %v2322, %v2615
        %2617 = vmatmul.f32.gmra.mxu0 %v645
        %v2618 = vpop.f32.mrf.mxu0
        %v2619 = vadd.f32 %v2322, %v2618
        %2620 = vmatmul.f32.gmra.mxu0 %v649
        %v2621 = vpop.f32.mrf.mxu0
        %v2622 = vadd.f32 %v2322, %v2621
        %2623 = vmatmul.f32.gmra.mxu0 %v653
        %v2624 = vpop.f32.mrf.mxu0
        %v2625 = vadd.f32 %v2322, %v2624
        %2626 = vmatmul.f32.gmra.mxu0 %v657
        %v2627 = vpop.f32.mrf.mxu0
        %v2628 = vadd.f32 %v2322, %v2627
        %2629 = vmatmul.f32.gmra.mxu0 %v661
        %v2630 = vpop.f32.mrf.mxu0
        %v2631 = vadd.f32 %v2322, %v2630
        %2632 = vmatmul.f32.gmra.mxu0 %v665
        %v2633 = vpop.f32.mrf.mxu0
        %v2634 = vadd.f32 %v2322, %v2633
        %2635 = vmatmul.f32.gmra.mxu0 %v669
        %v2636 = vpop.f32.mrf.mxu0
        %v2637 = vadd.f32 %v2322, %v2636
        %2638 = vmatmul.f32.gmra.mxu0 %v673
        %v2639 = vpop.f32.mrf.mxu0
        %v2640 = vadd.f32 %v2322, %v2639
        %2641 = vmatmul.f32.gmra.mxu0 %v677
        %v2642 = vpop.f32.mrf.mxu0
        %v2643 = vadd.f32 %v2322, %v2642
        %2644 = vmatmul.f32.gmra.mxu0 %v681
        %v2645 = vpop.f32.mrf.mxu0
        %v2646 = vadd.f32 %v2322, %v2645
        %2647 = vmatmul.f32.gmra.mxu0 %v685
        %v2648 = vpop.f32.mrf.mxu0
        %v2649 = vadd.f32 %v2322, %v2648
        %2650 = vmatmul.f32.gmra.mxu0 %v689
        %v2651 = vpop.f32.mrf.mxu0
        %v2652 = vadd.f32 %v2322, %v2651
        %2653 = vdwg.mxu0
        %2654 = vmatpush.msra.mxu0 %v2188
        %2655 = vmatpush.msra.mxu0 %v2184
        %2656 = vmatpush.msra.mxu0 %v2180
        %2657 = vmatpush.msra.mxu0 %v2176
        %2658 = vmatpush.msra.mxu0 %v2172
        %2659 = vmatpush.msra.mxu0 %v2168
        %2660 = vmatpush.msra.mxu0 %v2164
        %2661 = vmatpush.msra.mxu0 %v2160
        %2662 = vmatpush.msra.mxu0 %v2156
        %2663 = vmatpush.msra.mxu0 %v2152
        %2664 = vmatpush.msra.mxu0 %v2148
        %2665 = vmatpush.msra.mxu0 %v2144
        %2666 = vmatpush.msra.mxu0 %v2140
        %2667 = vmatpush.msra.mxu0 %v2136
        %2668 = vmatpush.msra.mxu0 %v2132
        %2669 = vmatpush.msra.mxu0 %v2128
        %2670 = vmatmul.f32.gmra.mxu0 %v630
        %v2671 = vpop.f32.mrf.mxu0
        %v2672 = vadd.f32 %v2607, %v2671
        %2673 = vmatmul.f32.gmra.mxu0 %v634
        %v2674 = vpop.f32.mrf.mxu0
        %v2675 = vadd.f32 %v2610, %v2674
        %2676 = vmatmul.f32.gmra.mxu0 %v638
        %v2677 = vpop.f32.mrf.mxu0
        %v2678 = vadd.f32 %v2613, %v2677
        %2679 = vmatmul.f32.gmra.mxu0 %v642
        %v2680 = vpop.f32.mrf.mxu0
        %v2681 = vadd.f32 %v2616, %v2680
        %2682 = vmatmul.f32.gmra.mxu0 %v646
        %v2683 = vpop.f32.mrf.mxu0
        %v2684 = vadd.f32 %v2619, %v2683
        %2685 = vmatmul.f32.gmra.mxu0 %v650
        %v2686 = vpop.f32.mrf.mxu0
        %v2687 = vadd.f32 %v2622, %v2686
        %2688 = vmatmul.f32.gmra.mxu0 %v654
        %v2689 = vpop.f32.mrf.mxu0
        %v2690 = vadd.f32 %v2625, %v2689
        %2691 = vmatmul.f32.gmra.mxu0 %v658
        %v2692 = vpop.f32.mrf.mxu0
        %v2693 = vadd.f32 %v2628, %v2692
        %2694 = vmatmul.f32.gmra.mxu0 %v662
        %v2695 = vpop.f32.mrf.mxu0
        %v2696 = vadd.f32 %v2631, %v2695
        %2697 = vmatmul.f32.gmra.mxu0 %v666
        %v2698 = vpop.f32.mrf.mxu0
        %v2699 = vadd.f32 %v2634, %v2698
        %2700 = vmatmul.f32.gmra.mxu0 %v670
        %v2701 = vpop.f32.mrf.mxu0
        %v2702 = vadd.f32 %v2637, %v2701
        %2703 = vmatmul.f32.gmra.mxu0 %v674
        %v2704 = vpop.f32.mrf.mxu0
        %v2705 = vadd.f32 %v2640, %v2704
        %2706 = vmatmul.f32.gmra.mxu0 %v678
        %v2707 = vpop.f32.mrf.mxu0
        %v2708 = vadd.f32 %v2643, %v2707
        %2709 = vmatmul.f32.gmra.mxu0 %v682
        %v2710 = vpop.f32.mrf.mxu0
        %v2711 = vadd.f32 %v2646, %v2710
        %2712 = vmatmul.f32.gmra.mxu0 %v686
        %v2713 = vpop.f32.mrf.mxu0
        %v2714 = vadd.f32 %v2649, %v2713
        %2715 = vmatmul.f32.gmra.mxu0 %v690
        %v2716 = vpop.f32.mrf.mxu0
        %v2717 = vadd.f32 %v2652, %v2716
        %2718 = vdwg.mxu0
        %2719 = vmatpush.msra.mxu0 %v2252
        %2720 = vmatpush.msra.mxu0 %v2248
        %2721 = vmatpush.msra.mxu0 %v2244
        %2722 = vmatpush.msra.mxu0 %v2240
        %2723 = vmatpush.msra.mxu0 %v2236
        %2724 = vmatpush.msra.mxu0 %v2232
        %2725 = vmatpush.msra.mxu0 %v2228
        %2726 = vmatpush.msra.mxu0 %v2224
        %2727 = vmatpush.msra.mxu0 %v2220
        %2728 = vmatpush.msra.mxu0 %v2216
        %2729 = vmatpush.msra.mxu0 %v2212
        %2730 = vmatpush.msra.mxu0 %v2208
        %2731 = vmatpush.msra.mxu0 %v2204
        %2732 = vmatpush.msra.mxu0 %v2200
        %2733 = vmatpush.msra.mxu0 %v2196
        %2734 = vmatpush.msra.mxu0 %v2192
        %2735 = vmatmul.f32.gmra.mxu0 %v631
        %v2736 = vpop.f32.mrf.mxu0
        %v2737 = vadd.f32 %v2672, %v2736
        %2738 = vmatmul.f32.gmra.mxu0 %v635
        %v2739 = vpop.f32.mrf.mxu0
        %v2740 = vadd.f32 %v2675, %v2739
        %2741 = vmatmul.f32.gmra.mxu0 %v639
        %v2742 = vpop.f32.mrf.mxu0
        %v2743 = vadd.f32 %v2678, %v2742
        %2744 = vmatmul.f32.gmra.mxu0 %v643
        %v2745 = vpop.f32.mrf.mxu0
        %v2746 = vadd.f32 %v2681, %v2745
        %2747 = vmatmul.f32.gmra.mxu0 %v647
        %v2748 = vpop.f32.mrf.mxu0
        %v2749 = vadd.f32 %v2684, %v2748
        %2750 = vmatmul.f32.gmra.mxu0 %v651
        %v2751 = vpop.f32.mrf.mxu0
        %v2752 = vadd.f32 %v2687, %v2751
        %2753 = vmatmul.f32.gmra.mxu0 %v655
        %v2754 = vpop.f32.mrf.mxu0
        %v2755 = vadd.f32 %v2690, %v2754
        %2756 = vmatmul.f32.gmra.mxu0 %v659
        %v2757 = vpop.f32.mrf.mxu0
        %v2758 = vadd.f32 %v2693, %v2757
        %2759 = vmatmul.f32.gmra.mxu0 %v663
        %v2760 = vpop.f32.mrf.mxu0
        %v2761 = vadd.f32 %v2696, %v2760
        %2762 = vmatmul.f32.gmra.mxu0 %v667
        %v2763 = vpop.f32.mrf.mxu0
        %v2764 = vadd.f32 %v2699, %v2763
        %2765 = vmatmul.f32.gmra.mxu0 %v671
        %v2766 = vpop.f32.mrf.mxu0
        %v2767 = vadd.f32 %v2702, %v2766
        %2768 = vmatmul.f32.gmra.mxu0 %v675
        %v2769 = vpop.f32.mrf.mxu0
        %v2770 = vadd.f32 %v2705, %v2769
        %2771 = vmatmul.f32.gmra.mxu0 %v679
        %v2772 = vpop.f32.mrf.mxu0
        %v2773 = vadd.f32 %v2708, %v2772
        %2774 = vmatmul.f32.gmra.mxu0 %v683
        %v2775 = vpop.f32.mrf.mxu0
        %v2776 = vadd.f32 %v2711, %v2775
        %2777 = vmatmul.f32.gmra.mxu0 %v687
        %v2778 = vpop.f32.mrf.mxu0
        %v2779 = vadd.f32 %v2714, %v2778
        %2780 = vmatmul.f32.gmra.mxu0 %v691
        %v2781 = vpop.f32.mrf.mxu0
        %v2782 = vadd.f32 %v2717, %v2781
        %2783 = vdwg.mxu0
        %2784 = vmatpush.msra.mxu0 %v2316
        %2785 = vmatpush.msra.mxu0 %v2312
        %2786 = vmatpush.msra.mxu0 %v2308
        %2787 = vmatpush.msra.mxu0 %v2304
        %2788 = vmatpush.msra.mxu0 %v2300
        %2789 = vmatpush.msra.mxu0 %v2296
        %2790 = vmatpush.msra.mxu0 %v2292
        %2791 = vmatpush.msra.mxu0 %v2288
        %2792 = vmatpush.msra.mxu0 %v2284
        %2793 = vmatpush.msra.mxu0 %v2280
        %2794 = vmatpush.msra.mxu0 %v2276
        %2795 = vmatpush.msra.mxu0 %v2272
        %2796 = vmatpush.msra.mxu0 %v2268
        %2797 = vmatpush.msra.mxu0 %v2264
        %2798 = vmatpush.msra.mxu0 %v2260
        %2799 = vmatpush.msra.mxu0 %v2256
        %2800 = vmatmul.f32.gmra.mxu0 %v632
        %v2801 = vpop.f32.mrf.mxu0
        %v2802 = vadd.f32 %v2737, %v2801
        %2803 = vmatmul.f32.gmra.mxu0 %v636
        %v2804 = vpop.f32.mrf.mxu0
        %v2805 = vadd.f32 %v2740, %v2804
        %2806 = vmatmul.f32.gmra.mxu0 %v640
        %v2807 = vpop.f32.mrf.mxu0
        %v2808 = vadd.f32 %v2743, %v2807
        %2809 = vmatmul.f32.gmra.mxu0 %v644
        %v2810 = vpop.f32.mrf.mxu0
        %v2811 = vadd.f32 %v2746, %v2810
        %2812 = vmatmul.f32.gmra.mxu0 %v648
        %v2813 = vpop.f32.mrf.mxu0
        %v2814 = vadd.f32 %v2749, %v2813
        %2815 = vmatmul.f32.gmra.mxu0 %v652
        %v2816 = vpop.f32.mrf.mxu0
        %v2817 = vadd.f32 %v2752, %v2816
        %2818 = vmatmul.f32.gmra.mxu0 %v656
        %v2819 = vpop.f32.mrf.mxu0
        %v2820 = vadd.f32 %v2755, %v2819
        %2821 = vmatmul.f32.gmra.mxu0 %v660
        %v2822 = vpop.f32.mrf.mxu0
        %v2823 = vadd.f32 %v2758, %v2822
        %2824 = vmatmul.f32.gmra.mxu0 %v664
        %v2825 = vpop.f32.mrf.mxu0
        %v2826 = vadd.f32 %v2761, %v2825
        %2827 = vmatmul.f32.gmra.mxu0 %v668
        %v2828 = vpop.f32.mrf.mxu0
        %v2829 = vadd.f32 %v2764, %v2828
        %2830 = vmatmul.f32.gmra.mxu0 %v672
        %v2831 = vpop.f32.mrf.mxu0
        %v2832 = vadd.f32 %v2767, %v2831
        %2833 = vmatmul.f32.gmra.mxu0 %v676
        %v2834 = vpop.f32.mrf.mxu0
        %v2835 = vadd.f32 %v2770, %v2834
        %2836 = vmatmul.f32.gmra.mxu0 %v680
        %v2837 = vpop.f32.mrf.mxu0
        %v2838 = vadd.f32 %v2773, %v2837
        %2839 = vmatmul.f32.gmra.mxu0 %v684
        %v2840 = vpop.f32.mrf.mxu0
        %v2841 = vadd.f32 %v2776, %v2840
        %2842 = vmatmul.f32.gmra.mxu0 %v688
        %v2843 = vpop.f32.mrf.mxu0
        %v2844 = vadd.f32 %v2779, %v2843
        %2845 = vmatmul.f32.gmra.mxu0 %v692
        %v2846 = vpop.f32.mrf.mxu0
        %v2847 = vadd.f32 %v2782, %v2846
        %2848 = vdwg.mxu0
        %2849 = vmatpush.msra.mxu0 %v2125
        %2850 = vmatpush.msra.mxu0 %v2121
        %2851 = vmatpush.msra.mxu0 %v2117
        %2852 = vmatpush.msra.mxu0 %v2113
        %2853 = vmatpush.msra.mxu0 %v2109
        %2854 = vmatpush.msra.mxu0 %v2105
        %2855 = vmatpush.msra.mxu0 %v2101
        %2856 = vmatpush.msra.mxu0 %v2097
        %2857 = vmatpush.msra.mxu0 %v2093
        %2858 = vmatpush.msra.mxu0 %v2089
        %2859 = vmatpush.msra.mxu0 %v2085
        %2860 = vmatpush.msra.mxu0 %v2081
        %2861 = vmatpush.msra.mxu0 %v2077
        %2862 = vmatpush.msra.mxu0 %v2073
        %2863 = vmatpush.msra.mxu0 %v2069
        %2864 = vmatpush.msra.mxu0 %v2065
        %2865 = vmatmul.f32.gmra.mxu0 %v629
        %v2866 = vpop.f32.mrf.mxu0
        %v2867 = vadd.f32 %v2323, %v2866
        %2868 = vmatmul.f32.gmra.mxu0 %v633
        %v2869 = vpop.f32.mrf.mxu0
        %v2870 = vadd.f32 %v2323, %v2869
        %2871 = vmatmul.f32.gmra.mxu0 %v637
        %v2872 = vpop.f32.mrf.mxu0
        %v2873 = vadd.f32 %v2323, %v2872
        %2874 = vmatmul.f32.gmra.mxu0 %v641
        %v2875 = vpop.f32.mrf.mxu0
        %v2876 = vadd.f32 %v2323, %v2875
        %2877 = vmatmul.f32.gmra.mxu0 %v645
        %v2878 = vpop.f32.mrf.mxu0
        %v2879 = vadd.f32 %v2323, %v2878
        %2880 = vmatmul.f32.gmra.mxu0 %v649
        %v2881 = vpop.f32.mrf.mxu0
        %v2882 = vadd.f32 %v2323, %v2881
        %2883 = vmatmul.f32.gmra.mxu0 %v653
        %v2884 = vpop.f32.mrf.mxu0
        %v2885 = vadd.f32 %v2323, %v2884
        %2886 = vmatmul.f32.gmra.mxu0 %v657
        %v2887 = vpop.f32.mrf.mxu0
        %v2888 = vadd.f32 %v2323, %v2887
        %2889 = vmatmul.f32.gmra.mxu0 %v661
        %v2890 = vpop.f32.mrf.mxu0
        %v2891 = vadd.f32 %v2323, %v2890
        %2892 = vmatmul.f32.gmra.mxu0 %v665
        %v2893 = vpop.f32.mrf.mxu0
        %v2894 = vadd.f32 %v2323, %v2893
        %2895 = vmatmul.f32.gmra.mxu0 %v669
        %v2896 = vpop.f32.mrf.mxu0
        %v2897 = vadd.f32 %v2323, %v2896
        %2898 = vmatmul.f32.gmra.mxu0 %v673
        %v2899 = vpop.f32.mrf.mxu0
        %v2900 = vadd.f32 %v2323, %v2899
        %2901 = vmatmul.f32.gmra.mxu0 %v677
        %v2902 = vpop.f32.mrf.mxu0
        %v2903 = vadd.f32 %v2323, %v2902
        %2904 = vmatmul.f32.gmra.mxu0 %v681
        %v2905 = vpop.f32.mrf.mxu0
        %v2906 = vadd.f32 %v2323, %v2905
        %2907 = vmatmul.f32.gmra.mxu0 %v685
        %v2908 = vpop.f32.mrf.mxu0
        %v2909 = vadd.f32 %v2323, %v2908
        %2910 = vmatmul.f32.gmra.mxu0 %v689
        %v2911 = vpop.f32.mrf.mxu0
        %v2912 = vadd.f32 %v2323, %v2911
        %2913 = vdwg.mxu0
        %2914 = vmatpush.msra.mxu0 %v2189
        %2915 = vmatpush.msra.mxu0 %v2185
        %2916 = vmatpush.msra.mxu0 %v2181
        %2917 = vmatpush.msra.mxu0 %v2177
        %2918 = vmatpush.msra.mxu0 %v2173
        %2919 = vmatpush.msra.mxu0 %v2169
        %2920 = vmatpush.msra.mxu0 %v2165
        %2921 = vmatpush.msra.mxu0 %v2161
        %2922 = vmatpush.msra.mxu0 %v2157
        %2923 = vmatpush.msra.mxu0 %v2153
        %2924 = vmatpush.msra.mxu0 %v2149
        %2925 = vmatpush.msra.mxu0 %v2145
        %2926 = vmatpush.msra.mxu0 %v2141
        %2927 = vmatpush.msra.mxu0 %v2137
        %2928 = vmatpush.msra.mxu0 %v2133
        %2929 = vmatpush.msra.mxu0 %v2129
        %2930 = vmatmul.f32.gmra.mxu0 %v630
        %v2931 = vpop.f32.mrf.mxu0
        %v2932 = vadd.f32 %v2867, %v2931
        %2933 = vmatmul.f32.gmra.mxu0 %v634
        %v2934 = vpop.f32.mrf.mxu0
        %v2935 = vadd.f32 %v2870, %v2934
        %2936 = vmatmul.f32.gmra.mxu0 %v638
        %v2937 = vpop.f32.mrf.mxu0
        %v2938 = vadd.f32 %v2873, %v2937
        %2939 = vmatmul.f32.gmra.mxu0 %v642
        %v2940 = vpop.f32.mrf.mxu0
        %v2941 = vadd.f32 %v2876, %v2940
        %2942 = vmatmul.f32.gmra.mxu0 %v646
        %v2943 = vpop.f32.mrf.mxu0
        %v2944 = vadd.f32 %v2879, %v2943
        %2945 = vmatmul.f32.gmra.mxu0 %v650
        %v2946 = vpop.f32.mrf.mxu0
        %v2947 = vadd.f32 %v2882, %v2946
        %2948 = vmatmul.f32.gmra.mxu0 %v654
        %v2949 = vpop.f32.mrf.mxu0
        %v2950 = vadd.f32 %v2885, %v2949
        %2951 = vmatmul.f32.gmra.mxu0 %v658
        %v2952 = vpop.f32.mrf.mxu0
        %v2953 = vadd.f32 %v2888, %v2952
        %2954 = vmatmul.f32.gmra.mxu0 %v662
        %v2955 = vpop.f32.mrf.mxu0
        %v2956 = vadd.f32 %v2891, %v2955
        %2957 = vmatmul.f32.gmra.mxu0 %v666
        %v2958 = vpop.f32.mrf.mxu0
        %v2959 = vadd.f32 %v2894, %v2958
        %2960 = vmatmul.f32.gmra.mxu0 %v670
        %v2961 = vpop.f32.mrf.mxu0
        %v2962 = vadd.f32 %v2897, %v2961
        %2963 = vmatmul.f32.gmra.mxu0 %v674
        %v2964 = vpop.f32.mrf.mxu0
        %v2965 = vadd.f32 %v2900, %v2964
        %2966 = vmatmul.f32.gmra.mxu0 %v678
        %v2967 = vpop.f32.mrf.mxu0
        %v2968 = vadd.f32 %v2903, %v2967
        %2969 = vmatmul.f32.gmra.mxu0 %v682
        %v2970 = vpop.f32.mrf.mxu0
        %v2971 = vadd.f32 %v2906, %v2970
        %2972 = vmatmul.f32.gmra.mxu0 %v686
        %v2973 = vpop.f32.mrf.mxu0
        %v2974 = vadd.f32 %v2909, %v2973
        %2975 = vmatmul.f32.gmra.mxu0 %v690
        %v2976 = vpop.f32.mrf.mxu0
        %v2977 = vadd.f32 %v2912, %v2976
        %2978 = vdwg.mxu0
        %2979 = vmatpush.msra.mxu0 %v2253
        %2980 = vmatpush.msra.mxu0 %v2249
        %2981 = vmatpush.msra.mxu0 %v2245
        %2982 = vmatpush.msra.mxu0 %v2241
        %2983 = vmatpush.msra.mxu0 %v2237
        %2984 = vmatpush.msra.mxu0 %v2233
        %2985 = vmatpush.msra.mxu0 %v2229
        %2986 = vmatpush.msra.mxu0 %v2225
        %2987 = vmatpush.msra.mxu0 %v2221
        %2988 = vmatpush.msra.mxu0 %v2217
        %2989 = vmatpush.msra.mxu0 %v2213
        %2990 = vmatpush.msra.mxu0 %v2209
        %2991 = vmatpush.msra.mxu0 %v2205
        %2992 = vmatpush.msra.mxu0 %v2201
        %2993 = vmatpush.msra.mxu0 %v2197
        %2994 = vmatpush.msra.mxu0 %v2193
        %2995 = vmatmul.f32.gmra.mxu0 %v631
        %v2996 = vpop.f32.mrf.mxu0
        %v2997 = vadd.f32 %v2932, %v2996
        %2998 = vmatmul.f32.gmra.mxu0 %v635
        %v2999 = vpop.f32.mrf.mxu0
        %v3000 = vadd.f32 %v2935, %v2999
        %3001 = vmatmul.f32.gmra.mxu0 %v639
        %v3002 = vpop.f32.mrf.mxu0
        %v3003 = vadd.f32 %v2938, %v3002
        %3004 = vmatmul.f32.gmra.mxu0 %v643
        %v3005 = vpop.f32.mrf.mxu0
        %v3006 = vadd.f32 %v2941, %v3005
        %3007 = vmatmul.f32.gmra.mxu0 %v647
        %v3008 = vpop.f32.mrf.mxu0
        %v3009 = vadd.f32 %v2944, %v3008
        %3010 = vmatmul.f32.gmra.mxu0 %v651
        %v3011 = vpop.f32.mrf.mxu0
        %v3012 = vadd.f32 %v2947, %v3011
        %3013 = vmatmul.f32.gmra.mxu0 %v655
        %v3014 = vpop.f32.mrf.mxu0
        %v3015 = vadd.f32 %v2950, %v3014
        %3016 = vmatmul.f32.gmra.mxu0 %v659
        %v3017 = vpop.f32.mrf.mxu0
        %v3018 = vadd.f32 %v2953, %v3017
        %3019 = vmatmul.f32.gmra.mxu0 %v663
        %v3020 = vpop.f32.mrf.mxu0
        %v3021 = vadd.f32 %v2956, %v3020
        %3022 = vmatmul.f32.gmra.mxu0 %v667
        %v3023 = vpop.f32.mrf.mxu0
        %v3024 = vadd.f32 %v2959, %v3023
        %3025 = vmatmul.f32.gmra.mxu0 %v671
        %v3026 = vpop.f32.mrf.mxu0
        %v3027 = vadd.f32 %v2962, %v3026
        %3028 = vmatmul.f32.gmra.mxu0 %v675
        %v3029 = vpop.f32.mrf.mxu0
        %v3030 = vadd.f32 %v2965, %v3029
        %3031 = vmatmul.f32.gmra.mxu0 %v679
        %v3032 = vpop.f32.mrf.mxu0
        %v3033 = vadd.f32 %v2968, %v3032
        %3034 = vmatmul.f32.gmra.mxu0 %v683
        %v3035 = vpop.f32.mrf.mxu0
        %v3036 = vadd.f32 %v2971, %v3035
        %3037 = vmatmul.f32.gmra.mxu0 %v687
        %v3038 = vpop.f32.mrf.mxu0
        %v3039 = vadd.f32 %v2974, %v3038
        %3040 = vmatmul.f32.gmra.mxu0 %v691
        %v3041 = vpop.f32.mrf.mxu0
        %v3042 = vadd.f32 %v2977, %v3041
        %3043 = vdwg.mxu0
        %3044 = vmatpush.msra.mxu0 %v2317
        %3045 = vmatpush.msra.mxu0 %v2313
        %3046 = vmatpush.msra.mxu0 %v2309
        %3047 = vmatpush.msra.mxu0 %v2305
        %3048 = vmatpush.msra.mxu0 %v2301
        %3049 = vmatpush.msra.mxu0 %v2297
        %3050 = vmatpush.msra.mxu0 %v2293
        %3051 = vmatpush.msra.mxu0 %v2289
        %3052 = vmatpush.msra.mxu0 %v2285
        %3053 = vmatpush.msra.mxu0 %v2281
        %3054 = vmatpush.msra.mxu0 %v2277
        %3055 = vmatpush.msra.mxu0 %v2273
        %3056 = vmatpush.msra.mxu0 %v2269
        %3057 = vmatpush.msra.mxu0 %v2265
        %3058 = vmatpush.msra.mxu0 %v2261
        %3059 = vmatpush.msra.mxu0 %v2257
        %3060 = vmatmul.f32.gmra.mxu0 %v632
        %v3061 = vpop.f32.mrf.mxu0
        %v3062 = vadd.f32 %v2997, %v3061
        %3063 = vmatmul.f32.gmra.mxu0 %v636
        %v3064 = vpop.f32.mrf.mxu0
        %v3065 = vadd.f32 %v3000, %v3064
        %3066 = vmatmul.f32.gmra.mxu0 %v640
        %v3067 = vpop.f32.mrf.mxu0
        %v3068 = vadd.f32 %v3003, %v3067
        %3069 = vmatmul.f32.gmra.mxu0 %v644
        %v3070 = vpop.f32.mrf.mxu0
        %v3071 = vadd.f32 %v3006, %v3070
        %3072 = vmatmul.f32.gmra.mxu0 %v648
        %v3073 = vpop.f32.mrf.mxu0
        %v3074 = vadd.f32 %v3009, %v3073
        %3075 = vmatmul.f32.gmra.mxu0 %v652
        %v3076 = vpop.f32.mrf.mxu0
        %v3077 = vadd.f32 %v3012, %v3076
        %3078 = vmatmul.f32.gmra.mxu0 %v656
        %v3079 = vpop.f32.mrf.mxu0
        %v3080 = vadd.f32 %v3015, %v3079
        %3081 = vmatmul.f32.gmra.mxu0 %v660
        %v3082 = vpop.f32.mrf.mxu0
        %v3083 = vadd.f32 %v3018, %v3082
        %3084 = vmatmul.f32.gmra.mxu0 %v664
        %v3085 = vpop.f32.mrf.mxu0
        %v3086 = vadd.f32 %v3021, %v3085
        %3087 = vmatmul.f32.gmra.mxu0 %v668
        %v3088 = vpop.f32.mrf.mxu0
        %v3089 = vadd.f32 %v3024, %v3088
        %3090 = vmatmul.f32.gmra.mxu0 %v672
        %v3091 = vpop.f32.mrf.mxu0
        %v3092 = vadd.f32 %v3027, %v3091
        %3093 = vmatmul.f32.gmra.mxu0 %v676
        %v3094 = vpop.f32.mrf.mxu0
        %v3095 = vadd.f32 %v3030, %v3094
        %3096 = vmatmul.f32.gmra.mxu0 %v680
        %v3097 = vpop.f32.mrf.mxu0
        %v3098 = vadd.f32 %v3033, %v3097
        %3099 = vmatmul.f32.gmra.mxu0 %v684
        %v3100 = vpop.f32.mrf.mxu0
        %v3101 = vadd.f32 %v3036, %v3100
        %3102 = vmatmul.f32.gmra.mxu0 %v688
        %v3103 = vpop.f32.mrf.mxu0
        %v3104 = vadd.f32 %v3039, %v3103
        %3105 = vmatmul.f32.gmra.mxu0 %v692
        %v3106 = vpop.f32.mrf.mxu0
        %v3107 = vadd.f32 %v3042, %v3106
        %3108 = vdwg.mxu0
        %3109 = vmatpush.msra.mxu0 %v2126
        %3110 = vmatpush.msra.mxu0 %v2122
        %3111 = vmatpush.msra.mxu0 %v2118
        %3112 = vmatpush.msra.mxu0 %v2114
        %3113 = vmatpush.msra.mxu0 %v2110
        %3114 = vmatpush.msra.mxu0 %v2106
        %3115 = vmatpush.msra.mxu0 %v2102
        %3116 = vmatpush.msra.mxu0 %v2098
        %3117 = vmatpush.msra.mxu0 %v2094
        %3118 = vmatpush.msra.mxu0 %v2090
        %3119 = vmatpush.msra.mxu0 %v2086
        %3120 = vmatpush.msra.mxu0 %v2082
        %3121 = vmatpush.msra.mxu0 %v2078
        %3122 = vmatpush.msra.mxu0 %v2074
        %3123 = vmatpush.msra.mxu0 %v2070
        %3124 = vmatpush.msra.mxu0 %v2066
        %3125 = vmatmul.f32.gmra.mxu0 %v629
        %v3126 = vpop.f32.mrf.mxu0
        %v3127 = vadd.f32 %v2324, %v3126
        %3128 = vmatmul.f32.gmra.mxu0 %v633
        %v3129 = vpop.f32.mrf.mxu0
        %v3130 = vadd.f32 %v2324, %v3129
        %3131 = vmatmul.f32.gmra.mxu0 %v637
        %v3132 = vpop.f32.mrf.mxu0
        %v3133 = vadd.f32 %v2324, %v3132
        %3134 = vmatmul.f32.gmra.mxu0 %v641
        %v3135 = vpop.f32.mrf.mxu0
        %v3136 = vadd.f32 %v2324, %v3135
        %3137 = vmatmul.f32.gmra.mxu0 %v645
        %v3138 = vpop.f32.mrf.mxu0
        %v3139 = vadd.f32 %v2324, %v3138
        %3140 = vmatmul.f32.gmra.mxu0 %v649
        %v3141 = vpop.f32.mrf.mxu0
        %v3142 = vadd.f32 %v2324, %v3141
        %3143 = vmatmul.f32.gmra.mxu0 %v653
        %v3144 = vpop.f32.mrf.mxu0
        %v3145 = vadd.f32 %v2324, %v3144
        %3146 = vmatmul.f32.gmra.mxu0 %v657
        %v3147 = vpop.f32.mrf.mxu0
        %v3148 = vadd.f32 %v2324, %v3147
        %3149 = vmatmul.f32.gmra.mxu0 %v661
        %v3150 = vpop.f32.mrf.mxu0
        %v3151 = vadd.f32 %v2324, %v3150
        %3152 = vmatmul.f32.gmra.mxu0 %v665
        %v3153 = vpop.f32.mrf.mxu0
        %v3154 = vadd.f32 %v2324, %v3153
        %3155 = vmatmul.f32.gmra.mxu0 %v669
        %v3156 = vpop.f32.mrf.mxu0
        %v3157 = vadd.f32 %v2324, %v3156
        %3158 = vmatmul.f32.gmra.mxu0 %v673
        %v3159 = vpop.f32.mrf.mxu0
        %v3160 = vadd.f32 %v2324, %v3159
        %3161 = vmatmul.f32.gmra.mxu0 %v677
        %v3162 = vpop.f32.mrf.mxu0
        %v3163 = vadd.f32 %v2324, %v3162
        %3164 = vmatmul.f32.gmra.mxu0 %v681
        %v3165 = vpop.f32.mrf.mxu0
        %v3166 = vadd.f32 %v2324, %v3165
        %3167 = vmatmul.f32.gmra.mxu0 %v685
        %v3168 = vpop.f32.mrf.mxu0
        %v3169 = vadd.f32 %v2324, %v3168
        %3170 = vmatmul.f32.gmra.mxu0 %v689
        %v3171 = vpop.f32.mrf.mxu0
        %v3172 = vadd.f32 %v2324, %v3171
        %3173 = vdwg.mxu0
        %3174 = vmatpush.msra.mxu0 %v2190
        %3175 = vmatpush.msra.mxu0 %v2186
        %3176 = vmatpush.msra.mxu0 %v2182
        %3177 = vmatpush.msra.mxu0 %v2178
        %3178 = vmatpush.msra.mxu0 %v2174
        %3179 = vmatpush.msra.mxu0 %v2170
        %3180 = vmatpush.msra.mxu0 %v2166
        %3181 = vmatpush.msra.mxu0 %v2162
        %3182 = vmatpush.msra.mxu0 %v2158
        %3183 = vmatpush.msra.mxu0 %v2154
        %3184 = vmatpush.msra.mxu0 %v2150
        %3185 = vmatpush.msra.mxu0 %v2146
        %3186 = vmatpush.msra.mxu0 %v2142
        %3187 = vmatpush.msra.mxu0 %v2138
        %3188 = vmatpush.msra.mxu0 %v2134
        %3189 = vmatpush.msra.mxu0 %v2130
        %3190 = vmatmul.f32.gmra.mxu0 %v630
        %v3191 = vpop.f32.mrf.mxu0
        %v3192 = vadd.f32 %v3127, %v3191
        %3193 = vmatmul.f32.gmra.mxu0 %v634
        %v3194 = vpop.f32.mrf.mxu0
        %v3195 = vadd.f32 %v3130, %v3194
        %3196 = vmatmul.f32.gmra.mxu0 %v638
        %v3197 = vpop.f32.mrf.mxu0
        %v3198 = vadd.f32 %v3133, %v3197
        %3199 = vmatmul.f32.gmra.mxu0 %v642
        %v3200 = vpop.f32.mrf.mxu0
        %v3201 = vadd.f32 %v3136, %v3200
        %3202 = vmatmul.f32.gmra.mxu0 %v646
        %v3203 = vpop.f32.mrf.mxu0
        %v3204 = vadd.f32 %v3139, %v3203
        %3205 = vmatmul.f32.gmra.mxu0 %v650
        %v3206 = vpop.f32.mrf.mxu0
        %v3207 = vadd.f32 %v3142, %v3206
        %3208 = vmatmul.f32.gmra.mxu0 %v654
        %v3209 = vpop.f32.mrf.mxu0
        %v3210 = vadd.f32 %v3145, %v3209
        %3211 = vmatmul.f32.gmra.mxu0 %v658
        %v3212 = vpop.f32.mrf.mxu0
        %v3213 = vadd.f32 %v3148, %v3212
        %3214 = vmatmul.f32.gmra.mxu0 %v662
        %v3215 = vpop.f32.mrf.mxu0
        %v3216 = vadd.f32 %v3151, %v3215
        %3217 = vmatmul.f32.gmra.mxu0 %v666
        %v3218 = vpop.f32.mrf.mxu0
        %v3219 = vadd.f32 %v3154, %v3218
        %3220 = vmatmul.f32.gmra.mxu0 %v670
        %v3221 = vpop.f32.mrf.mxu0
        %v3222 = vadd.f32 %v3157, %v3221
        %3223 = vmatmul.f32.gmra.mxu0 %v674
        %v3224 = vpop.f32.mrf.mxu0
        %v3225 = vadd.f32 %v3160, %v3224
        %3226 = vmatmul.f32.gmra.mxu0 %v678
        %v3227 = vpop.f32.mrf.mxu0
        %v3228 = vadd.f32 %v3163, %v3227
        %3229 = vmatmul.f32.gmra.mxu0 %v682
        %v3230 = vpop.f32.mrf.mxu0
        %v3231 = vadd.f32 %v3166, %v3230
        %3232 = vmatmul.f32.gmra.mxu0 %v686
        %v3233 = vpop.f32.mrf.mxu0
        %v3234 = vadd.f32 %v3169, %v3233
        %3235 = vmatmul.f32.gmra.mxu0 %v690
        %v3236 = vpop.f32.mrf.mxu0
        %v3237 = vadd.f32 %v3172, %v3236
        %3238 = vdwg.mxu0
        %3239 = vmatpush.msra.mxu0 %v2254
        %3240 = vmatpush.msra.mxu0 %v2250
        %3241 = vmatpush.msra.mxu0 %v2246
        %3242 = vmatpush.msra.mxu0 %v2242
        %3243 = vmatpush.msra.mxu0 %v2238
        %3244 = vmatpush.msra.mxu0 %v2234
        %3245 = vmatpush.msra.mxu0 %v2230
        %3246 = vmatpush.msra.mxu0 %v2226
        %3247 = vmatpush.msra.mxu0 %v2222
        %3248 = vmatpush.msra.mxu0 %v2218
        %3249 = vmatpush.msra.mxu0 %v2214
        %3250 = vmatpush.msra.mxu0 %v2210
        %3251 = vmatpush.msra.mxu0 %v2206
        %3252 = vmatpush.msra.mxu0 %v2202
        %3253 = vmatpush.msra.mxu0 %v2198
        %3254 = vmatpush.msra.mxu0 %v2194
        %3255 = vmatmul.f32.gmra.mxu0 %v631
        %v3256 = vpop.f32.mrf.mxu0
        %v3257 = vadd.f32 %v3192, %v3256
        %3258 = vmatmul.f32.gmra.mxu0 %v635
        %v3259 = vpop.f32.mrf.mxu0
        %v3260 = vadd.f32 %v3195, %v3259
        %3261 = vmatmul.f32.gmra.mxu0 %v639
        %v3262 = vpop.f32.mrf.mxu0
        %v3263 = vadd.f32 %v3198, %v3262
        %3264 = vmatmul.f32.gmra.mxu0 %v643
        %v3265 = vpop.f32.mrf.mxu0
        %v3266 = vadd.f32 %v3201, %v3265
        %3267 = vmatmul.f32.gmra.mxu0 %v647
        %v3268 = vpop.f32.mrf.mxu0
        %v3269 = vadd.f32 %v3204, %v3268
        %3270 = vmatmul.f32.gmra.mxu0 %v651
        %v3271 = vpop.f32.mrf.mxu0
        %v3272 = vadd.f32 %v3207, %v3271
        %3273 = vmatmul.f32.gmra.mxu0 %v655
        %v3274 = vpop.f32.mrf.mxu0
        %v3275 = vadd.f32 %v3210, %v3274
        %3276 = vmatmul.f32.gmra.mxu0 %v659
        %v3277 = vpop.f32.mrf.mxu0
        %v3278 = vadd.f32 %v3213, %v3277
        %3279 = vmatmul.f32.gmra.mxu0 %v663
        %v3280 = vpop.f32.mrf.mxu0
        %v3281 = vadd.f32 %v3216, %v3280
        %3282 = vmatmul.f32.gmra.mxu0 %v667
        %v3283 = vpop.f32.mrf.mxu0
        %v3284 = vadd.f32 %v3219, %v3283
        %3285 = vmatmul.f32.gmra.mxu0 %v671
        %v3286 = vpop.f32.mrf.mxu0
        %v3287 = vadd.f32 %v3222, %v3286
        %3288 = vmatmul.f32.gmra.mxu0 %v675
        %v3289 = vpop.f32.mrf.mxu0
        %v3290 = vadd.f32 %v3225, %v3289
        %3291 = vmatmul.f32.gmra.mxu0 %v679
        %v3292 = vpop.f32.mrf.mxu0
        %v3293 = vadd.f32 %v3228, %v3292
        %3294 = vmatmul.f32.gmra.mxu0 %v683
        %v3295 = vpop.f32.mrf.mxu0
        %v3296 = vadd.f32 %v3231, %v3295
        %3297 = vmatmul.f32.gmra.mxu0 %v687
        %v3298 = vpop.f32.mrf.mxu0
        %v3299 = vadd.f32 %v3234, %v3298
        %3300 = vmatmul.f32.gmra.mxu0 %v691
        %v3301 = vpop.f32.mrf.mxu0
        %v3302 = vadd.f32 %v3237, %v3301
        %3303 = vdwg.mxu0
        %3304 = vmatpush.msra.mxu0 %v2318
        %3305 = vmatpush.msra.mxu0 %v2314
        %3306 = vmatpush.msra.mxu0 %v2310
        %3307 = vmatpush.msra.mxu0 %v2306
        %3308 = vmatpush.msra.mxu0 %v2302
        %3309 = vmatpush.msra.mxu0 %v2298
        %3310 = vmatpush.msra.mxu0 %v2294
        %3311 = vmatpush.msra.mxu0 %v2290
        %3312 = vmatpush.msra.mxu0 %v2286
        %3313 = vmatpush.msra.mxu0 %v2282
        %3314 = vmatpush.msra.mxu0 %v2278
        %3315 = vmatpush.msra.mxu0 %v2274
        %3316 = vmatpush.msra.mxu0 %v2270
        %3317 = vmatpush.msra.mxu0 %v2266
        %3318 = vmatpush.msra.mxu0 %v2262
        %3319 = vmatpush.msra.mxu0 %v2258
        %3320 = vmatmul.f32.gmra.mxu0 %v632
        %v3321 = vpop.f32.mrf.mxu0
        %v3322 = vadd.f32 %v3257, %v3321
        %3323 = vmatmul.f32.gmra.mxu0 %v636
        %v3324 = vpop.f32.mrf.mxu0
        %v3325 = vadd.f32 %v3260, %v3324
        %3326 = vmatmul.f32.gmra.mxu0 %v640
        %v3327 = vpop.f32.mrf.mxu0
        %v3328 = vadd.f32 %v3263, %v3327
        %3329 = vmatmul.f32.gmra.mxu0 %v644
        %v3330 = vpop.f32.mrf.mxu0
        %v3331 = vadd.f32 %v3266, %v3330
        %3332 = vmatmul.f32.gmra.mxu0 %v648
        %v3333 = vpop.f32.mrf.mxu0
        %v3334 = vadd.f32 %v3269, %v3333
        %3335 = vmatmul.f32.gmra.mxu0 %v652
        %v3336 = vpop.f32.mrf.mxu0
        %v3337 = vadd.f32 %v3272, %v3336
        %3338 = vmatmul.f32.gmra.mxu0 %v656
        %v3339 = vpop.f32.mrf.mxu0
        %v3340 = vadd.f32 %v3275, %v3339
        %3341 = vmatmul.f32.gmra.mxu0 %v660
        %v3342 = vpop.f32.mrf.mxu0
        %v3343 = vadd.f32 %v3278, %v3342
        %3344 = vmatmul.f32.gmra.mxu0 %v664
        %v3345 = vpop.f32.mrf.mxu0
        %v3346 = vadd.f32 %v3281, %v3345
        %3347 = vmatmul.f32.gmra.mxu0 %v668
        %v3348 = vpop.f32.mrf.mxu0
        %v3349 = vadd.f32 %v3284, %v3348
        %3350 = vmatmul.f32.gmra.mxu0 %v672
        %v3351 = vpop.f32.mrf.mxu0
        %v3352 = vadd.f32 %v3287, %v3351
        %3353 = vmatmul.f32.gmra.mxu0 %v676
        %v3354 = vpop.f32.mrf.mxu0
        %v3355 = vadd.f32 %v3290, %v3354
        %3356 = vmatmul.f32.gmra.mxu0 %v680
        %v3357 = vpop.f32.mrf.mxu0
        %v3358 = vadd.f32 %v3293, %v3357
        %3359 = vmatmul.f32.gmra.mxu0 %v684
        %v3360 = vpop.f32.mrf.mxu0
        %v3361 = vadd.f32 %v3296, %v3360
        %3362 = vmatmul.f32.gmra.mxu0 %v688
        %v3363 = vpop.f32.mrf.mxu0
        %v3364 = vadd.f32 %v3299, %v3363
        %3365 = vmatmul.f32.gmra.mxu0 %v692
        %v3366 = vpop.f32.mrf.mxu0
        %v3367 = vadd.f32 %v3302, %v3366
        %3368 = vdwg.mxu0
        %3369 = vst [vmem:[#allocation3] sm:$0xff] %v2542
        %3370 = vst [vmem:[#allocation3 + $0x8] sm:$0xff] %v2802
        %3371 = vst [vmem:[#allocation3 + $0x10] sm:$0xff] %v3062
        %3372 = vst [vmem:[#allocation3 + $0x18] sm:$0xff] %v3322
        %3373 = vst [vmem:[#allocation3 + $0x20] sm:$0xff] %v2545
        %3374 = vst [vmem:[#allocation3 + $0x28] sm:$0xff] %v2805
        %3375 = vst [vmem:[#allocation3 + $0x30] sm:$0xff] %v3065
        %3376 = vst [vmem:[#allocation3 + $0x38] sm:$0xff] %v3325
        %3377 = vst [vmem:[#allocation3 + $0x40] sm:$0xff] %v2548
        %3378 = vst [vmem:[#allocation3 + $0x48] sm:$0xff] %v2808
        %3379 = vst [vmem:[#allocation3 + $0x50] sm:$0xff] %v3068
        %3380 = vst [vmem:[#allocation3 + $0x58] sm:$0xff] %v3328
        %3381 = vst [vmem:[#allocation3 + $0x60] sm:$0xff] %v2551
        %3382 = vst [vmem:[#allocation3 + $0x68] sm:$0xff] %v2811
        %3383 = vst [vmem:[#allocation3 + $0x70] sm:$0xff] %v3071
        %3384 = vst [vmem:[#allocation3 + $0x78] sm:$0xff] %v3331
        %3385 = vst [vmem:[#allocation3 + $0x80] sm:$0xff] %v2554
        %3386 = vst [vmem:[#allocation3 + $0x88] sm:$0xff] %v2814
        %3387 = vst [vmem:[#allocation3 + $0x90] sm:$0xff] %v3074
        %3388 = vst [vmem:[#allocation3 + $0x98] sm:$0xff] %v3334
        %3389 = vst [vmem:[#allocation3 + $0xa0] sm:$0xff] %v2557
        %3390 = vst [vmem:[#allocation3 + $0xa8] sm:$0xff] %v2817
        %3391 = vst [vmem:[#allocation3 + $0xb0] sm:$0xff] %v3077
        %3392 = vst [vmem:[#allocation3 + $0xb8] sm:$0xff] %v3337
        %3393 = vst [vmem:[#allocation3 + $0xc0] sm:$0xff] %v2560
        %3394 = vst [vmem:[#allocation3 + $0xc8] sm:$0xff] %v2820
        %3395 = vst [vmem:[#allocation3 + $0xd0] sm:$0xff] %v3080
        %3396 = vst [vmem:[#allocation3 + $0xd8] sm:$0xff] %v3340
        %3397 = vst [vmem:[#allocation3 + $0xe0] sm:$0xff] %v2563
        %3398 = vst [vmem:[#allocation3 + $0xe8] sm:$0xff] %v2823
        %3399 = vst [vmem:[#allocation3 + $0xf0] sm:$0xff] %v3083
        %3400 = vst [vmem:[#allocation3 + $0xf8] sm:$0xff] %v3343
        %3401 = vst [vmem:[#allocation3 + $0x100] sm:$0xff] %v2566
        %3402 = vst [vmem:[#allocation3 + $0x108] sm:$0xff] %v2826
        %3403 = vst [vmem:[#allocation3 + $0x110] sm:$0xff] %v3086
        %3404 = vst [vmem:[#allocation3 + $0x118] sm:$0xff] %v3346
        %3405 = vst [vmem:[#allocation3 + $0x120] sm:$0xff] %v2569
        %3406 = vst [vmem:[#allocation3 + $0x128] sm:$0xff] %v2829
        %3407 = vst [vmem:[#allocation3 + $0x130] sm:$0xff] %v3089
        %3408 = vst [vmem:[#allocation3 + $0x138] sm:$0xff] %v3349
        %3409 = vst [vmem:[#allocation3 + $0x140] sm:$0xff] %v2572
        %3410 = vst [vmem:[#allocation3 + $0x148] sm:$0xff] %v2832
        %3411 = vst [vmem:[#allocation3 + $0x150] sm:$0xff] %v3092
        %3412 = vst [vmem:[#allocation3 + $0x158] sm:$0xff] %v3352
        %3413 = vst [vmem:[#allocation3 + $0x160] sm:$0xff] %v2575
        %3414 = vst [vmem:[#allocation3 + $0x168] sm:$0xff] %v2835
        %3415 = vst [vmem:[#allocation3 + $0x170] sm:$0xff] %v3095
        %3416 = vst [vmem:[#allocation3 + $0x178] sm:$0xff] %v3355
        %3417 = vst [vmem:[#allocation3 + $0x180] sm:$0xff] %v2578
        %3418 = vst [vmem:[#allocation3 + $0x188] sm:$0xff] %v2838
        %3419 = vst [vmem:[#allocation3 + $0x190] sm:$0xff] %v3098
        %3420 = vst [vmem:[#allocation3 + $0x198] sm:$0xff] %v3358
        %3421 = vst [vmem:[#allocation3 + $0x1a0] sm:$0xff] %v2581
        %3422 = vst [vmem:[#allocation3 + $0x1a8] sm:$0xff] %v2841
        %3423 = vst [vmem:[#allocation3 + $0x1b0] sm:$0xff] %v3101
        %3424 = vst [vmem:[#allocation3 + $0x1b8] sm:$0xff] %v3361
        %3425 = vst [vmem:[#allocation3 + $0x1c0] sm:$0xff] %v2584
        %3426 = vst [vmem:[#allocation3 + $0x1c8] sm:$0xff] %v2844
        %3427 = vst [vmem:[#allocation3 + $0x1d0] sm:$0xff] %v3104
        %3428 = vst [vmem:[#allocation3 + $0x1d8] sm:$0xff] %v3364
        %3429 = vst [vmem:[#allocation3 + $0x1e0] sm:$0xff] %v2587
        %3430 = vst [vmem:[#allocation3 + $0x1e8] sm:$0xff] %v2847
        %3431 = vst [vmem:[#allocation3 + $0x1f0] sm:$0xff] %v3107
        %3432 = vst [vmem:[#allocation3 + $0x1f8] sm:$0xff] %v3367
        %v3433 = vld [vmem:[#allocation15] sm:$0xff]
        %v3434 = vld [vmem:[#allocation15 + $0x8] sm:$0xff]
        %v3435 = vld [vmem:[#allocation15 + $0x10] sm:$0xff]
        %v3436 = vld [vmem:[#allocation15 + $0x18] sm:$0xff]
        %v3437 = vld [vmem:[#allocation15 + $0x20] sm:$0xff]
        %v3438 = vld [vmem:[#allocation15 + $0x28] sm:$0xff]
        %v3439 = vld [vmem:[#allocation15 + $0x30] sm:$0xff]
        %v3440 = vld [vmem:[#allocation15 + $0x38] sm:$0xff]
        %v3441 = vld [vmem:[#allocation15 + $0x40] sm:$0xff]
        %v3442 = vld [vmem:[#allocation15 + $0x48] sm:$0xff]
        %v3443 = vld [vmem:[#allocation15 + $0x50] sm:$0xff]
        %v3444 = vld [vmem:[#allocation15 + $0x58] sm:$0xff]
        %v3445 = vld [vmem:[#allocation15 + $0x60] sm:$0xff]
        %v3446 = vld [vmem:[#allocation15 + $0x68] sm:$0xff]
        %v3447 = vld [vmem:[#allocation15 + $0x70] sm:$0xff]
        %v3448 = vld [vmem:[#allocation15 + $0x78] sm:$0xff]
        %v3449 = vld [vmem:[#allocation15 + $0x80] sm:$0xff]
        %v3450 = vld [vmem:[#allocation15 + $0x88] sm:$0xff]
        %v3451 = vld [vmem:[#allocation15 + $0x90] sm:$0xff]
        %v3452 = vld [vmem:[#allocation15 + $0x98] sm:$0xff]
        %v3453 = vld [vmem:[#allocation15 + $0xa0] sm:$0xff]
        %v3454 = vld [vmem:[#allocation15 + $0xa8] sm:$0xff]
        %v3455 = vld [vmem:[#allocation15 + $0xb0] sm:$0xff]
        %v3456 = vld [vmem:[#allocation15 + $0xb8] sm:$0xff]
        %v3457 = vld [vmem:[#allocation15 + $0xc0] sm:$0xff]
        %v3458 = vld [vmem:[#allocation15 + $0xc8] sm:$0xff]
        %v3459 = vld [vmem:[#allocation15 + $0xd0] sm:$0xff]
        %v3460 = vld [vmem:[#allocation15 + $0xd8] sm:$0xff]
        %v3461 = vld [vmem:[#allocation15 + $0xe0] sm:$0xff]
        %v3462 = vld [vmem:[#allocation15 + $0xe8] sm:$0xff]
        %v3463 = vld [vmem:[#allocation15 + $0xf0] sm:$0xff]
        %v3464 = vld [vmem:[#allocation15 + $0xf8] sm:$0xff]
        %v3465 = vld [vmem:[#allocation15 + $0x100] sm:$0xff]
        %v3466 = vld [vmem:[#allocation15 + $0x108] sm:$0xff]
        %v3467 = vld [vmem:[#allocation15 + $0x110] sm:$0xff]
        %v3468 = vld [vmem:[#allocation15 + $0x118] sm:$0xff]
        %v3469 = vld [vmem:[#allocation15 + $0x120] sm:$0xff]
        %v3470 = vld [vmem:[#allocation15 + $0x128] sm:$0xff]
        %v3471 = vld [vmem:[#allocation15 + $0x130] sm:$0xff]
        %v3472 = vld [vmem:[#allocation15 + $0x138] sm:$0xff]
        %v3473 = vld [vmem:[#allocation15 + $0x140] sm:$0xff]
        %v3474 = vld [vmem:[#allocation15 + $0x148] sm:$0xff]
        %v3475 = vld [vmem:[#allocation15 + $0x150] sm:$0xff]
        %v3476 = vld [vmem:[#allocation15 + $0x158] sm:$0xff]
        %v3477 = vld [vmem:[#allocation15 + $0x160] sm:$0xff]
        %v3478 = vld [vmem:[#allocation15 + $0x168] sm:$0xff]
        %v3479 = vld [vmem:[#allocation15 + $0x170] sm:$0xff]
        %v3480 = vld [vmem:[#allocation15 + $0x178] sm:$0xff]
        %v3481 = vld [vmem:[#allocation15 + $0x180] sm:$0xff]
        %v3482 = vld [vmem:[#allocation15 + $0x188] sm:$0xff]
        %v3483 = vld [vmem:[#allocation15 + $0x190] sm:$0xff]
        %v3484 = vld [vmem:[#allocation15 + $0x198] sm:$0xff]
        %v3485 = vld [vmem:[#allocation15 + $0x1a0] sm:$0xff]
        %v3486 = vld [vmem:[#allocation15 + $0x1a8] sm:$0xff]
        %v3487 = vld [vmem:[#allocation15 + $0x1b0] sm:$0xff]
        %v3488 = vld [vmem:[#allocation15 + $0x1b8] sm:$0xff]
        %v3489 = vld [vmem:[#allocation15 + $0x1c0] sm:$0xff]
        %v3490 = vld [vmem:[#allocation15 + $0x1c8] sm:$0xff]
        %v3491 = vld [vmem:[#allocation15 + $0x1d0] sm:$0xff]
        %v3492 = vld [vmem:[#allocation15 + $0x1d8] sm:$0xff]
        %v3493 = vld [vmem:[#allocation15 + $0x1e0] sm:$0xff]
        %v3494 = vld [vmem:[#allocation15 + $0x1e8] sm:$0xff]
        %v3495 = vld [vmem:[#allocation15 + $0x1f0] sm:$0xff]
        %v3496 = vld [vmem:[#allocation15 + $0x1f8] sm:$0xff]
        %v3497 = vld [vmem:[#allocation15 + $0x200] sm:$0xff]
        %v3498 = vld [vmem:[#allocation15 + $0x208] sm:$0xff]
        %v3499 = vld [vmem:[#allocation15 + $0x210] sm:$0xff]
        %v3500 = vld [vmem:[#allocation15 + $0x218] sm:$0xff]
        %v3501 = vld [vmem:[#allocation15 + $0x220] sm:$0xff]
        %v3502 = vld [vmem:[#allocation15 + $0x228] sm:$0xff]
        %v3503 = vld [vmem:[#allocation15 + $0x230] sm:$0xff]
        %v3504 = vld [vmem:[#allocation15 + $0x238] sm:$0xff]
        %v3505 = vld [vmem:[#allocation15 + $0x240] sm:$0xff]
        %v3506 = vld [vmem:[#allocation15 + $0x248] sm:$0xff]
        %v3507 = vld [vmem:[#allocation15 + $0x250] sm:$0xff]
        %v3508 = vld [vmem:[#allocation15 + $0x258] sm:$0xff]
        %v3509 = vld [vmem:[#allocation15 + $0x260] sm:$0xff]
        %v3510 = vld [vmem:[#allocation15 + $0x268] sm:$0xff]
        %v3511 = vld [vmem:[#allocation15 + $0x270] sm:$0xff]
        %v3512 = vld [vmem:[#allocation15 + $0x278] sm:$0xff]
        %v3513 = vld [vmem:[#allocation15 + $0x280] sm:$0xff]
        %v3514 = vld [vmem:[#allocation15 + $0x288] sm:$0xff]
        %v3515 = vld [vmem:[#allocation15 + $0x290] sm:$0xff]
        %v3516 = vld [vmem:[#allocation15 + $0x298] sm:$0xff]
        %v3517 = vld [vmem:[#allocation15 + $0x2a0] sm:$0xff]
        %v3518 = vld [vmem:[#allocation15 + $0x2a8] sm:$0xff]
        %v3519 = vld [vmem:[#allocation15 + $0x2b0] sm:$0xff]
        %v3520 = vld [vmem:[#allocation15 + $0x2b8] sm:$0xff]
        %v3521 = vld [vmem:[#allocation15 + $0x2c0] sm:$0xff]
        %v3522 = vld [vmem:[#allocation15 + $0x2c8] sm:$0xff]
        %v3523 = vld [vmem:[#allocation15 + $0x2d0] sm:$0xff]
        %v3524 = vld [vmem:[#allocation15 + $0x2d8] sm:$0xff]
        %v3525 = vld [vmem:[#allocation15 + $0x2e0] sm:$0xff]
        %v3526 = vld [vmem:[#allocation15 + $0x2e8] sm:$0xff]
        %v3527 = vld [vmem:[#allocation15 + $0x2f0] sm:$0xff]
        %v3528 = vld [vmem:[#allocation15 + $0x2f8] sm:$0xff]
        %v3529 = vld [vmem:[#allocation15 + $0x300] sm:$0xff]
        %v3530 = vld [vmem:[#allocation15 + $0x308] sm:$0xff]
        %v3531 = vld [vmem:[#allocation15 + $0x310] sm:$0xff]
        %v3532 = vld [vmem:[#allocation15 + $0x318] sm:$0xff]
        %v3533 = vld [vmem:[#allocation15 + $0x320] sm:$0xff]
        %v3534 = vld [vmem:[#allocation15 + $0x328] sm:$0xff]
        %v3535 = vld [vmem:[#allocation15 + $0x330] sm:$0xff]
        %v3536 = vld [vmem:[#allocation15 + $0x338] sm:$0xff]
        %v3537 = vld [vmem:[#allocation15 + $0x340] sm:$0xff]
        %v3538 = vld [vmem:[#allocation15 + $0x348] sm:$0xff]
        %v3539 = vld [vmem:[#allocation15 + $0x350] sm:$0xff]
        %v3540 = vld [vmem:[#allocation15 + $0x358] sm:$0xff]
        %v3541 = vld [vmem:[#allocation15 + $0x360] sm:$0xff]
        %v3542 = vld [vmem:[#allocation15 + $0x368] sm:$0xff]
        %v3543 = vld [vmem:[#allocation15 + $0x370] sm:$0xff]
        %v3544 = vld [vmem:[#allocation15 + $0x378] sm:$0xff]
        %v3545 = vld [vmem:[#allocation15 + $0x380] sm:$0xff]
        %v3546 = vld [vmem:[#allocation15 + $0x388] sm:$0xff]
        %v3547 = vld [vmem:[#allocation15 + $0x390] sm:$0xff]
        %v3548 = vld [vmem:[#allocation15 + $0x398] sm:$0xff]
        %v3549 = vld [vmem:[#allocation15 + $0x3a0] sm:$0xff]
        %v3550 = vld [vmem:[#allocation15 + $0x3a8] sm:$0xff]
        %v3551 = vld [vmem:[#allocation15 + $0x3b0] sm:$0xff]
        %v3552 = vld [vmem:[#allocation15 + $0x3b8] sm:$0xff]
        %v3553 = vld [vmem:[#allocation15 + $0x3c0] sm:$0xff]
        %v3554 = vld [vmem:[#allocation15 + $0x3c8] sm:$0xff]
        %v3555 = vld [vmem:[#allocation15 + $0x3d0] sm:$0xff]
        %v3556 = vld [vmem:[#allocation15 + $0x3d8] sm:$0xff]
        %v3557 = vld [vmem:[#allocation15 + $0x3e0] sm:$0xff]
        %v3558 = vld [vmem:[#allocation15 + $0x3e8] sm:$0xff]
        %v3559 = vld [vmem:[#allocation15 + $0x3f0] sm:$0xff]
        %v3560 = vld [vmem:[#allocation15 + $0x3f8] sm:$0xff]
        %v3561 = vld [vmem:[#allocation15 + $0x400] sm:$0xff]
        %v3562 = vld [vmem:[#allocation15 + $0x408] sm:$0xff]
        %v3563 = vld [vmem:[#allocation15 + $0x410] sm:$0xff]
        %v3564 = vld [vmem:[#allocation15 + $0x418] sm:$0xff]
        %v3565 = vld [vmem:[#allocation15 + $0x420] sm:$0xff]
        %v3566 = vld [vmem:[#allocation15 + $0x428] sm:$0xff]
        %v3567 = vld [vmem:[#allocation15 + $0x430] sm:$0xff]
        %v3568 = vld [vmem:[#allocation15 + $0x438] sm:$0xff]
        %v3569 = vld [vmem:[#allocation15 + $0x440] sm:$0xff]
        %v3570 = vld [vmem:[#allocation15 + $0x448] sm:$0xff]
        %v3571 = vld [vmem:[#allocation15 + $0x450] sm:$0xff]
        %v3572 = vld [vmem:[#allocation15 + $0x458] sm:$0xff]
        %v3573 = vld [vmem:[#allocation15 + $0x460] sm:$0xff]
        %v3574 = vld [vmem:[#allocation15 + $0x468] sm:$0xff]
        %v3575 = vld [vmem:[#allocation15 + $0x470] sm:$0xff]
        %v3576 = vld [vmem:[#allocation15 + $0x478] sm:$0xff]
        %v3577 = vld [vmem:[#allocation15 + $0x480] sm:$0xff]
        %v3578 = vld [vmem:[#allocation15 + $0x488] sm:$0xff]
        %v3579 = vld [vmem:[#allocation15 + $0x490] sm:$0xff]
        %v3580 = vld [vmem:[#allocation15 + $0x498] sm:$0xff]
        %v3581 = vld [vmem:[#allocation15 + $0x4a0] sm:$0xff]
        %v3582 = vld [vmem:[#allocation15 + $0x4a8] sm:$0xff]
        %v3583 = vld [vmem:[#allocation15 + $0x4b0] sm:$0xff]
        %v3584 = vld [vmem:[#allocation15 + $0x4b8] sm:$0xff]
        %v3585 = vld [vmem:[#allocation15 + $0x4c0] sm:$0xff]
        %v3586 = vld [vmem:[#allocation15 + $0x4c8] sm:$0xff]
        %v3587 = vld [vmem:[#allocation15 + $0x4d0] sm:$0xff]
        %v3588 = vld [vmem:[#allocation15 + $0x4d8] sm:$0xff]
        %v3589 = vld [vmem:[#allocation15 + $0x4e0] sm:$0xff]
        %v3590 = vld [vmem:[#allocation15 + $0x4e8] sm:$0xff]
        %v3591 = vld [vmem:[#allocation15 + $0x4f0] sm:$0xff]
        %v3592 = vld [vmem:[#allocation15 + $0x4f8] sm:$0xff]
        %v3593 = vld [vmem:[#allocation15 + $0x500] sm:$0xff]
        %v3594 = vld [vmem:[#allocation15 + $0x508] sm:$0xff]
        %v3595 = vld [vmem:[#allocation15 + $0x510] sm:$0xff]
        %v3596 = vld [vmem:[#allocation15 + $0x518] sm:$0xff]
        %v3597 = vld [vmem:[#allocation15 + $0x520] sm:$0xff]
        %v3598 = vld [vmem:[#allocation15 + $0x528] sm:$0xff]
        %v3599 = vld [vmem:[#allocation15 + $0x530] sm:$0xff]
        %v3600 = vld [vmem:[#allocation15 + $0x538] sm:$0xff]
        %v3601 = vld [vmem:[#allocation15 + $0x540] sm:$0xff]
        %v3602 = vld [vmem:[#allocation15 + $0x548] sm:$0xff]
        %v3603 = vld [vmem:[#allocation15 + $0x550] sm:$0xff]
        %v3604 = vld [vmem:[#allocation15 + $0x558] sm:$0xff]
        %v3605 = vld [vmem:[#allocation15 + $0x560] sm:$0xff]
        %v3606 = vld [vmem:[#allocation15 + $0x568] sm:$0xff]
        %v3607 = vld [vmem:[#allocation15 + $0x570] sm:$0xff]
        %v3608 = vld [vmem:[#allocation15 + $0x578] sm:$0xff]
        %v3609 = vld [vmem:[#allocation15 + $0x580] sm:$0xff]
        %v3610 = vld [vmem:[#allocation15 + $0x588] sm:$0xff]
        %v3611 = vld [vmem:[#allocation15 + $0x590] sm:$0xff]
        %v3612 = vld [vmem:[#allocation15 + $0x598] sm:$0xff]
        %v3613 = vld [vmem:[#allocation15 + $0x5a0] sm:$0xff]
        %v3614 = vld [vmem:[#allocation15 + $0x5a8] sm:$0xff]
        %v3615 = vld [vmem:[#allocation15 + $0x5b0] sm:$0xff]
        %v3616 = vld [vmem:[#allocation15 + $0x5b8] sm:$0xff]
        %v3617 = vld [vmem:[#allocation15 + $0x5c0] sm:$0xff]
        %v3618 = vld [vmem:[#allocation15 + $0x5c8] sm:$0xff]
        %v3619 = vld [vmem:[#allocation15 + $0x5d0] sm:$0xff]
        %v3620 = vld [vmem:[#allocation15 + $0x5d8] sm:$0xff]
        %v3621 = vld [vmem:[#allocation15 + $0x5e0] sm:$0xff]
        %v3622 = vld [vmem:[#allocation15 + $0x5e8] sm:$0xff]
        %v3623 = vld [vmem:[#allocation15 + $0x5f0] sm:$0xff]
        %v3624 = vld [vmem:[#allocation15 + $0x5f8] sm:$0xff]
        %v3625 = vld [vmem:[#allocation15 + $0x600] sm:$0xff]
        %v3626 = vld [vmem:[#allocation15 + $0x608] sm:$0xff]
        %v3627 = vld [vmem:[#allocation15 + $0x610] sm:$0xff]
        %v3628 = vld [vmem:[#allocation15 + $0x618] sm:$0xff]
        %v3629 = vld [vmem:[#allocation15 + $0x620] sm:$0xff]
        %v3630 = vld [vmem:[#allocation15 + $0x628] sm:$0xff]
        %v3631 = vld [vmem:[#allocation15 + $0x630] sm:$0xff]
        %v3632 = vld [vmem:[#allocation15 + $0x638] sm:$0xff]
        %v3633 = vld [vmem:[#allocation15 + $0x640] sm:$0xff]
        %v3634 = vld [vmem:[#allocation15 + $0x648] sm:$0xff]
        %v3635 = vld [vmem:[#allocation15 + $0x650] sm:$0xff]
        %v3636 = vld [vmem:[#allocation15 + $0x658] sm:$0xff]
        %v3637 = vld [vmem:[#allocation15 + $0x660] sm:$0xff]
        %v3638 = vld [vmem:[#allocation15 + $0x668] sm:$0xff]
        %v3639 = vld [vmem:[#allocation15 + $0x670] sm:$0xff]
        %v3640 = vld [vmem:[#allocation15 + $0x678] sm:$0xff]
        %v3641 = vld [vmem:[#allocation15 + $0x680] sm:$0xff]
        %v3642 = vld [vmem:[#allocation15 + $0x688] sm:$0xff]
        %v3643 = vld [vmem:[#allocation15 + $0x690] sm:$0xff]
        %v3644 = vld [vmem:[#allocation15 + $0x698] sm:$0xff]
        %v3645 = vld [vmem:[#allocation15 + $0x6a0] sm:$0xff]
        %v3646 = vld [vmem:[#allocation15 + $0x6a8] sm:$0xff]
        %v3647 = vld [vmem:[#allocation15 + $0x6b0] sm:$0xff]
        %v3648 = vld [vmem:[#allocation15 + $0x6b8] sm:$0xff]
        %v3649 = vld [vmem:[#allocation15 + $0x6c0] sm:$0xff]
        %v3650 = vld [vmem:[#allocation15 + $0x6c8] sm:$0xff]
        %v3651 = vld [vmem:[#allocation15 + $0x6d0] sm:$0xff]
        %v3652 = vld [vmem:[#allocation15 + $0x6d8] sm:$0xff]
        %v3653 = vld [vmem:[#allocation15 + $0x6e0] sm:$0xff]
        %v3654 = vld [vmem:[#allocation15 + $0x6e8] sm:$0xff]
        %v3655 = vld [vmem:[#allocation15 + $0x6f0] sm:$0xff]
        %v3656 = vld [vmem:[#allocation15 + $0x6f8] sm:$0xff]
        %v3657 = vld [vmem:[#allocation15 + $0x700] sm:$0xff]
        %v3658 = vld [vmem:[#allocation15 + $0x708] sm:$0xff]
        %v3659 = vld [vmem:[#allocation15 + $0x710] sm:$0xff]
        %v3660 = vld [vmem:[#allocation15 + $0x718] sm:$0xff]
        %v3661 = vld [vmem:[#allocation15 + $0x720] sm:$0xff]
        %v3662 = vld [vmem:[#allocation15 + $0x728] sm:$0xff]
        %v3663 = vld [vmem:[#allocation15 + $0x730] sm:$0xff]
        %v3664 = vld [vmem:[#allocation15 + $0x738] sm:$0xff]
        %v3665 = vld [vmem:[#allocation15 + $0x740] sm:$0xff]
        %v3666 = vld [vmem:[#allocation15 + $0x748] sm:$0xff]
        %v3667 = vld [vmem:[#allocation15 + $0x750] sm:$0xff]
        %v3668 = vld [vmem:[#allocation15 + $0x758] sm:$0xff]
        %v3669 = vld [vmem:[#allocation15 + $0x760] sm:$0xff]
        %v3670 = vld [vmem:[#allocation15 + $0x768] sm:$0xff]
        %v3671 = vld [vmem:[#allocation15 + $0x770] sm:$0xff]
        %v3672 = vld [vmem:[#allocation15 + $0x778] sm:$0xff]
        %v3673 = vld [vmem:[#allocation15 + $0x780] sm:$0xff]
        %v3674 = vld [vmem:[#allocation15 + $0x788] sm:$0xff]
        %v3675 = vld [vmem:[#allocation15 + $0x790] sm:$0xff]
        %v3676 = vld [vmem:[#allocation15 + $0x798] sm:$0xff]
        %v3677 = vld [vmem:[#allocation15 + $0x7a0] sm:$0xff]
        %v3678 = vld [vmem:[#allocation15 + $0x7a8] sm:$0xff]
        %v3679 = vld [vmem:[#allocation15 + $0x7b0] sm:$0xff]
        %v3680 = vld [vmem:[#allocation15 + $0x7b8] sm:$0xff]
        %v3681 = vld [vmem:[#allocation15 + $0x7c0] sm:$0xff]
        %v3682 = vld [vmem:[#allocation15 + $0x7c8] sm:$0xff]
        %v3683 = vld [vmem:[#allocation15 + $0x7d0] sm:$0xff]
        %v3684 = vld [vmem:[#allocation15 + $0x7d8] sm:$0xff]
        %v3685 = vld [vmem:[#allocation15 + $0x7e0] sm:$0xff]
        %v3686 = vld [vmem:[#allocation15 + $0x7e8] sm:$0xff]
        %v3687 = vld [vmem:[#allocation15 + $0x7f0] sm:$0xff]
        %v3688 = vld [vmem:[#allocation15 + $0x7f8] sm:$0xff]
        %v3689 = vld [vmem:[%s6] sm:$0xf]
        %v3691 = vperm.slane %v3689, 0
        %v3692 = vperm.slane %v3689, 1
        %v3693 = vperm.slane %v3689, 2
        %v3694 = vperm.slane %v3689, 3
        %3699 = vmatpush.msra.mxu0 %v3493
        %3700 = vmatpush.msra.mxu0 %v3489
        %3701 = vmatpush.msra.mxu0 %v3485
        %3702 = vmatpush.msra.mxu0 %v3481
        %3703 = vmatpush.msra.mxu0 %v3477
        %3704 = vmatpush.msra.mxu0 %v3473
        %3705 = vmatpush.msra.mxu0 %v3469
        %3706 = vmatpush.msra.mxu0 %v3465
        %3707 = vmatpush.msra.mxu0 %v3461
        %3708 = vmatpush.msra.mxu0 %v3457
        %3709 = vmatpush.msra.mxu0 %v3453
        %3710 = vmatpush.msra.mxu0 %v3449
        %3711 = vmatpush.msra.mxu0 %v3445
        %3712 = vmatpush.msra.mxu0 %v3441
        %3713 = vmatpush.msra.mxu0 %v3437
        %3714 = vmatpush.msra.mxu0 %v3433
        %3715 = vmatmul.f32.gmra.mxu0 %v629
        %v3716 = vpop.f32.mrf.mxu0
        %v3717 = vadd.f32 %v3691, %v3716
        %3718 = vmatmul.f32.gmra.mxu0 %v633
        %v3719 = vpop.f32.mrf.mxu0
        %v3720 = vadd.f32 %v3691, %v3719
        %3721 = vmatmul.f32.gmra.mxu0 %v637
        %v3722 = vpop.f32.mrf.mxu0
        %v3723 = vadd.f32 %v3691, %v3722
        %3724 = vmatmul.f32.gmra.mxu0 %v641
        %v3725 = vpop.f32.mrf.mxu0
        %v3726 = vadd.f32 %v3691, %v3725
        %3727 = vmatmul.f32.gmra.mxu0 %v645
        %v3728 = vpop.f32.mrf.mxu0
        %v3729 = vadd.f32 %v3691, %v3728
        %3730 = vmatmul.f32.gmra.mxu0 %v649
        %v3731 = vpop.f32.mrf.mxu0
        %v3732 = vadd.f32 %v3691, %v3731
        %3733 = vmatmul.f32.gmra.mxu0 %v653
        %v3734 = vpop.f32.mrf.mxu0
        %v3735 = vadd.f32 %v3691, %v3734
        %3736 = vmatmul.f32.gmra.mxu0 %v657
        %v3737 = vpop.f32.mrf.mxu0
        %v3738 = vadd.f32 %v3691, %v3737
        %3739 = vmatmul.f32.gmra.mxu0 %v661
        %v3740 = vpop.f32.mrf.mxu0
        %v3741 = vadd.f32 %v3691, %v3740
        %3742 = vmatmul.f32.gmra.mxu0 %v665
        %v3743 = vpop.f32.mrf.mxu0
        %v3744 = vadd.f32 %v3691, %v3743
        %3745 = vmatmul.f32.gmra.mxu0 %v669
        %v3746 = vpop.f32.mrf.mxu0
        %v3747 = vadd.f32 %v3691, %v3746
        %3748 = vmatmul.f32.gmra.mxu0 %v673
        %v3749 = vpop.f32.mrf.mxu0
        %v3750 = vadd.f32 %v3691, %v3749
        %3751 = vmatmul.f32.gmra.mxu0 %v677
        %v3752 = vpop.f32.mrf.mxu0
        %v3753 = vadd.f32 %v3691, %v3752
        %3754 = vmatmul.f32.gmra.mxu0 %v681
        %v3755 = vpop.f32.mrf.mxu0
        %v3756 = vadd.f32 %v3691, %v3755
        %3757 = vmatmul.f32.gmra.mxu0 %v685
        %v3758 = vpop.f32.mrf.mxu0
        %v3759 = vadd.f32 %v3691, %v3758
        %3760 = vmatmul.f32.gmra.mxu0 %v689
        %v3761 = vpop.f32.mrf.mxu0
        %v3762 = vadd.f32 %v3691, %v3761
        %3763 = vdwg.mxu0
        %3764 = vmatpush.msra.mxu0 %v3557
        %3765 = vmatpush.msra.mxu0 %v3553
        %3766 = vmatpush.msra.mxu0 %v3549
        %3767 = vmatpush.msra.mxu0 %v3545
        %3768 = vmatpush.msra.mxu0 %v3541
        %3769 = vmatpush.msra.mxu0 %v3537
        %3770 = vmatpush.msra.mxu0 %v3533
        %3771 = vmatpush.msra.mxu0 %v3529
        %3772 = vmatpush.msra.mxu0 %v3525
        %3773 = vmatpush.msra.mxu0 %v3521
        %3774 = vmatpush.msra.mxu0 %v3517
        %3775 = vmatpush.msra.mxu0 %v3513
        %3776 = vmatpush.msra.mxu0 %v3509
        %3777 = vmatpush.msra.mxu0 %v3505
        %3778 = vmatpush.msra.mxu0 %v3501
        %3779 = vmatpush.msra.mxu0 %v3497
        %3780 = vmatmul.f32.gmra.mxu0 %v630
        %v3781 = vpop.f32.mrf.mxu0
        %v3782 = vadd.f32 %v3717, %v3781
        %3783 = vmatmul.f32.gmra.mxu0 %v634
        %v3784 = vpop.f32.mrf.mxu0
        %v3785 = vadd.f32 %v3720, %v3784
        %3786 = vmatmul.f32.gmra.mxu0 %v638
        %v3787 = vpop.f32.mrf.mxu0
        %v3788 = vadd.f32 %v3723, %v3787
        %3789 = vmatmul.f32.gmra.mxu0 %v642
        %v3790 = vpop.f32.mrf.mxu0
        %v3791 = vadd.f32 %v3726, %v3790
        %3792 = vmatmul.f32.gmra.mxu0 %v646
        %v3793 = vpop.f32.mrf.mxu0
        %v3794 = vadd.f32 %v3729, %v3793
        %3795 = vmatmul.f32.gmra.mxu0 %v650
        %v3796 = vpop.f32.mrf.mxu0
        %v3797 = vadd.f32 %v3732, %v3796
        %3798 = vmatmul.f32.gmra.mxu0 %v654
        %v3799 = vpop.f32.mrf.mxu0
        %v3800 = vadd.f32 %v3735, %v3799
        %3801 = vmatmul.f32.gmra.mxu0 %v658
        %v3802 = vpop.f32.mrf.mxu0
        %v3803 = vadd.f32 %v3738, %v3802
        %3804 = vmatmul.f32.gmra.mxu0 %v662
        %v3805 = vpop.f32.mrf.mxu0
        %v3806 = vadd.f32 %v3741, %v3805
        %3807 = vmatmul.f32.gmra.mxu0 %v666
        %v3808 = vpop.f32.mrf.mxu0
        %v3809 = vadd.f32 %v3744, %v3808
        %3810 = vmatmul.f32.gmra.mxu0 %v670
        %v3811 = vpop.f32.mrf.mxu0
        %v3812 = vadd.f32 %v3747, %v3811
        %3813 = vmatmul.f32.gmra.mxu0 %v674
        %v3814 = vpop.f32.mrf.mxu0
        %v3815 = vadd.f32 %v3750, %v3814
        %3816 = vmatmul.f32.gmra.mxu0 %v678
        %v3817 = vpop.f32.mrf.mxu0
        %v3818 = vadd.f32 %v3753, %v3817
        %3819 = vmatmul.f32.gmra.mxu0 %v682
        %v3820 = vpop.f32.mrf.mxu0
        %v3821 = vadd.f32 %v3756, %v3820
        %3822 = vmatmul.f32.gmra.mxu0 %v686
        %v3823 = vpop.f32.mrf.mxu0
        %v3824 = vadd.f32 %v3759, %v3823
        %3825 = vmatmul.f32.gmra.mxu0 %v690
        %v3826 = vpop.f32.mrf.mxu0
        %v3827 = vadd.f32 %v3762, %v3826
        %3828 = vdwg.mxu0
        %3829 = vmatpush.msra.mxu0 %v3621
        %3830 = vmatpush.msra.mxu0 %v3617
        %3831 = vmatpush.msra.mxu0 %v3613
        %3832 = vmatpush.msra.mxu0 %v3609
        %3833 = vmatpush.msra.mxu0 %v3605
        %3834 = vmatpush.msra.mxu0 %v3601
        %3835 = vmatpush.msra.mxu0 %v3597
        %3836 = vmatpush.msra.mxu0 %v3593
        %3837 = vmatpush.msra.mxu0 %v3589
        %3838 = vmatpush.msra.mxu0 %v3585
        %3839 = vmatpush.msra.mxu0 %v3581
        %3840 = vmatpush.msra.mxu0 %v3577
        %3841 = vmatpush.msra.mxu0 %v3573
        %3842 = vmatpush.msra.mxu0 %v3569
        %3843 = vmatpush.msra.mxu0 %v3565
        %3844 = vmatpush.msra.mxu0 %v3561
        %3845 = vmatmul.f32.gmra.mxu0 %v631
        %v3846 = vpop.f32.mrf.mxu0
        %v3847 = vadd.f32 %v3782, %v3846
        %3848 = vmatmul.f32.gmra.mxu0 %v635
        %v3849 = vpop.f32.mrf.mxu0
        %v3850 = vadd.f32 %v3785, %v3849
        %3851 = vmatmul.f32.gmra.mxu0 %v639
        %v3852 = vpop.f32.mrf.mxu0
        %v3853 = vadd.f32 %v3788, %v3852
        %3854 = vmatmul.f32.gmra.mxu0 %v643
        %v3855 = vpop.f32.mrf.mxu0
        %v3856 = vadd.f32 %v3791, %v3855
        %3857 = vmatmul.f32.gmra.mxu0 %v647
        %v3858 = vpop.f32.mrf.mxu0
        %v3859 = vadd.f32 %v3794, %v3858
        %3860 = vmatmul.f32.gmra.mxu0 %v651
        %v3861 = vpop.f32.mrf.mxu0
        %v3862 = vadd.f32 %v3797, %v3861
        %3863 = vmatmul.f32.gmra.mxu0 %v655
        %v3864 = vpop.f32.mrf.mxu0
        %v3865 = vadd.f32 %v3800, %v3864
        %3866 = vmatmul.f32.gmra.mxu0 %v659
        %v3867 = vpop.f32.mrf.mxu0
        %v3868 = vadd.f32 %v3803, %v3867
        %3869 = vmatmul.f32.gmra.mxu0 %v663
        %v3870 = vpop.f32.mrf.mxu0
        %v3871 = vadd.f32 %v3806, %v3870
        %3872 = vmatmul.f32.gmra.mxu0 %v667
        %v3873 = vpop.f32.mrf.mxu0
        %v3874 = vadd.f32 %v3809, %v3873
        %3875 = vmatmul.f32.gmra.mxu0 %v671
        %v3876 = vpop.f32.mrf.mxu0
        %v3877 = vadd.f32 %v3812, %v3876
        %3878 = vmatmul.f32.gmra.mxu0 %v675
        %v3879 = vpop.f32.mrf.mxu0
        %v3880 = vadd.f32 %v3815, %v3879
        %3881 = vmatmul.f32.gmra.mxu0 %v679
        %v3882 = vpop.f32.mrf.mxu0
        %v3883 = vadd.f32 %v3818, %v3882
        %3884 = vmatmul.f32.gmra.mxu0 %v683
        %v3885 = vpop.f32.mrf.mxu0
        %v3886 = vadd.f32 %v3821, %v3885
        %3887 = vmatmul.f32.gmra.mxu0 %v687
        %v3888 = vpop.f32.mrf.mxu0
        %v3889 = vadd.f32 %v3824, %v3888
        %3890 = vmatmul.f32.gmra.mxu0 %v691
        %v3891 = vpop.f32.mrf.mxu0
        %v3892 = vadd.f32 %v3827, %v3891
        %3893 = vdwg.mxu0
        %3894 = vmatpush.msra.mxu0 %v3685
        %3895 = vmatpush.msra.mxu0 %v3681
        %3896 = vmatpush.msra.mxu0 %v3677
        %3897 = vmatpush.msra.mxu0 %v3673
        %3898 = vmatpush.msra.mxu0 %v3669
        %3899 = vmatpush.msra.mxu0 %v3665
        %3900 = vmatpush.msra.mxu0 %v3661
        %3901 = vmatpush.msra.mxu0 %v3657
        %3902 = vmatpush.msra.mxu0 %v3653
        %3903 = vmatpush.msra.mxu0 %v3649
        %3904 = vmatpush.msra.mxu0 %v3645
        %3905 = vmatpush.msra.mxu0 %v3641
        %3906 = vmatpush.msra.mxu0 %v3637
        %3907 = vmatpush.msra.mxu0 %v3633
        %3908 = vmatpush.msra.mxu0 %v3629
        %3909 = vmatpush.msra.mxu0 %v3625
        %3910 = vmatmul.f32.gmra.mxu0 %v632
        %v3911 = vpop.f32.mrf.mxu0
        %v3912 = vadd.f32 %v3847, %v3911
        %3913 = vmatmul.f32.gmra.mxu0 %v636
        %v3914 = vpop.f32.mrf.mxu0
        %v3915 = vadd.f32 %v3850, %v3914
        %3916 = vmatmul.f32.gmra.mxu0 %v640
        %v3917 = vpop.f32.mrf.mxu0
        %v3918 = vadd.f32 %v3853, %v3917
        %3919 = vmatmul.f32.gmra.mxu0 %v644
        %v3920 = vpop.f32.mrf.mxu0
        %v3921 = vadd.f32 %v3856, %v3920
        %3922 = vmatmul.f32.gmra.mxu0 %v648
        %v3923 = vpop.f32.mrf.mxu0
        %v3924 = vadd.f32 %v3859, %v3923
        %3925 = vmatmul.f32.gmra.mxu0 %v652
        %v3926 = vpop.f32.mrf.mxu0
        %v3927 = vadd.f32 %v3862, %v3926
        %3928 = vmatmul.f32.gmra.mxu0 %v656
        %v3929 = vpop.f32.mrf.mxu0
        %v3930 = vadd.f32 %v3865, %v3929
        %3931 = vmatmul.f32.gmra.mxu0 %v660
        %v3932 = vpop.f32.mrf.mxu0
        %v3933 = vadd.f32 %v3868, %v3932
        %3934 = vmatmul.f32.gmra.mxu0 %v664
        %v3935 = vpop.f32.mrf.mxu0
        %v3936 = vadd.f32 %v3871, %v3935
        %3937 = vmatmul.f32.gmra.mxu0 %v668
        %v3938 = vpop.f32.mrf.mxu0
        %v3939 = vadd.f32 %v3874, %v3938
        %3940 = vmatmul.f32.gmra.mxu0 %v672
        %v3941 = vpop.f32.mrf.mxu0
        %v3942 = vadd.f32 %v3877, %v3941
        %3943 = vmatmul.f32.gmra.mxu0 %v676
        %v3944 = vpop.f32.mrf.mxu0
        %v3945 = vadd.f32 %v3880, %v3944
        %3946 = vmatmul.f32.gmra.mxu0 %v680
        %v3947 = vpop.f32.mrf.mxu0
        %v3948 = vadd.f32 %v3883, %v3947
        %3949 = vmatmul.f32.gmra.mxu0 %v684
        %v3950 = vpop.f32.mrf.mxu0
        %v3951 = vadd.f32 %v3886, %v3950
        %3952 = vmatmul.f32.gmra.mxu0 %v688
        %v3953 = vpop.f32.mrf.mxu0
        %v3954 = vadd.f32 %v3889, %v3953
        %3955 = vmatmul.f32.gmra.mxu0 %v692
        %v3956 = vpop.f32.mrf.mxu0
        %v3957 = vadd.f32 %v3892, %v3956
        %3958 = vdwg.mxu0
        %3959 = vmatpush.msra.mxu0 %v3494
        %3960 = vmatpush.msra.mxu0 %v3490
        %3961 = vmatpush.msra.mxu0 %v3486
        %3962 = vmatpush.msra.mxu0 %v3482
        %3963 = vmatpush.msra.mxu0 %v3478
        %3964 = vmatpush.msra.mxu0 %v3474
        %3965 = vmatpush.msra.mxu0 %v3470
        %3966 = vmatpush.msra.mxu0 %v3466
        %3967 = vmatpush.msra.mxu0 %v3462
        %3968 = vmatpush.msra.mxu0 %v3458
        %3969 = vmatpush.msra.mxu0 %v3454
        %3970 = vmatpush.msra.mxu0 %v3450
        %3971 = vmatpush.msra.mxu0 %v3446
        %3972 = vmatpush.msra.mxu0 %v3442
        %3973 = vmatpush.msra.mxu0 %v3438
        %3974 = vmatpush.msra.mxu0 %v3434
        %3975 = vmatmul.f32.gmra.mxu0 %v629
        %v3976 = vpop.f32.mrf.mxu0
        %v3977 = vadd.f32 %v3692, %v3976
        %3978 = vmatmul.f32.gmra.mxu0 %v633
        %v3979 = vpop.f32.mrf.mxu0
        %v3980 = vadd.f32 %v3692, %v3979
        %3981 = vmatmul.f32.gmra.mxu0 %v637
        %v3982 = vpop.f32.mrf.mxu0
        %v3983 = vadd.f32 %v3692, %v3982
        %3984 = vmatmul.f32.gmra.mxu0 %v641
        %v3985 = vpop.f32.mrf.mxu0
        %v3986 = vadd.f32 %v3692, %v3985
        %3987 = vmatmul.f32.gmra.mxu0 %v645
        %v3988 = vpop.f32.mrf.mxu0
        %v3989 = vadd.f32 %v3692, %v3988
        %3990 = vmatmul.f32.gmra.mxu0 %v649
        %v3991 = vpop.f32.mrf.mxu0
        %v3992 = vadd.f32 %v3692, %v3991
        %3993 = vmatmul.f32.gmra.mxu0 %v653
        %v3994 = vpop.f32.mrf.mxu0
        %v3995 = vadd.f32 %v3692, %v3994
        %3996 = vmatmul.f32.gmra.mxu0 %v657
        %v3997 = vpop.f32.mrf.mxu0
        %v3998 = vadd.f32 %v3692, %v3997
        %3999 = vmatmul.f32.gmra.mxu0 %v661
        %v4000 = vpop.f32.mrf.mxu0
        %v4001 = vadd.f32 %v3692, %v4000
        %4002 = vmatmul.f32.gmra.mxu0 %v665
        %v4003 = vpop.f32.mrf.mxu0
        %v4004 = vadd.f32 %v3692, %v4003
        %4005 = vmatmul.f32.gmra.mxu0 %v669
        %v4006 = vpop.f32.mrf.mxu0
        %v4007 = vadd.f32 %v3692, %v4006
        %4008 = vmatmul.f32.gmra.mxu0 %v673
        %v4009 = vpop.f32.mrf.mxu0
        %v4010 = vadd.f32 %v3692, %v4009
        %4011 = vmatmul.f32.gmra.mxu0 %v677
        %v4012 = vpop.f32.mrf.mxu0
        %v4013 = vadd.f32 %v3692, %v4012
        %4014 = vmatmul.f32.gmra.mxu0 %v681
        %v4015 = vpop.f32.mrf.mxu0
        %v4016 = vadd.f32 %v3692, %v4015
        %4017 = vmatmul.f32.gmra.mxu0 %v685
        %v4018 = vpop.f32.mrf.mxu0
        %v4019 = vadd.f32 %v3692, %v4018
        %4020 = vmatmul.f32.gmra.mxu0 %v689
        %v4021 = vpop.f32.mrf.mxu0
        %v4022 = vadd.f32 %v3692, %v4021
        %4023 = vdwg.mxu0
        %4024 = vmatpush.msra.mxu0 %v3558
        %4025 = vmatpush.msra.mxu0 %v3554
        %4026 = vmatpush.msra.mxu0 %v3550
        %4027 = vmatpush.msra.mxu0 %v3546
        %4028 = vmatpush.msra.mxu0 %v3542
        %4029 = vmatpush.msra.mxu0 %v3538
        %4030 = vmatpush.msra.mxu0 %v3534
        %4031 = vmatpush.msra.mxu0 %v3530
        %4032 = vmatpush.msra.mxu0 %v3526
        %4033 = vmatpush.msra.mxu0 %v3522
        %4034 = vmatpush.msra.mxu0 %v3518
        %4035 = vmatpush.msra.mxu0 %v3514
        %4036 = vmatpush.msra.mxu0 %v3510
        %4037 = vmatpush.msra.mxu0 %v3506
        %4038 = vmatpush.msra.mxu0 %v3502
        %4039 = vmatpush.msra.mxu0 %v3498
        %4040 = vmatmul.f32.gmra.mxu0 %v630
        %v4041 = vpop.f32.mrf.mxu0
        %v4042 = vadd.f32 %v3977, %v4041
        %4043 = vmatmul.f32.gmra.mxu0 %v634
        %v4044 = vpop.f32.mrf.mxu0
        %v4045 = vadd.f32 %v3980, %v4044
        %4046 = vmatmul.f32.gmra.mxu0 %v638
        %v4047 = vpop.f32.mrf.mxu0
        %v4048 = vadd.f32 %v3983, %v4047
        %4049 = vmatmul.f32.gmra.mxu0 %v642
        %v4050 = vpop.f32.mrf.mxu0
        %v4051 = vadd.f32 %v3986, %v4050
        %4052 = vmatmul.f32.gmra.mxu0 %v646
        %v4053 = vpop.f32.mrf.mxu0
        %v4054 = vadd.f32 %v3989, %v4053
        %4055 = vmatmul.f32.gmra.mxu0 %v650
        %v4056 = vpop.f32.mrf.mxu0
        %v4057 = vadd.f32 %v3992, %v4056
        %4058 = vmatmul.f32.gmra.mxu0 %v654
        %v4059 = vpop.f32.mrf.mxu0
        %v4060 = vadd.f32 %v3995, %v4059
        %4061 = vmatmul.f32.gmra.mxu0 %v658
        %v4062 = vpop.f32.mrf.mxu0
        %v4063 = vadd.f32 %v3998, %v4062
        %4064 = vmatmul.f32.gmra.mxu0 %v662
        %v4065 = vpop.f32.mrf.mxu0
        %v4066 = vadd.f32 %v4001, %v4065
        %4067 = vmatmul.f32.gmra.mxu0 %v666
        %v4068 = vpop.f32.mrf.mxu0
        %v4069 = vadd.f32 %v4004, %v4068
        %4070 = vmatmul.f32.gmra.mxu0 %v670
        %v4071 = vpop.f32.mrf.mxu0
        %v4072 = vadd.f32 %v4007, %v4071
        %4073 = vmatmul.f32.gmra.mxu0 %v674
        %v4074 = vpop.f32.mrf.mxu0
        %v4075 = vadd.f32 %v4010, %v4074
        %4076 = vmatmul.f32.gmra.mxu0 %v678
        %v4077 = vpop.f32.mrf.mxu0
        %v4078 = vadd.f32 %v4013, %v4077
        %4079 = vmatmul.f32.gmra.mxu0 %v682
        %v4080 = vpop.f32.mrf.mxu0
        %v4081 = vadd.f32 %v4016, %v4080
        %4082 = vmatmul.f32.gmra.mxu0 %v686
        %v4083 = vpop.f32.mrf.mxu0
        %v4084 = vadd.f32 %v4019, %v4083
        %4085 = vmatmul.f32.gmra.mxu0 %v690
        %v4086 = vpop.f32.mrf.mxu0
        %v4087 = vadd.f32 %v4022, %v4086
        %4088 = vdwg.mxu0
        %4089 = vmatpush.msra.mxu0 %v3622
        %4090 = vmatpush.msra.mxu0 %v3618
        %4091 = vmatpush.msra.mxu0 %v3614
        %4092 = vmatpush.msra.mxu0 %v3610
        %4093 = vmatpush.msra.mxu0 %v3606
        %4094 = vmatpush.msra.mxu0 %v3602
        %4095 = vmatpush.msra.mxu0 %v3598
        %4096 = vmatpush.msra.mxu0 %v3594
        %4097 = vmatpush.msra.mxu0 %v3590
        %4098 = vmatpush.msra.mxu0 %v3586
        %4099 = vmatpush.msra.mxu0 %v3582
        %4100 = vmatpush.msra.mxu0 %v3578
        %4101 = vmatpush.msra.mxu0 %v3574
        %4102 = vmatpush.msra.mxu0 %v3570
        %4103 = vmatpush.msra.mxu0 %v3566
        %4104 = vmatpush.msra.mxu0 %v3562
        %4105 = vmatmul.f32.gmra.mxu0 %v631
        %v4106 = vpop.f32.mrf.mxu0
        %v4107 = vadd.f32 %v4042, %v4106
        %4108 = vmatmul.f32.gmra.mxu0 %v635
        %v4109 = vpop.f32.mrf.mxu0
        %v4110 = vadd.f32 %v4045, %v4109
        %4111 = vmatmul.f32.gmra.mxu0 %v639
        %v4112 = vpop.f32.mrf.mxu0
        %v4113 = vadd.f32 %v4048, %v4112
        %4114 = vmatmul.f32.gmra.mxu0 %v643
        %v4115 = vpop.f32.mrf.mxu0
        %v4116 = vadd.f32 %v4051, %v4115
        %4117 = vmatmul.f32.gmra.mxu0 %v647
        %v4118 = vpop.f32.mrf.mxu0
        %v4119 = vadd.f32 %v4054, %v4118
        %4120 = vmatmul.f32.gmra.mxu0 %v651
        %v4121 = vpop.f32.mrf.mxu0
        %v4122 = vadd.f32 %v4057, %v4121
        %4123 = vmatmul.f32.gmra.mxu0 %v655
        %v4124 = vpop.f32.mrf.mxu0
        %v4125 = vadd.f32 %v4060, %v4124
        %4126 = vmatmul.f32.gmra.mxu0 %v659
        %v4127 = vpop.f32.mrf.mxu0
        %v4128 = vadd.f32 %v4063, %v4127
        %4129 = vmatmul.f32.gmra.mxu0 %v663
        %v4130 = vpop.f32.mrf.mxu0
        %v4131 = vadd.f32 %v4066, %v4130
        %4132 = vmatmul.f32.gmra.mxu0 %v667
        %v4133 = vpop.f32.mrf.mxu0
        %v4134 = vadd.f32 %v4069, %v4133
        %4135 = vmatmul.f32.gmra.mxu0 %v671
        %v4136 = vpop.f32.mrf.mxu0
        %v4137 = vadd.f32 %v4072, %v4136
        %4138 = vmatmul.f32.gmra.mxu0 %v675
        %v4139 = vpop.f32.mrf.mxu0
        %v4140 = vadd.f32 %v4075, %v4139
        %4141 = vmatmul.f32.gmra.mxu0 %v679
        %v4142 = vpop.f32.mrf.mxu0
        %v4143 = vadd.f32 %v4078, %v4142
        %4144 = vmatmul.f32.gmra.mxu0 %v683
        %v4145 = vpop.f32.mrf.mxu0
        %v4146 = vadd.f32 %v4081, %v4145
        %4147 = vmatmul.f32.gmra.mxu0 %v687
        %v4148 = vpop.f32.mrf.mxu0
        %v4149 = vadd.f32 %v4084, %v4148
        %4150 = vmatmul.f32.gmra.mxu0 %v691
        %v4151 = vpop.f32.mrf.mxu0
        %v4152 = vadd.f32 %v4087, %v4151
        %4153 = vdwg.mxu0
        %4154 = vmatpush.msra.mxu0 %v3686
        %4155 = vmatpush.msra.mxu0 %v3682
        %4156 = vmatpush.msra.mxu0 %v3678
        %4157 = vmatpush.msra.mxu0 %v3674
        %4158 = vmatpush.msra.mxu0 %v3670
        %4159 = vmatpush.msra.mxu0 %v3666
        %4160 = vmatpush.msra.mxu0 %v3662
        %4161 = vmatpush.msra.mxu0 %v3658
        %4162 = vmatpush.msra.mxu0 %v3654
        %4163 = vmatpush.msra.mxu0 %v3650
        %4164 = vmatpush.msra.mxu0 %v3646
        %4165 = vmatpush.msra.mxu0 %v3642
        %4166 = vmatpush.msra.mxu0 %v3638
        %4167 = vmatpush.msra.mxu0 %v3634
        %4168 = vmatpush.msra.mxu0 %v3630
        %4169 = vmatpush.msra.mxu0 %v3626
        %4170 = vmatmul.f32.gmra.mxu0 %v632
        %v4171 = vpop.f32.mrf.mxu0
        %v4172 = vadd.f32 %v4107, %v4171
        %4173 = vmatmul.f32.gmra.mxu0 %v636
        %v4174 = vpop.f32.mrf.mxu0
        %v4175 = vadd.f32 %v4110, %v4174
        %4176 = vmatmul.f32.gmra.mxu0 %v640
        %v4177 = vpop.f32.mrf.mxu0
        %v4178 = vadd.f32 %v4113, %v4177
        %4179 = vmatmul.f32.gmra.mxu0 %v644
        %v4180 = vpop.f32.mrf.mxu0
        %v4181 = vadd.f32 %v4116, %v4180
        %4182 = vmatmul.f32.gmra.mxu0 %v648
        %v4183 = vpop.f32.mrf.mxu0
        %v4184 = vadd.f32 %v4119, %v4183
        %4185 = vmatmul.f32.gmra.mxu0 %v652
        %v4186 = vpop.f32.mrf.mxu0
        %v4187 = vadd.f32 %v4122, %v4186
        %4188 = vmatmul.f32.gmra.mxu0 %v656
        %v4189 = vpop.f32.mrf.mxu0
        %v4190 = vadd.f32 %v4125, %v4189
        %4191 = vmatmul.f32.gmra.mxu0 %v660
        %v4192 = vpop.f32.mrf.mxu0
        %v4193 = vadd.f32 %v4128, %v4192
        %4194 = vmatmul.f32.gmra.mxu0 %v664
        %v4195 = vpop.f32.mrf.mxu0
        %v4196 = vadd.f32 %v4131, %v4195
        %4197 = vmatmul.f32.gmra.mxu0 %v668
        %v4198 = vpop.f32.mrf.mxu0
        %v4199 = vadd.f32 %v4134, %v4198
        %4200 = vmatmul.f32.gmra.mxu0 %v672
        %v4201 = vpop.f32.mrf.mxu0
        %v4202 = vadd.f32 %v4137, %v4201
        %4203 = vmatmul.f32.gmra.mxu0 %v676
        %v4204 = vpop.f32.mrf.mxu0
        %v4205 = vadd.f32 %v4140, %v4204
        %4206 = vmatmul.f32.gmra.mxu0 %v680
        %v4207 = vpop.f32.mrf.mxu0
        %v4208 = vadd.f32 %v4143, %v4207
        %4209 = vmatmul.f32.gmra.mxu0 %v684
        %v4210 = vpop.f32.mrf.mxu0
        %v4211 = vadd.f32 %v4146, %v4210
        %4212 = vmatmul.f32.gmra.mxu0 %v688
        %v4213 = vpop.f32.mrf.mxu0
        %v4214 = vadd.f32 %v4149, %v4213
        %4215 = vmatmul.f32.gmra.mxu0 %v692
        %v4216 = vpop.f32.mrf.mxu0
        %v4217 = vadd.f32 %v4152, %v4216
        %4218 = vdwg.mxu0
        %4219 = vmatpush.msra.mxu0 %v3495
        %4220 = vmatpush.msra.mxu0 %v3491
        %4221 = vmatpush.msra.mxu0 %v3487
        %4222 = vmatpush.msra.mxu0 %v3483
        %4223 = vmatpush.msra.mxu0 %v3479
        %4224 = vmatpush.msra.mxu0 %v3475
        %4225 = vmatpush.msra.mxu0 %v3471
        %4226 = vmatpush.msra.mxu0 %v3467
        %4227 = vmatpush.msra.mxu0 %v3463
        %4228 = vmatpush.msra.mxu0 %v3459
        %4229 = vmatpush.msra.mxu0 %v3455
        %4230 = vmatpush.msra.mxu0 %v3451
        %4231 = vmatpush.msra.mxu0 %v3447
        %4232 = vmatpush.msra.mxu0 %v3443
        %4233 = vmatpush.msra.mxu0 %v3439
        %4234 = vmatpush.msra.mxu0 %v3435
        %4235 = vmatmul.f32.gmra.mxu0 %v629
        %v4236 = vpop.f32.mrf.mxu0
        %v4237 = vadd.f32 %v3693, %v4236
        %4238 = vmatmul.f32.gmra.mxu0 %v633
        %v4239 = vpop.f32.mrf.mxu0
        %v4240 = vadd.f32 %v3693, %v4239
        %4241 = vmatmul.f32.gmra.mxu0 %v637
        %v4242 = vpop.f32.mrf.mxu0
        %v4243 = vadd.f32 %v3693, %v4242
        %4244 = vmatmul.f32.gmra.mxu0 %v641
        %v4245 = vpop.f32.mrf.mxu0
        %v4246 = vadd.f32 %v3693, %v4245
        %4247 = vmatmul.f32.gmra.mxu0 %v645
        %v4248 = vpop.f32.mrf.mxu0
        %v4249 = vadd.f32 %v3693, %v4248
        %4250 = vmatmul.f32.gmra.mxu0 %v649
        %v4251 = vpop.f32.mrf.mxu0
        %v4252 = vadd.f32 %v3693, %v4251
        %4253 = vmatmul.f32.gmra.mxu0 %v653
        %v4254 = vpop.f32.mrf.mxu0
        %v4255 = vadd.f32 %v3693, %v4254
        %4256 = vmatmul.f32.gmra.mxu0 %v657
        %v4257 = vpop.f32.mrf.mxu0
        %v4258 = vadd.f32 %v3693, %v4257
        %4259 = vmatmul.f32.gmra.mxu0 %v661
        %v4260 = vpop.f32.mrf.mxu0
        %v4261 = vadd.f32 %v3693, %v4260
        %4262 = vmatmul.f32.gmra.mxu0 %v665
        %v4263 = vpop.f32.mrf.mxu0
        %v4264 = vadd.f32 %v3693, %v4263
        %4265 = vmatmul.f32.gmra.mxu0 %v669
        %v4266 = vpop.f32.mrf.mxu0
        %v4267 = vadd.f32 %v3693, %v4266
        %4268 = vmatmul.f32.gmra.mxu0 %v673
        %v4269 = vpop.f32.mrf.mxu0
        %v4270 = vadd.f32 %v3693, %v4269
        %4271 = vmatmul.f32.gmra.mxu0 %v677
        %v4272 = vpop.f32.mrf.mxu0
        %v4273 = vadd.f32 %v3693, %v4272
        %4274 = vmatmul.f32.gmra.mxu0 %v681
        %v4275 = vpop.f32.mrf.mxu0
        %v4276 = vadd.f32 %v3693, %v4275
        %4277 = vmatmul.f32.gmra.mxu0 %v685
        %v4278 = vpop.f32.mrf.mxu0
        %v4279 = vadd.f32 %v3693, %v4278
        %4280 = vmatmul.f32.gmra.mxu0 %v689
        %v4281 = vpop.f32.mrf.mxu0
        %v4282 = vadd.f32 %v3693, %v4281
        %4283 = vdwg.mxu0
        %4284 = vmatpush.msra.mxu0 %v3559
        %4285 = vmatpush.msra.mxu0 %v3555
        %4286 = vmatpush.msra.mxu0 %v3551
        %4287 = vmatpush.msra.mxu0 %v3547
        %4288 = vmatpush.msra.mxu0 %v3543
        %4289 = vmatpush.msra.mxu0 %v3539
        %4290 = vmatpush.msra.mxu0 %v3535
        %4291 = vmatpush.msra.mxu0 %v3531
        %4292 = vmatpush.msra.mxu0 %v3527
        %4293 = vmatpush.msra.mxu0 %v3523
        %4294 = vmatpush.msra.mxu0 %v3519
        %4295 = vmatpush.msra.mxu0 %v3515
        %4296 = vmatpush.msra.mxu0 %v3511
        %4297 = vmatpush.msra.mxu0 %v3507
        %4298 = vmatpush.msra.mxu0 %v3503
        %4299 = vmatpush.msra.mxu0 %v3499
        %4300 = vmatmul.f32.gmra.mxu0 %v630
        %v4301 = vpop.f32.mrf.mxu0
        %v4302 = vadd.f32 %v4237, %v4301
        %4303 = vmatmul.f32.gmra.mxu0 %v634
        %v4304 = vpop.f32.mrf.mxu0
        %v4305 = vadd.f32 %v4240, %v4304
        %4306 = vmatmul.f32.gmra.mxu0 %v638
        %v4307 = vpop.f32.mrf.mxu0
        %v4308 = vadd.f32 %v4243, %v4307
        %4309 = vmatmul.f32.gmra.mxu0 %v642
        %v4310 = vpop.f32.mrf.mxu0
        %v4311 = vadd.f32 %v4246, %v4310
        %4312 = vmatmul.f32.gmra.mxu0 %v646
        %v4313 = vpop.f32.mrf.mxu0
        %v4314 = vadd.f32 %v4249, %v4313
        %4315 = vmatmul.f32.gmra.mxu0 %v650
        %v4316 = vpop.f32.mrf.mxu0
        %v4317 = vadd.f32 %v4252, %v4316
        %4318 = vmatmul.f32.gmra.mxu0 %v654
        %v4319 = vpop.f32.mrf.mxu0
        %v4320 = vadd.f32 %v4255, %v4319
        %4321 = vmatmul.f32.gmra.mxu0 %v658
        %v4322 = vpop.f32.mrf.mxu0
        %v4323 = vadd.f32 %v4258, %v4322
        %4324 = vmatmul.f32.gmra.mxu0 %v662
        %v4325 = vpop.f32.mrf.mxu0
        %v4326 = vadd.f32 %v4261, %v4325
        %4327 = vmatmul.f32.gmra.mxu0 %v666
        %v4328 = vpop.f32.mrf.mxu0
        %v4329 = vadd.f32 %v4264, %v4328
        %4330 = vmatmul.f32.gmra.mxu0 %v670
        %v4331 = vpop.f32.mrf.mxu0
        %v4332 = vadd.f32 %v4267, %v4331
        %4333 = vmatmul.f32.gmra.mxu0 %v674
        %v4334 = vpop.f32.mrf.mxu0
        %v4335 = vadd.f32 %v4270, %v4334
        %4336 = vmatmul.f32.gmra.mxu0 %v678
        %v4337 = vpop.f32.mrf.mxu0
        %v4338 = vadd.f32 %v4273, %v4337
        %4339 = vmatmul.f32.gmra.mxu0 %v682
        %v4340 = vpop.f32.mrf.mxu0
        %v4341 = vadd.f32 %v4276, %v4340
        %4342 = vmatmul.f32.gmra.mxu0 %v686
        %v4343 = vpop.f32.mrf.mxu0
        %v4344 = vadd.f32 %v4279, %v4343
        %4345 = vmatmul.f32.gmra.mxu0 %v690
        %v4346 = vpop.f32.mrf.mxu0
        %v4347 = vadd.f32 %v4282, %v4346
        %4348 = vdwg.mxu0
        %4349 = vmatpush.msra.mxu0 %v3623
        %4350 = vmatpush.msra.mxu0 %v3619
        %4351 = vmatpush.msra.mxu0 %v3615
        %4352 = vmatpush.msra.mxu0 %v3611
        %4353 = vmatpush.msra.mxu0 %v3607
        %4354 = vmatpush.msra.mxu0 %v3603
        %4355 = vmatpush.msra.mxu0 %v3599
        %4356 = vmatpush.msra.mxu0 %v3595
        %4357 = vmatpush.msra.mxu0 %v3591
        %4358 = vmatpush.msra.mxu0 %v3587
        %4359 = vmatpush.msra.mxu0 %v3583
        %4360 = vmatpush.msra.mxu0 %v3579
        %4361 = vmatpush.msra.mxu0 %v3575
        %4362 = vmatpush.msra.mxu0 %v3571
        %4363 = vmatpush.msra.mxu0 %v3567
        %4364 = vmatpush.msra.mxu0 %v3563
        %4365 = vmatmul.f32.gmra.mxu0 %v631
        %v4366 = vpop.f32.mrf.mxu0
        %v4367 = vadd.f32 %v4302, %v4366
        %4368 = vmatmul.f32.gmra.mxu0 %v635
        %v4369 = vpop.f32.mrf.mxu0
        %v4370 = vadd.f32 %v4305, %v4369
        %4371 = vmatmul.f32.gmra.mxu0 %v639
        %v4372 = vpop.f32.mrf.mxu0
        %v4373 = vadd.f32 %v4308, %v4372
        %4374 = vmatmul.f32.gmra.mxu0 %v643
        %v4375 = vpop.f32.mrf.mxu0
        %v4376 = vadd.f32 %v4311, %v4375
        %4377 = vmatmul.f32.gmra.mxu0 %v647
        %v4378 = vpop.f32.mrf.mxu0
        %v4379 = vadd.f32 %v4314, %v4378
        %4380 = vmatmul.f32.gmra.mxu0 %v651
        %v4381 = vpop.f32.mrf.mxu0
        %v4382 = vadd.f32 %v4317, %v4381
        %4383 = vmatmul.f32.gmra.mxu0 %v655
        %v4384 = vpop.f32.mrf.mxu0
        %v4385 = vadd.f32 %v4320, %v4384
        %4386 = vmatmul.f32.gmra.mxu0 %v659
        %v4387 = vpop.f32.mrf.mxu0
        %v4388 = vadd.f32 %v4323, %v4387
        %4389 = vmatmul.f32.gmra.mxu0 %v663
        %v4390 = vpop.f32.mrf.mxu0
        %v4391 = vadd.f32 %v4326, %v4390
        %4392 = vmatmul.f32.gmra.mxu0 %v667
        %v4393 = vpop.f32.mrf.mxu0
        %v4394 = vadd.f32 %v4329, %v4393
        %4395 = vmatmul.f32.gmra.mxu0 %v671
        %v4396 = vpop.f32.mrf.mxu0
        %v4397 = vadd.f32 %v4332, %v4396
        %4398 = vmatmul.f32.gmra.mxu0 %v675
        %v4399 = vpop.f32.mrf.mxu0
        %v4400 = vadd.f32 %v4335, %v4399
        %4401 = vmatmul.f32.gmra.mxu0 %v679
        %v4402 = vpop.f32.mrf.mxu0
        %v4403 = vadd.f32 %v4338, %v4402
        %4404 = vmatmul.f32.gmra.mxu0 %v683
        %v4405 = vpop.f32.mrf.mxu0
        %v4406 = vadd.f32 %v4341, %v4405
        %4407 = vmatmul.f32.gmra.mxu0 %v687
        %v4408 = vpop.f32.mrf.mxu0
        %v4409 = vadd.f32 %v4344, %v4408
        %4410 = vmatmul.f32.gmra.mxu0 %v691
        %v4411 = vpop.f32.mrf.mxu0
        %v4412 = vadd.f32 %v4347, %v4411
        %4413 = vdwg.mxu0
        %4414 = vmatpush.msra.mxu0 %v3687
        %4415 = vmatpush.msra.mxu0 %v3683
        %4416 = vmatpush.msra.mxu0 %v3679
        %4417 = vmatpush.msra.mxu0 %v3675
        %4418 = vmatpush.msra.mxu0 %v3671
        %4419 = vmatpush.msra.mxu0 %v3667
        %4420 = vmatpush.msra.mxu0 %v3663
        %4421 = vmatpush.msra.mxu0 %v3659
        %4422 = vmatpush.msra.mxu0 %v3655
        %4423 = vmatpush.msra.mxu0 %v3651
        %4424 = vmatpush.msra.mxu0 %v3647
        %4425 = vmatpush.msra.mxu0 %v3643
        %4426 = vmatpush.msra.mxu0 %v3639
        %4427 = vmatpush.msra.mxu0 %v3635
        %4428 = vmatpush.msra.mxu0 %v3631
        %4429 = vmatpush.msra.mxu0 %v3627
        %4430 = vmatmul.f32.gmra.mxu0 %v632
        %v4431 = vpop.f32.mrf.mxu0
        %v4432 = vadd.f32 %v4367, %v4431
        %4433 = vmatmul.f32.gmra.mxu0 %v636
        %v4434 = vpop.f32.mrf.mxu0
        %v4435 = vadd.f32 %v4370, %v4434
        %4436 = vmatmul.f32.gmra.mxu0 %v640
        %v4437 = vpop.f32.mrf.mxu0
        %v4438 = vadd.f32 %v4373, %v4437
        %4439 = vmatmul.f32.gmra.mxu0 %v644
        %v4440 = vpop.f32.mrf.mxu0
        %v4441 = vadd.f32 %v4376, %v4440
        %4442 = vmatmul.f32.gmra.mxu0 %v648
        %v4443 = vpop.f32.mrf.mxu0
        %v4444 = vadd.f32 %v4379, %v4443
        %4445 = vmatmul.f32.gmra.mxu0 %v652
        %v4446 = vpop.f32.mrf.mxu0
        %v4447 = vadd.f32 %v4382, %v4446
        %4448 = vmatmul.f32.gmra.mxu0 %v656
        %v4449 = vpop.f32.mrf.mxu0
        %v4450 = vadd.f32 %v4385, %v4449
        %4451 = vmatmul.f32.gmra.mxu0 %v660
        %v4452 = vpop.f32.mrf.mxu0
        %v4453 = vadd.f32 %v4388, %v4452
        %4454 = vmatmul.f32.gmra.mxu0 %v664
        %v4455 = vpop.f32.mrf.mxu0
        %v4456 = vadd.f32 %v4391, %v4455
        %4457 = vmatmul.f32.gmra.mxu0 %v668
        %v4458 = vpop.f32.mrf.mxu0
        %v4459 = vadd.f32 %v4394, %v4458
        %4460 = vmatmul.f32.gmra.mxu0 %v672
        %v4461 = vpop.f32.mrf.mxu0
        %v4462 = vadd.f32 %v4397, %v4461
        %4463 = vmatmul.f32.gmra.mxu0 %v676
        %v4464 = vpop.f32.mrf.mxu0
        %v4465 = vadd.f32 %v4400, %v4464
        %4466 = vmatmul.f32.gmra.mxu0 %v680
        %v4467 = vpop.f32.mrf.mxu0
        %v4468 = vadd.f32 %v4403, %v4467
        %4469 = vmatmul.f32.gmra.mxu0 %v684
        %v4470 = vpop.f32.mrf.mxu0
        %v4471 = vadd.f32 %v4406, %v4470
        %4472 = vmatmul.f32.gmra.mxu0 %v688
        %v4473 = vpop.f32.mrf.mxu0
        %v4474 = vadd.f32 %v4409, %v4473
        %4475 = vmatmul.f32.gmra.mxu0 %v692
        %v4476 = vpop.f32.mrf.mxu0
        %v4477 = vadd.f32 %v4412, %v4476
        %4478 = vdwg.mxu0
        %4479 = vmatpush.msra.mxu0 %v3496
        %4480 = vmatpush.msra.mxu0 %v3492
        %4481 = vmatpush.msra.mxu0 %v3488
        %4482 = vmatpush.msra.mxu0 %v3484
        %4483 = vmatpush.msra.mxu0 %v3480
        %4484 = vmatpush.msra.mxu0 %v3476
        %4485 = vmatpush.msra.mxu0 %v3472
        %4486 = vmatpush.msra.mxu0 %v3468
        %4487 = vmatpush.msra.mxu0 %v3464
        %4488 = vmatpush.msra.mxu0 %v3460
        %4489 = vmatpush.msra.mxu0 %v3456
        %4490 = vmatpush.msra.mxu0 %v3452
        %4491 = vmatpush.msra.mxu0 %v3448
        %4492 = vmatpush.msra.mxu0 %v3444
        %4493 = vmatpush.msra.mxu0 %v3440
        %4494 = vmatpush.msra.mxu0 %v3436
        %4495 = vmatmul.f32.gmra.mxu0 %v629
        %v4496 = vpop.f32.mrf.mxu0
        %v4497 = vadd.f32 %v3694, %v4496
        %4498 = vmatmul.f32.gmra.mxu0 %v633
        %v4499 = vpop.f32.mrf.mxu0
        %v4500 = vadd.f32 %v3694, %v4499
        %4501 = vmatmul.f32.gmra.mxu0 %v637
        %v4502 = vpop.f32.mrf.mxu0
        %v4503 = vadd.f32 %v3694, %v4502
        %4504 = vmatmul.f32.gmra.mxu0 %v641
        %v4505 = vpop.f32.mrf.mxu0
        %v4506 = vadd.f32 %v3694, %v4505
        %4507 = vmatmul.f32.gmra.mxu0 %v645
        %v4508 = vpop.f32.mrf.mxu0
        %v4509 = vadd.f32 %v3694, %v4508
        %4510 = vmatmul.f32.gmra.mxu0 %v649
        %v4511 = vpop.f32.mrf.mxu0
        %v4512 = vadd.f32 %v3694, %v4511
        %4513 = vmatmul.f32.gmra.mxu0 %v653
        %v4514 = vpop.f32.mrf.mxu0
        %v4515 = vadd.f32 %v3694, %v4514
        %4516 = vmatmul.f32.gmra.mxu0 %v657
        %v4517 = vpop.f32.mrf.mxu0
        %v4518 = vadd.f32 %v3694, %v4517
        %4519 = vmatmul.f32.gmra.mxu0 %v661
        %v4520 = vpop.f32.mrf.mxu0
        %v4521 = vadd.f32 %v3694, %v4520
        %4522 = vmatmul.f32.gmra.mxu0 %v665
        %v4523 = vpop.f32.mrf.mxu0
        %v4524 = vadd.f32 %v3694, %v4523
        %4525 = vmatmul.f32.gmra.mxu0 %v669
        %v4526 = vpop.f32.mrf.mxu0
        %v4527 = vadd.f32 %v3694, %v4526
        %4528 = vmatmul.f32.gmra.mxu0 %v673
        %v4529 = vpop.f32.mrf.mxu0
        %v4530 = vadd.f32 %v3694, %v4529
        %4531 = vmatmul.f32.gmra.mxu0 %v677
        %v4532 = vpop.f32.mrf.mxu0
        %v4533 = vadd.f32 %v3694, %v4532
        %4534 = vmatmul.f32.gmra.mxu0 %v681
        %v4535 = vpop.f32.mrf.mxu0
        %v4536 = vadd.f32 %v3694, %v4535
        %4537 = vmatmul.f32.gmra.mxu0 %v685
        %v4538 = vpop.f32.mrf.mxu0
        %v4539 = vadd.f32 %v3694, %v4538
        %4540 = vmatmul.f32.gmra.mxu0 %v689
        %v4541 = vpop.f32.mrf.mxu0
        %v4542 = vadd.f32 %v3694, %v4541
        %4543 = vdwg.mxu0
        %4544 = vmatpush.msra.mxu0 %v3560
        %4545 = vmatpush.msra.mxu0 %v3556
        %4546 = vmatpush.msra.mxu0 %v3552
        %4547 = vmatpush.msra.mxu0 %v3548
        %4548 = vmatpush.msra.mxu0 %v3544
        %4549 = vmatpush.msra.mxu0 %v3540
        %4550 = vmatpush.msra.mxu0 %v3536
        %4551 = vmatpush.msra.mxu0 %v3532
        %4552 = vmatpush.msra.mxu0 %v3528
        %4553 = vmatpush.msra.mxu0 %v3524
        %4554 = vmatpush.msra.mxu0 %v3520
        %4555 = vmatpush.msra.mxu0 %v3516
        %4556 = vmatpush.msra.mxu0 %v3512
        %4557 = vmatpush.msra.mxu0 %v3508
        %4558 = vmatpush.msra.mxu0 %v3504
        %4559 = vmatpush.msra.mxu0 %v3500
        %4560 = vmatmul.f32.gmra.mxu0 %v630
        %v4561 = vpop.f32.mrf.mxu0
        %v4562 = vadd.f32 %v4497, %v4561
        %4563 = vmatmul.f32.gmra.mxu0 %v634
        %v4564 = vpop.f32.mrf.mxu0
        %v4565 = vadd.f32 %v4500, %v4564
        %4566 = vmatmul.f32.gmra.mxu0 %v638
        %v4567 = vpop.f32.mrf.mxu0
        %v4568 = vadd.f32 %v4503, %v4567
        %4569 = vmatmul.f32.gmra.mxu0 %v642
        %v4570 = vpop.f32.mrf.mxu0
        %v4571 = vadd.f32 %v4506, %v4570
        %4572 = vmatmul.f32.gmra.mxu0 %v646
        %v4573 = vpop.f32.mrf.mxu0
        %v4574 = vadd.f32 %v4509, %v4573
        %4575 = vmatmul.f32.gmra.mxu0 %v650
        %v4576 = vpop.f32.mrf.mxu0
        %v4577 = vadd.f32 %v4512, %v4576
        %4578 = vmatmul.f32.gmra.mxu0 %v654
        %v4579 = vpop.f32.mrf.mxu0
        %v4580 = vadd.f32 %v4515, %v4579
        %4581 = vmatmul.f32.gmra.mxu0 %v658
        %v4582 = vpop.f32.mrf.mxu0
        %v4583 = vadd.f32 %v4518, %v4582
        %4584 = vmatmul.f32.gmra.mxu0 %v662
        %v4585 = vpop.f32.mrf.mxu0
        %v4586 = vadd.f32 %v4521, %v4585
        %4587 = vmatmul.f32.gmra.mxu0 %v666
        %v4588 = vpop.f32.mrf.mxu0
        %v4589 = vadd.f32 %v4524, %v4588
        %4590 = vmatmul.f32.gmra.mxu0 %v670
        %v4591 = vpop.f32.mrf.mxu0
        %v4592 = vadd.f32 %v4527, %v4591
        %4593 = vmatmul.f32.gmra.mxu0 %v674
        %v4594 = vpop.f32.mrf.mxu0
        %v4595 = vadd.f32 %v4530, %v4594
        %4596 = vmatmul.f32.gmra.mxu0 %v678
        %v4597 = vpop.f32.mrf.mxu0
        %v4598 = vadd.f32 %v4533, %v4597
        %4599 = vmatmul.f32.gmra.mxu0 %v682
        %v4600 = vpop.f32.mrf.mxu0
        %v4601 = vadd.f32 %v4536, %v4600
        %4602 = vmatmul.f32.gmra.mxu0 %v686
        %v4603 = vpop.f32.mrf.mxu0
        %v4604 = vadd.f32 %v4539, %v4603
        %4605 = vmatmul.f32.gmra.mxu0 %v690
        %v4606 = vpop.f32.mrf.mxu0
        %v4607 = vadd.f32 %v4542, %v4606
        %4608 = vdwg.mxu0
        %4609 = vmatpush.msra.mxu0 %v3624
        %4610 = vmatpush.msra.mxu0 %v3620
        %4611 = vmatpush.msra.mxu0 %v3616
        %4612 = vmatpush.msra.mxu0 %v3612
        %4613 = vmatpush.msra.mxu0 %v3608
        %4614 = vmatpush.msra.mxu0 %v3604
        %4615 = vmatpush.msra.mxu0 %v3600
        %4616 = vmatpush.msra.mxu0 %v3596
        %4617 = vmatpush.msra.mxu0 %v3592
        %4618 = vmatpush.msra.mxu0 %v3588
        %4619 = vmatpush.msra.mxu0 %v3584
        %4620 = vmatpush.msra.mxu0 %v3580
        %4621 = vmatpush.msra.mxu0 %v3576
        %4622 = vmatpush.msra.mxu0 %v3572
        %4623 = vmatpush.msra.mxu0 %v3568
        %4624 = vmatpush.msra.mxu0 %v3564
        %4625 = vmatmul.f32.gmra.mxu0 %v631
        %v4626 = vpop.f32.mrf.mxu0
        %v4627 = vadd.f32 %v4562, %v4626
        %4628 = vmatmul.f32.gmra.mxu0 %v635
        %v4629 = vpop.f32.mrf.mxu0
        %v4630 = vadd.f32 %v4565, %v4629
        %4631 = vmatmul.f32.gmra.mxu0 %v639
        %v4632 = vpop.f32.mrf.mxu0
        %v4633 = vadd.f32 %v4568, %v4632
        %4634 = vmatmul.f32.gmra.mxu0 %v643
        %v4635 = vpop.f32.mrf.mxu0
        %v4636 = vadd.f32 %v4571, %v4635
        %4637 = vmatmul.f32.gmra.mxu0 %v647
        %v4638 = vpop.f32.mrf.mxu0
        %v4639 = vadd.f32 %v4574, %v4638
        %4640 = vmatmul.f32.gmra.mxu0 %v651
        %v4641 = vpop.f32.mrf.mxu0
        %v4642 = vadd.f32 %v4577, %v4641
        %4643 = vmatmul.f32.gmra.mxu0 %v655
        %v4644 = vpop.f32.mrf.mxu0
        %v4645 = vadd.f32 %v4580, %v4644
        %4646 = vmatmul.f32.gmra.mxu0 %v659
        %v4647 = vpop.f32.mrf.mxu0
        %v4648 = vadd.f32 %v4583, %v4647
        %4649 = vmatmul.f32.gmra.mxu0 %v663
        %v4650 = vpop.f32.mrf.mxu0
        %v4651 = vadd.f32 %v4586, %v4650
        %4652 = vmatmul.f32.gmra.mxu0 %v667
        %v4653 = vpop.f32.mrf.mxu0
        %v4654 = vadd.f32 %v4589, %v4653
        %4655 = vmatmul.f32.gmra.mxu0 %v671
        %v4656 = vpop.f32.mrf.mxu0
        %v4657 = vadd.f32 %v4592, %v4656
        %4658 = vmatmul.f32.gmra.mxu0 %v675
        %v4659 = vpop.f32.mrf.mxu0
        %v4660 = vadd.f32 %v4595, %v4659
        %4661 = vmatmul.f32.gmra.mxu0 %v679
        %v4662 = vpop.f32.mrf.mxu0
        %v4663 = vadd.f32 %v4598, %v4662
        %4664 = vmatmul.f32.gmra.mxu0 %v683
        %v4665 = vpop.f32.mrf.mxu0
        %v4666 = vadd.f32 %v4601, %v4665
        %4667 = vmatmul.f32.gmra.mxu0 %v687
        %v4668 = vpop.f32.mrf.mxu0
        %v4669 = vadd.f32 %v4604, %v4668
        %4670 = vmatmul.f32.gmra.mxu0 %v691
        %v4671 = vpop.f32.mrf.mxu0
        %v4672 = vadd.f32 %v4607, %v4671
        %4673 = vdwg.mxu0
        %4674 = vmatpush.msra.mxu0 %v3688
        %4675 = vmatpush.msra.mxu0 %v3684
        %4676 = vmatpush.msra.mxu0 %v3680
        %4677 = vmatpush.msra.mxu0 %v3676
        %4678 = vmatpush.msra.mxu0 %v3672
        %4679 = vmatpush.msra.mxu0 %v3668
        %4680 = vmatpush.msra.mxu0 %v3664
        %4681 = vmatpush.msra.mxu0 %v3660
        %4682 = vmatpush.msra.mxu0 %v3656
        %4683 = vmatpush.msra.mxu0 %v3652
        %4684 = vmatpush.msra.mxu0 %v3648
        %4685 = vmatpush.msra.mxu0 %v3644
        %4686 = vmatpush.msra.mxu0 %v3640
        %4687 = vmatpush.msra.mxu0 %v3636
        %4688 = vmatpush.msra.mxu0 %v3632
        %4689 = vmatpush.msra.mxu0 %v3628
        %4690 = vmatmul.f32.gmra.mxu0 %v632
        %v4691 = vpop.f32.mrf.mxu0
        %v4692 = vadd.f32 %v4627, %v4691
        %4693 = vmatmul.f32.gmra.mxu0 %v636
        %v4694 = vpop.f32.mrf.mxu0
        %v4695 = vadd.f32 %v4630, %v4694
        %4696 = vmatmul.f32.gmra.mxu0 %v640
        %v4697 = vpop.f32.mrf.mxu0
        %v4698 = vadd.f32 %v4633, %v4697
        %4699 = vmatmul.f32.gmra.mxu0 %v644
        %v4700 = vpop.f32.mrf.mxu0
        %v4701 = vadd.f32 %v4636, %v4700
        %4702 = vmatmul.f32.gmra.mxu0 %v648
        %v4703 = vpop.f32.mrf.mxu0
        %v4704 = vadd.f32 %v4639, %v4703
        %4705 = vmatmul.f32.gmra.mxu0 %v652
        %v4706 = vpop.f32.mrf.mxu0
        %v4707 = vadd.f32 %v4642, %v4706
        %4708 = vmatmul.f32.gmra.mxu0 %v656
        %v4709 = vpop.f32.mrf.mxu0
        %v4710 = vadd.f32 %v4645, %v4709
        %4711 = vmatmul.f32.gmra.mxu0 %v660
        %v4712 = vpop.f32.mrf.mxu0
        %v4713 = vadd.f32 %v4648, %v4712
        %4714 = vmatmul.f32.gmra.mxu0 %v664
        %v4715 = vpop.f32.mrf.mxu0
        %v4716 = vadd.f32 %v4651, %v4715
        %4717 = vmatmul.f32.gmra.mxu0 %v668
        %v4718 = vpop.f32.mrf.mxu0
        %v4719 = vadd.f32 %v4654, %v4718
        %4720 = vmatmul.f32.gmra.mxu0 %v672
        %v4721 = vpop.f32.mrf.mxu0
        %v4722 = vadd.f32 %v4657, %v4721
        %4723 = vmatmul.f32.gmra.mxu0 %v676
        %v4724 = vpop.f32.mrf.mxu0
        %v4725 = vadd.f32 %v4660, %v4724
        %4726 = vmatmul.f32.gmra.mxu0 %v680
        %v4727 = vpop.f32.mrf.mxu0
        %v4728 = vadd.f32 %v4663, %v4727
        %4729 = vmatmul.f32.gmra.mxu0 %v684
        %v4730 = vpop.f32.mrf.mxu0
        %v4731 = vadd.f32 %v4666, %v4730
        %4732 = vmatmul.f32.gmra.mxu0 %v688
        %v4733 = vpop.f32.mrf.mxu0
        %v4734 = vadd.f32 %v4669, %v4733
        %4735 = vmatmul.f32.gmra.mxu0 %v692
        %v4736 = vpop.f32.mrf.mxu0
        %v4737 = vadd.f32 %v4672, %v4736
        %4738 = vdwg.mxu0
        %4739 = vst [vmem:[#allocation4] sm:$0xff] %v3912
        %4740 = vst [vmem:[#allocation4 + $0x8] sm:$0xff] %v4172
        %4741 = vst [vmem:[#allocation4 + $0x10] sm:$0xff] %v4432
        %4742 = vst [vmem:[#allocation4 + $0x18] sm:$0xff] %v4692
        %4743 = vst [vmem:[#allocation4 + $0x20] sm:$0xff] %v3915
        %4744 = vst [vmem:[#allocation4 + $0x28] sm:$0xff] %v4175
        %4745 = vst [vmem:[#allocation4 + $0x30] sm:$0xff] %v4435
        %4746 = vst [vmem:[#allocation4 + $0x38] sm:$0xff] %v4695
        %4747 = vst [vmem:[#allocation4 + $0x40] sm:$0xff] %v3918
        %4748 = vst [vmem:[#allocation4 + $0x48] sm:$0xff] %v4178
        %4749 = vst [vmem:[#allocation4 + $0x50] sm:$0xff] %v4438
        %4750 = vst [vmem:[#allocation4 + $0x58] sm:$0xff] %v4698
        %4751 = vst [vmem:[#allocation4 + $0x60] sm:$0xff] %v3921
        %4752 = vst [vmem:[#allocation4 + $0x68] sm:$0xff] %v4181
        %4753 = vst [vmem:[#allocation4 + $0x70] sm:$0xff] %v4441
        %4754 = vst [vmem:[#allocation4 + $0x78] sm:$0xff] %v4701
        %4755 = vst [vmem:[#allocation4 + $0x80] sm:$0xff] %v3924
        %4756 = vst [vmem:[#allocation4 + $0x88] sm:$0xff] %v4184
        %4757 = vst [vmem:[#allocation4 + $0x90] sm:$0xff] %v4444
        %4758 = vst [vmem:[#allocation4 + $0x98] sm:$0xff] %v4704
        %4759 = vst [vmem:[#allocation4 + $0xa0] sm:$0xff] %v3927
        %4760 = vst [vmem:[#allocation4 + $0xa8] sm:$0xff] %v4187
        %4761 = vst [vmem:[#allocation4 + $0xb0] sm:$0xff] %v4447
        %4762 = vst [vmem:[#allocation4 + $0xb8] sm:$0xff] %v4707
        %4763 = vst [vmem:[#allocation4 + $0xc0] sm:$0xff] %v3930
        %4764 = vst [vmem:[#allocation4 + $0xc8] sm:$0xff] %v4190
        %4765 = vst [vmem:[#allocation4 + $0xd0] sm:$0xff] %v4450
        %4766 = vst [vmem:[#allocation4 + $0xd8] sm:$0xff] %v4710
        %4767 = vst [vmem:[#allocation4 + $0xe0] sm:$0xff] %v3933
        %4768 = vst [vmem:[#allocation4 + $0xe8] sm:$0xff] %v4193
        %4769 = vst [vmem:[#allocation4 + $0xf0] sm:$0xff] %v4453
        %4770 = vst [vmem:[#allocation4 + $0xf8] sm:$0xff] %v4713
        %4771 = vst [vmem:[#allocation4 + $0x100] sm:$0xff] %v3936
        %4772 = vst [vmem:[#allocation4 + $0x108] sm:$0xff] %v4196
        %4773 = vst [vmem:[#allocation4 + $0x110] sm:$0xff] %v4456
        %4774 = vst [vmem:[#allocation4 + $0x118] sm:$0xff] %v4716
        %4775 = vst [vmem:[#allocation4 + $0x120] sm:$0xff] %v3939
        %4776 = vst [vmem:[#allocation4 + $0x128] sm:$0xff] %v4199
        %4777 = vst [vmem:[#allocation4 + $0x130] sm:$0xff] %v4459
        %4778 = vst [vmem:[#allocation4 + $0x138] sm:$0xff] %v4719
        %4779 = vst [vmem:[#allocation4 + $0x140] sm:$0xff] %v3942
        %4780 = vst [vmem:[#allocation4 + $0x148] sm:$0xff] %v4202
        %4781 = vst [vmem:[#allocation4 + $0x150] sm:$0xff] %v4462
        %4782 = vst [vmem:[#allocation4 + $0x158] sm:$0xff] %v4722
        %4783 = vst [vmem:[#allocation4 + $0x160] sm:$0xff] %v3945
        %4784 = vst [vmem:[#allocation4 + $0x168] sm:$0xff] %v4205
        %4785 = vst [vmem:[#allocation4 + $0x170] sm:$0xff] %v4465
        %4786 = vst [vmem:[#allocation4 + $0x178] sm:$0xff] %v4725
        %4787 = vst [vmem:[#allocation4 + $0x180] sm:$0xff] %v3948
        %4788 = vst [vmem:[#allocation4 + $0x188] sm:$0xff] %v4208
        %4789 = vst [vmem:[#allocation4 + $0x190] sm:$0xff] %v4468
        %4790 = vst [vmem:[#allocation4 + $0x198] sm:$0xff] %v4728
        %4791 = vst [vmem:[#allocation4 + $0x1a0] sm:$0xff] %v3951
        %4792 = vst [vmem:[#allocation4 + $0x1a8] sm:$0xff] %v4211
        %4793 = vst [vmem:[#allocation4 + $0x1b0] sm:$0xff] %v4471
        %4794 = vst [vmem:[#allocation4 + $0x1b8] sm:$0xff] %v4731
        %4795 = vst [vmem:[#allocation4 + $0x1c0] sm:$0xff] %v3954
        %4796 = vst [vmem:[#allocation4 + $0x1c8] sm:$0xff] %v4214
        %4797 = vst [vmem:[#allocation4 + $0x1d0] sm:$0xff] %v4474
        %4798 = vst [vmem:[#allocation4 + $0x1d8] sm:$0xff] %v4734
        %4799 = vst [vmem:[#allocation4 + $0x1e0] sm:$0xff] %v3957
        %4800 = vst [vmem:[#allocation4 + $0x1e8] sm:$0xff] %v4217
        %4801 = vst [vmem:[#allocation4 + $0x1f0] sm:$0xff] %v4477
        %4802 = vst [vmem:[#allocation4 + $0x1f8] sm:$0xff] %v4737
        %v4803 = vld [vmem:[#allocation20] sm:$0xff]
        %v4804 = vld [vmem:[#allocation20 + $0x8] sm:$0xff]
        %v4805 = vld [vmem:[#allocation20 + $0x10] sm:$0xff]
        %v4806 = vld [vmem:[#allocation20 + $0x18] sm:$0xff]
        %v4807 = vld [vmem:[#allocation20 + $0x20] sm:$0xff]
        %v4808 = vld [vmem:[#allocation20 + $0x28] sm:$0xff]
        %v4809 = vld [vmem:[#allocation20 + $0x30] sm:$0xff]
        %v4810 = vld [vmem:[#allocation20 + $0x38] sm:$0xff]
        %v4811 = vld [vmem:[#allocation20 + $0x40] sm:$0xff]
        %v4812 = vld [vmem:[#allocation20 + $0x48] sm:$0xff]
        %v4813 = vld [vmem:[#allocation20 + $0x50] sm:$0xff]
        %v4814 = vld [vmem:[#allocation20 + $0x58] sm:$0xff]
        %v4815 = vld [vmem:[#allocation20 + $0x60] sm:$0xff]
        %v4816 = vld [vmem:[#allocation20 + $0x68] sm:$0xff]
        %v4817 = vld [vmem:[#allocation20 + $0x70] sm:$0xff]
        %v4818 = vld [vmem:[#allocation20 + $0x78] sm:$0xff]
        %v4819 = vld [vmem:[#allocation21] sm:$0xff]
        %v4820 = vld [vmem:[#allocation21 + $0x8] sm:$0xff]
        %v4821 = vld [vmem:[#allocation21 + $0x10] sm:$0xff]
        %v4822 = vld [vmem:[#allocation21 + $0x18] sm:$0xff]
        %v4823 = vld [vmem:[#allocation21 + $0x20] sm:$0xff]
        %v4824 = vld [vmem:[#allocation21 + $0x28] sm:$0xff]
        %v4825 = vld [vmem:[#allocation21 + $0x30] sm:$0xff]
        %v4826 = vld [vmem:[#allocation21 + $0x38] sm:$0xff]
        %v4827 = vld [vmem:[#allocation21 + $0x40] sm:$0xff]
        %v4828 = vld [vmem:[#allocation21 + $0x48] sm:$0xff]
        %v4829 = vld [vmem:[#allocation21 + $0x50] sm:$0xff]
        %v4830 = vld [vmem:[#allocation21 + $0x58] sm:$0xff]
        %v4831 = vld [vmem:[#allocation21 + $0x60] sm:$0xff]
        %v4832 = vld [vmem:[#allocation21 + $0x68] sm:$0xff]
        %v4833 = vld [vmem:[#allocation21 + $0x70] sm:$0xff]
        %v4834 = vld [vmem:[#allocation21 + $0x78] sm:$0xff]
        %v4835 = vlaneseq
        %v4836 = vshrl.u32 %v4835, 7
        %v4837 = vadd.s32 %v4836, 8
        %v4838 = vadd.s32 %v4836, 16
        %v4839 = vadd.s32 %v4836, 24
        %v4840 = vadd.s32 %v4836, 32
        %v4841 = vadd.s32 %v4836, 40
        %v4842 = vadd.s32 %v4836, 48
        %v4843 = vadd.s32 %v4836, 56
        %v4844 = vadd.s32 %v4836, 64
        %v4845 = vadd.s32 %v4836, 72
        %v4846 = vadd.s32 %v4836, 80
        %v4847 = vadd.s32 %v4836, 88
        %v4848 = vadd.s32 %v4836, 96
        %v4849 = vadd.s32 %v4836, 104
        %v4850 = vadd.s32 %v4836, 112
        %v4851 = vadd.s32 %v4836, 120
        %v4852 = vlaneseq
        %v4853 = vand.u32 %v4852, 127
        %vm4854 = vcmp.gt.s32.totalorder %v4853, %v4836
        %vm4855 = vcmp.gt.s32.totalorder %v4853, %v4837
        %vm4856 = vcmp.gt.s32.totalorder %v4853, %v4838
        %vm4857 = vcmp.gt.s32.totalorder %v4853, %v4839
        %vm4858 = vcmp.gt.s32.totalorder %v4853, %v4840
        %vm4859 = vcmp.gt.s32.totalorder %v4853, %v4841
        %vm4860 = vcmp.gt.s32.totalorder %v4853, %v4842
        %vm4861 = vcmp.gt.s32.totalorder %v4853, %v4843
        %vm4862 = vcmp.gt.s32.totalorder %v4853, %v4844
        %vm4863 = vcmp.gt.s32.totalorder %v4853, %v4845
        %vm4864 = vcmp.gt.s32.totalorder %v4853, %v4846
        %vm4865 = vcmp.gt.s32.totalorder %v4853, %v4847
        %vm4866 = vcmp.gt.s32.totalorder %v4853, %v4848
        %vm4867 = vcmp.gt.s32.totalorder %v4853, %v4849
        %vm4868 = vcmp.gt.s32.totalorder %v4853, %v4850
        %vm4869 = vcmp.gt.s32.totalorder %v4853, %v4851
        %v4870 = vld [vmem:[%s628] sm:$0x1]
        %v4872 = vperm.slane %v4870, 0
        %v4874 = vsel %vm4854, -1e+30, %v4872
        %v4875 = vsel %vm4855, -1e+30, %v4872
        %v4876 = vsel %vm4856, -1e+30, %v4872
        %v4877 = vsel %vm4857, -1e+30, %v4872
        %v4878 = vsel %vm4858, -1e+30, %v4872
        %v4879 = vsel %vm4859, -1e+30, %v4872
        %v4880 = vsel %vm4860, -1e+30, %v4872
        %v4881 = vsel %vm4861, -1e+30, %v4872
        %v4882 = vsel %vm4862, -1e+30, %v4872
        %v4883 = vsel %vm4863, -1e+30, %v4872
        %v4884 = vsel %vm4864, -1e+30, %v4872
        %v4885 = vsel %vm4865, -1e+30, %v4872
        %v4886 = vsel %vm4866, -1e+30, %v4872
        %v4887 = vsel %vm4867, -1e+30, %v4872
        %v4888 = vsel %vm4868, -1e+30, %v4872
        %v4889 = vsel %vm4869, -1e+30, %v4872
        %v4890 = vld [vmem:[#allocation2] sm:$0xff]
        %v4891 = vld [vmem:[#allocation2 + $0x20] sm:$0xff]
        %v4892 = vld [vmem:[#allocation2 + $0x40] sm:$0xff]
        %v4893 = vld [vmem:[#allocation2 + $0x60] sm:$0xff]
        %v4894 = vld [vmem:[#allocation2 + $0x80] sm:$0xff]
        %v4895 = vld [vmem:[#allocation2 + $0xa0] sm:$0xff]
        %v4896 = vld [vmem:[#allocation2 + $0xc0] sm:$0xff]
        %v4897 = vld [vmem:[#allocation2 + $0xe0] sm:$0xff]
        %v4898 = vld [vmem:[#allocation2 + $0x100] sm:$0xff]
        %v4899 = vld [vmem:[#allocation2 + $0x120] sm:$0xff]
        %v4900 = vld [vmem:[#allocation2 + $0x140] sm:$0xff]
        %v4901 = vld [vmem:[#allocation2 + $0x160] sm:$0xff]
        %v4902 = vld [vmem:[#allocation2 + $0x180] sm:$0xff]
        %v4903 = vld [vmem:[#allocation2 + $0x1a0] sm:$0xff]
        %v4904 = vld [vmem:[#allocation2 + $0x1c0] sm:$0xff]
        %v4905 = vld [vmem:[#allocation2 + $0x1e0] sm:$0xff]
        %v4906 = vld [vmem:[#allocation3] sm:$0xff]
        %v4907 = vld [vmem:[#allocation3 + $0x20] sm:$0xff]
        %v4908 = vld [vmem:[#allocation3 + $0x40] sm:$0xff]
        %v4909 = vld [vmem:[#allocation3 + $0x60] sm:$0xff]
        %v4910 = vld [vmem:[#allocation3 + $0x80] sm:$0xff]
        %v4911 = vld [vmem:[#allocation3 + $0xa0] sm:$0xff]
        %v4912 = vld [vmem:[#allocation3 + $0xc0] sm:$0xff]
        %v4913 = vld [vmem:[#allocation3 + $0xe0] sm:$0xff]
        %v4914 = vld [vmem:[#allocation3 + $0x100] sm:$0xff]
        %v4915 = vld [vmem:[#allocation3 + $0x120] sm:$0xff]
        %v4916 = vld [vmem:[#allocation3 + $0x140] sm:$0xff]
        %v4917 = vld [vmem:[#allocation3 + $0x160] sm:$0xff]
        %v4918 = vld [vmem:[#allocation3 + $0x180] sm:$0xff]
        %v4919 = vld [vmem:[#allocation3 + $0x1a0] sm:$0xff]
        %v4920 = vld [vmem:[#allocation3 + $0x1c0] sm:$0xff]
        %v4921 = vld [vmem:[#allocation3 + $0x1e0] sm:$0xff]
        %v4922 = vmul.f32 %v4890, %v4803
        %v4923 = vmul.f32 %v4891, %v4804
        %v4924 = vmul.f32 %v4892, %v4805
        %v4925 = vmul.f32 %v4893, %v4806
        %v4926 = vmul.f32 %v4894, %v4807
        %v4927 = vmul.f32 %v4895, %v4808
        %v4928 = vmul.f32 %v4896, %v4809
        %v4929 = vmul.f32 %v4897, %v4810
        %v4930 = vmul.f32 %v4898, %v4811
        %v4931 = vmul.f32 %v4899, %v4812
        %v4932 = vmul.f32 %v4900, %v4813
        %v4933 = vmul.f32 %v4901, %v4814
        %v4934 = vmul.f32 %v4902, %v4815
        %v4935 = vmul.f32 %v4903, %v4816
        %v4936 = vmul.f32 %v4904, %v4817
        %v4937 = vmul.f32 %v4905, %v4818
        %4938 = vrot.lane.b32.xlu0 %v4890, 64
        %v4939 = vpop.permute.xlu0 %4938
        %4940 = vrot.lane.b32.xlu0 %v4891, 64
        %v4941 = vpop.permute.xlu0 %4940
        %4942 = vrot.lane.b32.xlu0 %v4892, 64
        %v4943 = vpop.permute.xlu0 %4942
        %4944 = vrot.lane.b32.xlu0 %v4893, 64
        %v4945 = vpop.permute.xlu0 %4944
        %4946 = vrot.lane.b32.xlu0 %v4894, 64
        %v4947 = vpop.permute.xlu0 %4946
        %4948 = vrot.lane.b32.xlu0 %v4895, 64
        %v4949 = vpop.permute.xlu0 %4948
        %4950 = vrot.lane.b32.xlu0 %v4896, 64
        %v4951 = vpop.permute.xlu0 %4950
        %4952 = vrot.lane.b32.xlu0 %v4897, 64
        %v4953 = vpop.permute.xlu0 %4952
        %4954 = vrot.lane.b32.xlu0 %v4898, 64
        %v4955 = vpop.permute.xlu0 %4954
        %4956 = vrot.lane.b32.xlu0 %v4899, 64
        %v4957 = vpop.permute.xlu0 %4956
        %4958 = vrot.lane.b32.xlu0 %v4900, 64
        %v4959 = vpop.permute.xlu0 %4958
        %4960 = vrot.lane.b32.xlu0 %v4901, 64
        %v4961 = vpop.permute.xlu0 %4960
        %4962 = vrot.lane.b32.xlu0 %v4902, 64
        %v4963 = vpop.permute.xlu0 %4962
        %4964 = vrot.lane.b32.xlu0 %v4903, 64
        %v4965 = vpop.permute.xlu0 %4964
        %4966 = vrot.lane.b32.xlu0 %v4904, 64
        %v4967 = vpop.permute.xlu0 %4966
        %4968 = vrot.lane.b32.xlu0 %v4905, 64
        %v4969 = vpop.permute.xlu0 %4968
        %v4970 = vmul.f32 %v4939, %v4819
        %v4971 = vmul.f32 %v4941, %v4820
        %v4972 = vmul.f32 %v4943, %v4821
        %v4973 = vmul.f32 %v4945, %v4822
        %v4974 = vmul.f32 %v4947, %v4823
        %v4975 = vmul.f32 %v4949, %v4824
        %v4976 = vmul.f32 %v4951, %v4825
        %v4977 = vmul.f32 %v4953, %v4826
        %v4978 = vmul.f32 %v4955, %v4827
        %v4979 = vmul.f32 %v4957, %v4828
        %v4980 = vmul.f32 %v4959, %v4829
        %v4981 = vmul.f32 %v4961, %v4830
        %v4982 = vmul.f32 %v4963, %v4831
        %v4983 = vmul.f32 %v4965, %v4832
        %v4984 = vmul.f32 %v4967, %v4833
        %v4985 = vmul.f32 %v4969, %v4834
        %v4986 = vadd.f32 %v4922, %v4970
        %v4987 = vadd.f32 %v4923, %v4971
        %v4988 = vadd.f32 %v4924, %v4972
        %v4989 = vadd.f32 %v4925, %v4973
        %v4990 = vadd.f32 %v4926, %v4974
        %v4991 = vadd.f32 %v4927, %v4975
        %v4992 = vadd.f32 %v4928, %v4976
        %v4993 = vadd.f32 %v4929, %v4977
        %v4994 = vadd.f32 %v4930, %v4978
        %v4995 = vadd.f32 %v4931, %v4979
        %v4996 = vadd.f32 %v4932, %v4980
        %v4997 = vadd.f32 %v4933, %v4981
        %v4998 = vadd.f32 %v4934, %v4982
        %v4999 = vadd.f32 %v4935, %v4983
        %v5000 = vadd.f32 %v4936, %v4984
        %v5001 = vadd.f32 %v4937, %v4985
        %v5002 = vmul.f32 %v4986, 0.088388346
        %v5003 = vmul.f32 %v4987, 0.088388346
        %v5004 = vmul.f32 %v4988, 0.088388346
        %v5005 = vmul.f32 %v4989, 0.088388346
        %v5006 = vmul.f32 %v4990, 0.088388346
        %v5007 = vmul.f32 %v4991, 0.088388346
        %v5008 = vmul.f32 %v4992, 0.088388346
        %v5009 = vmul.f32 %v4993, 0.088388346
        %v5010 = vmul.f32 %v4994, 0.088388346
        %v5011 = vmul.f32 %v4995, 0.088388346
        %v5012 = vmul.f32 %v4996, 0.088388346
        %v5013 = vmul.f32 %v4997, 0.088388346
        %v5014 = vmul.f32 %v4998, 0.088388346
        %v5015 = vmul.f32 %v4999, 0.088388346
        %v5016 = vmul.f32 %v5000, 0.088388346
        %v5017 = vmul.f32 %v5001, 0.088388346
        %v5018 = vmul.f32 %v4906, %v4803
        %v5019 = vmul.f32 %v4907, %v4804
        %v5020 = vmul.f32 %v4908, %v4805
        %v5021 = vmul.f32 %v4909, %v4806
        %v5022 = vmul.f32 %v4910, %v4807
        %v5023 = vmul.f32 %v4911, %v4808
        %v5024 = vmul.f32 %v4912, %v4809
        %v5025 = vmul.f32 %v4913, %v4810
        %v5026 = vmul.f32 %v4914, %v4811
        %v5027 = vmul.f32 %v4915, %v4812
        %v5028 = vmul.f32 %v4916, %v4813
        %v5029 = vmul.f32 %v4917, %v4814
        %v5030 = vmul.f32 %v4918, %v4815
        %v5031 = vmul.f32 %v4919, %v4816
        %v5032 = vmul.f32 %v4920, %v4817
        %v5033 = vmul.f32 %v4921, %v4818
        %5034 = vrot.lane.b32.xlu0 %v4906, 64
        %v5035 = vpop.permute.xlu0 %5034
        %5036 = vrot.lane.b32.xlu0 %v4907, 64
        %v5037 = vpop.permute.xlu0 %5036
        %5038 = vrot.lane.b32.xlu0 %v4908, 64
        %v5039 = vpop.permute.xlu0 %5038
        %5040 = vrot.lane.b32.xlu0 %v4909, 64
        %v5041 = vpop.permute.xlu0 %5040
        %5042 = vrot.lane.b32.xlu0 %v4910, 64
        %v5043 = vpop.permute.xlu0 %5042
        %5044 = vrot.lane.b32.xlu0 %v4911, 64
        %v5045 = vpop.permute.xlu0 %5044
        %5046 = vrot.lane.b32.xlu0 %v4912, 64
        %v5047 = vpop.permute.xlu0 %5046
        %5048 = vrot.lane.b32.xlu0 %v4913, 64
        %v5049 = vpop.permute.xlu0 %5048
        %5050 = vrot.lane.b32.xlu0 %v4914, 64
        %v5051 = vpop.permute.xlu0 %5050
        %5052 = vrot.lane.b32.xlu0 %v4915, 64
        %v5053 = vpop.permute.xlu0 %5052
        %5054 = vrot.lane.b32.xlu0 %v4916, 64
        %v5055 = vpop.permute.xlu0 %5054
        %5056 = vrot.lane.b32.xlu0 %v4917, 64
        %v5057 = vpop.permute.xlu0 %5056
        %5058 = vrot.lane.b32.xlu0 %v4918, 64
        %v5059 = vpop.permute.xlu0 %5058
        %5060 = vrot.lane.b32.xlu0 %v4919, 64
        %v5061 = vpop.permute.xlu0 %5060
        %5062 = vrot.lane.b32.xlu0 %v4920, 64
        %v5063 = vpop.permute.xlu0 %5062
        %5064 = vrot.lane.b32.xlu0 %v4921, 64
        %v5065 = vpop.permute.xlu0 %5064
        %v5066 = vmul.f32 %v5035, %v4819
        %v5067 = vmul.f32 %v5037, %v4820
        %v5068 = vmul.f32 %v5039, %v4821
        %v5069 = vmul.f32 %v5041, %v4822
        %v5070 = vmul.f32 %v5043, %v4823
        %v5071 = vmul.f32 %v5045, %v4824
        %v5072 = vmul.f32 %v5047, %v4825
        %v5073 = vmul.f32 %v5049, %v4826
        %v5074 = vmul.f32 %v5051, %v4827
        %v5075 = vmul.f32 %v5053, %v4828
        %v5076 = vmul.f32 %v5055, %v4829
        %v5077 = vmul.f32 %v5057, %v4830
        %v5078 = vmul.f32 %v5059, %v4831
        %v5079 = vmul.f32 %v5061, %v4832
        %v5080 = vmul.f32 %v5063, %v4833
        %v5081 = vmul.f32 %v5065, %v4834
        %v5082 = vadd.f32 %v5018, %v5066
        %v5083 = vadd.f32 %v5019, %v5067
        %v5084 = vadd.f32 %v5020, %v5068
        %v5085 = vadd.f32 %v5021, %v5069
        %v5086 = vadd.f32 %v5022, %v5070
        %v5087 = vadd.f32 %v5023, %v5071
        %v5088 = vadd.f32 %v5024, %v5072
        %v5089 = vadd.f32 %v5025, %v5073
        %v5090 = vadd.f32 %v5026, %v5074
        %v5091 = vadd.f32 %v5027, %v5075
        %v5092 = vadd.f32 %v5028, %v5076
        %v5093 = vadd.f32 %v5029, %v5077
        %v5094 = vadd.f32 %v5030, %v5078
        %v5095 = vadd.f32 %v5031, %v5079
        %v5096 = vadd.f32 %v5032, %v5080
        %v5097 = vadd.f32 %v5033, %v5081
        %5098 = vmatpush.xpose.msra.mxu0 %v5097
        %5099 = vmatpush.xpose.msra.mxu0 %v5096
        %5100 = vmatpush.xpose.msra.mxu0 %v5095
        %5101 = vmatpush.xpose.msra.mxu0 %v5094
        %5102 = vmatpush.xpose.msra.mxu0 %v5093
        %5103 = vmatpush.xpose.msra.mxu0 %v5092
        %5104 = vmatpush.xpose.msra.mxu0 %v5091
        %5105 = vmatpush.xpose.msra.mxu0 %v5090
        %5106 = vmatpush.xpose.msra.mxu0 %v5089
        %5107 = vmatpush.xpose.msra.mxu0 %v5088
        %5108 = vmatpush.xpose.msra.mxu0 %v5087
        %5109 = vmatpush.xpose.msra.mxu0 %v5086
        %5110 = vmatpush.xpose.msra.mxu0 %v5085
        %5111 = vmatpush.xpose.msra.mxu0 %v5084
        %5112 = vmatpush.xpose.msra.mxu0 %v5083
        %5113 = vmatpush.xpose.msra.mxu0 %v5082
        %5114 = vmatmul.f32.gmra.mxu0 %v5002
        %v5115 = vpop.f32.mrf.mxu0
        %v5116 = vadd.f32 %v4874, %v5115
        %5117 = vmatmul.f32.gmra.mxu0 %v5003
        %v5118 = vpop.f32.mrf.mxu0
        %v5119 = vadd.f32 %v4875, %v5118
        %5120 = vmatmul.f32.gmra.mxu0 %v5004
        %v5121 = vpop.f32.mrf.mxu0
        %v5122 = vadd.f32 %v4876, %v5121
        %5123 = vmatmul.f32.gmra.mxu0 %v5005
        %v5124 = vpop.f32.mrf.mxu0
        %v5125 = vadd.f32 %v4877, %v5124
        %5126 = vmatmul.f32.gmra.mxu0 %v5006
        %v5127 = vpop.f32.mrf.mxu0
        %v5128 = vadd.f32 %v4878, %v5127
        %5129 = vmatmul.f32.gmra.mxu0 %v5007
        %v5130 = vpop.f32.mrf.mxu0
        %v5131 = vadd.f32 %v4879, %v5130
        %5132 = vmatmul.f32.gmra.mxu0 %v5008
        %v5133 = vpop.f32.mrf.mxu0
        %v5134 = vadd.f32 %v4880, %v5133
        %5135 = vmatmul.f32.gmra.mxu0 %v5009
        %v5136 = vpop.f32.mrf.mxu0
        %v5137 = vadd.f32 %v4881, %v5136
        %5138 = vmatmul.f32.gmra.mxu0 %v5010
        %v5139 = vpop.f32.mrf.mxu0
        %v5140 = vadd.f32 %v4882, %v5139
        %5141 = vmatmul.f32.gmra.mxu0 %v5011
        %v5142 = vpop.f32.mrf.mxu0
        %v5143 = vadd.f32 %v4883, %v5142
        %5144 = vmatmul.f32.gmra.mxu0 %v5012
        %v5145 = vpop.f32.mrf.mxu0
        %v5146 = vadd.f32 %v4884, %v5145
        %5147 = vmatmul.f32.gmra.mxu0 %v5013
        %v5148 = vpop.f32.mrf.mxu0
        %v5149 = vadd.f32 %v4885, %v5148
        %5150 = vmatmul.f32.gmra.mxu0 %v5014
        %v5151 = vpop.f32.mrf.mxu0
        %v5152 = vadd.f32 %v4886, %v5151
        %5153 = vmatmul.f32.gmra.mxu0 %v5015
        %v5154 = vpop.f32.mrf.mxu0
        %v5155 = vadd.f32 %v4887, %v5154
        %5156 = vmatmul.f32.gmra.mxu0 %v5016
        %v5157 = vpop.f32.mrf.mxu0
        %v5158 = vadd.f32 %v4888, %v5157
        %5159 = vmatmul.f32.gmra.mxu0 %v5017
        %v5160 = vpop.f32.mrf.mxu0
        %v5161 = vadd.f32 %v4889, %v5160
        %5162 = vdwg.mxu0
        %5163 = vmax.xlane.f32.xlu0 %v5116
        %v5164 = vpop.xlane.xlu0 %5163
        %5165 = vmax.xlane.f32.xlu0 %v5119
        %v5166 = vpop.xlane.xlu0 %5165
        %5167 = vmax.xlane.f32.xlu0 %v5122
        %v5168 = vpop.xlane.xlu0 %5167
        %5169 = vmax.xlane.f32.xlu0 %v5125
        %v5170 = vpop.xlane.xlu0 %5169
        %5171 = vmax.xlane.f32.xlu0 %v5128
        %v5172 = vpop.xlane.xlu0 %5171
        %5173 = vmax.xlane.f32.xlu0 %v5131
        %v5174 = vpop.xlane.xlu0 %5173
        %5175 = vmax.xlane.f32.xlu0 %v5134
        %v5176 = vpop.xlane.xlu0 %5175
        %5177 = vmax.xlane.f32.xlu0 %v5137
        %v5178 = vpop.xlane.xlu0 %5177
        %5179 = vmax.xlane.f32.xlu0 %v5140
        %v5180 = vpop.xlane.xlu0 %5179
        %5181 = vmax.xlane.f32.xlu0 %v5143
        %v5182 = vpop.xlane.xlu0 %5181
        %5183 = vmax.xlane.f32.xlu0 %v5146
        %v5184 = vpop.xlane.xlu0 %5183
        %5185 = vmax.xlane.f32.xlu0 %v5149
        %v5186 = vpop.xlane.xlu0 %5185
        %5187 = vmax.xlane.f32.xlu0 %v5152
        %v5188 = vpop.xlane.xlu0 %5187
        %5189 = vmax.xlane.f32.xlu0 %v5155
        %v5190 = vpop.xlane.xlu0 %5189
        %5191 = vmax.xlane.f32.xlu0 %v5158
        %v5192 = vpop.xlane.xlu0 %5191
        %5193 = vmax.xlane.f32.xlu0 %v5161
        %v5194 = vpop.xlane.xlu0 %5193
        %v5195 = vsub.f32 %v5116, %v5164
        %v5196 = vsub.f32 %v5119, %v5166
        %v5197 = vsub.f32 %v5122, %v5168
        %v5198 = vsub.f32 %v5125, %v5170
        %v5199 = vsub.f32 %v5128, %v5172
        %v5200 = vsub.f32 %v5131, %v5174
        %v5201 = vsub.f32 %v5134, %v5176
        %v5202 = vsub.f32 %v5137, %v5178
        %v5203 = vsub.f32 %v5140, %v5180
        %v5204 = vsub.f32 %v5143, %v5182
        %v5205 = vsub.f32 %v5146, %v5184
        %v5206 = vsub.f32 %v5149, %v5186
        %v5207 = vsub.f32 %v5152, %v5188
        %v5208 = vsub.f32 %v5155, %v5190
        %v5209 = vsub.f32 %v5158, %v5192
        %v5210 = vsub.f32 %v5161, %v5194
        %v5211 = vmul.f32 %v5195, 1.442695
        %v5212 = vpow.pop %v5211
        %v5213 = vmul.f32 %v5196, 1.442695
        %v5214 = vpow.pop %v5213
        %v5215 = vmul.f32 %v5197, 1.442695
        %v5216 = vpow.pop %v5215
        %v5217 = vmul.f32 %v5198, 1.442695
        %v5218 = vpow.pop %v5217
        %v5219 = vmul.f32 %v5199, 1.442695
        %v5220 = vpow.pop %v5219
        %v5221 = vmul.f32 %v5200, 1.442695
        %v5222 = vpow.pop %v5221
        %v5223 = vmul.f32 %v5201, 1.442695
        %v5224 = vpow.pop %v5223
        %v5225 = vmul.f32 %v5202, 1.442695
        %v5226 = vpow.pop %v5225
        %v5227 = vmul.f32 %v5203, 1.442695
        %v5228 = vpow.pop %v5227
        %v5229 = vmul.f32 %v5204, 1.442695
        %v5230 = vpow.pop %v5229
        %v5231 = vmul.f32 %v5205, 1.442695
        %v5232 = vpow.pop %v5231
        %v5233 = vmul.f32 %v5206, 1.442695
        %v5234 = vpow.pop %v5233
        %v5235 = vmul.f32 %v5207, 1.442695
        %v5236 = vpow.pop %v5235
        %v5237 = vmul.f32 %v5208, 1.442695
        %v5238 = vpow.pop %v5237
        %v5239 = vmul.f32 %v5209, 1.442695
        %v5240 = vpow.pop %v5239
        %v5241 = vmul.f32 %v5210, 1.442695
        %v5242 = vpow.pop %v5241
        %5243 = vadd.xlane.f32.xlu0 %v5212
        %v5244 = vpop.xlane.xlu0 %5243
        %5245 = vadd.xlane.f32.xlu0 %v5214
        %v5246 = vpop.xlane.xlu0 %5245
        %5247 = vadd.xlane.f32.xlu0 %v5216
        %v5248 = vpop.xlane.xlu0 %5247
        %5249 = vadd.xlane.f32.xlu0 %v5218
        %v5250 = vpop.xlane.xlu0 %5249
        %5251 = vadd.xlane.f32.xlu0 %v5220
        %v5252 = vpop.xlane.xlu0 %5251
        %5253 = vadd.xlane.f32.xlu0 %v5222
        %v5254 = vpop.xlane.xlu0 %5253
        %5255 = vadd.xlane.f32.xlu0 %v5224
        %v5256 = vpop.xlane.xlu0 %5255
        %5257 = vadd.xlane.f32.xlu0 %v5226
        %v5258 = vpop.xlane.xlu0 %5257
        %5259 = vadd.xlane.f32.xlu0 %v5228
        %v5260 = vpop.xlane.xlu0 %5259
        %5261 = vadd.xlane.f32.xlu0 %v5230
        %v5262 = vpop.xlane.xlu0 %5261
        %5263 = vadd.xlane.f32.xlu0 %v5232
        %v5264 = vpop.xlane.xlu0 %5263
        %5265 = vadd.xlane.f32.xlu0 %v5234
        %v5266 = vpop.xlane.xlu0 %5265
        %5267 = vadd.xlane.f32.xlu0 %v5236
        %v5268 = vpop.xlane.xlu0 %5267
        %5269 = vadd.xlane.f32.xlu0 %v5238
        %v5270 = vpop.xlane.xlu0 %5269
        %5271 = vadd.xlane.f32.xlu0 %v5240
        %v5272 = vpop.xlane.xlu0 %5271
        %5273 = vadd.xlane.f32.xlu0 %v5242
        %v5274 = vpop.xlane.xlu0 %5273
        %v5275 = vrcp.pop %v5244
        %v5276 = vrcp.pop %v5246
        %v5277 = vrcp.pop %v5248
        %v5278 = vrcp.pop %v5250
        %v5279 = vrcp.pop %v5252
        %v5280 = vrcp.pop %v5254
        %v5281 = vrcp.pop %v5256
        %v5282 = vrcp.pop %v5258
        %v5283 = vrcp.pop %v5260
        %v5284 = vrcp.pop %v5262
        %v5285 = vrcp.pop %v5264
        %v5286 = vrcp.pop %v5266
        %v5287 = vrcp.pop %v5268
        %v5288 = vrcp.pop %v5270
        %v5289 = vrcp.pop %v5272
        %v5290 = vrcp.pop %v5274
        %v5291 = vmul.f32 %v5212, %v5275
        %v5292 = vmul.f32 %v5214, %v5276
        %v5293 = vmul.f32 %v5216, %v5277
        %v5294 = vmul.f32 %v5218, %v5278
        %v5295 = vmul.f32 %v5220, %v5279
        %v5296 = vmul.f32 %v5222, %v5280
        %v5297 = vmul.f32 %v5224, %v5281
        %v5298 = vmul.f32 %v5226, %v5282
        %v5299 = vmul.f32 %v5228, %v5283
        %v5300 = vmul.f32 %v5230, %v5284
        %v5301 = vmul.f32 %v5232, %v5285
        %v5302 = vmul.f32 %v5234, %v5286
        %v5303 = vmul.f32 %v5236, %v5287
        %v5304 = vmul.f32 %v5238, %v5288
        %v5305 = vmul.f32 %v5240, %v5289
        %v5306 = vmul.f32 %v5242, %v5290
        %5307 = vst [vmem:[%s625] sm:$0xff] %v5291
        %5308 = vst [vmem:[%s625 + $0x8] sm:$0xff] %v5292
        %5309 = vst [vmem:[%s625 + $0x10] sm:$0xff] %v5293
        %5310 = vst [vmem:[%s625 + $0x18] sm:$0xff] %v5294
        %5311 = vst [vmem:[%s625 + $0x20] sm:$0xff] %v5295
        %5312 = vst [vmem:[%s625 + $0x28] sm:$0xff] %v5296
        %5313 = vst [vmem:[%s625 + $0x30] sm:$0xff] %v5297
        %5314 = vst [vmem:[%s625 + $0x38] sm:$0xff] %v5298
        %5315 = vst [vmem:[%s625 + $0x40] sm:$0xff] %v5299
        %5316 = vst [vmem:[%s625 + $0x48] sm:$0xff] %v5300
        %5317 = vst [vmem:[%s625 + $0x50] sm:$0xff] %v5301
        %5318 = vst [vmem:[%s625 + $0x58] sm:$0xff] %v5302
        %5319 = vst [vmem:[%s625 + $0x60] sm:$0xff] %v5303
        %5320 = vst [vmem:[%s625 + $0x68] sm:$0xff] %v5304
        %5321 = vst [vmem:[%s625 + $0x70] sm:$0xff] %v5305
        %5322 = vst [vmem:[%s625 + $0x78] sm:$0xff] %v5306
        %v5323 = vld [vmem:[#allocation4] sm:$0xff]
        %v5324 = vld [vmem:[#allocation4 + $0x20] sm:$0xff]
        %v5325 = vld [vmem:[#allocation4 + $0x40] sm:$0xff]
        %v5326 = vld [vmem:[#allocation4 + $0x60] sm:$0xff]
        %v5327 = vld [vmem:[#allocation4 + $0x80] sm:$0xff]
        %v5328 = vld [vmem:[#allocation4 + $0xa0] sm:$0xff]
        %v5329 = vld [vmem:[#allocation4 + $0xc0] sm:$0xff]
        %v5330 = vld [vmem:[#allocation4 + $0xe0] sm:$0xff]
        %v5331 = vld [vmem:[#allocation4 + $0x100] sm:$0xff]
        %v5332 = vld [vmem:[#allocation4 + $0x120] sm:$0xff]
        %v5333 = vld [vmem:[#allocation4 + $0x140] sm:$0xff]
        %v5334 = vld [vmem:[#allocation4 + $0x160] sm:$0xff]
        %v5335 = vld [vmem:[#allocation4 + $0x180] sm:$0xff]
        %v5336 = vld [vmem:[#allocation4 + $0x1a0] sm:$0xff]
        %v5337 = vld [vmem:[#allocation4 + $0x1c0] sm:$0xff]
        %v5338 = vld [vmem:[#allocation4 + $0x1e0] sm:$0xff]
        %5339 = vmatpush.msra.mxu0 %v5338
        %5340 = vmatpush.msra.mxu0 %v5337
        %5341 = vmatpush.msra.mxu0 %v5336
        %5342 = vmatpush.msra.mxu0 %v5335
        %5343 = vmatpush.msra.mxu0 %v5334
        %5344 = vmatpush.msra.mxu0 %v5333
        %5345 = vmatpush.msra.mxu0 %v5332
        %5346 = vmatpush.msra.mxu0 %v5331
        %5347 = vmatpush.msra.mxu0 %v5330
        %5348 = vmatpush.msra.mxu0 %v5329
        %5349 = vmatpush.msra.mxu0 %v5328
        %5350 = vmatpush.msra.mxu0 %v5327
        %5351 = vmatpush.msra.mxu0 %v5326
        %5352 = vmatpush.msra.mxu0 %v5325
        %5353 = vmatpush.msra.mxu0 %v5324
        %5354 = vmatpush.msra.mxu0 %v5323
        %5355 = vmatmul.f32.gmra.mxu0 %v5291
        %v5356 = vpop.f32.mrf.mxu0
        %v5357 = vadd.f32 0.0, %v5356
        %5358 = vmatmul.f32.gmra.mxu0 %v5292
        %v5359 = vpop.f32.mrf.mxu0
        %v5360 = vadd.f32 0.0, %v5359
        %5361 = vmatmul.f32.gmra.mxu0 %v5293
        %v5362 = vpop.f32.mrf.mxu0
        %v5363 = vadd.f32 0.0, %v5362
        %5364 = vmatmul.f32.gmra.mxu0 %v5294
        %v5365 = vpop.f32.mrf.mxu0
        %v5366 = vadd.f32 0.0, %v5365
        %5367 = vmatmul.f32.gmra.mxu0 %v5295
        %v5368 = vpop.f32.mrf.mxu0
        %v5369 = vadd.f32 0.0, %v5368
        %5370 = vmatmul.f32.gmra.mxu0 %v5296
        %v5371 = vpop.f32.mrf.mxu0
        %v5372 = vadd.f32 0.0, %v5371
        %5373 = vmatmul.f32.gmra.mxu0 %v5297
        %v5374 = vpop.f32.mrf.mxu0
        %v5375 = vadd.f32 0.0, %v5374
        %5376 = vmatmul.f32.gmra.mxu0 %v5298
        %v5377 = vpop.f32.mrf.mxu0
        %v5378 = vadd.f32 0.0, %v5377
        %5379 = vmatmul.f32.gmra.mxu0 %v5299
        %v5380 = vpop.f32.mrf.mxu0
        %v5381 = vadd.f32 0.0, %v5380
        %5382 = vmatmul.f32.gmra.mxu0 %v5300
        %v5383 = vpop.f32.mrf.mxu0
        %v5384 = vadd.f32 0.0, %v5383
        %5385 = vmatmul.f32.gmra.mxu0 %v5301
        %v5386 = vpop.f32.mrf.mxu0
        %v5387 = vadd.f32 0.0, %v5386
        %5388 = vmatmul.f32.gmra.mxu0 %v5302
        %v5389 = vpop.f32.mrf.mxu0
        %v5390 = vadd.f32 0.0, %v5389
        %5391 = vmatmul.f32.gmra.mxu0 %v5303
        %v5392 = vpop.f32.mrf.mxu0
        %v5393 = vadd.f32 0.0, %v5392
        %5394 = vmatmul.f32.gmra.mxu0 %v5304
        %v5395 = vpop.f32.mrf.mxu0
        %v5396 = vadd.f32 0.0, %v5395
        %5397 = vmatmul.f32.gmra.mxu0 %v5305
        %v5398 = vpop.f32.mrf.mxu0
        %v5399 = vadd.f32 0.0, %v5398
        %5400 = vmatmul.f32.gmra.mxu0 %v5306
        %v5401 = vpop.f32.mrf.mxu0
        %v5402 = vadd.f32 0.0, %v5401
        %5403 = vdwg.mxu0
        %5404 = vst [vmem:[#allocation5] sm:$0xff] %v5357
        %5405 = vst [vmem:[#allocation5 + $0x20] sm:$0xff] %v5360
        %5406 = vst [vmem:[#allocation5 + $0x40] sm:$0xff] %v5363
        %5407 = vst [vmem:[#allocation5 + $0x60] sm:$0xff] %v5366
        %5408 = vst [vmem:[#allocation5 + $0x80] sm:$0xff] %v5369
        %5409 = vst [vmem:[#allocation5 + $0xa0] sm:$0xff] %v5372
        %5410 = vst [vmem:[#allocation5 + $0xc0] sm:$0xff] %v5375
        %5411 = vst [vmem:[#allocation5 + $0xe0] sm:$0xff] %v5378
        %5412 = vst [vmem:[#allocation5 + $0x100] sm:$0xff] %v5381
        %5413 = vst [vmem:[#allocation5 + $0x120] sm:$0xff] %v5384
        %5414 = vst [vmem:[#allocation5 + $0x140] sm:$0xff] %v5387
        %5415 = vst [vmem:[#allocation5 + $0x160] sm:$0xff] %v5390
        %5416 = vst [vmem:[#allocation5 + $0x180] sm:$0xff] %v5393
        %5417 = vst [vmem:[#allocation5 + $0x1a0] sm:$0xff] %v5396
        %5418 = vst [vmem:[#allocation5 + $0x1c0] sm:$0xff] %v5399
        %5419 = vst [vmem:[#allocation5 + $0x1e0] sm:$0xff] %v5402
        %v5420 = vld [vmem:[#allocation2 + $0x8] sm:$0xff]
        %v5421 = vld [vmem:[#allocation2 + $0x28] sm:$0xff]
        %v5422 = vld [vmem:[#allocation2 + $0x48] sm:$0xff]
        %v5423 = vld [vmem:[#allocation2 + $0x68] sm:$0xff]
        %v5424 = vld [vmem:[#allocation2 + $0x88] sm:$0xff]
        %v5425 = vld [vmem:[#allocation2 + $0xa8] sm:$0xff]
        %v5426 = vld [vmem:[#allocation2 + $0xc8] sm:$0xff]
        %v5427 = vld [vmem:[#allocation2 + $0xe8] sm:$0xff]
        %v5428 = vld [vmem:[#allocation2 + $0x108] sm:$0xff]
        %v5429 = vld [vmem:[#allocation2 + $0x128] sm:$0xff]
        %v5430 = vld [vmem:[#allocation2 + $0x148] sm:$0xff]
        %v5431 = vld [vmem:[#allocation2 + $0x168] sm:$0xff]
        %v5432 = vld [vmem:[#allocation2 + $0x188] sm:$0xff]
        %v5433 = vld [vmem:[#allocation2 + $0x1a8] sm:$0xff]
        %v5434 = vld [vmem:[#allocation2 + $0x1c8] sm:$0xff]
        %v5435 = vld [vmem:[#allocation2 + $0x1e8] sm:$0xff]
        %v5436 = vld [vmem:[#allocation3 + $0x8] sm:$0xff]
        %v5437 = vld [vmem:[#allocation3 + $0x28] sm:$0xff]
        %v5438 = vld [vmem:[#allocation3 + $0x48] sm:$0xff]
        %v5439 = vld [vmem:[#allocation3 + $0x68] sm:$0xff]
        %v5440 = vld [vmem:[#allocation3 + $0x88] sm:$0xff]
        %v5441 = vld [vmem:[#allocation3 + $0xa8] sm:$0xff]
        %v5442 = vld [vmem:[#allocation3 + $0xc8] sm:$0xff]
        %v5443 = vld [vmem:[#allocation3 + $0xe8] sm:$0xff]
        %v5444 = vld [vmem:[#allocation3 + $0x108] sm:$0xff]
        %v5445 = vld [vmem:[#allocation3 + $0x128] sm:$0xff]
        %v5446 = vld [vmem:[#allocation3 + $0x148] sm:$0xff]
        %v5447 = vld [vmem:[#allocation3 + $0x168] sm:$0xff]
        %v5448 = vld [vmem:[#allocation3 + $0x188] sm:$0xff]
        %v5449 = vld [vmem:[#allocation3 + $0x1a8] sm:$0xff]
        %v5450 = vld [vmem:[#allocation3 + $0x1c8] sm:$0xff]
        %v5451 = vld [vmem:[#allocation3 + $0x1e8] sm:$0xff]
        %v5452 = vmul.f32 %v5420, %v4803
        %v5453 = vmul.f32 %v5421, %v4804
        %v5454 = vmul.f32 %v5422, %v4805
        %v5455 = vmul.f32 %v5423, %v4806
        %v5456 = vmul.f32 %v5424, %v4807
        %v5457 = vmul.f32 %v5425, %v4808
        %v5458 = vmul.f32 %v5426, %v4809
        %v5459 = vmul.f32 %v5427, %v4810
        %v5460 = vmul.f32 %v5428, %v4811
        %v5461 = vmul.f32 %v5429, %v4812
        %v5462 = vmul.f32 %v5430, %v4813
        %v5463 = vmul.f32 %v5431, %v4814
        %v5464 = vmul.f32 %v5432, %v4815
        %v5465 = vmul.f32 %v5433, %v4816
        %v5466 = vmul.f32 %v5434, %v4817
        %v5467 = vmul.f32 %v5435, %v4818
        %5468 = vrot.lane.b32.xlu0 %v5420, 64
        %v5469 = vpop.permute.xlu0 %5468
        %5470 = vrot.lane.b32.xlu0 %v5421, 64
        %v5471 = vpop.permute.xlu0 %5470
        %5472 = vrot.lane.b32.xlu0 %v5422, 64
        %v5473 = vpop.permute.xlu0 %5472
        %5474 = vrot.lane.b32.xlu0 %v5423, 64
        %v5475 = vpop.permute.xlu0 %5474
        %5476 = vrot.lane.b32.xlu0 %v5424, 64
        %v5477 = vpop.permute.xlu0 %5476
        %5478 = vrot.lane.b32.xlu0 %v5425, 64
        %v5479 = vpop.permute.xlu0 %5478
        %5480 = vrot.lane.b32.xlu0 %v5426, 64
        %v5481 = vpop.permute.xlu0 %5480
        %5482 = vrot.lane.b32.xlu0 %v5427, 64
        %v5483 = vpop.permute.xlu0 %5482
        %5484 = vrot.lane.b32.xlu0 %v5428, 64
        %v5485 = vpop.permute.xlu0 %5484
        %5486 = vrot.lane.b32.xlu0 %v5429, 64
        %v5487 = vpop.permute.xlu0 %5486
        %5488 = vrot.lane.b32.xlu0 %v5430, 64
        %v5489 = vpop.permute.xlu0 %5488
        %5490 = vrot.lane.b32.xlu0 %v5431, 64
        %v5491 = vpop.permute.xlu0 %5490
        %5492 = vrot.lane.b32.xlu0 %v5432, 64
        %v5493 = vpop.permute.xlu0 %5492
        %5494 = vrot.lane.b32.xlu0 %v5433, 64
        %v5495 = vpop.permute.xlu0 %5494
        %5496 = vrot.lane.b32.xlu0 %v5434, 64
        %v5497 = vpop.permute.xlu0 %5496
        %5498 = vrot.lane.b32.xlu0 %v5435, 64
        %v5499 = vpop.permute.xlu0 %5498
        %v5500 = vmul.f32 %v5469, %v4819
        %v5501 = vmul.f32 %v5471, %v4820
        %v5502 = vmul.f32 %v5473, %v4821
        %v5503 = vmul.f32 %v5475, %v4822
        %v5504 = vmul.f32 %v5477, %v4823
        %v5505 = vmul.f32 %v5479, %v4824
        %v5506 = vmul.f32 %v5481, %v4825
        %v5507 = vmul.f32 %v5483, %v4826
        %v5508 = vmul.f32 %v5485, %v4827
        %v5509 = vmul.f32 %v5487, %v4828
        %v5510 = vmul.f32 %v5489, %v4829
        %v5511 = vmul.f32 %v5491, %v4830
        %v5512 = vmul.f32 %v5493, %v4831
        %v5513 = vmul.f32 %v5495, %v4832
        %v5514 = vmul.f32 %v5497, %v4833
        %v5515 = vmul.f32 %v5499, %v4834
        %v5516 = vadd.f32 %v5452, %v5500
        %v5517 = vadd.f32 %v5453, %v5501
        %v5518 = vadd.f32 %v5454, %v5502
        %v5519 = vadd.f32 %v5455, %v5503
        %v5520 = vadd.f32 %v5456, %v5504
        %v5521 = vadd.f32 %v5457, %v5505
        %v5522 = vadd.f32 %v5458, %v5506
        %v5523 = vadd.f32 %v5459, %v5507
        %v5524 = vadd.f32 %v5460, %v5508
        %v5525 = vadd.f32 %v5461, %v5509
        %v5526 = vadd.f32 %v5462, %v5510
        %v5527 = vadd.f32 %v5463, %v5511
        %v5528 = vadd.f32 %v5464, %v5512
        %v5529 = vadd.f32 %v5465, %v5513
        %v5530 = vadd.f32 %v5466, %v5514
        %v5531 = vadd.f32 %v5467, %v5515
        %v5532 = vmul.f32 %v5516, 0.088388346
        %v5533 = vmul.f32 %v5517, 0.088388346
        %v5534 = vmul.f32 %v5518, 0.088388346
        %v5535 = vmul.f32 %v5519, 0.088388346
        %v5536 = vmul.f32 %v5520, 0.088388346
        %v5537 = vmul.f32 %v5521, 0.088388346
        %v5538 = vmul.f32 %v5522, 0.088388346
        %v5539 = vmul.f32 %v5523, 0.088388346
        %v5540 = vmul.f32 %v5524, 0.088388346
        %v5541 = vmul.f32 %v5525, 0.088388346
        %v5542 = vmul.f32 %v5526, 0.088388346
        %v5543 = vmul.f32 %v5527, 0.088388346
        %v5544 = vmul.f32 %v5528, 0.088388346
        %v5545 = vmul.f32 %v5529, 0.088388346
        %v5546 = vmul.f32 %v5530, 0.088388346
        %v5547 = vmul.f32 %v5531, 0.088388346
        %v5548 = vmul.f32 %v5436, %v4803
        %v5549 = vmul.f32 %v5437, %v4804
        %v5550 = vmul.f32 %v5438, %v4805
        %v5551 = vmul.f32 %v5439, %v4806
        %v5552 = vmul.f32 %v5440, %v4807
        %v5553 = vmul.f32 %v5441, %v4808
        %v5554 = vmul.f32 %v5442, %v4809
        %v5555 = vmul.f32 %v5443, %v4810
        %v5556 = vmul.f32 %v5444, %v4811
        %v5557 = vmul.f32 %v5445, %v4812
        %v5558 = vmul.f32 %v5446, %v4813
        %v5559 = vmul.f32 %v5447, %v4814
        %v5560 = vmul.f32 %v5448, %v4815
        %v5561 = vmul.f32 %v5449, %v4816
        %v5562 = vmul.f32 %v5450, %v4817
        %v5563 = vmul.f32 %v5451, %v4818
        %5564 = vrot.lane.b32.xlu0 %v5436, 64
        %v5565 = vpop.permute.xlu0 %5564
        %5566 = vrot.lane.b32.xlu0 %v5437, 64
        %v5567 = vpop.permute.xlu0 %5566
        %5568 = vrot.lane.b32.xlu0 %v5438, 64
        %v5569 = vpop.permute.xlu0 %5568
        %5570 = vrot.lane.b32.xlu0 %v5439, 64
        %v5571 = vpop.permute.xlu0 %5570
        %5572 = vrot.lane.b32.xlu0 %v5440, 64
        %v5573 = vpop.permute.xlu0 %5572
        %5574 = vrot.lane.b32.xlu0 %v5441, 64
        %v5575 = vpop.permute.xlu0 %5574
        %5576 = vrot.lane.b32.xlu0 %v5442, 64
        %v5577 = vpop.permute.xlu0 %5576
        %5578 = vrot.lane.b32.xlu0 %v5443, 64
        %v5579 = vpop.permute.xlu0 %5578
        %5580 = vrot.lane.b32.xlu0 %v5444, 64
        %v5581 = vpop.permute.xlu0 %5580
        %5582 = vrot.lane.b32.xlu0 %v5445, 64
        %v5583 = vpop.permute.xlu0 %5582
        %5584 = vrot.lane.b32.xlu0 %v5446, 64
        %v5585 = vpop.permute.xlu0 %5584
        %5586 = vrot.lane.b32.xlu0 %v5447, 64
        %v5587 = vpop.permute.xlu0 %5586
        %5588 = vrot.lane.b32.xlu0 %v5448, 64
        %v5589 = vpop.permute.xlu0 %5588
        %5590 = vrot.lane.b32.xlu0 %v5449, 64
        %v5591 = vpop.permute.xlu0 %5590
        %5592 = vrot.lane.b32.xlu0 %v5450, 64
        %v5593 = vpop.permute.xlu0 %5592
        %5594 = vrot.lane.b32.xlu0 %v5451, 64
        %v5595 = vpop.permute.xlu0 %5594
        %v5596 = vmul.f32 %v5565, %v4819
        %v5597 = vmul.f32 %v5567, %v4820
        %v5598 = vmul.f32 %v5569, %v4821
        %v5599 = vmul.f32 %v5571, %v4822
        %v5600 = vmul.f32 %v5573, %v4823
        %v5601 = vmul.f32 %v5575, %v4824
        %v5602 = vmul.f32 %v5577, %v4825
        %v5603 = vmul.f32 %v5579, %v4826
        %v5604 = vmul.f32 %v5581, %v4827
        %v5605 = vmul.f32 %v5583, %v4828
        %v5606 = vmul.f32 %v5585, %v4829
        %v5607 = vmul.f32 %v5587, %v4830
        %v5608 = vmul.f32 %v5589, %v4831
        %v5609 = vmul.f32 %v5591, %v4832
        %v5610 = vmul.f32 %v5593, %v4833
        %v5611 = vmul.f32 %v5595, %v4834
        %v5612 = vadd.f32 %v5548, %v5596
        %v5613 = vadd.f32 %v5549, %v5597
        %v5614 = vadd.f32 %v5550, %v5598
        %v5615 = vadd.f32 %v5551, %v5599
        %v5616 = vadd.f32 %v5552, %v5600
        %v5617 = vadd.f32 %v5553, %v5601
        %v5618 = vadd.f32 %v5554, %v5602
        %v5619 = vadd.f32 %v5555, %v5603
        %v5620 = vadd.f32 %v5556, %v5604
        %v5621 = vadd.f32 %v5557, %v5605
        %v5622 = vadd.f32 %v5558, %v5606
        %v5623 = vadd.f32 %v5559, %v5607
        %v5624 = vadd.f32 %v5560, %v5608
        %v5625 = vadd.f32 %v5561, %v5609
        %v5626 = vadd.f32 %v5562, %v5610
        %v5627 = vadd.f32 %v5563, %v5611
        %5628 = vmatpush.xpose.msra.mxu0 %v5627
        %5629 = vmatpush.xpose.msra.mxu0 %v5626
        %5630 = vmatpush.xpose.msra.mxu0 %v5625
        %5631 = vmatpush.xpose.msra.mxu0 %v5624
        %5632 = vmatpush.xpose.msra.mxu0 %v5623
        %5633 = vmatpush.xpose.msra.mxu0 %v5622
        %5634 = vmatpush.xpose.msra.mxu0 %v5621
        %5635 = vmatpush.xpose.msra.mxu0 %v5620
        %5636 = vmatpush.xpose.msra.mxu0 %v5619
        %5637 = vmatpush.xpose.msra.mxu0 %v5618
        %5638 = vmatpush.xpose.msra.mxu0 %v5617
        %5639 = vmatpush.xpose.msra.mxu0 %v5616
        %5640 = vmatpush.xpose.msra.mxu0 %v5615
        %5641 = vmatpush.xpose.msra.mxu0 %v5614
        %5642 = vmatpush.xpose.msra.mxu0 %v5613
        %5643 = vmatpush.xpose.msra.mxu0 %v5612
        %5644 = vmatmul.f32.gmra.mxu0 %v5532
        %v5645 = vpop.f32.mrf.mxu0
        %v5646 = vadd.f32 %v4874, %v5645
        %5647 = vmatmul.f32.gmra.mxu0 %v5533
        %v5648 = vpop.f32.mrf.mxu0
        %v5649 = vadd.f32 %v4875, %v5648
        %5650 = vmatmul.f32.gmra.mxu0 %v5534
        %v5651 = vpop.f32.mrf.mxu0
        %v5652 = vadd.f32 %v4876, %v5651
        %5653 = vmatmul.f32.gmra.mxu0 %v5535
        %v5654 = vpop.f32.mrf.mxu0
        %v5655 = vadd.f32 %v4877, %v5654
        %5656 = vmatmul.f32.gmra.mxu0 %v5536
        %v5657 = vpop.f32.mrf.mxu0
        %v5658 = vadd.f32 %v4878, %v5657
        %5659 = vmatmul.f32.gmra.mxu0 %v5537
        %v5660 = vpop.f32.mrf.mxu0
        %v5661 = vadd.f32 %v4879, %v5660
        %5662 = vmatmul.f32.gmra.mxu0 %v5538
        %v5663 = vpop.f32.mrf.mxu0
        %v5664 = vadd.f32 %v4880, %v5663
        %5665 = vmatmul.f32.gmra.mxu0 %v5539
        %v5666 = vpop.f32.mrf.mxu0
        %v5667 = vadd.f32 %v4881, %v5666
        %5668 = vmatmul.f32.gmra.mxu0 %v5540
        %v5669 = vpop.f32.mrf.mxu0
        %v5670 = vadd.f32 %v4882, %v5669
        %5671 = vmatmul.f32.gmra.mxu0 %v5541
        %v5672 = vpop.f32.mrf.mxu0
        %v5673 = vadd.f32 %v4883, %v5672
        %5674 = vmatmul.f32.gmra.mxu0 %v5542
        %v5675 = vpop.f32.mrf.mxu0
        %v5676 = vadd.f32 %v4884, %v5675
        %5677 = vmatmul.f32.gmra.mxu0 %v5543
        %v5678 = vpop.f32.mrf.mxu0
        %v5679 = vadd.f32 %v4885, %v5678
        %5680 = vmatmul.f32.gmra.mxu0 %v5544
        %v5681 = vpop.f32.mrf.mxu0
        %v5682 = vadd.f32 %v4886, %v5681
        %5683 = vmatmul.f32.gmra.mxu0 %v5545
        %v5684 = vpop.f32.mrf.mxu0
        %v5685 = vadd.f32 %v4887, %v5684
        %5686 = vmatmul.f32.gmra.mxu0 %v5546
        %v5687 = vpop.f32.mrf.mxu0
        %v5688 = vadd.f32 %v4888, %v5687
        %5689 = vmatmul.f32.gmra.mxu0 %v5547
        %v5690 = vpop.f32.mrf.mxu0
        %v5691 = vadd.f32 %v4889, %v5690
        %5692 = vdwg.mxu0
        %5693 = vmax.xlane.f32.xlu0 %v5646
        %v5694 = vpop.xlane.xlu0 %5693
        %5695 = vmax.xlane.f32.xlu0 %v5649
        %v5696 = vpop.xlane.xlu0 %5695
        %5697 = vmax.xlane.f32.xlu0 %v5652
        %v5698 = vpop.xlane.xlu0 %5697
        %5699 = vmax.xlane.f32.xlu0 %v5655
        %v5700 = vpop.xlane.xlu0 %5699
        %5701 = vmax.xlane.f32.xlu0 %v5658
        %v5702 = vpop.xlane.xlu0 %5701
        %5703 = vmax.xlane.f32.xlu0 %v5661
        %v5704 = vpop.xlane.xlu0 %5703
        %5705 = vmax.xlane.f32.xlu0 %v5664
        %v5706 = vpop.xlane.xlu0 %5705
        %5707 = vmax.xlane.f32.xlu0 %v5667
        %v5708 = vpop.xlane.xlu0 %5707
        %5709 = vmax.xlane.f32.xlu0 %v5670
        %v5710 = vpop.xlane.xlu0 %5709
        %5711 = vmax.xlane.f32.xlu0 %v5673
        %v5712 = vpop.xlane.xlu0 %5711
        %5713 = vmax.xlane.f32.xlu0 %v5676
        %v5714 = vpop.xlane.xlu0 %5713
        %5715 = vmax.xlane.f32.xlu0 %v5679
        %v5716 = vpop.xlane.xlu0 %5715
        %5717 = vmax.xlane.f32.xlu0 %v5682
        %v5718 = vpop.xlane.xlu0 %5717
        %5719 = vmax.xlane.f32.xlu0 %v5685
        %v5720 = vpop.xlane.xlu0 %5719
        %5721 = vmax.xlane.f32.xlu0 %v5688
        %v5722 = vpop.xlane.xlu0 %5721
        %5723 = vmax.xlane.f32.xlu0 %v5691
        %v5724 = vpop.xlane.xlu0 %5723
        %v5725 = vsub.f32 %v5646, %v5694
        %v5726 = vsub.f32 %v5649, %v5696
        %v5727 = vsub.f32 %v5652, %v5698
        %v5728 = vsub.f32 %v5655, %v5700
        %v5729 = vsub.f32 %v5658, %v5702
        %v5730 = vsub.f32 %v5661, %v5704
        %v5731 = vsub.f32 %v5664, %v5706
        %v5732 = vsub.f32 %v5667, %v5708
        %v5733 = vsub.f32 %v5670, %v5710
        %v5734 = vsub.f32 %v5673, %v5712
        %v5735 = vsub.f32 %v5676, %v5714
        %v5736 = vsub.f32 %v5679, %v5716
        %v5737 = vsub.f32 %v5682, %v5718
        %v5738 = vsub.f32 %v5685, %v5720
        %v5739 = vsub.f32 %v5688, %v5722
        %v5740 = vsub.f32 %v5691, %v5724
        %v5741 = vmul.f32 %v5725, 1.442695
        %v5742 = vpow.pop %v5741
        %v5743 = vmul.f32 %v5726, 1.442695
        %v5744 = vpow.pop %v5743
        %v5745 = vmul.f32 %v5727, 1.442695
        %v5746 = vpow.pop %v5745
        %v5747 = vmul.f32 %v5728, 1.442695
        %v5748 = vpow.pop %v5747
        %v5749 = vmul.f32 %v5729, 1.442695
        %v5750 = vpow.pop %v5749
        %v5751 = vmul.f32 %v5730, 1.442695
        %v5752 = vpow.pop %v5751
        %v5753 = vmul.f32 %v5731, 1.442695
        %v5754 = vpow.pop %v5753
        %v5755 = vmul.f32 %v5732, 1.442695
        %v5756 = vpow.pop %v5755
        %v5757 = vmul.f32 %v5733, 1.442695
        %v5758 = vpow.pop %v5757
        %v5759 = vmul.f32 %v5734, 1.442695
        %v5760 = vpow.pop %v5759
        %v5761 = vmul.f32 %v5735, 1.442695
        %v5762 = vpow.pop %v5761
        %v5763 = vmul.f32 %v5736, 1.442695
        %v5764 = vpow.pop %v5763
        %v5765 = vmul.f32 %v5737, 1.442695
        %v5766 = vpow.pop %v5765
        %v5767 = vmul.f32 %v5738, 1.442695
        %v5768 = vpow.pop %v5767
        %v5769 = vmul.f32 %v5739, 1.442695
        %v5770 = vpow.pop %v5769
        %v5771 = vmul.f32 %v5740, 1.442695
        %v5772 = vpow.pop %v5771
        %5773 = vadd.xlane.f32.xlu0 %v5742
        %v5774 = vpop.xlane.xlu0 %5773
        %5775 = vadd.xlane.f32.xlu0 %v5744
        %v5776 = vpop.xlane.xlu0 %5775
        %5777 = vadd.xlane.f32.xlu0 %v5746
        %v5778 = vpop.xlane.xlu0 %5777
        %5779 = vadd.xlane.f32.xlu0 %v5748
        %v5780 = vpop.xlane.xlu0 %5779
        %5781 = vadd.xlane.f32.xlu0 %v5750
        %v5782 = vpop.xlane.xlu0 %5781
        %5783 = vadd.xlane.f32.xlu0 %v5752
        %v5784 = vpop.xlane.xlu0 %5783
        %5785 = vadd.xlane.f32.xlu0 %v5754
        %v5786 = vpop.xlane.xlu0 %5785
        %5787 = vadd.xlane.f32.xlu0 %v5756
        %v5788 = vpop.xlane.xlu0 %5787
        %5789 = vadd.xlane.f32.xlu0 %v5758
        %v5790 = vpop.xlane.xlu0 %5789
        %5791 = vadd.xlane.f32.xlu0 %v5760
        %v5792 = vpop.xlane.xlu0 %5791
        %5793 = vadd.xlane.f32.xlu0 %v5762
        %v5794 = vpop.xlane.xlu0 %5793
        %5795 = vadd.xlane.f32.xlu0 %v5764
        %v5796 = vpop.xlane.xlu0 %5795
        %5797 = vadd.xlane.f32.xlu0 %v5766
        %v5798 = vpop.xlane.xlu0 %5797
        %5799 = vadd.xlane.f32.xlu0 %v5768
        %v5800 = vpop.xlane.xlu0 %5799
        %5801 = vadd.xlane.f32.xlu0 %v5770
        %v5802 = vpop.xlane.xlu0 %5801
        %5803 = vadd.xlane.f32.xlu0 %v5772
        %v5804 = vpop.xlane.xlu0 %5803
        %v5805 = vrcp.pop %v5774
        %v5806 = vrcp.pop %v5776
        %v5807 = vrcp.pop %v5778
        %v5808 = vrcp.pop %v5780
        %v5809 = vrcp.pop %v5782
        %v5810 = vrcp.pop %v5784
        %v5811 = vrcp.pop %v5786
        %v5812 = vrcp.pop %v5788
        %v5813 = vrcp.pop %v5790
        %v5814 = vrcp.pop %v5792
        %v5815 = vrcp.pop %v5794
        %v5816 = vrcp.pop %v5796
        %v5817 = vrcp.pop %v5798
        %v5818 = vrcp.pop %v5800
        %v5819 = vrcp.pop %v5802
        %v5820 = vrcp.pop %v5804
        %v5821 = vmul.f32 %v5742, %v5805
        %v5822 = vmul.f32 %v5744, %v5806
        %v5823 = vmul.f32 %v5746, %v5807
        %v5824 = vmul.f32 %v5748, %v5808
        %v5825 = vmul.f32 %v5750, %v5809
        %v5826 = vmul.f32 %v5752, %v5810
        %v5827 = vmul.f32 %v5754, %v5811
        %v5828 = vmul.f32 %v5756, %v5812
        %v5829 = vmul.f32 %v5758, %v5813
        %v5830 = vmul.f32 %v5760, %v5814
        %v5831 = vmul.f32 %v5762, %v5815
        %v5832 = vmul.f32 %v5764, %v5816
        %v5833 = vmul.f32 %v5766, %v5817
        %v5834 = vmul.f32 %v5768, %v5818
        %v5835 = vmul.f32 %v5770, %v5819
        %v5836 = vmul.f32 %v5772, %v5820
        %s5837 = scalar_lea.vmem %s625, 128 [#allocation24]
        %5838 = vst [vmem:[%s5837] sm:$0xff] %v5821
        %5839 = vst [vmem:[%s5837 + $0x8] sm:$0xff] %v5822
        %5840 = vst [vmem:[%s5837 + $0x10] sm:$0xff] %v5823
        %5841 = vst [vmem:[%s5837 + $0x18] sm:$0xff] %v5824
        %5842 = vst [vmem:[%s5837 + $0x20] sm:$0xff] %v5825
        %5843 = vst [vmem:[%s5837 + $0x28] sm:$0xff] %v5826
        %5844 = vst [vmem:[%s5837 + $0x30] sm:$0xff] %v5827
        %5845 = vst [vmem:[%s5837 + $0x38] sm:$0xff] %v5828
        %5846 = vst [vmem:[%s5837 + $0x40] sm:$0xff] %v5829
        %5847 = vst [vmem:[%s5837 + $0x48] sm:$0xff] %v5830
        %5848 = vst [vmem:[%s5837 + $0x50] sm:$0xff] %v5831
        %5849 = vst [vmem:[%s5837 + $0x58] sm:$0xff] %v5832
        %5850 = vst [vmem:[%s5837 + $0x60] sm:$0xff] %v5833
        %5851 = vst [vmem:[%s5837 + $0x68] sm:$0xff] %v5834
        %5852 = vst [vmem:[%s5837 + $0x70] sm:$0xff] %v5835
        %5853 = vst [vmem:[%s5837 + $0x78] sm:$0xff] %v5836
        %v5854 = vld [vmem:[#allocation4 + $0x8] sm:$0xff]
        %v5855 = vld [vmem:[#allocation4 + $0x28] sm:$0xff]
        %v5856 = vld [vmem:[#allocation4 + $0x48] sm:$0xff]
        %v5857 = vld [vmem:[#allocation4 + $0x68] sm:$0xff]
        %v5858 = vld [vmem:[#allocation4 + $0x88] sm:$0xff]
        %v5859 = vld [vmem:[#allocation4 + $0xa8] sm:$0xff]
        %v5860 = vld [vmem:[#allocation4 + $0xc8] sm:$0xff]
        %v5861 = vld [vmem:[#allocation4 + $0xe8] sm:$0xff]
        %v5862 = vld [vmem:[#allocation4 + $0x108] sm:$0xff]
        %v5863 = vld [vmem:[#allocation4 + $0x128] sm:$0xff]
        %v5864 = vld [vmem:[#allocation4 + $0x148] sm:$0xff]
        %v5865 = vld [vmem:[#allocation4 + $0x168] sm:$0xff]
        %v5866 = vld [vmem:[#allocation4 + $0x188] sm:$0xff]
        %v5867 = vld [vmem:[#allocation4 + $0x1a8] sm:$0xff]
        %v5868 = vld [vmem:[#allocation4 + $0x1c8] sm:$0xff]
        %v5869 = vld [vmem:[#allocation4 + $0x1e8] sm:$0xff]
        %5870 = vmatpush.msra.mxu0 %v5869
        %5871 = vmatpush.msra.mxu0 %v5868
        %5872 = vmatpush.msra.mxu0 %v5867
        %5873 = vmatpush.msra.mxu0 %v5866
        %5874 = vmatpush.msra.mxu0 %v5865
        %5875 = vmatpush.msra.mxu0 %v5864
        %5876 = vmatpush.msra.mxu0 %v5863
        %5877 = vmatpush.msra.mxu0 %v5862
        %5878 = vmatpush.msra.mxu0 %v5861
        %5879 = vmatpush.msra.mxu0 %v5860
        %5880 = vmatpush.msra.mxu0 %v5859
        %5881 = vmatpush.msra.mxu0 %v5858
        %5882 = vmatpush.msra.mxu0 %v5857
        %5883 = vmatpush.msra.mxu0 %v5856
        %5884 = vmatpush.msra.mxu0 %v5855
        %5885 = vmatpush.msra.mxu0 %v5854
        %5886 = vmatmul.f32.gmra.mxu0 %v5821
        %v5887 = vpop.f32.mrf.mxu0
        %v5888 = vadd.f32 0.0, %v5887
        %5889 = vmatmul.f32.gmra.mxu0 %v5822
        %v5890 = vpop.f32.mrf.mxu0
        %v5891 = vadd.f32 0.0, %v5890
        %5892 = vmatmul.f32.gmra.mxu0 %v5823
        %v5893 = vpop.f32.mrf.mxu0
        %v5894 = vadd.f32 0.0, %v5893
        %5895 = vmatmul.f32.gmra.mxu0 %v5824
        %v5896 = vpop.f32.mrf.mxu0
        %v5897 = vadd.f32 0.0, %v5896
        %5898 = vmatmul.f32.gmra.mxu0 %v5825
        %v5899 = vpop.f32.mrf.mxu0
        %v5900 = vadd.f32 0.0, %v5899
        %5901 = vmatmul.f32.gmra.mxu0 %v5826
        %v5902 = vpop.f32.mrf.mxu0
        %v5903 = vadd.f32 0.0, %v5902
        %5904 = vmatmul.f32.gmra.mxu0 %v5827
        %v5905 = vpop.f32.mrf.mxu0
        %v5906 = vadd.f32 0.0, %v5905
        %5907 = vmatmul.f32.gmra.mxu0 %v5828
        %v5908 = vpop.f32.mrf.mxu0
        %v5909 = vadd.f32 0.0, %v5908
        %5910 = vmatmul.f32.gmra.mxu0 %v5829
        %v5911 = vpop.f32.mrf.mxu0
        %v5912 = vadd.f32 0.0, %v5911
        %5913 = vmatmul.f32.gmra.mxu0 %v5830
        %v5914 = vpop.f32.mrf.mxu0
        %v5915 = vadd.f32 0.0, %v5914
        %5916 = vmatmul.f32.gmra.mxu0 %v5831
        %v5917 = vpop.f32.mrf.mxu0
        %v5918 = vadd.f32 0.0, %v5917
        %5919 = vmatmul.f32.gmra.mxu0 %v5832
        %v5920 = vpop.f32.mrf.mxu0
        %v5921 = vadd.f32 0.0, %v5920
        %5922 = vmatmul.f32.gmra.mxu0 %v5833
        %v5923 = vpop.f32.mrf.mxu0
        %v5924 = vadd.f32 0.0, %v5923
        %5925 = vmatmul.f32.gmra.mxu0 %v5834
        %v5926 = vpop.f32.mrf.mxu0
        %v5927 = vadd.f32 0.0, %v5926
        %5928 = vmatmul.f32.gmra.mxu0 %v5835
        %v5929 = vpop.f32.mrf.mxu0
        %v5930 = vadd.f32 0.0, %v5929
        %5931 = vmatmul.f32.gmra.mxu0 %v5836
        %v5932 = vpop.f32.mrf.mxu0
        %v5933 = vadd.f32 0.0, %v5932
        %5934 = vdwg.mxu0
        %5935 = vst [vmem:[#allocation5 + $0x8] sm:$0xff] %v5888
        %5936 = vst [vmem:[#allocation5 + $0x28] sm:$0xff] %v5891
        %5937 = vst [vmem:[#allocation5 + $0x48] sm:$0xff] %v5894
        %5938 = vst [vmem:[#allocation5 + $0x68] sm:$0xff] %v5897
        %5939 = vst [vmem:[#allocation5 + $0x88] sm:$0xff] %v5900
        %5940 = vst [vmem:[#allocation5 + $0xa8] sm:$0xff] %v5903
        %5941 = vst [vmem:[#allocation5 + $0xc8] sm:$0xff] %v5906
        %5942 = vst [vmem:[#allocation5 + $0xe8] sm:$0xff] %v5909
        %5943 = vst [vmem:[#allocation5 + $0x108] sm:$0xff] %v5912
        %5944 = vst [vmem:[#allocation5 + $0x128] sm:$0xff] %v5915
        %5945 = vst [vmem:[#allocation5 + $0x148] sm:$0xff] %v5918
        %5946 = vst [vmem:[#allocation5 + $0x168] sm:$0xff] %v5921
        %5947 = vst [vmem:[#allocation5 + $0x188] sm:$0xff] %v5924
        %5948 = vst [vmem:[#allocation5 + $0x1a8] sm:$0xff] %v5927
        %5949 = vst [vmem:[#allocation5 + $0x1c8] sm:$0xff] %v5930
        %5950 = vst [vmem:[#allocation5 + $0x1e8] sm:$0xff] %v5933
        %v5951 = vld [vmem:[#allocation2 + $0x10] sm:$0xff]
        %v5952 = vld [vmem:[#allocation2 + $0x30] sm:$0xff]
        %v5953 = vld [vmem:[#allocation2 + $0x50] sm:$0xff]
        %v5954 = vld [vmem:[#allocation2 + $0x70] sm:$0xff]
        %v5955 = vld [vmem:[#allocation2 + $0x90] sm:$0xff]
        %v5956 = vld [vmem:[#allocation2 + $0xb0] sm:$0xff]
        %v5957 = vld [vmem:[#allocation2 + $0xd0] sm:$0xff]
        %v5958 = vld [vmem:[#allocation2 + $0xf0] sm:$0xff]
        %v5959 = vld [vmem:[#allocation2 + $0x110] sm:$0xff]
        %v5960 = vld [vmem:[#allocation2 + $0x130] sm:$0xff]
        %v5961 = vld [vmem:[#allocation2 + $0x150] sm:$0xff]
        %v5962 = vld [vmem:[#allocation2 + $0x170] sm:$0xff]
        %v5963 = vld [vmem:[#allocation2 + $0x190] sm:$0xff]
        %v5964 = vld [vmem:[#allocation2 + $0x1b0] sm:$0xff]
        %v5965 = vld [vmem:[#allocation2 + $0x1d0] sm:$0xff]
        %v5966 = vld [vmem:[#allocation2 + $0x1f0] sm:$0xff]
        %v5967 = vld [vmem:[#allocation3 + $0x10] sm:$0xff]
        %v5968 = vld [vmem:[#allocation3 + $0x30] sm:$0xff]
        %v5969 = vld [vmem:[#allocation3 + $0x50] sm:$0xff]
        %v5970 = vld [vmem:[#allocation3 + $0x70] sm:$0xff]
        %v5971 = vld [vmem:[#allocation3 + $0x90] sm:$0xff]
        %v5972 = vld [vmem:[#allocation3 + $0xb0] sm:$0xff]
        %v5973 = vld [vmem:[#allocation3 + $0xd0] sm:$0xff]
        %v5974 = vld [vmem:[#allocation3 + $0xf0] sm:$0xff]
        %v5975 = vld [vmem:[#allocation3 + $0x110] sm:$0xff]
        %v5976 = vld [vmem:[#allocation3 + $0x130] sm:$0xff]
        %v5977 = vld [vmem:[#allocation3 + $0x150] sm:$0xff]
        %v5978 = vld [vmem:[#allocation3 + $0x170] sm:$0xff]
        %v5979 = vld [vmem:[#allocation3 + $0x190] sm:$0xff]
        %v5980 = vld [vmem:[#allocation3 + $0x1b0] sm:$0xff]
        %v5981 = vld [vmem:[#allocation3 + $0x1d0] sm:$0xff]
        %v5982 = vld [vmem:[#allocation3 + $0x1f0] sm:$0xff]
        %v5983 = vmul.f32 %v5951, %v4803
        %v5984 = vmul.f32 %v5952, %v4804
        %v5985 = vmul.f32 %v5953, %v4805
        %v5986 = vmul.f32 %v5954, %v4806
        %v5987 = vmul.f32 %v5955, %v4807
        %v5988 = vmul.f32 %v5956, %v4808
        %v5989 = vmul.f32 %v5957, %v4809
        %v5990 = vmul.f32 %v5958, %v4810
        %v5991 = vmul.f32 %v5959, %v4811
        %v5992 = vmul.f32 %v5960, %v4812
        %v5993 = vmul.f32 %v5961, %v4813
        %v5994 = vmul.f32 %v5962, %v4814
        %v5995 = vmul.f32 %v5963, %v4815
        %v5996 = vmul.f32 %v5964, %v4816
        %v5997 = vmul.f32 %v5965, %v4817
        %v5998 = vmul.f32 %v5966, %v4818
        %5999 = vrot.lane.b32.xlu0 %v5951, 64
        %v6000 = vpop.permute.xlu0 %5999
        %6001 = vrot.lane.b32.xlu0 %v5952, 64
        %v6002 = vpop.permute.xlu0 %6001
        %6003 = vrot.lane.b32.xlu0 %v5953, 64
        %v6004 = vpop.permute.xlu0 %6003
        %6005 = vrot.lane.b32.xlu0 %v5954, 64
        %v6006 = vpop.permute.xlu0 %6005
        %6007 = vrot.lane.b32.xlu0 %v5955, 64
        %v6008 = vpop.permute.xlu0 %6007
        %6009 = vrot.lane.b32.xlu0 %v5956, 64
        %v6010 = vpop.permute.xlu0 %6009
        %6011 = vrot.lane.b32.xlu0 %v5957, 64
        %v6012 = vpop.permute.xlu0 %6011
        %6013 = vrot.lane.b32.xlu0 %v5958, 64
        %v6014 = vpop.permute.xlu0 %6013
        %6015 = vrot.lane.b32.xlu0 %v5959, 64
        %v6016 = vpop.permute.xlu0 %6015
        %6017 = vrot.lane.b32.xlu0 %v5960, 64
        %v6018 = vpop.permute.xlu0 %6017
        %6019 = vrot.lane.b32.xlu0 %v5961, 64
        %v6020 = vpop.permute.xlu0 %6019
        %6021 = vrot.lane.b32.xlu0 %v5962, 64
        %v6022 = vpop.permute.xlu0 %6021
        %6023 = vrot.lane.b32.xlu0 %v5963, 64
        %v6024 = vpop.permute.xlu0 %6023
        %6025 = vrot.lane.b32.xlu0 %v5964, 64
        %v6026 = vpop.permute.xlu0 %6025
        %6027 = vrot.lane.b32.xlu0 %v5965, 64
        %v6028 = vpop.permute.xlu0 %6027
        %6029 = vrot.lane.b32.xlu0 %v5966, 64
        %v6030 = vpop.permute.xlu0 %6029
        %v6031 = vmul.f32 %v6000, %v4819
        %v6032 = vmul.f32 %v6002, %v4820
        %v6033 = vmul.f32 %v6004, %v4821
        %v6034 = vmul.f32 %v6006, %v4822
        %v6035 = vmul.f32 %v6008, %v4823
        %v6036 = vmul.f32 %v6010, %v4824
        %v6037 = vmul.f32 %v6012, %v4825
        %v6038 = vmul.f32 %v6014, %v4826
        %v6039 = vmul.f32 %v6016, %v4827
        %v6040 = vmul.f32 %v6018, %v4828
        %v6041 = vmul.f32 %v6020, %v4829
        %v6042 = vmul.f32 %v6022, %v4830
        %v6043 = vmul.f32 %v6024, %v4831
        %v6044 = vmul.f32 %v6026, %v4832
        %v6045 = vmul.f32 %v6028, %v4833
        %v6046 = vmul.f32 %v6030, %v4834
        %v6047 = vadd.f32 %v5983, %v6031
        %v6048 = vadd.f32 %v5984, %v6032
        %v6049 = vadd.f32 %v5985, %v6033
        %v6050 = vadd.f32 %v5986, %v6034
        %v6051 = vadd.f32 %v5987, %v6035
        %v6052 = vadd.f32 %v5988, %v6036
        %v6053 = vadd.f32 %v5989, %v6037
        %v6054 = vadd.f32 %v5990, %v6038
        %v6055 = vadd.f32 %v5991, %v6039
        %v6056 = vadd.f32 %v5992, %v6040
        %v6057 = vadd.f32 %v5993, %v6041
        %v6058 = vadd.f32 %v5994, %v6042
        %v6059 = vadd.f32 %v5995, %v6043
        %v6060 = vadd.f32 %v5996, %v6044
        %v6061 = vadd.f32 %v5997, %v6045
        %v6062 = vadd.f32 %v5998, %v6046
        %v6063 = vmul.f32 %v6047, 0.088388346
        %v6064 = vmul.f32 %v6048, 0.088388346
        %v6065 = vmul.f32 %v6049, 0.088388346
        %v6066 = vmul.f32 %v6050, 0.088388346
        %v6067 = vmul.f32 %v6051, 0.088388346
        %v6068 = vmul.f32 %v6052, 0.088388346
        %v6069 = vmul.f32 %v6053, 0.088388346
        %v6070 = vmul.f32 %v6054, 0.088388346
        %v6071 = vmul.f32 %v6055, 0.088388346
        %v6072 = vmul.f32 %v6056, 0.088388346
        %v6073 = vmul.f32 %v6057, 0.088388346
        %v6074 = vmul.f32 %v6058, 0.088388346
        %v6075 = vmul.f32 %v6059, 0.088388346
        %v6076 = vmul.f32 %v6060, 0.088388346
        %v6077 = vmul.f32 %v6061, 0.088388346
        %v6078 = vmul.f32 %v6062, 0.088388346
        %v6079 = vmul.f32 %v5967, %v4803
        %v6080 = vmul.f32 %v5968, %v4804
        %v6081 = vmul.f32 %v5969, %v4805
        %v6082 = vmul.f32 %v5970, %v4806
        %v6083 = vmul.f32 %v5971, %v4807
        %v6084 = vmul.f32 %v5972, %v4808
        %v6085 = vmul.f32 %v5973, %v4809
        %v6086 = vmul.f32 %v5974, %v4810
        %v6087 = vmul.f32 %v5975, %v4811
        %v6088 = vmul.f32 %v5976, %v4812
        %v6089 = vmul.f32 %v5977, %v4813
        %v6090 = vmul.f32 %v5978, %v4814
        %v6091 = vmul.f32 %v5979, %v4815
        %v6092 = vmul.f32 %v5980, %v4816
        %v6093 = vmul.f32 %v5981, %v4817
        %v6094 = vmul.f32 %v5982, %v4818
        %6095 = vrot.lane.b32.xlu0 %v5967, 64
        %v6096 = vpop.permute.xlu0 %6095
        %6097 = vrot.lane.b32.xlu0 %v5968, 64
        %v6098 = vpop.permute.xlu0 %6097
        %6099 = vrot.lane.b32.xlu0 %v5969, 64
        %v6100 = vpop.permute.xlu0 %6099
        %6101 = vrot.lane.b32.xlu0 %v5970, 64
        %v6102 = vpop.permute.xlu0 %6101
        %6103 = vrot.lane.b32.xlu0 %v5971, 64
        %v6104 = vpop.permute.xlu0 %6103
        %6105 = vrot.lane.b32.xlu0 %v5972, 64
        %v6106 = vpop.permute.xlu0 %6105
        %6107 = vrot.lane.b32.xlu0 %v5973, 64
        %v6108 = vpop.permute.xlu0 %6107
        %6109 = vrot.lane.b32.xlu0 %v5974, 64
        %v6110 = vpop.permute.xlu0 %6109
        %6111 = vrot.lane.b32.xlu0 %v5975, 64
        %v6112 = vpop.permute.xlu0 %6111
        %6113 = vrot.lane.b32.xlu0 %v5976, 64
        %v6114 = vpop.permute.xlu0 %6113
        %6115 = vrot.lane.b32.xlu0 %v5977, 64
        %v6116 = vpop.permute.xlu0 %6115
        %6117 = vrot.lane.b32.xlu0 %v5978, 64
        %v6118 = vpop.permute.xlu0 %6117
        %6119 = vrot.lane.b32.xlu0 %v5979, 64
        %v6120 = vpop.permute.xlu0 %6119
        %6121 = vrot.lane.b32.xlu0 %v5980, 64
        %v6122 = vpop.permute.xlu0 %6121
        %6123 = vrot.lane.b32.xlu0 %v5981, 64
        %v6124 = vpop.permute.xlu0 %6123
        %6125 = vrot.lane.b32.xlu0 %v5982, 64
        %v6126 = vpop.permute.xlu0 %6125
        %v6127 = vmul.f32 %v6096, %v4819
        %v6128 = vmul.f32 %v6098, %v4820
        %v6129 = vmul.f32 %v6100, %v4821
        %v6130 = vmul.f32 %v6102, %v4822
        %v6131 = vmul.f32 %v6104, %v4823
        %v6132 = vmul.f32 %v6106, %v4824
        %v6133 = vmul.f32 %v6108, %v4825
        %v6134 = vmul.f32 %v6110, %v4826
        %v6135 = vmul.f32 %v6112, %v4827
        %v6136 = vmul.f32 %v6114, %v4828
        %v6137 = vmul.f32 %v6116, %v4829
        %v6138 = vmul.f32 %v6118, %v4830
        %v6139 = vmul.f32 %v6120, %v4831
        %v6140 = vmul.f32 %v6122, %v4832
        %v6141 = vmul.f32 %v6124, %v4833
        %v6142 = vmul.f32 %v6126, %v4834
        %v6143 = vadd.f32 %v6079, %v6127
        %v6144 = vadd.f32 %v6080, %v6128
        %v6145 = vadd.f32 %v6081, %v6129
        %v6146 = vadd.f32 %v6082, %v6130
        %v6147 = vadd.f32 %v6083, %v6131
        %v6148 = vadd.f32 %v6084, %v6132
        %v6149 = vadd.f32 %v6085, %v6133
        %v6150 = vadd.f32 %v6086, %v6134
        %v6151 = vadd.f32 %v6087, %v6135
        %v6152 = vadd.f32 %v6088, %v6136
        %v6153 = vadd.f32 %v6089, %v6137
        %v6154 = vadd.f32 %v6090, %v6138
        %v6155 = vadd.f32 %v6091, %v6139
        %v6156 = vadd.f32 %v6092, %v6140
        %v6157 = vadd.f32 %v6093, %v6141
        %v6158 = vadd.f32 %v6094, %v6142
        %6159 = vmatpush.xpose.msra.mxu0 %v6158
        %6160 = vmatpush.xpose.msra.mxu0 %v6157
        %6161 = vmatpush.xpose.msra.mxu0 %v6156
        %6162 = vmatpush.xpose.msra.mxu0 %v6155
        %6163 = vmatpush.xpose.msra.mxu0 %v6154
        %6164 = vmatpush.xpose.msra.mxu0 %v6153
        %6165 = vmatpush.xpose.msra.mxu0 %v6152
        %6166 = vmatpush.xpose.msra.mxu0 %v6151
        %6167 = vmatpush.xpose.msra.mxu0 %v6150
        %6168 = vmatpush.xpose.msra.mxu0 %v6149
        %6169 = vmatpush.xpose.msra.mxu0 %v6148
        %6170 = vmatpush.xpose.msra.mxu0 %v6147
        %6171 = vmatpush.xpose.msra.mxu0 %v6146
        %6172 = vmatpush.xpose.msra.mxu0 %v6145
        %6173 = vmatpush.xpose.msra.mxu0 %v6144
        %6174 = vmatpush.xpose.msra.mxu0 %v6143
        %6175 = vmatmul.f32.gmra.mxu0 %v6063
        %v6176 = vpop.f32.mrf.mxu0
        %v6177 = vadd.f32 %v4874, %v6176
        %6178 = vmatmul.f32.gmra.mxu0 %v6064
        %v6179 = vpop.f32.mrf.mxu0
        %v6180 = vadd.f32 %v4875, %v6179
        %6181 = vmatmul.f32.gmra.mxu0 %v6065
        %v6182 = vpop.f32.mrf.mxu0
        %v6183 = vadd.f32 %v4876, %v6182
        %6184 = vmatmul.f32.gmra.mxu0 %v6066
        %v6185 = vpop.f32.mrf.mxu0
        %v6186 = vadd.f32 %v4877, %v6185
        %6187 = vmatmul.f32.gmra.mxu0 %v6067
        %v6188 = vpop.f32.mrf.mxu0
        %v6189 = vadd.f32 %v4878, %v6188
        %6190 = vmatmul.f32.gmra.mxu0 %v6068
        %v6191 = vpop.f32.mrf.mxu0
        %v6192 = vadd.f32 %v4879, %v6191
        %6193 = vmatmul.f32.gmra.mxu0 %v6069
        %v6194 = vpop.f32.mrf.mxu0
        %v6195 = vadd.f32 %v4880, %v6194
        %6196 = vmatmul.f32.gmra.mxu0 %v6070
        %v6197 = vpop.f32.mrf.mxu0
        %v6198 = vadd.f32 %v4881, %v6197
        %6199 = vmatmul.f32.gmra.mxu0 %v6071
        %v6200 = vpop.f32.mrf.mxu0
        %v6201 = vadd.f32 %v4882, %v6200
        %6202 = vmatmul.f32.gmra.mxu0 %v6072
        %v6203 = vpop.f32.mrf.mxu0
        %v6204 = vadd.f32 %v4883, %v6203
        %6205 = vmatmul.f32.gmra.mxu0 %v6073
        %v6206 = vpop.f32.mrf.mxu0
        %v6207 = vadd.f32 %v4884, %v6206
        %6208 = vmatmul.f32.gmra.mxu0 %v6074
        %v6209 = vpop.f32.mrf.mxu0
        %v6210 = vadd.f32 %v4885, %v6209
        %6211 = vmatmul.f32.gmra.mxu0 %v6075
        %v6212 = vpop.f32.mrf.mxu0
        %v6213 = vadd.f32 %v4886, %v6212
        %6214 = vmatmul.f32.gmra.mxu0 %v6076
        %v6215 = vpop.f32.mrf.mxu0
        %v6216 = vadd.f32 %v4887, %v6215
        %6217 = vmatmul.f32.gmra.mxu0 %v6077
        %v6218 = vpop.f32.mrf.mxu0
        %v6219 = vadd.f32 %v4888, %v6218
        %6220 = vmatmul.f32.gmra.mxu0 %v6078
        %v6221 = vpop.f32.mrf.mxu0
        %v6222 = vadd.f32 %v4889, %v6221
        %6223 = vdwg.mxu0
        %6224 = vmax.xlane.f32.xlu0 %v6177
        %v6225 = vpop.xlane.xlu0 %6224
        %6226 = vmax.xlane.f32.xlu0 %v6180
        %v6227 = vpop.xlane.xlu0 %6226
        %6228 = vmax.xlane.f32.xlu0 %v6183
        %v6229 = vpop.xlane.xlu0 %6228
        %6230 = vmax.xlane.f32.xlu0 %v6186
        %v6231 = vpop.xlane.xlu0 %6230
        %6232 = vmax.xlane.f32.xlu0 %v6189
        %v6233 = vpop.xlane.xlu0 %6232
        %6234 = vmax.xlane.f32.xlu0 %v6192
        %v6235 = vpop.xlane.xlu0 %6234
        %6236 = vmax.xlane.f32.xlu0 %v6195
        %v6237 = vpop.xlane.xlu0 %6236
        %6238 = vmax.xlane.f32.xlu0 %v6198
        %v6239 = vpop.xlane.xlu0 %6238
        %6240 = vmax.xlane.f32.xlu0 %v6201
        %v6241 = vpop.xlane.xlu0 %6240
        %6242 = vmax.xlane.f32.xlu0 %v6204
        %v6243 = vpop.xlane.xlu0 %6242
        %6244 = vmax.xlane.f32.xlu0 %v6207
        %v6245 = vpop.xlane.xlu0 %6244
        %6246 = vmax.xlane.f32.xlu0 %v6210
        %v6247 = vpop.xlane.xlu0 %6246
        %6248 = vmax.xlane.f32.xlu0 %v6213
        %v6249 = vpop.xlane.xlu0 %6248
        %6250 = vmax.xlane.f32.xlu0 %v6216
        %v6251 = vpop.xlane.xlu0 %6250
        %6252 = vmax.xlane.f32.xlu0 %v6219
        %v6253 = vpop.xlane.xlu0 %6252
        %6254 = vmax.xlane.f32.xlu0 %v6222
        %v6255 = vpop.xlane.xlu0 %6254
        %v6256 = vsub.f32 %v6177, %v6225
        %v6257 = vsub.f32 %v6180, %v6227
        %v6258 = vsub.f32 %v6183, %v6229
        %v6259 = vsub.f32 %v6186, %v6231
        %v6260 = vsub.f32 %v6189, %v6233
        %v6261 = vsub.f32 %v6192, %v6235
        %v6262 = vsub.f32 %v6195, %v6237
        %v6263 = vsub.f32 %v6198, %v6239
        %v6264 = vsub.f32 %v6201, %v6241
        %v6265 = vsub.f32 %v6204, %v6243
        %v6266 = vsub.f32 %v6207, %v6245
        %v6267 = vsub.f32 %v6210, %v6247
        %v6268 = vsub.f32 %v6213, %v6249
        %v6269 = vsub.f32 %v6216, %v6251
        %v6270 = vsub.f32 %v6219, %v6253
        %v6271 = vsub.f32 %v6222, %v6255
        %v6272 = vmul.f32 %v6256, 1.442695
        %v6273 = vpow.pop %v6272
        %v6274 = vmul.f32 %v6257, 1.442695
        %v6275 = vpow.pop %v6274
        %v6276 = vmul.f32 %v6258, 1.442695
        %v6277 = vpow.pop %v6276
        %v6278 = vmul.f32 %v6259, 1.442695
        %v6279 = vpow.pop %v6278
        %v6280 = vmul.f32 %v6260, 1.442695
        %v6281 = vpow.pop %v6280
        %v6282 = vmul.f32 %v6261, 1.442695
        %v6283 = vpow.pop %v6282
        %v6284 = vmul.f32 %v6262, 1.442695
        %v6285 = vpow.pop %v6284
        %v6286 = vmul.f32 %v6263, 1.442695
        %v6287 = vpow.pop %v6286
        %v6288 = vmul.f32 %v6264, 1.442695
        %v6289 = vpow.pop %v6288
        %v6290 = vmul.f32 %v6265, 1.442695
        %v6291 = vpow.pop %v6290
        %v6292 = vmul.f32 %v6266, 1.442695
        %v6293 = vpow.pop %v6292
        %v6294 = vmul.f32 %v6267, 1.442695
        %v6295 = vpow.pop %v6294
        %v6296 = vmul.f32 %v6268, 1.442695
        %v6297 = vpow.pop %v6296
        %v6298 = vmul.f32 %v6269, 1.442695
        %v6299 = vpow.pop %v6298
        %v6300 = vmul.f32 %v6270, 1.442695
        %v6301 = vpow.pop %v6300
        %v6302 = vmul.f32 %v6271, 1.442695
        %v6303 = vpow.pop %v6302
        %6304 = vadd.xlane.f32.xlu0 %v6273
        %v6305 = vpop.xlane.xlu0 %6304
        %6306 = vadd.xlane.f32.xlu0 %v6275
        %v6307 = vpop.xlane.xlu0 %6306
        %6308 = vadd.xlane.f32.xlu0 %v6277
        %v6309 = vpop.xlane.xlu0 %6308
        %6310 = vadd.xlane.f32.xlu0 %v6279
        %v6311 = vpop.xlane.xlu0 %6310
        %6312 = vadd.xlane.f32.xlu0 %v6281
        %v6313 = vpop.xlane.xlu0 %6312
        %6314 = vadd.xlane.f32.xlu0 %v6283
        %v6315 = vpop.xlane.xlu0 %6314
        %6316 = vadd.xlane.f32.xlu0 %v6285
        %v6317 = vpop.xlane.xlu0 %6316
        %6318 = vadd.xlane.f32.xlu0 %v6287
        %v6319 = vpop.xlane.xlu0 %6318
        %6320 = vadd.xlane.f32.xlu0 %v6289
        %v6321 = vpop.xlane.xlu0 %6320
        %6322 = vadd.xlane.f32.xlu0 %v6291
        %v6323 = vpop.xlane.xlu0 %6322
        %6324 = vadd.xlane.f32.xlu0 %v6293
        %v6325 = vpop.xlane.xlu0 %6324
        %6326 = vadd.xlane.f32.xlu0 %v6295
        %v6327 = vpop.xlane.xlu0 %6326
        %6328 = vadd.xlane.f32.xlu0 %v6297
        %v6329 = vpop.xlane.xlu0 %6328
        %6330 = vadd.xlane.f32.xlu0 %v6299
        %v6331 = vpop.xlane.xlu0 %6330
        %6332 = vadd.xlane.f32.xlu0 %v6301
        %v6333 = vpop.xlane.xlu0 %6332
        %6334 = vadd.xlane.f32.xlu0 %v6303
        %v6335 = vpop.xlane.xlu0 %6334
        %v6336 = vrcp.pop %v6305
        %v6337 = vrcp.pop %v6307
        %v6338 = vrcp.pop %v6309
        %v6339 = vrcp.pop %v6311
        %v6340 = vrcp.pop %v6313
        %v6341 = vrcp.pop %v6315
        %v6342 = vrcp.pop %v6317
        %v6343 = vrcp.pop %v6319
        %v6344 = vrcp.pop %v6321
        %v6345 = vrcp.pop %v6323
        %v6346 = vrcp.pop %v6325
        %v6347 = vrcp.pop %v6327
        %v6348 = vrcp.pop %v6329
        %v6349 = vrcp.pop %v6331
        %v6350 = vrcp.pop %v6333
        %v6351 = vrcp.pop %v6335
        %v6352 = vmul.f32 %v6273, %v6336
        %v6353 = vmul.f32 %v6275, %v6337
        %v6354 = vmul.f32 %v6277, %v6338
        %v6355 = vmul.f32 %v6279, %v6339
        %v6356 = vmul.f32 %v6281, %v6340
        %v6357 = vmul.f32 %v6283, %v6341
        %v6358 = vmul.f32 %v6285, %v6342
        %v6359 = vmul.f32 %v6287, %v6343
        %v6360 = vmul.f32 %v6289, %v6344
        %v6361 = vmul.f32 %v6291, %v6345
        %v6362 = vmul.f32 %v6293, %v6346
        %v6363 = vmul.f32 %v6295, %v6347
        %v6364 = vmul.f32 %v6297, %v6348
        %v6365 = vmul.f32 %v6299, %v6349
        %v6366 = vmul.f32 %v6301, %v6350
        %v6367 = vmul.f32 %v6303, %v6351
        %s6368 = scalar_lea.vmem %s625, 256 [#allocation24]
        %6369 = vst [vmem:[%s6368] sm:$0xff] %v6352
        %6370 = vst [vmem:[%s6368 + $0x8] sm:$0xff] %v6353
        %6371 = vst [vmem:[%s6368 + $0x10] sm:$0xff] %v6354
        %6372 = vst [vmem:[%s6368 + $0x18] sm:$0xff] %v6355
        %6373 = vst [vmem:[%s6368 + $0x20] sm:$0xff] %v6356
        %6374 = vst [vmem:[%s6368 + $0x28] sm:$0xff] %v6357
        %6375 = vst [vmem:[%s6368 + $0x30] sm:$0xff] %v6358
        %6376 = vst [vmem:[%s6368 + $0x38] sm:$0xff] %v6359
        %6377 = vst [vmem:[%s6368 + $0x40] sm:$0xff] %v6360
        %6378 = vst [vmem:[%s6368 + $0x48] sm:$0xff] %v6361
        %6379 = vst [vmem:[%s6368 + $0x50] sm:$0xff] %v6362
        %6380 = vst [vmem:[%s6368 + $0x58] sm:$0xff] %v6363
        %6381 = vst [vmem:[%s6368 + $0x60] sm:$0xff] %v6364
        %6382 = vst [vmem:[%s6368 + $0x68] sm:$0xff] %v6365
        %6383 = vst [vmem:[%s6368 + $0x70] sm:$0xff] %v6366
        %6384 = vst [vmem:[%s6368 + $0x78] sm:$0xff] %v6367
        %v6385 = vld [vmem:[#allocation4 + $0x10] sm:$0xff]
        %v6386 = vld [vmem:[#allocation4 + $0x30] sm:$0xff]
        %v6387 = vld [vmem:[#allocation4 + $0x50] sm:$0xff]
        %v6388 = vld [vmem:[#allocation4 + $0x70] sm:$0xff]
        %v6389 = vld [vmem:[#allocation4 + $0x90] sm:$0xff]
        %v6390 = vld [vmem:[#allocation4 + $0xb0] sm:$0xff]
        %v6391 = vld [vmem:[#allocation4 + $0xd0] sm:$0xff]
        %v6392 = vld [vmem:[#allocation4 + $0xf0] sm:$0xff]
        %v6393 = vld [vmem:[#allocation4 + $0x110] sm:$0xff]
        %v6394 = vld [vmem:[#allocation4 + $0x130] sm:$0xff]
        %v6395 = vld [vmem:[#allocation4 + $0x150] sm:$0xff]
        %v6396 = vld [vmem:[#allocation4 + $0x170] sm:$0xff]
        %v6397 = vld [vmem:[#allocation4 + $0x190] sm:$0xff]
        %v6398 = vld [vmem:[#allocation4 + $0x1b0] sm:$0xff]
        %v6399 = vld [vmem:[#allocation4 + $0x1d0] sm:$0xff]
        %v6400 = vld [vmem:[#allocation4 + $0x1f0] sm:$0xff]
        %6401 = vmatpush.msra.mxu0 %v6400
        %6402 = vmatpush.msra.mxu0 %v6399
        %6403 = vmatpush.msra.mxu0 %v6398
        %6404 = vmatpush.msra.mxu0 %v6397
        %6405 = vmatpush.msra.mxu0 %v6396
        %6406 = vmatpush.msra.mxu0 %v6395
        %6407 = vmatpush.msra.mxu0 %v6394
        %6408 = vmatpush.msra.mxu0 %v6393
        %6409 = vmatpush.msra.mxu0 %v6392
        %6410 = vmatpush.msra.mxu0 %v6391
        %6411 = vmatpush.msra.mxu0 %v6390
        %6412 = vmatpush.msra.mxu0 %v6389
        %6413 = vmatpush.msra.mxu0 %v6388
        %6414 = vmatpush.msra.mxu0 %v6387
        %6415 = vmatpush.msra.mxu0 %v6386
        %6416 = vmatpush.msra.mxu0 %v6385
        %6417 = vmatmul.f32.gmra.mxu0 %v6352
        %v6418 = vpop.f32.mrf.mxu0
        %v6419 = vadd.f32 0.0, %v6418
        %6420 = vmatmul.f32.gmra.mxu0 %v6353
        %v6421 = vpop.f32.mrf.mxu0
        %v6422 = vadd.f32 0.0, %v6421
        %6423 = vmatmul.f32.gmra.mxu0 %v6354
        %v6424 = vpop.f32.mrf.mxu0
        %v6425 = vadd.f32 0.0, %v6424
        %6426 = vmatmul.f32.gmra.mxu0 %v6355
        %v6427 = vpop.f32.mrf.mxu0
        %v6428 = vadd.f32 0.0, %v6427
        %6429 = vmatmul.f32.gmra.mxu0 %v6356
        %v6430 = vpop.f32.mrf.mxu0
        %v6431 = vadd.f32 0.0, %v6430
        %6432 = vmatmul.f32.gmra.mxu0 %v6357
        %v6433 = vpop.f32.mrf.mxu0
        %v6434 = vadd.f32 0.0, %v6433
        %6435 = vmatmul.f32.gmra.mxu0 %v6358
        %v6436 = vpop.f32.mrf.mxu0
        %v6437 = vadd.f32 0.0, %v6436
        %6438 = vmatmul.f32.gmra.mxu0 %v6359
        %v6439 = vpop.f32.mrf.mxu0
        %v6440 = vadd.f32 0.0, %v6439
        %6441 = vmatmul.f32.gmra.mxu0 %v6360
        %v6442 = vpop.f32.mrf.mxu0
        %v6443 = vadd.f32 0.0, %v6442
        %6444 = vmatmul.f32.gmra.mxu0 %v6361
        %v6445 = vpop.f32.mrf.mxu0
        %v6446 = vadd.f32 0.0, %v6445
        %6447 = vmatmul.f32.gmra.mxu0 %v6362
        %v6448 = vpop.f32.mrf.mxu0
        %v6449 = vadd.f32 0.0, %v6448
        %6450 = vmatmul.f32.gmra.mxu0 %v6363
        %v6451 = vpop.f32.mrf.mxu0
        %v6452 = vadd.f32 0.0, %v6451
        %6453 = vmatmul.f32.gmra.mxu0 %v6364
        %v6454 = vpop.f32.mrf.mxu0
        %v6455 = vadd.f32 0.0, %v6454
        %6456 = vmatmul.f32.gmra.mxu0 %v6365
        %v6457 = vpop.f32.mrf.mxu0
        %v6458 = vadd.f32 0.0, %v6457
        %6459 = vmatmul.f32.gmra.mxu0 %v6366
        %v6460 = vpop.f32.mrf.mxu0
        %v6461 = vadd.f32 0.0, %v6460
        %6462 = vmatmul.f32.gmra.mxu0 %v6367
        %v6463 = vpop.f32.mrf.mxu0
        %v6464 = vadd.f32 0.0, %v6463
        %6465 = vdwg.mxu0
        %6466 = vst [vmem:[#allocation5 + $0x10] sm:$0xff] %v6419
        %6467 = vst [vmem:[#allocation5 + $0x30] sm:$0xff] %v6422
        %6468 = vst [vmem:[#allocation5 + $0x50] sm:$0xff] %v6425
        %6469 = vst [vmem:[#allocation5 + $0x70] sm:$0xff] %v6428
        %6470 = vst [vmem:[#allocation5 + $0x90] sm:$0xff] %v6431
        %6471 = vst [vmem:[#allocation5 + $0xb0] sm:$0xff] %v6434
        %6472 = vst [vmem:[#allocation5 + $0xd0] sm:$0xff] %v6437
        %6473 = vst [vmem:[#allocation5 + $0xf0] sm:$0xff] %v6440
        %6474 = vst [vmem:[#allocation5 + $0x110] sm:$0xff] %v6443
        %6475 = vst [vmem:[#allocation5 + $0x130] sm:$0xff] %v6446
        %6476 = vst [vmem:[#allocation5 + $0x150] sm:$0xff] %v6449
        %6477 = vst [vmem:[#allocation5 + $0x170] sm:$0xff] %v6452
        %6478 = vst [vmem:[#allocation5 + $0x190] sm:$0xff] %v6455
        %6479 = vst [vmem:[#allocation5 + $0x1b0] sm:$0xff] %v6458
        %6480 = vst [vmem:[#allocation5 + $0x1d0] sm:$0xff] %v6461
        %6481 = vst [vmem:[#allocation5 + $0x1f0] sm:$0xff] %v6464
        %v6482 = vld [vmem:[#allocation2 + $0x18] sm:$0xff]
        %v6483 = vld [vmem:[#allocation2 + $0x38] sm:$0xff]
        %v6484 = vld [vmem:[#allocation2 + $0x58] sm:$0xff]
        %v6485 = vld [vmem:[#allocation2 + $0x78] sm:$0xff]
        %v6486 = vld [vmem:[#allocation2 + $0x98] sm:$0xff]
        %v6487 = vld [vmem:[#allocation2 + $0xb8] sm:$0xff]
        %v6488 = vld [vmem:[#allocation2 + $0xd8] sm:$0xff]
        %v6489 = vld [vmem:[#allocation2 + $0xf8] sm:$0xff]
        %v6490 = vld [vmem:[#allocation2 + $0x118] sm:$0xff]
        %v6491 = vld [vmem:[#allocation2 + $0x138] sm:$0xff]
        %v6492 = vld [vmem:[#allocation2 + $0x158] sm:$0xff]
        %v6493 = vld [vmem:[#allocation2 + $0x178] sm:$0xff]
        %v6494 = vld [vmem:[#allocation2 + $0x198] sm:$0xff]
        %v6495 = vld [vmem:[#allocation2 + $0x1b8] sm:$0xff]
        %v6496 = vld [vmem:[#allocation2 + $0x1d8] sm:$0xff]
        %v6497 = vld [vmem:[#allocation2 + $0x1f8] sm:$0xff]
        %v6498 = vld [vmem:[#allocation3 + $0x18] sm:$0xff]
        %v6499 = vld [vmem:[#allocation3 + $0x38] sm:$0xff]
        %v6500 = vld [vmem:[#allocation3 + $0x58] sm:$0xff]
        %v6501 = vld [vmem:[#allocation3 + $0x78] sm:$0xff]
        %v6502 = vld [vmem:[#allocation3 + $0x98] sm:$0xff]
        %v6503 = vld [vmem:[#allocation3 + $0xb8] sm:$0xff]
        %v6504 = vld [vmem:[#allocation3 + $0xd8] sm:$0xff]
        %v6505 = vld [vmem:[#allocation3 + $0xf8] sm:$0xff]
        %v6506 = vld [vmem:[#allocation3 + $0x118] sm:$0xff]
        %v6507 = vld [vmem:[#allocation3 + $0x138] sm:$0xff]
        %v6508 = vld [vmem:[#allocation3 + $0x158] sm:$0xff]
        %v6509 = vld [vmem:[#allocation3 + $0x178] sm:$0xff]
        %v6510 = vld [vmem:[#allocation3 + $0x198] sm:$0xff]
        %v6511 = vld [vmem:[#allocation3 + $0x1b8] sm:$0xff]
        %v6512 = vld [vmem:[#allocation3 + $0x1d8] sm:$0xff]
        %v6513 = vld [vmem:[#allocation3 + $0x1f8] sm:$0xff]
        %v6514 = vmul.f32 %v6482, %v4803
        %v6515 = vmul.f32 %v6483, %v4804
        %v6516 = vmul.f32 %v6484, %v4805
        %v6517 = vmul.f32 %v6485, %v4806
        %v6518 = vmul.f32 %v6486, %v4807
        %v6519 = vmul.f32 %v6487, %v4808
        %v6520 = vmul.f32 %v6488, %v4809
        %v6521 = vmul.f32 %v6489, %v4810
        %v6522 = vmul.f32 %v6490, %v4811
        %v6523 = vmul.f32 %v6491, %v4812
        %v6524 = vmul.f32 %v6492, %v4813
        %v6525 = vmul.f32 %v6493, %v4814
        %v6526 = vmul.f32 %v6494, %v4815
        %v6527 = vmul.f32 %v6495, %v4816
        %v6528 = vmul.f32 %v6496, %v4817
        %v6529 = vmul.f32 %v6497, %v4818
        %6530 = vrot.lane.b32.xlu0 %v6482, 64
        %v6531 = vpop.permute.xlu0 %6530
        %6532 = vrot.lane.b32.xlu0 %v6483, 64
        %v6533 = vpop.permute.xlu0 %6532
        %6534 = vrot.lane.b32.xlu0 %v6484, 64
        %v6535 = vpop.permute.xlu0 %6534
        %6536 = vrot.lane.b32.xlu0 %v6485, 64
        %v6537 = vpop.permute.xlu0 %6536
        %6538 = vrot.lane.b32.xlu0 %v6486, 64
        %v6539 = vpop.permute.xlu0 %6538
        %6540 = vrot.lane.b32.xlu0 %v6487, 64
        %v6541 = vpop.permute.xlu0 %6540
        %6542 = vrot.lane.b32.xlu0 %v6488, 64
        %v6543 = vpop.permute.xlu0 %6542
        %6544 = vrot.lane.b32.xlu0 %v6489, 64
        %v6545 = vpop.permute.xlu0 %6544
        %6546 = vrot.lane.b32.xlu0 %v6490, 64
        %v6547 = vpop.permute.xlu0 %6546
        %6548 = vrot.lane.b32.xlu0 %v6491, 64
        %v6549 = vpop.permute.xlu0 %6548
        %6550 = vrot.lane.b32.xlu0 %v6492, 64
        %v6551 = vpop.permute.xlu0 %6550
        %6552 = vrot.lane.b32.xlu0 %v6493, 64
        %v6553 = vpop.permute.xlu0 %6552
        %6554 = vrot.lane.b32.xlu0 %v6494, 64
        %v6555 = vpop.permute.xlu0 %6554
        %6556 = vrot.lane.b32.xlu0 %v6495, 64
        %v6557 = vpop.permute.xlu0 %6556
        %6558 = vrot.lane.b32.xlu0 %v6496, 64
        %v6559 = vpop.permute.xlu0 %6558
        %6560 = vrot.lane.b32.xlu0 %v6497, 64
        %v6561 = vpop.permute.xlu0 %6560
        %v6562 = vmul.f32 %v6531, %v4819
        %v6563 = vmul.f32 %v6533, %v4820
        %v6564 = vmul.f32 %v6535, %v4821
        %v6565 = vmul.f32 %v6537, %v4822
        %v6566 = vmul.f32 %v6539, %v4823
        %v6567 = vmul.f32 %v6541, %v4824
        %v6568 = vmul.f32 %v6543, %v4825
        %v6569 = vmul.f32 %v6545, %v4826
        %v6570 = vmul.f32 %v6547, %v4827
        %v6571 = vmul.f32 %v6549, %v4828
        %v6572 = vmul.f32 %v6551, %v4829
        %v6573 = vmul.f32 %v6553, %v4830
        %v6574 = vmul.f32 %v6555, %v4831
        %v6575 = vmul.f32 %v6557, %v4832
        %v6576 = vmul.f32 %v6559, %v4833
        %v6577 = vmul.f32 %v6561, %v4834
        %v6578 = vadd.f32 %v6514, %v6562
        %v6579 = vadd.f32 %v6515, %v6563
        %v6580 = vadd.f32 %v6516, %v6564
        %v6581 = vadd.f32 %v6517, %v6565
        %v6582 = vadd.f32 %v6518, %v6566
        %v6583 = vadd.f32 %v6519, %v6567
        %v6584 = vadd.f32 %v6520, %v6568
        %v6585 = vadd.f32 %v6521, %v6569
        %v6586 = vadd.f32 %v6522, %v6570
        %v6587 = vadd.f32 %v6523, %v6571
        %v6588 = vadd.f32 %v6524, %v6572
        %v6589 = vadd.f32 %v6525, %v6573
        %v6590 = vadd.f32 %v6526, %v6574
        %v6591 = vadd.f32 %v6527, %v6575
        %v6592 = vadd.f32 %v6528, %v6576
        %v6593 = vadd.f32 %v6529, %v6577
        %v6594 = vmul.f32 %v6578, 0.088388346
        %v6595 = vmul.f32 %v6579, 0.088388346
        %v6596 = vmul.f32 %v6580, 0.088388346
        %v6597 = vmul.f32 %v6581, 0.088388346
        %v6598 = vmul.f32 %v6582, 0.088388346
        %v6599 = vmul.f32 %v6583, 0.088388346
        %v6600 = vmul.f32 %v6584, 0.088388346
        %v6601 = vmul.f32 %v6585, 0.088388346
        %v6602 = vmul.f32 %v6586, 0.088388346
        %v6603 = vmul.f32 %v6587, 0.088388346
        %v6604 = vmul.f32 %v6588, 0.088388346
        %v6605 = vmul.f32 %v6589, 0.088388346
        %v6606 = vmul.f32 %v6590, 0.088388346
        %v6607 = vmul.f32 %v6591, 0.088388346
        %v6608 = vmul.f32 %v6592, 0.088388346
        %v6609 = vmul.f32 %v6593, 0.088388346
        %v6610 = vmul.f32 %v6498, %v4803
        %v6611 = vmul.f32 %v6499, %v4804
        %v6612 = vmul.f32 %v6500, %v4805
        %v6613 = vmul.f32 %v6501, %v4806
        %v6614 = vmul.f32 %v6502, %v4807
        %v6615 = vmul.f32 %v6503, %v4808
        %v6616 = vmul.f32 %v6504, %v4809
        %v6617 = vmul.f32 %v6505, %v4810
        %v6618 = vmul.f32 %v6506, %v4811
        %v6619 = vmul.f32 %v6507, %v4812
        %v6620 = vmul.f32 %v6508, %v4813
        %v6621 = vmul.f32 %v6509, %v4814
        %v6622 = vmul.f32 %v6510, %v4815
        %v6623 = vmul.f32 %v6511, %v4816
        %v6624 = vmul.f32 %v6512, %v4817
        %v6625 = vmul.f32 %v6513, %v4818
        %6626 = vrot.lane.b32.xlu0 %v6498, 64
        %v6627 = vpop.permute.xlu0 %6626
        %6628 = vrot.lane.b32.xlu0 %v6499, 64
        %v6629 = vpop.permute.xlu0 %6628
        %6630 = vrot.lane.b32.xlu0 %v6500, 64
        %v6631 = vpop.permute.xlu0 %6630
        %6632 = vrot.lane.b32.xlu0 %v6501, 64
        %v6633 = vpop.permute.xlu0 %6632
        %6634 = vrot.lane.b32.xlu0 %v6502, 64
        %v6635 = vpop.permute.xlu0 %6634
        %6636 = vrot.lane.b32.xlu0 %v6503, 64
        %v6637 = vpop.permute.xlu0 %6636
        %6638 = vrot.lane.b32.xlu0 %v6504, 64
        %v6639 = vpop.permute.xlu0 %6638
        %6640 = vrot.lane.b32.xlu0 %v6505, 64
        %v6641 = vpop.permute.xlu0 %6640
        %6642 = vrot.lane.b32.xlu0 %v6506, 64
        %v6643 = vpop.permute.xlu0 %6642
        %6644 = vrot.lane.b32.xlu0 %v6507, 64
        %v6645 = vpop.permute.xlu0 %6644
        %6646 = vrot.lane.b32.xlu0 %v6508, 64
        %v6647 = vpop.permute.xlu0 %6646
        %6648 = vrot.lane.b32.xlu0 %v6509, 64
        %v6649 = vpop.permute.xlu0 %6648
        %6650 = vrot.lane.b32.xlu0 %v6510, 64
        %v6651 = vpop.permute.xlu0 %6650
        %6652 = vrot.lane.b32.xlu0 %v6511, 64
        %v6653 = vpop.permute.xlu0 %6652
        %6654 = vrot.lane.b32.xlu0 %v6512, 64
        %v6655 = vpop.permute.xlu0 %6654
        %6656 = vrot.lane.b32.xlu0 %v6513, 64
        %v6657 = vpop.permute.xlu0 %6656
        %v6658 = vmul.f32 %v6627, %v4819
        %v6659 = vmul.f32 %v6629, %v4820
        %v6660 = vmul.f32 %v6631, %v4821
        %v6661 = vmul.f32 %v6633, %v4822
        %v6662 = vmul.f32 %v6635, %v4823
        %v6663 = vmul.f32 %v6637, %v4824
        %v6664 = vmul.f32 %v6639, %v4825
        %v6665 = vmul.f32 %v6641, %v4826
        %v6666 = vmul.f32 %v6643, %v4827
        %v6667 = vmul.f32 %v6645, %v4828
        %v6668 = vmul.f32 %v6647, %v4829
        %v6669 = vmul.f32 %v6649, %v4830
        %v6670 = vmul.f32 %v6651, %v4831
        %v6671 = vmul.f32 %v6653, %v4832
        %v6672 = vmul.f32 %v6655, %v4833
        %v6673 = vmul.f32 %v6657, %v4834
        %v6674 = vadd.f32 %v6610, %v6658
        %v6675 = vadd.f32 %v6611, %v6659
        %v6676 = vadd.f32 %v6612, %v6660
        %v6677 = vadd.f32 %v6613, %v6661
        %v6678 = vadd.f32 %v6614, %v6662
        %v6679 = vadd.f32 %v6615, %v6663
        %v6680 = vadd.f32 %v6616, %v6664
        %v6681 = vadd.f32 %v6617, %v6665
        %v6682 = vadd.f32 %v6618, %v6666
        %v6683 = vadd.f32 %v6619, %v6667
        %v6684 = vadd.f32 %v6620, %v6668
        %v6685 = vadd.f32 %v6621, %v6669
        %v6686 = vadd.f32 %v6622, %v6670
        %v6687 = vadd.f32 %v6623, %v6671
        %v6688 = vadd.f32 %v6624, %v6672
        %v6689 = vadd.f32 %v6625, %v6673
        %6690 = vmatpush.xpose.msra.mxu0 %v6689
        %6691 = vmatpush.xpose.msra.mxu0 %v6688
        %6692 = vmatpush.xpose.msra.mxu0 %v6687
        %6693 = vmatpush.xpose.msra.mxu0 %v6686
        %6694 = vmatpush.xpose.msra.mxu0 %v6685
        %6695 = vmatpush.xpose.msra.mxu0 %v6684
        %6696 = vmatpush.xpose.msra.mxu0 %v6683
        %6697 = vmatpush.xpose.msra.mxu0 %v6682
        %6698 = vmatpush.xpose.msra.mxu0 %v6681
        %6699 = vmatpush.xpose.msra.mxu0 %v6680
        %6700 = vmatpush.xpose.msra.mxu0 %v6679
        %6701 = vmatpush.xpose.msra.mxu0 %v6678
        %6702 = vmatpush.xpose.msra.mxu0 %v6677
        %6703 = vmatpush.xpose.msra.mxu0 %v6676
        %6704 = vmatpush.xpose.msra.mxu0 %v6675
        %6705 = vmatpush.xpose.msra.mxu0 %v6674
        %6706 = vmatmul.f32.gmra.mxu0 %v6594
        %v6707 = vpop.f32.mrf.mxu0
        %v6708 = vadd.f32 %v4874, %v6707
        %6709 = vmatmul.f32.gmra.mxu0 %v6595
        %v6710 = vpop.f32.mrf.mxu0
        %v6711 = vadd.f32 %v4875, %v6710
        %6712 = vmatmul.f32.gmra.mxu0 %v6596
        %v6713 = vpop.f32.mrf.mxu0
        %v6714 = vadd.f32 %v4876, %v6713
        %6715 = vmatmul.f32.gmra.mxu0 %v6597
        %v6716 = vpop.f32.mrf.mxu0
        %v6717 = vadd.f32 %v4877, %v6716
        %6718 = vmatmul.f32.gmra.mxu0 %v6598
        %v6719 = vpop.f32.mrf.mxu0
        %v6720 = vadd.f32 %v4878, %v6719
        %6721 = vmatmul.f32.gmra.mxu0 %v6599
        %v6722 = vpop.f32.mrf.mxu0
        %v6723 = vadd.f32 %v4879, %v6722
        %6724 = vmatmul.f32.gmra.mxu0 %v6600
        %v6725 = vpop.f32.mrf.mxu0
        %v6726 = vadd.f32 %v4880, %v6725
        %6727 = vmatmul.f32.gmra.mxu0 %v6601
        %v6728 = vpop.f32.mrf.mxu0
        %v6729 = vadd.f32 %v4881, %v6728
        %6730 = vmatmul.f32.gmra.mxu0 %v6602
        %v6731 = vpop.f32.mrf.mxu0
        %v6732 = vadd.f32 %v4882, %v6731
        %6733 = vmatmul.f32.gmra.mxu0 %v6603
        %v6734 = vpop.f32.mrf.mxu0
        %v6735 = vadd.f32 %v4883, %v6734
        %6736 = vmatmul.f32.gmra.mxu0 %v6604
        %v6737 = vpop.f32.mrf.mxu0
        %v6738 = vadd.f32 %v4884, %v6737
        %6739 = vmatmul.f32.gmra.mxu0 %v6605
        %v6740 = vpop.f32.mrf.mxu0
        %v6741 = vadd.f32 %v4885, %v6740
        %6742 = vmatmul.f32.gmra.mxu0 %v6606
        %v6743 = vpop.f32.mrf.mxu0
        %v6744 = vadd.f32 %v4886, %v6743
        %6745 = vmatmul.f32.gmra.mxu0 %v6607
        %v6746 = vpop.f32.mrf.mxu0
        %v6747 = vadd.f32 %v4887, %v6746
        %6748 = vmatmul.f32.gmra.mxu0 %v6608
        %v6749 = vpop.f32.mrf.mxu0
        %v6750 = vadd.f32 %v4888, %v6749
        %6751 = vmatmul.f32.gmra.mxu0 %v6609
        %v6752 = vpop.f32.mrf.mxu0
        %v6753 = vadd.f32 %v4889, %v6752
        %6754 = vdwg.mxu0
        %6755 = vmax.xlane.f32.xlu0 %v6708
        %v6756 = vpop.xlane.xlu0 %6755
        %6757 = vmax.xlane.f32.xlu0 %v6711
        %v6758 = vpop.xlane.xlu0 %6757
        %6759 = vmax.xlane.f32.xlu0 %v6714
        %v6760 = vpop.xlane.xlu0 %6759
        %6761 = vmax.xlane.f32.xlu0 %v6717
        %v6762 = vpop.xlane.xlu0 %6761
        %6763 = vmax.xlane.f32.xlu0 %v6720
        %v6764 = vpop.xlane.xlu0 %6763
        %6765 = vmax.xlane.f32.xlu0 %v6723
        %v6766 = vpop.xlane.xlu0 %6765
        %6767 = vmax.xlane.f32.xlu0 %v6726
        %v6768 = vpop.xlane.xlu0 %6767
        %6769 = vmax.xlane.f32.xlu0 %v6729
        %v6770 = vpop.xlane.xlu0 %6769
        %6771 = vmax.xlane.f32.xlu0 %v6732
        %v6772 = vpop.xlane.xlu0 %6771
        %6773 = vmax.xlane.f32.xlu0 %v6735
        %v6774 = vpop.xlane.xlu0 %6773
        %6775 = vmax.xlane.f32.xlu0 %v6738
        %v6776 = vpop.xlane.xlu0 %6775
        %6777 = vmax.xlane.f32.xlu0 %v6741
        %v6778 = vpop.xlane.xlu0 %6777
        %6779 = vmax.xlane.f32.xlu0 %v6744
        %v6780 = vpop.xlane.xlu0 %6779
        %6781 = vmax.xlane.f32.xlu0 %v6747
        %v6782 = vpop.xlane.xlu0 %6781
        %6783 = vmax.xlane.f32.xlu0 %v6750
        %v6784 = vpop.xlane.xlu0 %6783
        %6785 = vmax.xlane.f32.xlu0 %v6753
        %v6786 = vpop.xlane.xlu0 %6785
        %v6787 = vsub.f32 %v6708, %v6756
        %v6788 = vsub.f32 %v6711, %v6758
        %v6789 = vsub.f32 %v6714, %v6760
        %v6790 = vsub.f32 %v6717, %v6762
        %v6791 = vsub.f32 %v6720, %v6764
        %v6792 = vsub.f32 %v6723, %v6766
        %v6793 = vsub.f32 %v6726, %v6768
        %v6794 = vsub.f32 %v6729, %v6770
        %v6795 = vsub.f32 %v6732, %v6772
        %v6796 = vsub.f32 %v6735, %v6774
        %v6797 = vsub.f32 %v6738, %v6776
        %v6798 = vsub.f32 %v6741, %v6778
        %v6799 = vsub.f32 %v6744, %v6780
        %v6800 = vsub.f32 %v6747, %v6782
        %v6801 = vsub.f32 %v6750, %v6784
        %v6802 = vsub.f32 %v6753, %v6786
        %v6803 = vmul.f32 %v6787, 1.442695
        %v6804 = vpow.pop %v6803
        %v6805 = vmul.f32 %v6788, 1.442695
        %v6806 = vpow.pop %v6805
        %v6807 = vmul.f32 %v6789, 1.442695
        %v6808 = vpow.pop %v6807
        %v6809 = vmul.f32 %v6790, 1.442695
        %v6810 = vpow.pop %v6809
        %v6811 = vmul.f32 %v6791, 1.442695
        %v6812 = vpow.pop %v6811
        %v6813 = vmul.f32 %v6792, 1.442695
        %v6814 = vpow.pop %v6813
        %v6815 = vmul.f32 %v6793, 1.442695
        %v6816 = vpow.pop %v6815
        %v6817 = vmul.f32 %v6794, 1.442695
        %v6818 = vpow.pop %v6817
        %v6819 = vmul.f32 %v6795, 1.442695
        %v6820 = vpow.pop %v6819
        %v6821 = vmul.f32 %v6796, 1.442695
        %v6822 = vpow.pop %v6821
        %v6823 = vmul.f32 %v6797, 1.442695
        %v6824 = vpow.pop %v6823
        %v6825 = vmul.f32 %v6798, 1.442695
        %v6826 = vpow.pop %v6825
        %v6827 = vmul.f32 %v6799, 1.442695
        %v6828 = vpow.pop %v6827
        %v6829 = vmul.f32 %v6800, 1.442695
        %v6830 = vpow.pop %v6829
        %v6831 = vmul.f32 %v6801, 1.442695
        %v6832 = vpow.pop %v6831
        %v6833 = vmul.f32 %v6802, 1.442695
        %v6834 = vpow.pop %v6833
        %6835 = vadd.xlane.f32.xlu0 %v6804
        %v6836 = vpop.xlane.xlu0 %6835
        %6837 = vadd.xlane.f32.xlu0 %v6806
        %v6838 = vpop.xlane.xlu0 %6837
        %6839 = vadd.xlane.f32.xlu0 %v6808
        %v6840 = vpop.xlane.xlu0 %6839
        %6841 = vadd.xlane.f32.xlu0 %v6810
        %v6842 = vpop.xlane.xlu0 %6841
        %6843 = vadd.xlane.f32.xlu0 %v6812
        %v6844 = vpop.xlane.xlu0 %6843
        %6845 = vadd.xlane.f32.xlu0 %v6814
        %v6846 = vpop.xlane.xlu0 %6845
        %6847 = vadd.xlane.f32.xlu0 %v6816
        %v6848 = vpop.xlane.xlu0 %6847
        %6849 = vadd.xlane.f32.xlu0 %v6818
        %v6850 = vpop.xlane.xlu0 %6849
        %6851 = vadd.xlane.f32.xlu0 %v6820
        %v6852 = vpop.xlane.xlu0 %6851
        %6853 = vadd.xlane.f32.xlu0 %v6822
        %v6854 = vpop.xlane.xlu0 %6853
        %6855 = vadd.xlane.f32.xlu0 %v6824
        %v6856 = vpop.xlane.xlu0 %6855
        %6857 = vadd.xlane.f32.xlu0 %v6826
        %v6858 = vpop.xlane.xlu0 %6857
        %6859 = vadd.xlane.f32.xlu0 %v6828
        %v6860 = vpop.xlane.xlu0 %6859
        %6861 = vadd.xlane.f32.xlu0 %v6830
        %v6862 = vpop.xlane.xlu0 %6861
        %6863 = vadd.xlane.f32.xlu0 %v6832
        %v6864 = vpop.xlane.xlu0 %6863
        %6865 = vadd.xlane.f32.xlu0 %v6834
        %v6866 = vpop.xlane.xlu0 %6865
        %v6867 = vrcp.pop %v6836
        %v6868 = vrcp.pop %v6838
        %v6869 = vrcp.pop %v6840
        %v6870 = vrcp.pop %v6842
        %v6871 = vrcp.pop %v6844
        %v6872 = vrcp.pop %v6846
        %v6873 = vrcp.pop %v6848
        %v6874 = vrcp.pop %v6850
        %v6875 = vrcp.pop %v6852
        %v6876 = vrcp.pop %v6854
        %v6877 = vrcp.pop %v6856
        %v6878 = vrcp.pop %v6858
        %v6879 = vrcp.pop %v6860
        %v6880 = vrcp.pop %v6862
        %v6881 = vrcp.pop %v6864
        %v6882 = vrcp.pop %v6866
        %v6883 = vmul.f32 %v6804, %v6867
        %v6884 = vmul.f32 %v6806, %v6868
        %v6885 = vmul.f32 %v6808, %v6869
        %v6886 = vmul.f32 %v6810, %v6870
        %v6887 = vmul.f32 %v6812, %v6871
        %v6888 = vmul.f32 %v6814, %v6872
        %v6889 = vmul.f32 %v6816, %v6873
        %v6890 = vmul.f32 %v6818, %v6874
        %v6891 = vmul.f32 %v6820, %v6875
        %v6892 = vmul.f32 %v6822, %v6876
        %v6893 = vmul.f32 %v6824, %v6877
        %v6894 = vmul.f32 %v6826, %v6878
        %v6895 = vmul.f32 %v6828, %v6879
        %v6896 = vmul.f32 %v6830, %v6880
        %v6897 = vmul.f32 %v6832, %v6881
        %v6898 = vmul.f32 %v6834, %v6882
        %s6899 = scalar_lea.vmem %s625, 384 [#allocation24]
        %6900 = vst [vmem:[%s6899] sm:$0xff] %v6883
        %6901 = vst [vmem:[%s6899 + $0x8] sm:$0xff] %v6884
        %6902 = vst [vmem:[%s6899 + $0x10] sm:$0xff] %v6885
        %6903 = vst [vmem:[%s6899 + $0x18] sm:$0xff] %v6886
        %6904 = vst [vmem:[%s6899 + $0x20] sm:$0xff] %v6887
        %6905 = vst [vmem:[%s6899 + $0x28] sm:$0xff] %v6888
        %6906 = vst [vmem:[%s6899 + $0x30] sm:$0xff] %v6889
        %6907 = vst [vmem:[%s6899 + $0x38] sm:$0xff] %v6890
        %6908 = vst [vmem:[%s6899 + $0x40] sm:$0xff] %v6891
        %6909 = vst [vmem:[%s6899 + $0x48] sm:$0xff] %v6892
        %6910 = vst [vmem:[%s6899 + $0x50] sm:$0xff] %v6893
        %6911 = vst [vmem:[%s6899 + $0x58] sm:$0xff] %v6894
        %6912 = vst [vmem:[%s6899 + $0x60] sm:$0xff] %v6895
        %6913 = vst [vmem:[%s6899 + $0x68] sm:$0xff] %v6896
        %6914 = vst [vmem:[%s6899 + $0x70] sm:$0xff] %v6897
        %6915 = vst [vmem:[%s6899 + $0x78] sm:$0xff] %v6898
        %v6916 = vld [vmem:[#allocation4 + $0x18] sm:$0xff]
        %v6917 = vld [vmem:[#allocation4 + $0x38] sm:$0xff]
        %v6918 = vld [vmem:[#allocation4 + $0x58] sm:$0xff]
        %v6919 = vld [vmem:[#allocation4 + $0x78] sm:$0xff]
        %v6920 = vld [vmem:[#allocation4 + $0x98] sm:$0xff]
        %v6921 = vld [vmem:[#allocation4 + $0xb8] sm:$0xff]
        %v6922 = vld [vmem:[#allocation4 + $0xd8] sm:$0xff]
        %v6923 = vld [vmem:[#allocation4 + $0xf8] sm:$0xff]
        %v6924 = vld [vmem:[#allocation4 + $0x118] sm:$0xff]
        %v6925 = vld [vmem:[#allocation4 + $0x138] sm:$0xff]
        %v6926 = vld [vmem:[#allocation4 + $0x158] sm:$0xff]
        %v6927 = vld [vmem:[#allocation4 + $0x178] sm:$0xff]
        %v6928 = vld [vmem:[#allocation4 + $0x198] sm:$0xff]
        %v6929 = vld [vmem:[#allocation4 + $0x1b8] sm:$0xff]
        %v6930 = vld [vmem:[#allocation4 + $0x1d8] sm:$0xff]
        %v6931 = vld [vmem:[#allocation4 + $0x1f8] sm:$0xff]
        %6932 = vmatpush.msra.mxu0 %v6931
        %6933 = vmatpush.msra.mxu0 %v6930
        %6934 = vmatpush.msra.mxu0 %v6929
        %6935 = vmatpush.msra.mxu0 %v6928
        %6936 = vmatpush.msra.mxu0 %v6927
        %6937 = vmatpush.msra.mxu0 %v6926
        %6938 = vmatpush.msra.mxu0 %v6925
        %6939 = vmatpush.msra.mxu0 %v6924
        %6940 = vmatpush.msra.mxu0 %v6923
        %6941 = vmatpush.msra.mxu0 %v6922
        %6942 = vmatpush.msra.mxu0 %v6921
        %6943 = vmatpush.msra.mxu0 %v6920
        %6944 = vmatpush.msra.mxu0 %v6919
        %6945 = vmatpush.msra.mxu0 %v6918
        %6946 = vmatpush.msra.mxu0 %v6917
        %6947 = vmatpush.msra.mxu0 %v6916
        %6948 = vmatmul.f32.gmra.mxu0 %v6883
        %v6949 = vpop.f32.mrf.mxu0
        %v6950 = vadd.f32 0.0, %v6949
        %6951 = vmatmul.f32.gmra.mxu0 %v6884
        %v6952 = vpop.f32.mrf.mxu0
        %v6953 = vadd.f32 0.0, %v6952
        %6954 = vmatmul.f32.gmra.mxu0 %v6885
        %v6955 = vpop.f32.mrf.mxu0
        %v6956 = vadd.f32 0.0, %v6955
        %6957 = vmatmul.f32.gmra.mxu0 %v6886
        %v6958 = vpop.f32.mrf.mxu0
        %v6959 = vadd.f32 0.0, %v6958
        %6960 = vmatmul.f32.gmra.mxu0 %v6887
        %v6961 = vpop.f32.mrf.mxu0
        %v6962 = vadd.f32 0.0, %v6961
        %6963 = vmatmul.f32.gmra.mxu0 %v6888
        %v6964 = vpop.f32.mrf.mxu0
        %v6965 = vadd.f32 0.0, %v6964
        %6966 = vmatmul.f32.gmra.mxu0 %v6889
        %v6967 = vpop.f32.mrf.mxu0
        %v6968 = vadd.f32 0.0, %v6967
        %6969 = vmatmul.f32.gmra.mxu0 %v6890
        %v6970 = vpop.f32.mrf.mxu0
        %v6971 = vadd.f32 0.0, %v6970
        %6972 = vmatmul.f32.gmra.mxu0 %v6891
        %v6973 = vpop.f32.mrf.mxu0
        %v6974 = vadd.f32 0.0, %v6973
        %6975 = vmatmul.f32.gmra.mxu0 %v6892
        %v6976 = vpop.f32.mrf.mxu0
        %v6977 = vadd.f32 0.0, %v6976
        %6978 = vmatmul.f32.gmra.mxu0 %v6893
        %v6979 = vpop.f32.mrf.mxu0
        %v6980 = vadd.f32 0.0, %v6979
        %6981 = vmatmul.f32.gmra.mxu0 %v6894
        %v6982 = vpop.f32.mrf.mxu0
        %v6983 = vadd.f32 0.0, %v6982
        %6984 = vmatmul.f32.gmra.mxu0 %v6895
        %v6985 = vpop.f32.mrf.mxu0
        %v6986 = vadd.f32 0.0, %v6985
        %6987 = vmatmul.f32.gmra.mxu0 %v6896
        %v6988 = vpop.f32.mrf.mxu0
        %v6989 = vadd.f32 0.0, %v6988
        %6990 = vmatmul.f32.gmra.mxu0 %v6897
        %v6991 = vpop.f32.mrf.mxu0
        %v6992 = vadd.f32 0.0, %v6991
        %6993 = vmatmul.f32.gmra.mxu0 %v6898
        %v6994 = vpop.f32.mrf.mxu0
        %v6995 = vadd.f32 0.0, %v6994
        %6996 = vdwg.mxu0
        %6997 = vst [vmem:[#allocation5 + $0x18] sm:$0xff] %v6950
        %6998 = vst [vmem:[#allocation5 + $0x38] sm:$0xff] %v6953
        %6999 = vst [vmem:[#allocation5 + $0x58] sm:$0xff] %v6956
        %7000 = vst [vmem:[#allocation5 + $0x78] sm:$0xff] %v6959
        %7001 = vst [vmem:[#allocation5 + $0x98] sm:$0xff] %v6962
        %7002 = vst [vmem:[#allocation5 + $0xb8] sm:$0xff] %v6965
        %7003 = vst [vmem:[#allocation5 + $0xd8] sm:$0xff] %v6968
        %7004 = vst [vmem:[#allocation5 + $0xf8] sm:$0xff] %v6971
        %7005 = vst [vmem:[#allocation5 + $0x118] sm:$0xff] %v6974
        %7006 = vst [vmem:[#allocation5 + $0x138] sm:$0xff] %v6977
        %7007 = vst [vmem:[#allocation5 + $0x158] sm:$0xff] %v6980
        %7008 = vst [vmem:[#allocation5 + $0x178] sm:$0xff] %v6983
        %7009 = vst [vmem:[#allocation5 + $0x198] sm:$0xff] %v6986
        %7010 = vst [vmem:[#allocation5 + $0x1b8] sm:$0xff] %v6989
        %7011 = vst [vmem:[#allocation5 + $0x1d8] sm:$0xff] %v6992
        %7012 = vst [vmem:[#allocation5 + $0x1f8] sm:$0xff] %v6995
        %v7013 = vld [vmem:[#allocation5] sm:$0xff]
        %v7014 = vld [vmem:[#allocation5 + $0x8] sm:$0xff]
        %v7015 = vld [vmem:[#allocation5 + $0x10] sm:$0xff]
        %v7016 = vld [vmem:[#allocation5 + $0x18] sm:$0xff]
        %v7017 = vld [vmem:[#allocation5 + $0x20] sm:$0xff]
        %v7018 = vld [vmem:[#allocation5 + $0x28] sm:$0xff]
        %v7019 = vld [vmem:[#allocation5 + $0x30] sm:$0xff]
        %v7020 = vld [vmem:[#allocation5 + $0x38] sm:$0xff]
        %v7021 = vld [vmem:[#allocation5 + $0x40] sm:$0xff]
        %v7022 = vld [vmem:[#allocation5 + $0x48] sm:$0xff]
        %v7023 = vld [vmem:[#allocation5 + $0x50] sm:$0xff]
        %v7024 = vld [vmem:[#allocation5 + $0x58] sm:$0xff]
        %v7025 = vld [vmem:[#allocation5 + $0x60] sm:$0xff]
        %v7026 = vld [vmem:[#allocation5 + $0x68] sm:$0xff]
        %v7027 = vld [vmem:[#allocation5 + $0x70] sm:$0xff]
        %v7028 = vld [vmem:[#allocation5 + $0x78] sm:$0xff]
        %v7029 = vld [vmem:[#allocation5 + $0x80] sm:$0xff]
        %v7030 = vld [vmem:[#allocation5 + $0x88] sm:$0xff]
        %v7031 = vld [vmem:[#allocation5 + $0x90] sm:$0xff]
        %v7032 = vld [vmem:[#allocation5 + $0x98] sm:$0xff]
        %v7033 = vld [vmem:[#allocation5 + $0xa0] sm:$0xff]
        %v7034 = vld [vmem:[#allocation5 + $0xa8] sm:$0xff]
        %v7035 = vld [vmem:[#allocation5 + $0xb0] sm:$0xff]
        %v7036 = vld [vmem:[#allocation5 + $0xb8] sm:$0xff]
        %v7037 = vld [vmem:[#allocation5 + $0xc0] sm:$0xff]
        %v7038 = vld [vmem:[#allocation5 + $0xc8] sm:$0xff]
        %v7039 = vld [vmem:[#allocation5 + $0xd0] sm:$0xff]
        %v7040 = vld [vmem:[#allocation5 + $0xd8] sm:$0xff]
        %v7041 = vld [vmem:[#allocation5 + $0xe0] sm:$0xff]
        %v7042 = vld [vmem:[#allocation5 + $0xe8] sm:$0xff]
        %v7043 = vld [vmem:[#allocation5 + $0xf0] sm:$0xff]
        %v7044 = vld [vmem:[#allocation5 + $0xf8] sm:$0xff]
        %v7045 = vld [vmem:[#allocation5 + $0x100] sm:$0xff]
        %v7046 = vld [vmem:[#allocation5 + $0x108] sm:$0xff]
        %v7047 = vld [vmem:[#allocation5 + $0x110] sm:$0xff]
        %v7048 = vld [vmem:[#allocation5 + $0x118] sm:$0xff]
        %v7049 = vld [vmem:[#allocation5 + $0x120] sm:$0xff]
        %v7050 = vld [vmem:[#allocation5 + $0x128] sm:$0xff]
        %v7051 = vld [vmem:[#allocation5 + $0x130] sm:$0xff]
        %v7052 = vld [vmem:[#allocation5 + $0x138] sm:$0xff]
        %v7053 = vld [vmem:[#allocation5 + $0x140] sm:$0xff]
        %v7054 = vld [vmem:[#allocation5 + $0x148] sm:$0xff]
        %v7055 = vld [vmem:[#allocation5 + $0x150] sm:$0xff]
        %v7056 = vld [vmem:[#allocation5 + $0x158] sm:$0xff]
        %v7057 = vld [vmem:[#allocation5 + $0x160] sm:$0xff]
        %v7058 = vld [vmem:[#allocation5 + $0x168] sm:$0xff]
        %v7059 = vld [vmem:[#allocation5 + $0x170] sm:$0xff]
        %v7060 = vld [vmem:[#allocation5 + $0x178] sm:$0xff]
        %v7061 = vld [vmem:[#allocation5 + $0x180] sm:$0xff]
        %v7062 = vld [vmem:[#allocation5 + $0x188] sm:$0xff]
        %v7063 = vld [vmem:[#allocation5 + $0x190] sm:$0xff]
        %v7064 = vld [vmem:[#allocation5 + $0x198] sm:$0xff]
        %v7065 = vld [vmem:[#allocation5 + $0x1a0] sm:$0xff]
        %v7066 = vld [vmem:[#allocation5 + $0x1a8] sm:$0xff]
        %v7067 = vld [vmem:[#allocation5 + $0x1b0] sm:$0xff]
        %v7068 = vld [vmem:[#allocation5 + $0x1b8] sm:$0xff]
        %v7069 = vld [vmem:[#allocation5 + $0x1c0] sm:$0xff]
        %v7070 = vld [vmem:[#allocation5 + $0x1c8] sm:$0xff]
        %v7071 = vld [vmem:[#allocation5 + $0x1d0] sm:$0xff]
        %v7072 = vld [vmem:[#allocation5 + $0x1d8] sm:$0xff]
        %v7073 = vld [vmem:[#allocation5 + $0x1e0] sm:$0xff]
        %v7074 = vld [vmem:[#allocation5 + $0x1e8] sm:$0xff]
        %v7075 = vld [vmem:[#allocation5 + $0x1f0] sm:$0xff]
        %v7076 = vld [vmem:[#allocation5 + $0x1f8] sm:$0xff]
        %v7077 = vld [vmem:[#allocation17] sm:$0xff]
        %v7078 = vld [vmem:[#allocation17 + $0x8] sm:$0xff]
        %v7079 = vld [vmem:[#allocation17 + $0x10] sm:$0xff]
        %v7080 = vld [vmem:[#allocation17 + $0x18] sm:$0xff]
        %v7081 = vld [vmem:[#allocation17 + $0x20] sm:$0xff]
        %v7082 = vld [vmem:[#allocation17 + $0x28] sm:$0xff]
        %v7083 = vld [vmem:[#allocation17 + $0x30] sm:$0xff]
        %v7084 = vld [vmem:[#allocation17 + $0x38] sm:$0xff]
        %v7085 = vld [vmem:[#allocation17 + $0x40] sm:$0xff]
        %v7086 = vld [vmem:[#allocation17 + $0x48] sm:$0xff]
        %v7087 = vld [vmem:[#allocation17 + $0x50] sm:$0xff]
        %v7088 = vld [vmem:[#allocation17 + $0x58] sm:$0xff]
        %v7089 = vld [vmem:[#allocation17 + $0x60] sm:$0xff]
        %v7090 = vld [vmem:[#allocation17 + $0x68] sm:$0xff]
        %v7091 = vld [vmem:[#allocation17 + $0x70] sm:$0xff]
        %v7092 = vld [vmem:[#allocation17 + $0x78] sm:$0xff]
        %v7093 = vld [vmem:[#allocation17 + $0x80] sm:$0xff]
        %v7094 = vld [vmem:[#allocation17 + $0x88] sm:$0xff]
        %v7095 = vld [vmem:[#allocation17 + $0x90] sm:$0xff]
        %v7096 = vld [vmem:[#allocation17 + $0x98] sm:$0xff]
        %v7097 = vld [vmem:[#allocation17 + $0xa0] sm:$0xff]
        %v7098 = vld [vmem:[#allocation17 + $0xa8] sm:$0xff]
        %v7099 = vld [vmem:[#allocation17 + $0xb0] sm:$0xff]
        %v7100 = vld [vmem:[#allocation17 + $0xb8] sm:$0xff]
        %v7101 = vld [vmem:[#allocation17 + $0xc0] sm:$0xff]
        %v7102 = vld [vmem:[#allocation17 + $0xc8] sm:$0xff]
        %v7103 = vld [vmem:[#allocation17 + $0xd0] sm:$0xff]
        %v7104 = vld [vmem:[#allocation17 + $0xd8] sm:$0xff]
        %v7105 = vld [vmem:[#allocation17 + $0xe0] sm:$0xff]
        %v7106 = vld [vmem:[#allocation17 + $0xe8] sm:$0xff]
        %v7107 = vld [vmem:[#allocation17 + $0xf0] sm:$0xff]
        %v7108 = vld [vmem:[#allocation17 + $0xf8] sm:$0xff]
        %v7109 = vld [vmem:[#allocation17 + $0x100] sm:$0xff]
        %v7110 = vld [vmem:[#allocation17 + $0x108] sm:$0xff]
        %v7111 = vld [vmem:[#allocation17 + $0x110] sm:$0xff]
        %v7112 = vld [vmem:[#allocation17 + $0x118] sm:$0xff]
        %v7113 = vld [vmem:[#allocation17 + $0x120] sm:$0xff]
        %v7114 = vld [vmem:[#allocation17 + $0x128] sm:$0xff]
        %v7115 = vld [vmem:[#allocation17 + $0x130] sm:$0xff]
        %v7116 = vld [vmem:[#allocation17 + $0x138] sm:$0xff]
        %v7117 = vld [vmem:[#allocation17 + $0x140] sm:$0xff]
        %v7118 = vld [vmem:[#allocation17 + $0x148] sm:$0xff]
        %v7119 = vld [vmem:[#allocation17 + $0x150] sm:$0xff]
        %v7120 = vld [vmem:[#allocation17 + $0x158] sm:$0xff]
        %v7121 = vld [vmem:[#allocation17 + $0x160] sm:$0xff]
        %v7122 = vld [vmem:[#allocation17 + $0x168] sm:$0xff]
        %v7123 = vld [vmem:[#allocation17 + $0x170] sm:$0xff]
        %v7124 = vld [vmem:[#allocation17 + $0x178] sm:$0xff]
        %v7125 = vld [vmem:[#allocation17 + $0x180] sm:$0xff]
        %v7126 = vld [vmem:[#allocation17 + $0x188] sm:$0xff]
        %v7127 = vld [vmem:[#allocation17 + $0x190] sm:$0xff]
        %v7128 = vld [vmem:[#allocation17 + $0x198] sm:$0xff]
        %v7129 = vld [vmem:[#allocation17 + $0x1a0] sm:$0xff]
        %v7130 = vld [vmem:[#allocation17 + $0x1a8] sm:$0xff]
        %v7131 = vld [vmem:[#allocation17 + $0x1b0] sm:$0xff]
        %v7132 = vld [vmem:[#allocation17 + $0x1b8] sm:$0xff]
        %v7133 = vld [vmem:[#allocation17 + $0x1c0] sm:$0xff]
        %v7134 = vld [vmem:[#allocation17 + $0x1c8] sm:$0xff]
        %v7135 = vld [vmem:[#allocation17 + $0x1d0] sm:$0xff]
        %v7136 = vld [vmem:[#allocation17 + $0x1d8] sm:$0xff]
        %v7137 = vld [vmem:[#allocation17 + $0x1e0] sm:$0xff]
        %v7138 = vld [vmem:[#allocation17 + $0x1e8] sm:$0xff]
        %v7139 = vld [vmem:[#allocation17 + $0x1f0] sm:$0xff]
        %v7140 = vld [vmem:[#allocation17 + $0x1f8] sm:$0xff]
        %v7141 = vld [vmem:[#allocation17 + $0x200] sm:$0xff]
        %v7142 = vld [vmem:[#allocation17 + $0x208] sm:$0xff]
        %v7143 = vld [vmem:[#allocation17 + $0x210] sm:$0xff]
        %v7144 = vld [vmem:[#allocation17 + $0x218] sm:$0xff]
        %v7145 = vld [vmem:[#allocation17 + $0x220] sm:$0xff]
        %v7146 = vld [vmem:[#allocation17 + $0x228] sm:$0xff]
        %v7147 = vld [vmem:[#allocation17 + $0x230] sm:$0xff]
        %v7148 = vld [vmem:[#allocation17 + $0x238] sm:$0xff]
        %v7149 = vld [vmem:[#allocation17 + $0x240] sm:$0xff]
        %v7150 = vld [vmem:[#allocation17 + $0x248] sm:$0xff]
        %v7151 = vld [vmem:[#allocation17 + $0x250] sm:$0xff]
        %v7152 = vld [vmem:[#allocation17 + $0x258] sm:$0xff]
        %v7153 = vld [vmem:[#allocation17 + $0x260] sm:$0xff]
        %v7154 = vld [vmem:[#allocation17 + $0x268] sm:$0xff]
        %v7155 = vld [vmem:[#allocation17 + $0x270] sm:$0xff]
        %v7156 = vld [vmem:[#allocation17 + $0x278] sm:$0xff]
        %v7157 = vld [vmem:[#allocation17 + $0x280] sm:$0xff]
        %v7158 = vld [vmem:[#allocation17 + $0x288] sm:$0xff]
        %v7159 = vld [vmem:[#allocation17 + $0x290] sm:$0xff]
        %v7160 = vld [vmem:[#allocation17 + $0x298] sm:$0xff]
        %v7161 = vld [vmem:[#allocation17 + $0x2a0] sm:$0xff]
        %v7162 = vld [vmem:[#allocation17 + $0x2a8] sm:$0xff]
        %v7163 = vld [vmem:[#allocation17 + $0x2b0] sm:$0xff]
        %v7164 = vld [vmem:[#allocation17 + $0x2b8] sm:$0xff]
        %v7165 = vld [vmem:[#allocation17 + $0x2c0] sm:$0xff]
        %v7166 = vld [vmem:[#allocation17 + $0x2c8] sm:$0xff]
        %v7167 = vld [vmem:[#allocation17 + $0x2d0] sm:$0xff]
        %v7168 = vld [vmem:[#allocation17 + $0x2d8] sm:$0xff]
        %v7169 = vld [vmem:[#allocation17 + $0x2e0] sm:$0xff]
        %v7170 = vld [vmem:[#allocation17 + $0x2e8] sm:$0xff]
        %v7171 = vld [vmem:[#allocation17 + $0x2f0] sm:$0xff]
        %v7172 = vld [vmem:[#allocation17 + $0x2f8] sm:$0xff]
        %v7173 = vld [vmem:[#allocation17 + $0x300] sm:$0xff]
        %v7174 = vld [vmem:[#allocation17 + $0x308] sm:$0xff]
        %v7175 = vld [vmem:[#allocation17 + $0x310] sm:$0xff]
        %v7176 = vld [vmem:[#allocation17 + $0x318] sm:$0xff]
        %v7177 = vld [vmem:[#allocation17 + $0x320] sm:$0xff]
        %v7178 = vld [vmem:[#allocation17 + $0x328] sm:$0xff]
        %v7179 = vld [vmem:[#allocation17 + $0x330] sm:$0xff]
        %v7180 = vld [vmem:[#allocation17 + $0x338] sm:$0xff]
        %v7181 = vld [vmem:[#allocation17 + $0x340] sm:$0xff]
        %v7182 = vld [vmem:[#allocation17 + $0x348] sm:$0xff]
        %v7183 = vld [vmem:[#allocation17 + $0x350] sm:$0xff]
        %v7184 = vld [vmem:[#allocation17 + $0x358] sm:$0xff]
        %v7185 = vld [vmem:[#allocation17 + $0x360] sm:$0xff]
        %v7186 = vld [vmem:[#allocation17 + $0x368] sm:$0xff]
        %v7187 = vld [vmem:[#allocation17 + $0x370] sm:$0xff]
        %v7188 = vld [vmem:[#allocation17 + $0x378] sm:$0xff]
        %v7189 = vld [vmem:[#allocation17 + $0x380] sm:$0xff]
        %v7190 = vld [vmem:[#allocation17 + $0x388] sm:$0xff]
        %v7191 = vld [vmem:[#allocation17 + $0x390] sm:$0xff]
        %v7192 = vld [vmem:[#allocation17 + $0x398] sm:$0xff]
        %v7193 = vld [vmem:[#allocation17 + $0x3a0] sm:$0xff]
        %v7194 = vld [vmem:[#allocation17 + $0x3a8] sm:$0xff]
        %v7195 = vld [vmem:[#allocation17 + $0x3b0] sm:$0xff]
        %v7196 = vld [vmem:[#allocation17 + $0x3b8] sm:$0xff]
        %v7197 = vld [vmem:[#allocation17 + $0x3c0] sm:$0xff]
        %v7198 = vld [vmem:[#allocation17 + $0x3c8] sm:$0xff]
        %v7199 = vld [vmem:[#allocation17 + $0x3d0] sm:$0xff]
        %v7200 = vld [vmem:[#allocation17 + $0x3d8] sm:$0xff]
        %v7201 = vld [vmem:[#allocation17 + $0x3e0] sm:$0xff]
        %v7202 = vld [vmem:[#allocation17 + $0x3e8] sm:$0xff]
        %v7203 = vld [vmem:[#allocation17 + $0x3f0] sm:$0xff]
        %v7204 = vld [vmem:[#allocation17 + $0x3f8] sm:$0xff]
        %v7205 = vld [vmem:[#allocation17 + $0x400] sm:$0xff]
        %v7206 = vld [vmem:[#allocation17 + $0x408] sm:$0xff]
        %v7207 = vld [vmem:[#allocation17 + $0x410] sm:$0xff]
        %v7208 = vld [vmem:[#allocation17 + $0x418] sm:$0xff]
        %v7209 = vld [vmem:[#allocation17 + $0x420] sm:$0xff]
        %v7210 = vld [vmem:[#allocation17 + $0x428] sm:$0xff]
        %v7211 = vld [vmem:[#allocation17 + $0x430] sm:$0xff]
        %v7212 = vld [vmem:[#allocation17 + $0x438] sm:$0xff]
        %v7213 = vld [vmem:[#allocation17 + $0x440] sm:$0xff]
        %v7214 = vld [vmem:[#allocation17 + $0x448] sm:$0xff]
        %v7215 = vld [vmem:[#allocation17 + $0x450] sm:$0xff]
        %v7216 = vld [vmem:[#allocation17 + $0x458] sm:$0xff]
        %v7217 = vld [vmem:[#allocation17 + $0x460] sm:$0xff]
        %v7218 = vld [vmem:[#allocation17 + $0x468] sm:$0xff]
        %v7219 = vld [vmem:[#allocation17 + $0x470] sm:$0xff]
        %v7220 = vld [vmem:[#allocation17 + $0x478] sm:$0xff]
        %v7221 = vld [vmem:[#allocation17 + $0x480] sm:$0xff]
        %v7222 = vld [vmem:[#allocation17 + $0x488] sm:$0xff]
        %v7223 = vld [vmem:[#allocation17 + $0x490] sm:$0xff]
        %v7224 = vld [vmem:[#allocation17 + $0x498] sm:$0xff]
        %v7225 = vld [vmem:[#allocation17 + $0x4a0] sm:$0xff]
        %v7226 = vld [vmem:[#allocation17 + $0x4a8] sm:$0xff]
        %v7227 = vld [vmem:[#allocation17 + $0x4b0] sm:$0xff]
        %v7228 = vld [vmem:[#allocation17 + $0x4b8] sm:$0xff]
        %v7229 = vld [vmem:[#allocation17 + $0x4c0] sm:$0xff]
        %v7230 = vld [vmem:[#allocation17 + $0x4c8] sm:$0xff]
        %v7231 = vld [vmem:[#allocation17 + $0x4d0] sm:$0xff]
        %v7232 = vld [vmem:[#allocation17 + $0x4d8] sm:$0xff]
        %v7233 = vld [vmem:[#allocation17 + $0x4e0] sm:$0xff]
        %v7234 = vld [vmem:[#allocation17 + $0x4e8] sm:$0xff]
        %v7235 = vld [vmem:[#allocation17 + $0x4f0] sm:$0xff]
        %v7236 = vld [vmem:[#allocation17 + $0x4f8] sm:$0xff]
        %v7237 = vld [vmem:[#allocation17 + $0x500] sm:$0xff]
        %v7238 = vld [vmem:[#allocation17 + $0x508] sm:$0xff]
        %v7239 = vld [vmem:[#allocation17 + $0x510] sm:$0xff]
        %v7240 = vld [vmem:[#allocation17 + $0x518] sm:$0xff]
        %v7241 = vld [vmem:[#allocation17 + $0x520] sm:$0xff]
        %v7242 = vld [vmem:[#allocation17 + $0x528] sm:$0xff]
        %v7243 = vld [vmem:[#allocation17 + $0x530] sm:$0xff]
        %v7244 = vld [vmem:[#allocation17 + $0x538] sm:$0xff]
        %v7245 = vld [vmem:[#allocation17 + $0x540] sm:$0xff]
        %v7246 = vld [vmem:[#allocation17 + $0x548] sm:$0xff]
        %v7247 = vld [vmem:[#allocation17 + $0x550] sm:$0xff]
        %v7248 = vld [vmem:[#allocation17 + $0x558] sm:$0xff]
        %v7249 = vld [vmem:[#allocation17 + $0x560] sm:$0xff]
        %v7250 = vld [vmem:[#allocation17 + $0x568] sm:$0xff]
        %v7251 = vld [vmem:[#allocation17 + $0x570] sm:$0xff]
        %v7252 = vld [vmem:[#allocation17 + $0x578] sm:$0xff]
        %v7253 = vld [vmem:[#allocation17 + $0x580] sm:$0xff]
        %v7254 = vld [vmem:[#allocation17 + $0x588] sm:$0xff]
        %v7255 = vld [vmem:[#allocation17 + $0x590] sm:$0xff]
        %v7256 = vld [vmem:[#allocation17 + $0x598] sm:$0xff]
        %v7257 = vld [vmem:[#allocation17 + $0x5a0] sm:$0xff]
        %v7258 = vld [vmem:[#allocation17 + $0x5a8] sm:$0xff]
        %v7259 = vld [vmem:[#allocation17 + $0x5b0] sm:$0xff]
        %v7260 = vld [vmem:[#allocation17 + $0x5b8] sm:$0xff]
        %v7261 = vld [vmem:[#allocation17 + $0x5c0] sm:$0xff]
        %v7262 = vld [vmem:[#allocation17 + $0x5c8] sm:$0xff]
        %v7263 = vld [vmem:[#allocation17 + $0x5d0] sm:$0xff]
        %v7264 = vld [vmem:[#allocation17 + $0x5d8] sm:$0xff]
        %v7265 = vld [vmem:[#allocation17 + $0x5e0] sm:$0xff]
        %v7266 = vld [vmem:[#allocation17 + $0x5e8] sm:$0xff]
        %v7267 = vld [vmem:[#allocation17 + $0x5f0] sm:$0xff]
        %v7268 = vld [vmem:[#allocation17 + $0x5f8] sm:$0xff]
        %v7269 = vld [vmem:[#allocation17 + $0x600] sm:$0xff]
        %v7270 = vld [vmem:[#allocation17 + $0x608] sm:$0xff]
        %v7271 = vld [vmem:[#allocation17 + $0x610] sm:$0xff]
        %v7272 = vld [vmem:[#allocation17 + $0x618] sm:$0xff]
        %v7273 = vld [vmem:[#allocation17 + $0x620] sm:$0xff]
        %v7274 = vld [vmem:[#allocation17 + $0x628] sm:$0xff]
        %v7275 = vld [vmem:[#allocation17 + $0x630] sm:$0xff]
        %v7276 = vld [vmem:[#allocation17 + $0x638] sm:$0xff]
        %v7277 = vld [vmem:[#allocation17 + $0x640] sm:$0xff]
        %v7278 = vld [vmem:[#allocation17 + $0x648] sm:$0xff]
        %v7279 = vld [vmem:[#allocation17 + $0x650] sm:$0xff]
        %v7280 = vld [vmem:[#allocation17 + $0x658] sm:$0xff]
        %v7281 = vld [vmem:[#allocation17 + $0x660] sm:$0xff]
        %v7282 = vld [vmem:[#allocation17 + $0x668] sm:$0xff]
        %v7283 = vld [vmem:[#allocation17 + $0x670] sm:$0xff]
        %v7284 = vld [vmem:[#allocation17 + $0x678] sm:$0xff]
        %v7285 = vld [vmem:[#allocation17 + $0x680] sm:$0xff]
        %v7286 = vld [vmem:[#allocation17 + $0x688] sm:$0xff]
        %v7287 = vld [vmem:[#allocation17 + $0x690] sm:$0xff]
        %v7288 = vld [vmem:[#allocation17 + $0x698] sm:$0xff]
        %v7289 = vld [vmem:[#allocation17 + $0x6a0] sm:$0xff]
        %v7290 = vld [vmem:[#allocation17 + $0x6a8] sm:$0xff]
        %v7291 = vld [vmem:[#allocation17 + $0x6b0] sm:$0xff]
        %v7292 = vld [vmem:[#allocation17 + $0x6b8] sm:$0xff]
        %v7293 = vld [vmem:[#allocation17 + $0x6c0] sm:$0xff]
        %v7294 = vld [vmem:[#allocation17 + $0x6c8] sm:$0xff]
        %v7295 = vld [vmem:[#allocation17 + $0x6d0] sm:$0xff]
        %v7296 = vld [vmem:[#allocation17 + $0x6d8] sm:$0xff]
        %v7297 = vld [vmem:[#allocation17 + $0x6e0] sm:$0xff]
        %v7298 = vld [vmem:[#allocation17 + $0x6e8] sm:$0xff]
        %v7299 = vld [vmem:[#allocation17 + $0x6f0] sm:$0xff]
        %v7300 = vld [vmem:[#allocation17 + $0x6f8] sm:$0xff]
        %v7301 = vld [vmem:[#allocation17 + $0x700] sm:$0xff]
        %v7302 = vld [vmem:[#allocation17 + $0x708] sm:$0xff]
        %v7303 = vld [vmem:[#allocation17 + $0x710] sm:$0xff]
        %v7304 = vld [vmem:[#allocation17 + $0x718] sm:$0xff]
        %v7305 = vld [vmem:[#allocation17 + $0x720] sm:$0xff]
        %v7306 = vld [vmem:[#allocation17 + $0x728] sm:$0xff]
        %v7307 = vld [vmem:[#allocation17 + $0x730] sm:$0xff]
        %v7308 = vld [vmem:[#allocation17 + $0x738] sm:$0xff]
        %v7309 = vld [vmem:[#allocation17 + $0x740] sm:$0xff]
        %v7310 = vld [vmem:[#allocation17 + $0x748] sm:$0xff]
        %v7311 = vld [vmem:[#allocation17 + $0x750] sm:$0xff]
        %v7312 = vld [vmem:[#allocation17 + $0x758] sm:$0xff]
        %v7313 = vld [vmem:[#allocation17 + $0x760] sm:$0xff]
        %v7314 = vld [vmem:[#allocation17 + $0x768] sm:$0xff]
        %v7315 = vld [vmem:[#allocation17 + $0x770] sm:$0xff]
        %v7316 = vld [vmem:[#allocation17 + $0x778] sm:$0xff]
        %v7317 = vld [vmem:[#allocation17 + $0x780] sm:$0xff]
        %v7318 = vld [vmem:[#allocation17 + $0x788] sm:$0xff]
        %v7319 = vld [vmem:[#allocation17 + $0x790] sm:$0xff]
        %v7320 = vld [vmem:[#allocation17 + $0x798] sm:$0xff]
        %v7321 = vld [vmem:[#allocation17 + $0x7a0] sm:$0xff]
        %v7322 = vld [vmem:[#allocation17 + $0x7a8] sm:$0xff]
        %v7323 = vld [vmem:[#allocation17 + $0x7b0] sm:$0xff]
        %v7324 = vld [vmem:[#allocation17 + $0x7b8] sm:$0xff]
        %v7325 = vld [vmem:[#allocation17 + $0x7c0] sm:$0xff]
        %v7326 = vld [vmem:[#allocation17 + $0x7c8] sm:$0xff]
        %v7327 = vld [vmem:[#allocation17 + $0x7d0] sm:$0xff]
        %v7328 = vld [vmem:[#allocation17 + $0x7d8] sm:$0xff]
        %v7329 = vld [vmem:[#allocation17 + $0x7e0] sm:$0xff]
        %v7330 = vld [vmem:[#allocation17 + $0x7e8] sm:$0xff]
        %v7331 = vld [vmem:[#allocation17 + $0x7f0] sm:$0xff]
        %v7332 = vld [vmem:[#allocation17 + $0x7f8] sm:$0xff]
        %v7333 = vld [vmem:[#allocation18] sm:$0xf]
        %v7335 = vperm.slane %v7333, 0
        %v7336 = vperm.slane %v7333, 1
        %v7337 = vperm.slane %v7333, 2
        %v7338 = vperm.slane %v7333, 3
        %7343 = vmatpush.msra.mxu0 %v7137
        %7344 = vmatpush.msra.mxu0 %v7133
        %7345 = vmatpush.msra.mxu0 %v7129
        %7346 = vmatpush.msra.mxu0 %v7125
        %7347 = vmatpush.msra.mxu0 %v7121
        %7348 = vmatpush.msra.mxu0 %v7117
        %7349 = vmatpush.msra.mxu0 %v7113
        %7350 = vmatpush.msra.mxu0 %v7109
        %7351 = vmatpush.msra.mxu0 %v7105
        %7352 = vmatpush.msra.mxu0 %v7101
        %7353 = vmatpush.msra.mxu0 %v7097
        %7354 = vmatpush.msra.mxu0 %v7093
        %7355 = vmatpush.msra.mxu0 %v7089
        %7356 = vmatpush.msra.mxu0 %v7085
        %7357 = vmatpush.msra.mxu0 %v7081
        %7358 = vmatpush.msra.mxu0 %v7077
        %7359 = vmatmul.f32.gmra.mxu0 %v7013
        %v7360 = vpop.f32.mrf.mxu0
        %v7361 = vadd.f32 %v7335, %v7360
        %7362 = vmatmul.f32.gmra.mxu0 %v7017
        %v7363 = vpop.f32.mrf.mxu0
        %v7364 = vadd.f32 %v7335, %v7363
        %7365 = vmatmul.f32.gmra.mxu0 %v7021
        %v7366 = vpop.f32.mrf.mxu0
        %v7367 = vadd.f32 %v7335, %v7366
        %7368 = vmatmul.f32.gmra.mxu0 %v7025
        %v7369 = vpop.f32.mrf.mxu0
        %v7370 = vadd.f32 %v7335, %v7369
        %7371 = vmatmul.f32.gmra.mxu0 %v7029
        %v7372 = vpop.f32.mrf.mxu0
        %v7373 = vadd.f32 %v7335, %v7372
        %7374 = vmatmul.f32.gmra.mxu0 %v7033
        %v7375 = vpop.f32.mrf.mxu0
        %v7376 = vadd.f32 %v7335, %v7375
        %7377 = vmatmul.f32.gmra.mxu0 %v7037
        %v7378 = vpop.f32.mrf.mxu0
        %v7379 = vadd.f32 %v7335, %v7378
        %7380 = vmatmul.f32.gmra.mxu0 %v7041
        %v7381 = vpop.f32.mrf.mxu0
        %v7382 = vadd.f32 %v7335, %v7381
        %7383 = vmatmul.f32.gmra.mxu0 %v7045
        %v7384 = vpop.f32.mrf.mxu0
        %v7385 = vadd.f32 %v7335, %v7384
        %7386 = vmatmul.f32.gmra.mxu0 %v7049
        %v7387 = vpop.f32.mrf.mxu0
        %v7388 = vadd.f32 %v7335, %v7387
        %7389 = vmatmul.f32.gmra.mxu0 %v7053
        %v7390 = vpop.f32.mrf.mxu0
        %v7391 = vadd.f32 %v7335, %v7390
        %7392 = vmatmul.f32.gmra.mxu0 %v7057
        %v7393 = vpop.f32.mrf.mxu0
        %v7394 = vadd.f32 %v7335, %v7393
        %7395 = vmatmul.f32.gmra.mxu0 %v7061
        %v7396 = vpop.f32.mrf.mxu0
        %v7397 = vadd.f32 %v7335, %v7396
        %7398 = vmatmul.f32.gmra.mxu0 %v7065
        %v7399 = vpop.f32.mrf.mxu0
        %v7400 = vadd.f32 %v7335, %v7399
        %7401 = vmatmul.f32.gmra.mxu0 %v7069
        %v7402 = vpop.f32.mrf.mxu0
        %v7403 = vadd.f32 %v7335, %v7402
        %7404 = vmatmul.f32.gmra.mxu0 %v7073
        %v7405 = vpop.f32.mrf.mxu0
        %v7406 = vadd.f32 %v7335, %v7405
        %7407 = vdwg.mxu0
        %7408 = vmatpush.msra.mxu0 %v7201
        %7409 = vmatpush.msra.mxu0 %v7197
        %7410 = vmatpush.msra.mxu0 %v7193
        %7411 = vmatpush.msra.mxu0 %v7189
        %7412 = vmatpush.msra.mxu0 %v7185
        %7413 = vmatpush.msra.mxu0 %v7181
        %7414 = vmatpush.msra.mxu0 %v7177
        %7415 = vmatpush.msra.mxu0 %v7173
        %7416 = vmatpush.msra.mxu0 %v7169
        %7417 = vmatpush.msra.mxu0 %v7165
        %7418 = vmatpush.msra.mxu0 %v7161
        %7419 = vmatpush.msra.mxu0 %v7157
        %7420 = vmatpush.msra.mxu0 %v7153
        %7421 = vmatpush.msra.mxu0 %v7149
        %7422 = vmatpush.msra.mxu0 %v7145
        %7423 = vmatpush.msra.mxu0 %v7141
        %7424 = vmatmul.f32.gmra.mxu0 %v7014
        %v7425 = vpop.f32.mrf.mxu0
        %v7426 = vadd.f32 %v7361, %v7425
        %7427 = vmatmul.f32.gmra.mxu0 %v7018
        %v7428 = vpop.f32.mrf.mxu0
        %v7429 = vadd.f32 %v7364, %v7428
        %7430 = vmatmul.f32.gmra.mxu0 %v7022
        %v7431 = vpop.f32.mrf.mxu0
        %v7432 = vadd.f32 %v7367, %v7431
        %7433 = vmatmul.f32.gmra.mxu0 %v7026
        %v7434 = vpop.f32.mrf.mxu0
        %v7435 = vadd.f32 %v7370, %v7434
        %7436 = vmatmul.f32.gmra.mxu0 %v7030
        %v7437 = vpop.f32.mrf.mxu0
        %v7438 = vadd.f32 %v7373, %v7437
        %7439 = vmatmul.f32.gmra.mxu0 %v7034
        %v7440 = vpop.f32.mrf.mxu0
        %v7441 = vadd.f32 %v7376, %v7440
        %7442 = vmatmul.f32.gmra.mxu0 %v7038
        %v7443 = vpop.f32.mrf.mxu0
        %v7444 = vadd.f32 %v7379, %v7443
        %7445 = vmatmul.f32.gmra.mxu0 %v7042
        %v7446 = vpop.f32.mrf.mxu0
        %v7447 = vadd.f32 %v7382, %v7446
        %7448 = vmatmul.f32.gmra.mxu0 %v7046
        %v7449 = vpop.f32.mrf.mxu0
        %v7450 = vadd.f32 %v7385, %v7449
        %7451 = vmatmul.f32.gmra.mxu0 %v7050
        %v7452 = vpop.f32.mrf.mxu0
        %v7453 = vadd.f32 %v7388, %v7452
        %7454 = vmatmul.f32.gmra.mxu0 %v7054
        %v7455 = vpop.f32.mrf.mxu0
        %v7456 = vadd.f32 %v7391, %v7455
        %7457 = vmatmul.f32.gmra.mxu0 %v7058
        %v7458 = vpop.f32.mrf.mxu0
        %v7459 = vadd.f32 %v7394, %v7458
        %7460 = vmatmul.f32.gmra.mxu0 %v7062
        %v7461 = vpop.f32.mrf.mxu0
        %v7462 = vadd.f32 %v7397, %v7461
        %7463 = vmatmul.f32.gmra.mxu0 %v7066
        %v7464 = vpop.f32.mrf.mxu0
        %v7465 = vadd.f32 %v7400, %v7464
        %7466 = vmatmul.f32.gmra.mxu0 %v7070
        %v7467 = vpop.f32.mrf.mxu0
        %v7468 = vadd.f32 %v7403, %v7467
        %7469 = vmatmul.f32.gmra.mxu0 %v7074
        %v7470 = vpop.f32.mrf.mxu0
        %v7471 = vadd.f32 %v7406, %v7470
        %7472 = vdwg.mxu0
        %7473 = vmatpush.msra.mxu0 %v7265
        %7474 = vmatpush.msra.mxu0 %v7261
        %7475 = vmatpush.msra.mxu0 %v7257
        %7476 = vmatpush.msra.mxu0 %v7253
        %7477 = vmatpush.msra.mxu0 %v7249
        %7478 = vmatpush.msra.mxu0 %v7245
        %7479 = vmatpush.msra.mxu0 %v7241
        %7480 = vmatpush.msra.mxu0 %v7237
        %7481 = vmatpush.msra.mxu0 %v7233
        %7482 = vmatpush.msra.mxu0 %v7229
        %7483 = vmatpush.msra.mxu0 %v7225
        %7484 = vmatpush.msra.mxu0 %v7221
        %7485 = vmatpush.msra.mxu0 %v7217
        %7486 = vmatpush.msra.mxu0 %v7213
        %7487 = vmatpush.msra.mxu0 %v7209
        %7488 = vmatpush.msra.mxu0 %v7205
        %7489 = vmatmul.f32.gmra.mxu0 %v7015
        %v7490 = vpop.f32.mrf.mxu0
        %v7491 = vadd.f32 %v7426, %v7490
        %7492 = vmatmul.f32.gmra.mxu0 %v7019
        %v7493 = vpop.f32.mrf.mxu0
        %v7494 = vadd.f32 %v7429, %v7493
        %7495 = vmatmul.f32.gmra.mxu0 %v7023
        %v7496 = vpop.f32.mrf.mxu0
        %v7497 = vadd.f32 %v7432, %v7496
        %7498 = vmatmul.f32.gmra.mxu0 %v7027
        %v7499 = vpop.f32.mrf.mxu0
        %v7500 = vadd.f32 %v7435, %v7499
        %7501 = vmatmul.f32.gmra.mxu0 %v7031
        %v7502 = vpop.f32.mrf.mxu0
        %v7503 = vadd.f32 %v7438, %v7502
        %7504 = vmatmul.f32.gmra.mxu0 %v7035
        %v7505 = vpop.f32.mrf.mxu0
        %v7506 = vadd.f32 %v7441, %v7505
        %7507 = vmatmul.f32.gmra.mxu0 %v7039
        %v7508 = vpop.f32.mrf.mxu0
        %v7509 = vadd.f32 %v7444, %v7508
        %7510 = vmatmul.f32.gmra.mxu0 %v7043
        %v7511 = vpop.f32.mrf.mxu0
        %v7512 = vadd.f32 %v7447, %v7511
        %7513 = vmatmul.f32.gmra.mxu0 %v7047
        %v7514 = vpop.f32.mrf.mxu0
        %v7515 = vadd.f32 %v7450, %v7514
        %7516 = vmatmul.f32.gmra.mxu0 %v7051
        %v7517 = vpop.f32.mrf.mxu0
        %v7518 = vadd.f32 %v7453, %v7517
        %7519 = vmatmul.f32.gmra.mxu0 %v7055
        %v7520 = vpop.f32.mrf.mxu0
        %v7521 = vadd.f32 %v7456, %v7520
        %7522 = vmatmul.f32.gmra.mxu0 %v7059
        %v7523 = vpop.f32.mrf.mxu0
        %v7524 = vadd.f32 %v7459, %v7523
        %7525 = vmatmul.f32.gmra.mxu0 %v7063
        %v7526 = vpop.f32.mrf.mxu0
        %v7527 = vadd.f32 %v7462, %v7526
        %7528 = vmatmul.f32.gmra.mxu0 %v7067
        %v7529 = vpop.f32.mrf.mxu0
        %v7530 = vadd.f32 %v7465, %v7529
        %7531 = vmatmul.f32.gmra.mxu0 %v7071
        %v7532 = vpop.f32.mrf.mxu0
        %v7533 = vadd.f32 %v7468, %v7532
        %7534 = vmatmul.f32.gmra.mxu0 %v7075
        %v7535 = vpop.f32.mrf.mxu0
        %v7536 = vadd.f32 %v7471, %v7535
        %7537 = vdwg.mxu0
        %7538 = vmatpush.msra.mxu0 %v7329
        %7539 = vmatpush.msra.mxu0 %v7325
        %7540 = vmatpush.msra.mxu0 %v7321
        %7541 = vmatpush.msra.mxu0 %v7317
        %7542 = vmatpush.msra.mxu0 %v7313
        %7543 = vmatpush.msra.mxu0 %v7309
        %7544 = vmatpush.msra.mxu0 %v7305
        %7545 = vmatpush.msra.mxu0 %v7301
        %7546 = vmatpush.msra.mxu0 %v7297
        %7547 = vmatpush.msra.mxu0 %v7293
        %7548 = vmatpush.msra.mxu0 %v7289
        %7549 = vmatpush.msra.mxu0 %v7285
        %7550 = vmatpush.msra.mxu0 %v7281
        %7551 = vmatpush.msra.mxu0 %v7277
        %7552 = vmatpush.msra.mxu0 %v7273
        %7553 = vmatpush.msra.mxu0 %v7269
        %7554 = vmatmul.f32.gmra.mxu0 %v7016
        %v7555 = vpop.f32.mrf.mxu0
        %v7556 = vadd.f32 %v7491, %v7555
        %7557 = vmatmul.f32.gmra.mxu0 %v7020
        %v7558 = vpop.f32.mrf.mxu0
        %v7559 = vadd.f32 %v7494, %v7558
        %7560 = vmatmul.f32.gmra.mxu0 %v7024
        %v7561 = vpop.f32.mrf.mxu0
        %v7562 = vadd.f32 %v7497, %v7561
        %7563 = vmatmul.f32.gmra.mxu0 %v7028
        %v7564 = vpop.f32.mrf.mxu0
        %v7565 = vadd.f32 %v7500, %v7564
        %7566 = vmatmul.f32.gmra.mxu0 %v7032
        %v7567 = vpop.f32.mrf.mxu0
        %v7568 = vadd.f32 %v7503, %v7567
        %7569 = vmatmul.f32.gmra.mxu0 %v7036
        %v7570 = vpop.f32.mrf.mxu0
        %v7571 = vadd.f32 %v7506, %v7570
        %7572 = vmatmul.f32.gmra.mxu0 %v7040
        %v7573 = vpop.f32.mrf.mxu0
        %v7574 = vadd.f32 %v7509, %v7573
        %7575 = vmatmul.f32.gmra.mxu0 %v7044
        %v7576 = vpop.f32.mrf.mxu0
        %v7577 = vadd.f32 %v7512, %v7576
        %7578 = vmatmul.f32.gmra.mxu0 %v7048
        %v7579 = vpop.f32.mrf.mxu0
        %v7580 = vadd.f32 %v7515, %v7579
        %7581 = vmatmul.f32.gmra.mxu0 %v7052
        %v7582 = vpop.f32.mrf.mxu0
        %v7583 = vadd.f32 %v7518, %v7582
        %7584 = vmatmul.f32.gmra.mxu0 %v7056
        %v7585 = vpop.f32.mrf.mxu0
        %v7586 = vadd.f32 %v7521, %v7585
        %7587 = vmatmul.f32.gmra.mxu0 %v7060
        %v7588 = vpop.f32.mrf.mxu0
        %v7589 = vadd.f32 %v7524, %v7588
        %7590 = vmatmul.f32.gmra.mxu0 %v7064
        %v7591 = vpop.f32.mrf.mxu0
        %v7592 = vadd.f32 %v7527, %v7591
        %7593 = vmatmul.f32.gmra.mxu0 %v7068
        %v7594 = vpop.f32.mrf.mxu0
        %v7595 = vadd.f32 %v7530, %v7594
        %7596 = vmatmul.f32.gmra.mxu0 %v7072
        %v7597 = vpop.f32.mrf.mxu0
        %v7598 = vadd.f32 %v7533, %v7597
        %7599 = vmatmul.f32.gmra.mxu0 %v7076
        %v7600 = vpop.f32.mrf.mxu0
        %v7601 = vadd.f32 %v7536, %v7600
        %7602 = vdwg.mxu0
        %7603 = vmatpush.msra.mxu0 %v7138
        %7604 = vmatpush.msra.mxu0 %v7134
        %7605 = vmatpush.msra.mxu0 %v7130
        %7606 = vmatpush.msra.mxu0 %v7126
        %7607 = vmatpush.msra.mxu0 %v7122
        %7608 = vmatpush.msra.mxu0 %v7118
        %7609 = vmatpush.msra.mxu0 %v7114
        %7610 = vmatpush.msra.mxu0 %v7110
        %7611 = vmatpush.msra.mxu0 %v7106
        %7612 = vmatpush.msra.mxu0 %v7102
        %7613 = vmatpush.msra.mxu0 %v7098
        %7614 = vmatpush.msra.mxu0 %v7094
        %7615 = vmatpush.msra.mxu0 %v7090
        %7616 = vmatpush.msra.mxu0 %v7086
        %7617 = vmatpush.msra.mxu0 %v7082
        %7618 = vmatpush.msra.mxu0 %v7078
        %7619 = vmatmul.f32.gmra.mxu0 %v7013
        %v7620 = vpop.f32.mrf.mxu0
        %v7621 = vadd.f32 %v7336, %v7620
        %7622 = vmatmul.f32.gmra.mxu0 %v7017
        %v7623 = vpop.f32.mrf.mxu0
        %v7624 = vadd.f32 %v7336, %v7623
        %7625 = vmatmul.f32.gmra.mxu0 %v7021
        %v7626 = vpop.f32.mrf.mxu0
        %v7627 = vadd.f32 %v7336, %v7626
        %7628 = vmatmul.f32.gmra.mxu0 %v7025
        %v7629 = vpop.f32.mrf.mxu0
        %v7630 = vadd.f32 %v7336, %v7629
        %7631 = vmatmul.f32.gmra.mxu0 %v7029
        %v7632 = vpop.f32.mrf.mxu0
        %v7633 = vadd.f32 %v7336, %v7632
        %7634 = vmatmul.f32.gmra.mxu0 %v7033
        %v7635 = vpop.f32.mrf.mxu0
        %v7636 = vadd.f32 %v7336, %v7635
        %7637 = vmatmul.f32.gmra.mxu0 %v7037
        %v7638 = vpop.f32.mrf.mxu0
        %v7639 = vadd.f32 %v7336, %v7638
        %7640 = vmatmul.f32.gmra.mxu0 %v7041
        %v7641 = vpop.f32.mrf.mxu0
        %v7642 = vadd.f32 %v7336, %v7641
        %7643 = vmatmul.f32.gmra.mxu0 %v7045
        %v7644 = vpop.f32.mrf.mxu0
        %v7645 = vadd.f32 %v7336, %v7644
        %7646 = vmatmul.f32.gmra.mxu0 %v7049
        %v7647 = vpop.f32.mrf.mxu0
        %v7648 = vadd.f32 %v7336, %v7647
        %7649 = vmatmul.f32.gmra.mxu0 %v7053
        %v7650 = vpop.f32.mrf.mxu0
        %v7651 = vadd.f32 %v7336, %v7650
        %7652 = vmatmul.f32.gmra.mxu0 %v7057
        %v7653 = vpop.f32.mrf.mxu0
        %v7654 = vadd.f32 %v7336, %v7653
        %7655 = vmatmul.f32.gmra.mxu0 %v7061
        %v7656 = vpop.f32.mrf.mxu0
        %v7657 = vadd.f32 %v7336, %v7656
        %7658 = vmatmul.f32.gmra.mxu0 %v7065
        %v7659 = vpop.f32.mrf.mxu0
        %v7660 = vadd.f32 %v7336, %v7659
        %7661 = vmatmul.f32.gmra.mxu0 %v7069
        %v7662 = vpop.f32.mrf.mxu0
        %v7663 = vadd.f32 %v7336, %v7662
        %7664 = vmatmul.f32.gmra.mxu0 %v7073
        %v7665 = vpop.f32.mrf.mxu0
        %v7666 = vadd.f32 %v7336, %v7665
        %7667 = vdwg.mxu0
        %7668 = vmatpush.msra.mxu0 %v7202
        %7669 = vmatpush.msra.mxu0 %v7198
        %7670 = vmatpush.msra.mxu0 %v7194
        %7671 = vmatpush.msra.mxu0 %v7190
        %7672 = vmatpush.msra.mxu0 %v7186
        %7673 = vmatpush.msra.mxu0 %v7182
        %7674 = vmatpush.msra.mxu0 %v7178
        %7675 = vmatpush.msra.mxu0 %v7174
        %7676 = vmatpush.msra.mxu0 %v7170
        %7677 = vmatpush.msra.mxu0 %v7166
        %7678 = vmatpush.msra.mxu0 %v7162
        %7679 = vmatpush.msra.mxu0 %v7158
        %7680 = vmatpush.msra.mxu0 %v7154
        %7681 = vmatpush.msra.mxu0 %v7150
        %7682 = vmatpush.msra.mxu0 %v7146
        %7683 = vmatpush.msra.mxu0 %v7142
        %7684 = vmatmul.f32.gmra.mxu0 %v7014
        %v7685 = vpop.f32.mrf.mxu0
        %v7686 = vadd.f32 %v7621, %v7685
        %7687 = vmatmul.f32.gmra.mxu0 %v7018
        %v7688 = vpop.f32.mrf.mxu0
        %v7689 = vadd.f32 %v7624, %v7688
        %7690 = vmatmul.f32.gmra.mxu0 %v7022
        %v7691 = vpop.f32.mrf.mxu0
        %v7692 = vadd.f32 %v7627, %v7691
        %7693 = vmatmul.f32.gmra.mxu0 %v7026
        %v7694 = vpop.f32.mrf.mxu0
        %v7695 = vadd.f32 %v7630, %v7694
        %7696 = vmatmul.f32.gmra.mxu0 %v7030
        %v7697 = vpop.f32.mrf.mxu0
        %v7698 = vadd.f32 %v7633, %v7697
        %7699 = vmatmul.f32.gmra.mxu0 %v7034
        %v7700 = vpop.f32.mrf.mxu0
        %v7701 = vadd.f32 %v7636, %v7700
        %7702 = vmatmul.f32.gmra.mxu0 %v7038
        %v7703 = vpop.f32.mrf.mxu0
        %v7704 = vadd.f32 %v7639, %v7703
        %7705 = vmatmul.f32.gmra.mxu0 %v7042
        %v7706 = vpop.f32.mrf.mxu0
        %v7707 = vadd.f32 %v7642, %v7706
        %7708 = vmatmul.f32.gmra.mxu0 %v7046
        %v7709 = vpop.f32.mrf.mxu0
        %v7710 = vadd.f32 %v7645, %v7709
        %7711 = vmatmul.f32.gmra.mxu0 %v7050
        %v7712 = vpop.f32.mrf.mxu0
        %v7713 = vadd.f32 %v7648, %v7712
        %7714 = vmatmul.f32.gmra.mxu0 %v7054
        %v7715 = vpop.f32.mrf.mxu0
        %v7716 = vadd.f32 %v7651, %v7715
        %7717 = vmatmul.f32.gmra.mxu0 %v7058
        %v7718 = vpop.f32.mrf.mxu0
        %v7719 = vadd.f32 %v7654, %v7718
        %7720 = vmatmul.f32.gmra.mxu0 %v7062
        %v7721 = vpop.f32.mrf.mxu0
        %v7722 = vadd.f32 %v7657, %v7721
        %7723 = vmatmul.f32.gmra.mxu0 %v7066
        %v7724 = vpop.f32.mrf.mxu0
        %v7725 = vadd.f32 %v7660, %v7724
        %7726 = vmatmul.f32.gmra.mxu0 %v7070
        %v7727 = vpop.f32.mrf.mxu0
        %v7728 = vadd.f32 %v7663, %v7727
        %7729 = vmatmul.f32.gmra.mxu0 %v7074
        %v7730 = vpop.f32.mrf.mxu0
        %v7731 = vadd.f32 %v7666, %v7730
        %7732 = vdwg.mxu0
        %7733 = vmatpush.msra.mxu0 %v7266
        %7734 = vmatpush.msra.mxu0 %v7262
        %7735 = vmatpush.msra.mxu0 %v7258
        %7736 = vmatpush.msra.mxu0 %v7254
        %7737 = vmatpush.msra.mxu0 %v7250
        %7738 = vmatpush.msra.mxu0 %v7246
        %7739 = vmatpush.msra.mxu0 %v7242
        %7740 = vmatpush.msra.mxu0 %v7238
        %7741 = vmatpush.msra.mxu0 %v7234
        %7742 = vmatpush.msra.mxu0 %v7230
        %7743 = vmatpush.msra.mxu0 %v7226
        %7744 = vmatpush.msra.mxu0 %v7222
        %7745 = vmatpush.msra.mxu0 %v7218
        %7746 = vmatpush.msra.mxu0 %v7214
        %7747 = vmatpush.msra.mxu0 %v7210
        %7748 = vmatpush.msra.mxu0 %v7206
        %7749 = vmatmul.f32.gmra.mxu0 %v7015
        %v7750 = vpop.f32.mrf.mxu0
        %v7751 = vadd.f32 %v7686, %v7750
        %7752 = vmatmul.f32.gmra.mxu0 %v7019
        %v7753 = vpop.f32.mrf.mxu0
        %v7754 = vadd.f32 %v7689, %v7753
        %7755 = vmatmul.f32.gmra.mxu0 %v7023
        %v7756 = vpop.f32.mrf.mxu0
        %v7757 = vadd.f32 %v7692, %v7756
        %7758 = vmatmul.f32.gmra.mxu0 %v7027
        %v7759 = vpop.f32.mrf.mxu0
        %v7760 = vadd.f32 %v7695, %v7759
        %7761 = vmatmul.f32.gmra.mxu0 %v7031
        %v7762 = vpop.f32.mrf.mxu0
        %v7763 = vadd.f32 %v7698, %v7762
        %7764 = vmatmul.f32.gmra.mxu0 %v7035
        %v7765 = vpop.f32.mrf.mxu0
        %v7766 = vadd.f32 %v7701, %v7765
        %7767 = vmatmul.f32.gmra.mxu0 %v7039
        %v7768 = vpop.f32.mrf.mxu0
        %v7769 = vadd.f32 %v7704, %v7768
        %7770 = vmatmul.f32.gmra.mxu0 %v7043
        %v7771 = vpop.f32.mrf.mxu0
        %v7772 = vadd.f32 %v7707, %v7771
        %7773 = vmatmul.f32.gmra.mxu0 %v7047
        %v7774 = vpop.f32.mrf.mxu0
        %v7775 = vadd.f32 %v7710, %v7774
        %7776 = vmatmul.f32.gmra.mxu0 %v7051
        %v7777 = vpop.f32.mrf.mxu0
        %v7778 = vadd.f32 %v7713, %v7777
        %7779 = vmatmul.f32.gmra.mxu0 %v7055
        %v7780 = vpop.f32.mrf.mxu0
        %v7781 = vadd.f32 %v7716, %v7780
        %7782 = vmatmul.f32.gmra.mxu0 %v7059
        %v7783 = vpop.f32.mrf.mxu0
        %v7784 = vadd.f32 %v7719, %v7783
        %7785 = vmatmul.f32.gmra.mxu0 %v7063
        %v7786 = vpop.f32.mrf.mxu0
        %v7787 = vadd.f32 %v7722, %v7786
        %7788 = vmatmul.f32.gmra.mxu0 %v7067
        %v7789 = vpop.f32.mrf.mxu0
        %v7790 = vadd.f32 %v7725, %v7789
        %7791 = vmatmul.f32.gmra.mxu0 %v7071
        %v7792 = vpop.f32.mrf.mxu0
        %v7793 = vadd.f32 %v7728, %v7792
        %7794 = vmatmul.f32.gmra.mxu0 %v7075
        %v7795 = vpop.f32.mrf.mxu0
        %v7796 = vadd.f32 %v7731, %v7795
        %7797 = vdwg.mxu0
        %7798 = vmatpush.msra.mxu0 %v7330
        %7799 = vmatpush.msra.mxu0 %v7326
        %7800 = vmatpush.msra.mxu0 %v7322
        %7801 = vmatpush.msra.mxu0 %v7318
        %7802 = vmatpush.msra.mxu0 %v7314
        %7803 = vmatpush.msra.mxu0 %v7310
        %7804 = vmatpush.msra.mxu0 %v7306
        %7805 = vmatpush.msra.mxu0 %v7302
        %7806 = vmatpush.msra.mxu0 %v7298
        %7807 = vmatpush.msra.mxu0 %v7294
        %7808 = vmatpush.msra.mxu0 %v7290
        %7809 = vmatpush.msra.mxu0 %v7286
        %7810 = vmatpush.msra.mxu0 %v7282
        %7811 = vmatpush.msra.mxu0 %v7278
        %7812 = vmatpush.msra.mxu0 %v7274
        %7813 = vmatpush.msra.mxu0 %v7270
        %7814 = vmatmul.f32.gmra.mxu0 %v7016
        %v7815 = vpop.f32.mrf.mxu0
        %v7816 = vadd.f32 %v7751, %v7815
        %7817 = vmatmul.f32.gmra.mxu0 %v7020
        %v7818 = vpop.f32.mrf.mxu0
        %v7819 = vadd.f32 %v7754, %v7818
        %7820 = vmatmul.f32.gmra.mxu0 %v7024
        %v7821 = vpop.f32.mrf.mxu0
        %v7822 = vadd.f32 %v7757, %v7821
        %7823 = vmatmul.f32.gmra.mxu0 %v7028
        %v7824 = vpop.f32.mrf.mxu0
        %v7825 = vadd.f32 %v7760, %v7824
        %7826 = vmatmul.f32.gmra.mxu0 %v7032
        %v7827 = vpop.f32.mrf.mxu0
        %v7828 = vadd.f32 %v7763, %v7827
        %7829 = vmatmul.f32.gmra.mxu0 %v7036
        %v7830 = vpop.f32.mrf.mxu0
        %v7831 = vadd.f32 %v7766, %v7830
        %7832 = vmatmul.f32.gmra.mxu0 %v7040
        %v7833 = vpop.f32.mrf.mxu0
        %v7834 = vadd.f32 %v7769, %v7833
        %7835 = vmatmul.f32.gmra.mxu0 %v7044
        %v7836 = vpop.f32.mrf.mxu0
        %v7837 = vadd.f32 %v7772, %v7836
        %7838 = vmatmul.f32.gmra.mxu0 %v7048
        %v7839 = vpop.f32.mrf.mxu0
        %v7840 = vadd.f32 %v7775, %v7839
        %7841 = vmatmul.f32.gmra.mxu0 %v7052
        %v7842 = vpop.f32.mrf.mxu0
        %v7843 = vadd.f32 %v7778, %v7842
        %7844 = vmatmul.f32.gmra.mxu0 %v7056
        %v7845 = vpop.f32.mrf.mxu0
        %v7846 = vadd.f32 %v7781, %v7845
        %7847 = vmatmul.f32.gmra.mxu0 %v7060
        %v7848 = vpop.f32.mrf.mxu0
        %v7849 = vadd.f32 %v7784, %v7848
        %7850 = vmatmul.f32.gmra.mxu0 %v7064
        %v7851 = vpop.f32.mrf.mxu0
        %v7852 = vadd.f32 %v7787, %v7851
        %7853 = vmatmul.f32.gmra.mxu0 %v7068
        %v7854 = vpop.f32.mrf.mxu0
        %v7855 = vadd.f32 %v7790, %v7854
        %7856 = vmatmul.f32.gmra.mxu0 %v7072
        %v7857 = vpop.f32.mrf.mxu0
        %v7858 = vadd.f32 %v7793, %v7857
        %7859 = vmatmul.f32.gmra.mxu0 %v7076
        %v7860 = vpop.f32.mrf.mxu0
        %v7861 = vadd.f32 %v7796, %v7860
        %7862 = vdwg.mxu0
        %7863 = vmatpush.msra.mxu0 %v7139
        %7864 = vmatpush.msra.mxu0 %v7135
        %7865 = vmatpush.msra.mxu0 %v7131
        %7866 = vmatpush.msra.mxu0 %v7127
        %7867 = vmatpush.msra.mxu0 %v7123
        %7868 = vmatpush.msra.mxu0 %v7119
        %7869 = vmatpush.msra.mxu0 %v7115
        %7870 = vmatpush.msra.mxu0 %v7111
        %7871 = vmatpush.msra.mxu0 %v7107
        %7872 = vmatpush.msra.mxu0 %v7103
        %7873 = vmatpush.msra.mxu0 %v7099
        %7874 = vmatpush.msra.mxu0 %v7095
        %7875 = vmatpush.msra.mxu0 %v7091
        %7876 = vmatpush.msra.mxu0 %v7087
        %7877 = vmatpush.msra.mxu0 %v7083
        %7878 = vmatpush.msra.mxu0 %v7079
        %7879 = vmatmul.f32.gmra.mxu0 %v7013
        %v7880 = vpop.f32.mrf.mxu0
        %v7881 = vadd.f32 %v7337, %v7880
        %7882 = vmatmul.f32.gmra.mxu0 %v7017
        %v7883 = vpop.f32.mrf.mxu0
        %v7884 = vadd.f32 %v7337, %v7883
        %7885 = vmatmul.f32.gmra.mxu0 %v7021
        %v7886 = vpop.f32.mrf.mxu0
        %v7887 = vadd.f32 %v7337, %v7886
        %7888 = vmatmul.f32.gmra.mxu0 %v7025
        %v7889 = vpop.f32.mrf.mxu0
        %v7890 = vadd.f32 %v7337, %v7889
        %7891 = vmatmul.f32.gmra.mxu0 %v7029
        %v7892 = vpop.f32.mrf.mxu0
        %v7893 = vadd.f32 %v7337, %v7892
        %7894 = vmatmul.f32.gmra.mxu0 %v7033
        %v7895 = vpop.f32.mrf.mxu0
        %v7896 = vadd.f32 %v7337, %v7895
        %7897 = vmatmul.f32.gmra.mxu0 %v7037
        %v7898 = vpop.f32.mrf.mxu0
        %v7899 = vadd.f32 %v7337, %v7898
        %7900 = vmatmul.f32.gmra.mxu0 %v7041
        %v7901 = vpop.f32.mrf.mxu0
        %v7902 = vadd.f32 %v7337, %v7901
        %7903 = vmatmul.f32.gmra.mxu0 %v7045
        %v7904 = vpop.f32.mrf.mxu0
        %v7905 = vadd.f32 %v7337, %v7904
        %7906 = vmatmul.f32.gmra.mxu0 %v7049
        %v7907 = vpop.f32.mrf.mxu0
        %v7908 = vadd.f32 %v7337, %v7907
        %7909 = vmatmul.f32.gmra.mxu0 %v7053
        %v7910 = vpop.f32.mrf.mxu0
        %v7911 = vadd.f32 %v7337, %v7910
        %7912 = vmatmul.f32.gmra.mxu0 %v7057
        %v7913 = vpop.f32.mrf.mxu0
        %v7914 = vadd.f32 %v7337, %v7913
        %7915 = vmatmul.f32.gmra.mxu0 %v7061
        %v7916 = vpop.f32.mrf.mxu0
        %v7917 = vadd.f32 %v7337, %v7916
        %7918 = vmatmul.f32.gmra.mxu0 %v7065
        %v7919 = vpop.f32.mrf.mxu0
        %v7920 = vadd.f32 %v7337, %v7919
        %7921 = vmatmul.f32.gmra.mxu0 %v7069
        %v7922 = vpop.f32.mrf.mxu0
        %v7923 = vadd.f32 %v7337, %v7922
        %7924 = vmatmul.f32.gmra.mxu0 %v7073
        %v7925 = vpop.f32.mrf.mxu0
        %v7926 = vadd.f32 %v7337, %v7925
        %7927 = vdwg.mxu0
        %7928 = vmatpush.msra.mxu0 %v7203
        %7929 = vmatpush.msra.mxu0 %v7199
        %7930 = vmatpush.msra.mxu0 %v7195
        %7931 = vmatpush.msra.mxu0 %v7191
        %7932 = vmatpush.msra.mxu0 %v7187
        %7933 = vmatpush.msra.mxu0 %v7183
        %7934 = vmatpush.msra.mxu0 %v7179
        %7935 = vmatpush.msra.mxu0 %v7175
        %7936 = vmatpush.msra.mxu0 %v7171
        %7937 = vmatpush.msra.mxu0 %v7167
        %7938 = vmatpush.msra.mxu0 %v7163
        %7939 = vmatpush.msra.mxu0 %v7159
        %7940 = vmatpush.msra.mxu0 %v7155
        %7941 = vmatpush.msra.mxu0 %v7151
        %7942 = vmatpush.msra.mxu0 %v7147
        %7943 = vmatpush.msra.mxu0 %v7143
        %7944 = vmatmul.f32.gmra.mxu0 %v7014
        %v7945 = vpop.f32.mrf.mxu0
        %v7946 = vadd.f32 %v7881, %v7945
        %7947 = vmatmul.f32.gmra.mxu0 %v7018
        %v7948 = vpop.f32.mrf.mxu0
        %v7949 = vadd.f32 %v7884, %v7948
        %7950 = vmatmul.f32.gmra.mxu0 %v7022
        %v7951 = vpop.f32.mrf.mxu0
        %v7952 = vadd.f32 %v7887, %v7951
        %7953 = vmatmul.f32.gmra.mxu0 %v7026
        %v7954 = vpop.f32.mrf.mxu0
        %v7955 = vadd.f32 %v7890, %v7954
        %7956 = vmatmul.f32.gmra.mxu0 %v7030
        %v7957 = vpop.f32.mrf.mxu0
        %v7958 = vadd.f32 %v7893, %v7957
        %7959 = vmatmul.f32.gmra.mxu0 %v7034
        %v7960 = vpop.f32.mrf.mxu0
        %v7961 = vadd.f32 %v7896, %v7960
        %7962 = vmatmul.f32.gmra.mxu0 %v7038
        %v7963 = vpop.f32.mrf.mxu0
        %v7964 = vadd.f32 %v7899, %v7963
        %7965 = vmatmul.f32.gmra.mxu0 %v7042
        %v7966 = vpop.f32.mrf.mxu0
        %v7967 = vadd.f32 %v7902, %v7966
        %7968 = vmatmul.f32.gmra.mxu0 %v7046
        %v7969 = vpop.f32.mrf.mxu0
        %v7970 = vadd.f32 %v7905, %v7969
        %7971 = vmatmul.f32.gmra.mxu0 %v7050
        %v7972 = vpop.f32.mrf.mxu0
        %v7973 = vadd.f32 %v7908, %v7972
        %7974 = vmatmul.f32.gmra.mxu0 %v7054
        %v7975 = vpop.f32.mrf.mxu0
        %v7976 = vadd.f32 %v7911, %v7975
        %7977 = vmatmul.f32.gmra.mxu0 %v7058
        %v7978 = vpop.f32.mrf.mxu0
        %v7979 = vadd.f32 %v7914, %v7978
        %7980 = vmatmul.f32.gmra.mxu0 %v7062
        %v7981 = vpop.f32.mrf.mxu0
        %v7982 = vadd.f32 %v7917, %v7981
        %7983 = vmatmul.f32.gmra.mxu0 %v7066
        %v7984 = vpop.f32.mrf.mxu0
        %v7985 = vadd.f32 %v7920, %v7984
        %7986 = vmatmul.f32.gmra.mxu0 %v7070
        %v7987 = vpop.f32.mrf.mxu0
        %v7988 = vadd.f32 %v7923, %v7987
        %7989 = vmatmul.f32.gmra.mxu0 %v7074
        %v7990 = vpop.f32.mrf.mxu0
        %v7991 = vadd.f32 %v7926, %v7990
        %7992 = vdwg.mxu0
        %7993 = vmatpush.msra.mxu0 %v7267
        %7994 = vmatpush.msra.mxu0 %v7263
        %7995 = vmatpush.msra.mxu0 %v7259
        %7996 = vmatpush.msra.mxu0 %v7255
        %7997 = vmatpush.msra.mxu0 %v7251
        %7998 = vmatpush.msra.mxu0 %v7247
        %7999 = vmatpush.msra.mxu0 %v7243
        %8000 = vmatpush.msra.mxu0 %v7239
        %8001 = vmatpush.msra.mxu0 %v7235
        %8002 = vmatpush.msra.mxu0 %v7231
        %8003 = vmatpush.msra.mxu0 %v7227
        %8004 = vmatpush.msra.mxu0 %v7223
        %8005 = vmatpush.msra.mxu0 %v7219
        %8006 = vmatpush.msra.mxu0 %v7215
        %8007 = vmatpush.msra.mxu0 %v7211
        %8008 = vmatpush.msra.mxu0 %v7207
        %8009 = vmatmul.f32.gmra.mxu0 %v7015
        %v8010 = vpop.f32.mrf.mxu0
        %v8011 = vadd.f32 %v7946, %v8010
        %8012 = vmatmul.f32.gmra.mxu0 %v7019
        %v8013 = vpop.f32.mrf.mxu0
        %v8014 = vadd.f32 %v7949, %v8013
        %8015 = vmatmul.f32.gmra.mxu0 %v7023
        %v8016 = vpop.f32.mrf.mxu0
        %v8017 = vadd.f32 %v7952, %v8016
        %8018 = vmatmul.f32.gmra.mxu0 %v7027
        %v8019 = vpop.f32.mrf.mxu0
        %v8020 = vadd.f32 %v7955, %v8019
        %8021 = vmatmul.f32.gmra.mxu0 %v7031
        %v8022 = vpop.f32.mrf.mxu0
        %v8023 = vadd.f32 %v7958, %v8022
        %8024 = vmatmul.f32.gmra.mxu0 %v7035
        %v8025 = vpop.f32.mrf.mxu0
        %v8026 = vadd.f32 %v7961, %v8025
        %8027 = vmatmul.f32.gmra.mxu0 %v7039
        %v8028 = vpop.f32.mrf.mxu0
        %v8029 = vadd.f32 %v7964, %v8028
        %8030 = vmatmul.f32.gmra.mxu0 %v7043
        %v8031 = vpop.f32.mrf.mxu0
        %v8032 = vadd.f32 %v7967, %v8031
        %8033 = vmatmul.f32.gmra.mxu0 %v7047
        %v8034 = vpop.f32.mrf.mxu0
        %v8035 = vadd.f32 %v7970, %v8034
        %8036 = vmatmul.f32.gmra.mxu0 %v7051
        %v8037 = vpop.f32.mrf.mxu0
        %v8038 = vadd.f32 %v7973, %v8037
        %8039 = vmatmul.f32.gmra.mxu0 %v7055
        %v8040 = vpop.f32.mrf.mxu0
        %v8041 = vadd.f32 %v7976, %v8040
        %8042 = vmatmul.f32.gmra.mxu0 %v7059
        %v8043 = vpop.f32.mrf.mxu0
        %v8044 = vadd.f32 %v7979, %v8043
        %8045 = vmatmul.f32.gmra.mxu0 %v7063
        %v8046 = vpop.f32.mrf.mxu0
        %v8047 = vadd.f32 %v7982, %v8046
        %8048 = vmatmul.f32.gmra.mxu0 %v7067
        %v8049 = vpop.f32.mrf.mxu0
        %v8050 = vadd.f32 %v7985, %v8049
        %8051 = vmatmul.f32.gmra.mxu0 %v7071
        %v8052 = vpop.f32.mrf.mxu0
        %v8053 = vadd.f32 %v7988, %v8052
        %8054 = vmatmul.f32.gmra.mxu0 %v7075
        %v8055 = vpop.f32.mrf.mxu0
        %v8056 = vadd.f32 %v7991, %v8055
        %8057 = vdwg.mxu0
        %8058 = vmatpush.msra.mxu0 %v7331
        %8059 = vmatpush.msra.mxu0 %v7327
        %8060 = vmatpush.msra.mxu0 %v7323
        %8061 = vmatpush.msra.mxu0 %v7319
        %8062 = vmatpush.msra.mxu0 %v7315
        %8063 = vmatpush.msra.mxu0 %v7311
        %8064 = vmatpush.msra.mxu0 %v7307
        %8065 = vmatpush.msra.mxu0 %v7303
        %8066 = vmatpush.msra.mxu0 %v7299
        %8067 = vmatpush.msra.mxu0 %v7295
        %8068 = vmatpush.msra.mxu0 %v7291
        %8069 = vmatpush.msra.mxu0 %v7287
        %8070 = vmatpush.msra.mxu0 %v7283
        %8071 = vmatpush.msra.mxu0 %v7279
        %8072 = vmatpush.msra.mxu0 %v7275
        %8073 = vmatpush.msra.mxu0 %v7271
        %8074 = vmatmul.f32.gmra.mxu0 %v7016
        %v8075 = vpop.f32.mrf.mxu0
        %v8076 = vadd.f32 %v8011, %v8075
        %8077 = vmatmul.f32.gmra.mxu0 %v7020
        %v8078 = vpop.f32.mrf.mxu0
        %v8079 = vadd.f32 %v8014, %v8078
        %8080 = vmatmul.f32.gmra.mxu0 %v7024
        %v8081 = vpop.f32.mrf.mxu0
        %v8082 = vadd.f32 %v8017, %v8081
        %8083 = vmatmul.f32.gmra.mxu0 %v7028
        %v8084 = vpop.f32.mrf.mxu0
        %v8085 = vadd.f32 %v8020, %v8084
        %8086 = vmatmul.f32.gmra.mxu0 %v7032
        %v8087 = vpop.f32.mrf.mxu0
        %v8088 = vadd.f32 %v8023, %v8087
        %8089 = vmatmul.f32.gmra.mxu0 %v7036
        %v8090 = vpop.f32.mrf.mxu0
        %v8091 = vadd.f32 %v8026, %v8090
        %8092 = vmatmul.f32.gmra.mxu0 %v7040
        %v8093 = vpop.f32.mrf.mxu0
        %v8094 = vadd.f32 %v8029, %v8093
        %8095 = vmatmul.f32.gmra.mxu0 %v7044
        %v8096 = vpop.f32.mrf.mxu0
        %v8097 = vadd.f32 %v8032, %v8096
        %8098 = vmatmul.f32.gmra.mxu0 %v7048
        %v8099 = vpop.f32.mrf.mxu0
        %v8100 = vadd.f32 %v8035, %v8099
        %8101 = vmatmul.f32.gmra.mxu0 %v7052
        %v8102 = vpop.f32.mrf.mxu0
        %v8103 = vadd.f32 %v8038, %v8102
        %8104 = vmatmul.f32.gmra.mxu0 %v7056
        %v8105 = vpop.f32.mrf.mxu0
        %v8106 = vadd.f32 %v8041, %v8105
        %8107 = vmatmul.f32.gmra.mxu0 %v7060
        %v8108 = vpop.f32.mrf.mxu0
        %v8109 = vadd.f32 %v8044, %v8108
        %8110 = vmatmul.f32.gmra.mxu0 %v7064
        %v8111 = vpop.f32.mrf.mxu0
        %v8112 = vadd.f32 %v8047, %v8111
        %8113 = vmatmul.f32.gmra.mxu0 %v7068
        %v8114 = vpop.f32.mrf.mxu0
        %v8115 = vadd.f32 %v8050, %v8114
        %8116 = vmatmul.f32.gmra.mxu0 %v7072
        %v8117 = vpop.f32.mrf.mxu0
        %v8118 = vadd.f32 %v8053, %v8117
        %8119 = vmatmul.f32.gmra.mxu0 %v7076
        %v8120 = vpop.f32.mrf.mxu0
        %v8121 = vadd.f32 %v8056, %v8120
        %8122 = vdwg.mxu0
        %8123 = vmatpush.msra.mxu0 %v7140
        %8124 = vmatpush.msra.mxu0 %v7136
        %8125 = vmatpush.msra.mxu0 %v7132
        %8126 = vmatpush.msra.mxu0 %v7128
        %8127 = vmatpush.msra.mxu0 %v7124
        %8128 = vmatpush.msra.mxu0 %v7120
        %8129 = vmatpush.msra.mxu0 %v7116
        %8130 = vmatpush.msra.mxu0 %v7112
        %8131 = vmatpush.msra.mxu0 %v7108
        %8132 = vmatpush.msra.mxu0 %v7104
        %8133 = vmatpush.msra.mxu0 %v7100
        %8134 = vmatpush.msra.mxu0 %v7096
        %8135 = vmatpush.msra.mxu0 %v7092
        %8136 = vmatpush.msra.mxu0 %v7088
        %8137 = vmatpush.msra.mxu0 %v7084
        %8138 = vmatpush.msra.mxu0 %v7080
        %8139 = vmatmul.f32.gmra.mxu0 %v7013
        %v8140 = vpop.f32.mrf.mxu0
        %v8141 = vadd.f32 %v7338, %v8140
        %8142 = vmatmul.f32.gmra.mxu0 %v7017
        %v8143 = vpop.f32.mrf.mxu0
        %v8144 = vadd.f32 %v7338, %v8143
        %8145 = vmatmul.f32.gmra.mxu0 %v7021
        %v8146 = vpop.f32.mrf.mxu0
        %v8147 = vadd.f32 %v7338, %v8146
        %8148 = vmatmul.f32.gmra.mxu0 %v7025
        %v8149 = vpop.f32.mrf.mxu0
        %v8150 = vadd.f32 %v7338, %v8149
        %8151 = vmatmul.f32.gmra.mxu0 %v7029
        %v8152 = vpop.f32.mrf.mxu0
        %v8153 = vadd.f32 %v7338, %v8152
        %8154 = vmatmul.f32.gmra.mxu0 %v7033
        %v8155 = vpop.f32.mrf.mxu0
        %v8156 = vadd.f32 %v7338, %v8155
        %8157 = vmatmul.f32.gmra.mxu0 %v7037
        %v8158 = vpop.f32.mrf.mxu0
        %v8159 = vadd.f32 %v7338, %v8158
        %8160 = vmatmul.f32.gmra.mxu0 %v7041
        %v8161 = vpop.f32.mrf.mxu0
        %v8162 = vadd.f32 %v7338, %v8161
        %8163 = vmatmul.f32.gmra.mxu0 %v7045
        %v8164 = vpop.f32.mrf.mxu0
        %v8165 = vadd.f32 %v7338, %v8164
        %8166 = vmatmul.f32.gmra.mxu0 %v7049
        %v8167 = vpop.f32.mrf.mxu0
        %v8168 = vadd.f32 %v7338, %v8167
        %8169 = vmatmul.f32.gmra.mxu0 %v7053
        %v8170 = vpop.f32.mrf.mxu0
        %v8171 = vadd.f32 %v7338, %v8170
        %8172 = vmatmul.f32.gmra.mxu0 %v7057
        %v8173 = vpop.f32.mrf.mxu0
        %v8174 = vadd.f32 %v7338, %v8173
        %8175 = vmatmul.f32.gmra.mxu0 %v7061
        %v8176 = vpop.f32.mrf.mxu0
        %v8177 = vadd.f32 %v7338, %v8176
        %8178 = vmatmul.f32.gmra.mxu0 %v7065
        %v8179 = vpop.f32.mrf.mxu0
        %v8180 = vadd.f32 %v7338, %v8179
        %8181 = vmatmul.f32.gmra.mxu0 %v7069
        %v8182 = vpop.f32.mrf.mxu0
        %v8183 = vadd.f32 %v7338, %v8182
        %8184 = vmatmul.f32.gmra.mxu0 %v7073
        %v8185 = vpop.f32.mrf.mxu0
        %v8186 = vadd.f32 %v7338, %v8185
        %8187 = vdwg.mxu0
        %8188 = vmatpush.msra.mxu0 %v7204
        %8189 = vmatpush.msra.mxu0 %v7200
        %8190 = vmatpush.msra.mxu0 %v7196
        %8191 = vmatpush.msra.mxu0 %v7192
        %8192 = vmatpush.msra.mxu0 %v7188
        %8193 = vmatpush.msra.mxu0 %v7184
        %8194 = vmatpush.msra.mxu0 %v7180
        %8195 = vmatpush.msra.mxu0 %v7176
        %8196 = vmatpush.msra.mxu0 %v7172
        %8197 = vmatpush.msra.mxu0 %v7168
        %8198 = vmatpush.msra.mxu0 %v7164
        %8199 = vmatpush.msra.mxu0 %v7160
        %8200 = vmatpush.msra.mxu0 %v7156
        %8201 = vmatpush.msra.mxu0 %v7152
        %8202 = vmatpush.msra.mxu0 %v7148
        %8203 = vmatpush.msra.mxu0 %v7144
        %8204 = vmatmul.f32.gmra.mxu0 %v7014
        %v8205 = vpop.f32.mrf.mxu0
        %v8206 = vadd.f32 %v8141, %v8205
        %8207 = vmatmul.f32.gmra.mxu0 %v7018
        %v8208 = vpop.f32.mrf.mxu0
        %v8209 = vadd.f32 %v8144, %v8208
        %8210 = vmatmul.f32.gmra.mxu0 %v7022
        %v8211 = vpop.f32.mrf.mxu0
        %v8212 = vadd.f32 %v8147, %v8211
        %8213 = vmatmul.f32.gmra.mxu0 %v7026
        %v8214 = vpop.f32.mrf.mxu0
        %v8215 = vadd.f32 %v8150, %v8214
        %8216 = vmatmul.f32.gmra.mxu0 %v7030
        %v8217 = vpop.f32.mrf.mxu0
        %v8218 = vadd.f32 %v8153, %v8217
        %8219 = vmatmul.f32.gmra.mxu0 %v7034
        %v8220 = vpop.f32.mrf.mxu0
        %v8221 = vadd.f32 %v8156, %v8220
        %8222 = vmatmul.f32.gmra.mxu0 %v7038
        %v8223 = vpop.f32.mrf.mxu0
        %v8224 = vadd.f32 %v8159, %v8223
        %8225 = vmatmul.f32.gmra.mxu0 %v7042
        %v8226 = vpop.f32.mrf.mxu0
        %v8227 = vadd.f32 %v8162, %v8226
        %8228 = vmatmul.f32.gmra.mxu0 %v7046
        %v8229 = vpop.f32.mrf.mxu0
        %v8230 = vadd.f32 %v8165, %v8229
        %8231 = vmatmul.f32.gmra.mxu0 %v7050
        %v8232 = vpop.f32.mrf.mxu0
        %v8233 = vadd.f32 %v8168, %v8232
        %8234 = vmatmul.f32.gmra.mxu0 %v7054
        %v8235 = vpop.f32.mrf.mxu0
        %v8236 = vadd.f32 %v8171, %v8235
        %8237 = vmatmul.f32.gmra.mxu0 %v7058
        %v8238 = vpop.f32.mrf.mxu0
        %v8239 = vadd.f32 %v8174, %v8238
        %8240 = vmatmul.f32.gmra.mxu0 %v7062
        %v8241 = vpop.f32.mrf.mxu0
        %v8242 = vadd.f32 %v8177, %v8241
        %8243 = vmatmul.f32.gmra.mxu0 %v7066
        %v8244 = vpop.f32.mrf.mxu0
        %v8245 = vadd.f32 %v8180, %v8244
        %8246 = vmatmul.f32.gmra.mxu0 %v7070
        %v8247 = vpop.f32.mrf.mxu0
        %v8248 = vadd.f32 %v8183, %v8247
        %8249 = vmatmul.f32.gmra.mxu0 %v7074
        %v8250 = vpop.f32.mrf.mxu0
        %v8251 = vadd.f32 %v8186, %v8250
        %8252 = vdwg.mxu0
        %8253 = vmatpush.msra.mxu0 %v7268
        %8254 = vmatpush.msra.mxu0 %v7264
        %8255 = vmatpush.msra.mxu0 %v7260
        %8256 = vmatpush.msra.mxu0 %v7256
        %8257 = vmatpush.msra.mxu0 %v7252
        %8258 = vmatpush.msra.mxu0 %v7248
        %8259 = vmatpush.msra.mxu0 %v7244
        %8260 = vmatpush.msra.mxu0 %v7240
        %8261 = vmatpush.msra.mxu0 %v7236
        %8262 = vmatpush.msra.mxu0 %v7232
        %8263 = vmatpush.msra.mxu0 %v7228
        %8264 = vmatpush.msra.mxu0 %v7224
        %8265 = vmatpush.msra.mxu0 %v7220
        %8266 = vmatpush.msra.mxu0 %v7216
        %8267 = vmatpush.msra.mxu0 %v7212
        %8268 = vmatpush.msra.mxu0 %v7208
        %8269 = vmatmul.f32.gmra.mxu0 %v7015
        %v8270 = vpop.f32.mrf.mxu0
        %v8271 = vadd.f32 %v8206, %v8270
        %8272 = vmatmul.f32.gmra.mxu0 %v7019
        %v8273 = vpop.f32.mrf.mxu0
        %v8274 = vadd.f32 %v8209, %v8273
        %8275 = vmatmul.f32.gmra.mxu0 %v7023
        %v8276 = vpop.f32.mrf.mxu0
        %v8277 = vadd.f32 %v8212, %v8276
        %8278 = vmatmul.f32.gmra.mxu0 %v7027
        %v8279 = vpop.f32.mrf.mxu0
        %v8280 = vadd.f32 %v8215, %v8279
        %8281 = vmatmul.f32.gmra.mxu0 %v7031
        %v8282 = vpop.f32.mrf.mxu0
        %v8283 = vadd.f32 %v8218, %v8282
        %8284 = vmatmul.f32.gmra.mxu0 %v7035
        %v8285 = vpop.f32.mrf.mxu0
        %v8286 = vadd.f32 %v8221, %v8285
        %8287 = vmatmul.f32.gmra.mxu0 %v7039
        %v8288 = vpop.f32.mrf.mxu0
        %v8289 = vadd.f32 %v8224, %v8288
        %8290 = vmatmul.f32.gmra.mxu0 %v7043
        %v8291 = vpop.f32.mrf.mxu0
        %v8292 = vadd.f32 %v8227, %v8291
        %8293 = vmatmul.f32.gmra.mxu0 %v7047
        %v8294 = vpop.f32.mrf.mxu0
        %v8295 = vadd.f32 %v8230, %v8294
        %8296 = vmatmul.f32.gmra.mxu0 %v7051
        %v8297 = vpop.f32.mrf.mxu0
        %v8298 = vadd.f32 %v8233, %v8297
        %8299 = vmatmul.f32.gmra.mxu0 %v7055
        %v8300 = vpop.f32.mrf.mxu0
        %v8301 = vadd.f32 %v8236, %v8300
        %8302 = vmatmul.f32.gmra.mxu0 %v7059
        %v8303 = vpop.f32.mrf.mxu0
        %v8304 = vadd.f32 %v8239, %v8303
        %8305 = vmatmul.f32.gmra.mxu0 %v7063
        %v8306 = vpop.f32.mrf.mxu0
        %v8307 = vadd.f32 %v8242, %v8306
        %8308 = vmatmul.f32.gmra.mxu0 %v7067
        %v8309 = vpop.f32.mrf.mxu0
        %v8310 = vadd.f32 %v8245, %v8309
        %8311 = vmatmul.f32.gmra.mxu0 %v7071
        %v8312 = vpop.f32.mrf.mxu0
        %v8313 = vadd.f32 %v8248, %v8312
        %8314 = vmatmul.f32.gmra.mxu0 %v7075
        %v8315 = vpop.f32.mrf.mxu0
        %v8316 = vadd.f32 %v8251, %v8315
        %8317 = vdwg.mxu0
        %8318 = vmatpush.msra.mxu0 %v7332
        %8319 = vmatpush.msra.mxu0 %v7328
        %8320 = vmatpush.msra.mxu0 %v7324
        %8321 = vmatpush.msra.mxu0 %v7320
        %8322 = vmatpush.msra.mxu0 %v7316
        %8323 = vmatpush.msra.mxu0 %v7312
        %8324 = vmatpush.msra.mxu0 %v7308
        %8325 = vmatpush.msra.mxu0 %v7304
        %8326 = vmatpush.msra.mxu0 %v7300
        %8327 = vmatpush.msra.mxu0 %v7296
        %8328 = vmatpush.msra.mxu0 %v7292
        %8329 = vmatpush.msra.mxu0 %v7288
        %8330 = vmatpush.msra.mxu0 %v7284
        %8331 = vmatpush.msra.mxu0 %v7280
        %8332 = vmatpush.msra.mxu0 %v7276
        %8333 = vmatpush.msra.mxu0 %v7272
        %8334 = vmatmul.f32.gmra.mxu0 %v7016
        %v8335 = vpop.f32.mrf.mxu0
        %v8336 = vadd.f32 %v8271, %v8335
        %8337 = vmatmul.f32.gmra.mxu0 %v7020
        %v8338 = vpop.f32.mrf.mxu0
        %v8339 = vadd.f32 %v8274, %v8338
        %8340 = vmatmul.f32.gmra.mxu0 %v7024
        %v8341 = vpop.f32.mrf.mxu0
        %v8342 = vadd.f32 %v8277, %v8341
        %8343 = vmatmul.f32.gmra.mxu0 %v7028
        %v8344 = vpop.f32.mrf.mxu0
        %v8345 = vadd.f32 %v8280, %v8344
        %8346 = vmatmul.f32.gmra.mxu0 %v7032
        %v8347 = vpop.f32.mrf.mxu0
        %v8348 = vadd.f32 %v8283, %v8347
        %8349 = vmatmul.f32.gmra.mxu0 %v7036
        %v8350 = vpop.f32.mrf.mxu0
        %v8351 = vadd.f32 %v8286, %v8350
        %8352 = vmatmul.f32.gmra.mxu0 %v7040
        %v8353 = vpop.f32.mrf.mxu0
        %v8354 = vadd.f32 %v8289, %v8353
        %8355 = vmatmul.f32.gmra.mxu0 %v7044
        %v8356 = vpop.f32.mrf.mxu0
        %v8357 = vadd.f32 %v8292, %v8356
        %8358 = vmatmul.f32.gmra.mxu0 %v7048
        %v8359 = vpop.f32.mrf.mxu0
        %v8360 = vadd.f32 %v8295, %v8359
        %8361 = vmatmul.f32.gmra.mxu0 %v7052
        %v8362 = vpop.f32.mrf.mxu0
        %v8363 = vadd.f32 %v8298, %v8362
        %8364 = vmatmul.f32.gmra.mxu0 %v7056
        %v8365 = vpop.f32.mrf.mxu0
        %v8366 = vadd.f32 %v8301, %v8365
        %8367 = vmatmul.f32.gmra.mxu0 %v7060
        %v8368 = vpop.f32.mrf.mxu0
        %v8369 = vadd.f32 %v8304, %v8368
        %8370 = vmatmul.f32.gmra.mxu0 %v7064
        %v8371 = vpop.f32.mrf.mxu0
        %v8372 = vadd.f32 %v8307, %v8371
        %8373 = vmatmul.f32.gmra.mxu0 %v7068
        %v8374 = vpop.f32.mrf.mxu0
        %v8375 = vadd.f32 %v8310, %v8374
        %8376 = vmatmul.f32.gmra.mxu0 %v7072
        %v8377 = vpop.f32.mrf.mxu0
        %v8378 = vadd.f32 %v8313, %v8377
        %8379 = vmatmul.f32.gmra.mxu0 %v7076
        %v8380 = vpop.f32.mrf.mxu0
        %v8381 = vadd.f32 %v8316, %v8380
        %8382 = vdwg.mxu0
        %8383 = vst [vmem:[%s618] sm:$0xff] %v7556
        %8384 = vst [vmem:[%s618 + $0x8] sm:$0xff] %v7816
        %8385 = vst [vmem:[%s618 + $0x10] sm:$0xff] %v8076
        %8386 = vst [vmem:[%s618 + $0x18] sm:$0xff] %v8336
        %8387 = vst [vmem:[%s618 + $0x20] sm:$0xff] %v7559
        %8388 = vst [vmem:[%s618 + $0x28] sm:$0xff] %v7819
        %8389 = vst [vmem:[%s618 + $0x30] sm:$0xff] %v8079
        %8390 = vst [vmem:[%s618 + $0x38] sm:$0xff] %v8339
        %8391 = vst [vmem:[%s618 + $0x40] sm:$0xff] %v7562
        %8392 = vst [vmem:[%s618 + $0x48] sm:$0xff] %v7822
        %8393 = vst [vmem:[%s618 + $0x50] sm:$0xff] %v8082
        %8394 = vst [vmem:[%s618 + $0x58] sm:$0xff] %v8342
        %8395 = vst [vmem:[%s618 + $0x60] sm:$0xff] %v7565
        %8396 = vst [vmem:[%s618 + $0x68] sm:$0xff] %v7825
        %8397 = vst [vmem:[%s618 + $0x70] sm:$0xff] %v8085
        %8398 = vst [vmem:[%s618 + $0x78] sm:$0xff] %v8345
        %8399 = vst [vmem:[%s618 + $0x80] sm:$0xff] %v7568
        %8400 = vst [vmem:[%s618 + $0x88] sm:$0xff] %v7828
        %8401 = vst [vmem:[%s618 + $0x90] sm:$0xff] %v8088
        %8402 = vst [vmem:[%s618 + $0x98] sm:$0xff] %v8348
        %8403 = vst [vmem:[%s618 + $0xa0] sm:$0xff] %v7571
        %8404 = vst [vmem:[%s618 + $0xa8] sm:$0xff] %v7831
        %8405 = vst [vmem:[%s618 + $0xb0] sm:$0xff] %v8091
        %8406 = vst [vmem:[%s618 + $0xb8] sm:$0xff] %v8351
        %8407 = vst [vmem:[%s618 + $0xc0] sm:$0xff] %v7574
        %8408 = vst [vmem:[%s618 + $0xc8] sm:$0xff] %v7834
        %8409 = vst [vmem:[%s618 + $0xd0] sm:$0xff] %v8094
        %8410 = vst [vmem:[%s618 + $0xd8] sm:$0xff] %v8354
        %8411 = vst [vmem:[%s618 + $0xe0] sm:$0xff] %v7577
        %8412 = vst [vmem:[%s618 + $0xe8] sm:$0xff] %v7837
        %8413 = vst [vmem:[%s618 + $0xf0] sm:$0xff] %v8097
        %8414 = vst [vmem:[%s618 + $0xf8] sm:$0xff] %v8357
        %8415 = vst [vmem:[%s618 + $0x100] sm:$0xff] %v7580
        %8416 = vst [vmem:[%s618 + $0x108] sm:$0xff] %v7840
        %8417 = vst [vmem:[%s618 + $0x110] sm:$0xff] %v8100
        %8418 = vst [vmem:[%s618 + $0x118] sm:$0xff] %v8360
        %8419 = vst [vmem:[%s618 + $0x120] sm:$0xff] %v7583
        %8420 = vst [vmem:[%s618 + $0x128] sm:$0xff] %v7843
        %8421 = vst [vmem:[%s618 + $0x130] sm:$0xff] %v8103
        %8422 = vst [vmem:[%s618 + $0x138] sm:$0xff] %v8363
        %8423 = vst [vmem:[%s618 + $0x140] sm:$0xff] %v7586
        %8424 = vst [vmem:[%s618 + $0x148] sm:$0xff] %v7846
        %8425 = vst [vmem:[%s618 + $0x150] sm:$0xff] %v8106
        %8426 = vst [vmem:[%s618 + $0x158] sm:$0xff] %v8366
        %8427 = vst [vmem:[%s618 + $0x160] sm:$0xff] %v7589
        %8428 = vst [vmem:[%s618 + $0x168] sm:$0xff] %v7849
        %8429 = vst [vmem:[%s618 + $0x170] sm:$0xff] %v8109
        %8430 = vst [vmem:[%s618 + $0x178] sm:$0xff] %v8369
        %8431 = vst [vmem:[%s618 + $0x180] sm:$0xff] %v7592
        %8432 = vst [vmem:[%s618 + $0x188] sm:$0xff] %v7852
        %8433 = vst [vmem:[%s618 + $0x190] sm:$0xff] %v8112
        %8434 = vst [vmem:[%s618 + $0x198] sm:$0xff] %v8372
        %8435 = vst [vmem:[%s618 + $0x1a0] sm:$0xff] %v7595
        %8436 = vst [vmem:[%s618 + $0x1a8] sm:$0xff] %v7855
        %8437 = vst [vmem:[%s618 + $0x1b0] sm:$0xff] %v8115
        %8438 = vst [vmem:[%s618 + $0x1b8] sm:$0xff] %v8375
        %8439 = vst [vmem:[%s618 + $0x1c0] sm:$0xff] %v7598
        %8440 = vst [vmem:[%s618 + $0x1c8] sm:$0xff] %v7858
        %8441 = vst [vmem:[%s618 + $0x1d0] sm:$0xff] %v8118
        %8442 = vst [vmem:[%s618 + $0x1d8] sm:$0xff] %v8378
        %8443 = vst [vmem:[%s618 + $0x1e0] sm:$0xff] %v7601
        %8444 = vst [vmem:[%s618 + $0x1e8] sm:$0xff] %v7861
        %8445 = vst [vmem:[%s618 + $0x1f0] sm:$0xff] %v8121
        %8446 = vst [vmem:[%s618 + $0x1f8] sm:$0xff] %v8381
        %s8447 = sand.u32 %s309, 1
        %s8448 = scalar_lea.sflag [#allocation8], %s8447
        %s8449 = sand.u32 %s309, 1
        %s8450 = smul.addr %s8449, 512
        %s8451 = scalar_lea.vmem [#allocation23], %s8450
        %s8452 = sand.u32 %s335, 1
        %s8453 = scalar_lea.sflag [#allocation25], %s8452
        %s8454 = sand.u32 %s335, 1
        %s8455 = smul.addr %s8454, 512
        %s8456 = scalar_lea.vmem [#allocation24], %s8455
        // Predicated region
        $region109: #{tpu_custom_call.1} parent=67 // pred_check
          %p8457 = pneg %p319
        $region110: #{tpu_custom_call.1} parent=67 // pred_check_branch
          %8459 = sbr.rel (%p8457) target = $region112
        $region111: #{tpu_custom_call.1} parent=67 // pred_region
          %8461 = vsyncadd %s8448, 0
          %s8462 = smul.addr %s39, 64
          %s8463 = smul.addr %s8462, 8
          %s8464 = scalar_lea.hbm %s12, %s8463
          %s8465 = sshll.u32 %s8451, 4
          %s8466 = int_to_ptr.vmem [resolvable:$true] %s8465
          %s8467 = sshll.u32 %s8464, 4
          %s8468 = int_to_ptr.hbm [resolvable:$true] %s8467
          %8473 = dma.vmem_to_hbm [thread:$0]  %s8466, 8192, %s8468, %s8448, 512, 512, 32
        $region112: #{tpu_custom_call.1} parent=67 // pred_fallthru
          _
        // Predicated region
        $region113: #{tpu_custom_call.1} parent=67 // pred_check
          %p8474 = pneg %p345
        $region114: #{tpu_custom_call.1} parent=67 // pred_check_branch
          %8476 = sbr.rel (%p8474) target = $region116
        $region115: #{tpu_custom_call.1} parent=67 // pred_region
          %8478 = vsyncadd %s8453, 0
          %s8479 = smul.addr %s39, 64
          %s8480 = smul.addr %s8479, 8
          %s8481 = scalar_lea.hbm %s13, %s8480
          %s8482 = sshll.u32 %s8456, 4
          %s8483 = int_to_ptr.vmem [resolvable:$true] %s8482
          %s8484 = sshll.u32 %s8481, 4
          %s8485 = int_to_ptr.hbm [resolvable:$true] %s8484
          %8490 = dma.vmem_to_hbm [thread:$0]  %s8483, 8192, %s8485, %s8453, 128, 128, 8
        $region116: #{tpu_custom_call.1} parent=67 // pred_fallthru
          _
      $region68: #{tpu_custom_call.1} parent=5 // pred_fallthru
        _
      %p8491 = scmp.le.s32.totalorder 2, %s34
      // Predicated region
      $region117: #{tpu_custom_call.1} parent=5 // pred_check
        %p8492 = pneg %p8491
      $region118: #{tpu_custom_call.1} parent=5 // pred_check_branch
        %8494 = sbr.rel (%p8492) target = $region120
      $region119: #{tpu_custom_call.1} parent=5 // pred_region
        %s8495 = ssub.s32 %s34, 2
        // Predicated region
        $region121: #{tpu_custom_call.1} parent=119 // pred_check
          %p8496 = pneg %p325
        $region122: #{tpu_custom_call.1} parent=119 // pred_check_branch
          %8498 = sbr.rel (%p8496) target = $region124
        $region123: #{tpu_custom_call.1} parent=119 // pred_region
          %s8499 = sand.u32 %s310, 1
          %s8500 = scalar_lea.sflag [#allocation8], %s8499
          %s8501 = sand.u32 %s310, 1
          %s8502 = smul.addr %s8501, 512
          %s8503 = scalar_lea.vmem [#allocation23], %s8502
          %8505 = dma.done %s8500, 8192
        $region124: #{tpu_custom_call.1} parent=119 // pred_fallthru
          _
        // Predicated region
        $region125: #{tpu_custom_call.1} parent=119 // pred_check
          %p8506 = pneg %p351
        $region126: #{tpu_custom_call.1} parent=119 // pred_check_branch
          %8508 = sbr.rel (%p8506) target = $region128
        $region127: #{tpu_custom_call.1} parent=119 // pred_region
          %s8509 = sand.u32 %s336, 1
          %s8510 = scalar_lea.sflag [#allocation25], %s8509
          %s8511 = sand.u32 %s336, 1
          %s8512 = smul.addr %s8511, 512
          %s8513 = scalar_lea.vmem [#allocation24], %s8512
          %8515 = dma.done %s8510, 8192
        $region128: #{tpu_custom_call.1} parent=119 // pred_fallthru
          _
      $region120: #{tpu_custom_call.1} parent=5 // pred_fallthru
        _
    $region6: #{tpu_custom_call.1} parent=1 // loop_footer
      %s38 = sadd.s32 1, %s34
    $region7: #{tpu_custom_call.1} parent=1 // loop_footer_branch
      %33 = sbr.rel target = $region3
    $region8: #{tpu_custom_call.1} parent=1 // loop_exit
      _
    %8516 = vsyncpa [#allocation7], 1
    %s8517 = scalar_lea.sflag [#allocation7], 1
    %8518 = vsyncpa %s8517, 1
    %8519 = vsyncpa [#allocation10], 1
    %8520 = vsyncpa [#allocation13], 1
    %8521 = vsyncpa [#allocation16], 1
    %8522 = vsyncpa [#allocation19], 1
    %8523 = vsyncpa [#allocation22], 1
    %8524 = vsyncpa [#allocation8], 1
    %s8525 = scalar_lea.sflag [#allocation8], 1
    %8526 = vsyncpa %s8525, 1
    %8527 = vsyncpa [#allocation25], 1
    %s8528 = scalar_lea.sflag [#allocation25], 1
    %8529 = vsyncpa %s8528, 1

</llo_original>
